<compile_context>
chip_gen: v7x
topology: tpu7x:2x2x1
jax: 0.10.0
libtpu: 0.0.40
codegen_flags: <defaults>
</compile_context>

<pallas_src>
import jax
import jax.numpy as jnp
from jax.experimental import pallas as pl
from jax.experimental.pallas import tpu as pltpu


# ---------------------------------------------------------------------------
# Tiled matmul + bias kernel (used for both the input and output projections)
# ---------------------------------------------------------------------------
def _matmul_bias_kernel(a_ref, b_ref, bias_ref, o_ref, acc_ref):
    @pl.when(pl.program_id(2) == 0)
    def _():
        acc_ref[...] = jnp.zeros_like(acc_ref)

    acc_ref[...] += jnp.dot(a_ref[...], b_ref[...],
                            preferred_element_type=jnp.float32)

    @pl.when(pl.program_id(2) == pl.num_programs(2) - 1)
    def _():
        o_ref[...] = (acc_ref[...]
                      + bias_ref[...].astype(jnp.float32)).astype(o_ref.dtype)


def _pick_tile(dim, preferred, align):
    """Largest tile <= preferred that is a multiple of `align` and divides dim;
    falls back to the full dim (always legal for BlockSpec)."""
    if dim <= preferred:
        return dim
    t = (preferred // align) * align
    while t >= align:
        if dim % t == 0:
            return t
        t -= align
    return dim


def _matmul_bias(a, b, bias, *, out_dtype=jnp.float32,
                 tm=256, tn=512, tk=512):
    """(M, K) @ (K, N) + bias(1, N) -> (M, N) with f32 accumulation."""
    M, K = a.shape
    _, N = b.shape
    tm = _pick_tile(M, tm, 8)
    tn = _pick_tile(N, tn, 128)
    tk = _pick_tile(K, tk, 128)
    grid = (M // tm, N // tn, K // tk)

    return pl.pallas_call(
        _matmul_bias_kernel,
        out_shape=jax.ShapeDtypeStruct((M, N), out_dtype),
        grid_spec=pltpu.PrefetchScalarGridSpec(
            num_scalar_prefetch=0,
            grid=grid,
            in_specs=[
                pl.BlockSpec((tm, tk), lambda i, j, k: (i, k)),
                pl.BlockSpec((tk, tn), lambda i, j, k: (k, j)),
                pl.BlockSpec((1, tn), lambda i, j, k: (0, j)),
            ],
            out_specs=pl.BlockSpec((tm, tn), lambda i, j, k: (i, j)),
            scratch_shapes=[pltpu.VMEM((tm, tn), jnp.float32)],
        ),
        compiler_params=pltpu.CompilerParams(
            dimension_semantics=("parallel", "parallel", "arbitrary"),
        ),
    )(a, b, bias)


# ---------------------------------------------------------------------------
# LSTM recurrence kernel: one pallas_call, in-kernel (unrolled) time loop
# ---------------------------------------------------------------------------
def _lstm_recurrence_kernel(gx_ref, whh_ref, h_seq_ref):
    """gx_ref: (T, B, 4H) f32 precomputed x@W_ih^T + b.  whh_ref: (H, 4H) bf16.
    Writes h_seq_ref: (T, B, H) bf16.  h/c state and gate math stay in f32."""
    T, B, _ = gx_ref.shape
    H = whh_ref.shape[0]

    def step(t, carry):
        h_prev, c_prev = carry                              # f32 (B, H)
        gates = gx_ref[t] + jnp.dot(h_prev.astype(jnp.bfloat16), whh_ref[...],
                                    preferred_element_type=jnp.float32)
        i_g = jax.nn.sigmoid(gates[:, 0 * H:1 * H])
        f_g = jax.nn.sigmoid(gates[:, 1 * H:2 * H])
        g_g = jnp.tanh(gates[:, 2 * H:3 * H])
        o_g = jax.nn.sigmoid(gates[:, 3 * H:4 * H])
        c_new = f_g * c_prev + i_g * g_g
        h_new = o_g * jnp.tanh(c_new)
        h_seq_ref[t] = h_new.astype(h_seq_ref.dtype)
        return h_new, c_new

    h0 = jnp.zeros((B, H), jnp.float32)
    c0 = jnp.zeros((B, H), jnp.float32)
    # Fully unroll for short sequences so the LLO scheduler can overlap the
    # h@W_hh matmul with the gate VPU/EUP work across iterations.
    jax.lax.fori_loop(0, T, step, (h0, c0), unroll=(T <= 32))


def _lstm_recurrence(gates_x, w_hh_t):
    T, B, G = gates_x.shape
    H = w_hh_t.shape[0]
    return pl.pallas_call(
        _lstm_recurrence_kernel,
        out_shape=jax.ShapeDtypeStruct((T, B, H), jnp.bfloat16),
        grid_spec=pltpu.PrefetchScalarGridSpec(
            num_scalar_prefetch=0,
            grid=(1,),  # single grid step: whole recurrence lives in VMEM
            in_specs=[
                pl.BlockSpec((T, B, G), lambda i: (0, 0, 0)),
                pl.BlockSpec((H, G), lambda i: (0, 0)),
            ],
            out_specs=pl.BlockSpec((T, B, H), lambda i: (0, 0, 0)),
        ),
        compiler_params=pltpu.CompilerParams(
            dimension_semantics=("arbitrary",),
        ),
    )(gates_x, w_hh_t)


# ---------------------------------------------------------------------------
# Full model forward
# ---------------------------------------------------------------------------
def lstm_model_forward(token_ids, params):
    """token_ids: (B, T) int32.  Returns logits (B, T, V) float32."""
    emb = params["embedding"]                    # (V, E) f32
    w_ih_t = params["w_ih_t"]                    # (E, 4H) f32
    w_hh_t = params["w_hh_t"]                    # (H, 4H) f32
    b = params["b"]                              # (1, 4H) f32 (= b_ih + b_hh)
    w_out_t = params["w_out_t"]                  # (H, V) f32
    b_out = params["b_out"]                      # (1, V) f32

    B, T = token_ids.shape
    V, E = emb.shape
    H = w_hh_t.shape[0]

    # bf16 matmul operands, f32 accumulation / state / gate math.
    w_ih_bf = w_ih_t.astype(jnp.bfloat16)
    w_hh_bf = w_hh_t.astype(jnp.bfloat16)
    w_out_bf = w_out_t.astype(jnp.bfloat16)

    # Glue: transpose the tiny int32 token matrix (not the activation), gather.
    # TODO(synk): embedding gather stays in XLA; an in-kernel scalar-prefetch
    # gather would remove one HBM round trip for x.
    x_tm = jnp.take(emb, token_ids.T, axis=0).astype(jnp.bfloat16)   # (T, B, E)

    # 1) Batched input projection over all timesteps: (T*B, E) @ (E, 4H) + b.
    gates_x = _matmul_bias(x_tm.reshape(T * B, E), w_ih_bf, b,
                           out_dtype=jnp.float32).reshape(T, B, 4 * H)

    # 2) Serial recurrence (only h @ W_hh^T stays in the loop).
    h_seq = _lstm_recurrence(gates_x, w_hh_bf)                       # (T, B, H)

    # 3) Batched output projection: (B*T, H) @ (H, V) + b_out (vocab tiled).
    #    Small (T,B,H)->(B,T,H) transpose on the hidden-sized tensor avoids
    #    transposing the much larger (.., V) logits.
    h_bt = jnp.transpose(h_seq, (1, 0, 2)).reshape(B * T, H)
    logits = _matmul_bias(h_bt, w_out_bf, b_out, out_dtype=jnp.float32)

    return logits.reshape(B, T, V)


# ---------------------------------------------------------------------------
# Pure-JAX reference (mirrors torch.nn.LSTM i,f,g,o gate order)
# ---------------------------------------------------------------------------
def _reference_forward(token_ids, params, *, matmul_dtype=jnp.float32):
    emb = params["embedding"]
    w_ih_t, w_hh_t, b = params["w_ih_t"], params["w_hh_t"], params["b"]
    w_out_t, b_out = params["w_out_t"], params["b_out"]
    cast = lambda a: a.astype(matmul_dtype)

    B, T = token_ids.shape
    H = w_hh_t.shape[0]
    x = jnp.take(emb, token_ids, axis=0)                              # (B, T, E)
    gates_x = (jnp.dot(cast(x.reshape(B * T, -1)), cast(w_ih_t),
                       preferred_element_type=jnp.float32)
               .reshape(B, T, 4 * H) + b)

    h = jnp.zeros((B, H), jnp.float32)
    c = jnp.zeros((B, H), jnp.float32)
    hs = []
    for t in range(T):
        gates = gates_x[:, t, :] + jnp.dot(cast(h), cast(w_hh_t),
                                           preferred_element_type=jnp.float32)
        i = jax.nn.sigmoid(gates[:, 0 * H:1 * H])
        f = jax.nn.sigmoid(gates[:, 1 * H:2 * H])
        g = jnp.tanh(gates[:, 2 * H:3 * H])
        o = jax.nn.sigmoid(gates[:, 3 * H:4 * H])
        c = f * c + i * g
        h = o * jnp.tanh(c)
        hs.append(h)
    h_all = jnp.stack(hs, axis=1)                                     # (B, T, H)
    logits = (jnp.dot(cast(h_all.reshape(B * T, H)), cast(w_out_t),
                      preferred_element_type=jnp.float32) + b_out)
    return logits.reshape(B, T, -1)


def init_params(key, vocab_size, embedding_dim, hidden_dim):
    ks = jax.random.split(key, 7)
    bound = 1.0 / jnp.sqrt(hidden_dim)
    return {
        "embedding": jax.random.normal(ks[0], (vocab_size, embedding_dim),
                                       jnp.float32),
        # Pre-transposed: (E, 4H), (H, 4H); PyTorch gate order i, f, g, o.
        "w_ih_t": jax.random.uniform(ks[1], (embedding_dim, 4 * hidden_dim),
                                     jnp.float32, -bound, bound),
        "w_hh_t": jax.random.uniform(ks[2], (hidden_dim, 4 * hidden_dim),
                                     jnp.float32, -bound, bound),
        # Combined bias b_ih + b_hh.
        "b": (jax.random.uniform(ks[3], (1, 4 * hidden_dim), jnp.float32,
                                 -bound, bound)
              + jax.random.uniform(ks[4], (1, 4 * hidden_dim), jnp.float32,
                                   -bound, bound)),
        "w_out_t": jax.random.uniform(ks[5], (hidden_dim, vocab_size),
                                      jnp.float32, -bound, bound),
        "b_out": jax.random.uniform(ks[6], (1, vocab_size), jnp.float32,
                                    -bound, bound),
    }


if __name__ == "__main__":
    VOCAB = 512
    EMBED = 128
    HIDDEN = 256   # module default hidden_dim
    BATCH = 2
    SEQ = 8

    key = jax.random.PRNGKey(0)
    k_params, k_tokens = jax.random.split(key)
    params = init_params(k_params, VOCAB, EMBED, HIDDEN)
    token_ids = jax.random.randint(k_tokens, (BATCH, SEQ), 0, VOCAB, jnp.int32)

    fwd = jax.jit(lstm_model_forward)
    logits = fwd(token_ids, params)
    jax.block_until_ready(logits)

    assert logits.shape == (BATCH, SEQ, VOCAB)

    # Tight check vs a reference that mirrors the bf16-matmul / f32-state policy.
    ref_mixed = _reference_forward(token_ids, params, matmul_dtype=jnp.bfloat16)
    assert jnp.allclose(logits, ref_mixed, atol=5e-3, rtol=5e-3), \
        "mismatch vs mixed-precision reference"

    # Loose check vs the full-f32 (PyTorch-semantics) reference.
    ref_f32 = _reference_forward(token_ids, params, matmul_dtype=jnp.float32)
    assert jnp.allclose(logits, ref_f32, atol=5e-2, rtol=5e-2), \
        "mismatch vs f32 reference"

    print("KERNEL_OK")
</pallas_src>

<mosaic_0001>
module attributes {stable_mosaic.version = 11 : i64} {
  func.func @_matmul_bias_kernel(%arg0: i32, %arg1: i32, %arg2: i32, %arg3: memref<16x128xbf16, #tpu.memory_space<vmem>>, %arg4: memref<128x512xbf16, #tpu.memory_space<vmem>>, %arg5: memref<1x512xf32, #tpu.memory_space<vmem>>, %arg6: memref<16x512xf32, #tpu.memory_space<vmem>>, %arg7: memref<16x512xf32, #tpu.memory_space<vmem>>) attributes {dimension_semantics = [#tpu.dimension_semantics<parallel>, #tpu.dimension_semantics<parallel>, #tpu.dimension_semantics<arbitrary>], iteration_bounds = array<i64: 1, 2, 1>, scalar_prefetch = 0 : i64, scratch_operands = 1 : i64, tpu.core_type = #tpu.core_type<tc>, window_params = [{transform_indices = @transform_0, window_bounds = array<i64: 16, 128>}, {transform_indices = @transform_1, window_bounds = array<i64: 128, 512>}, {transform_indices = @transform_2, window_bounds = array<i64: 1, 512>}, {transform_indices = @transform_3, window_bounds = array<i64: 16, 512>}]} {
    %c0_i32 = arith.constant 0 : i32
    %0 = arith.cmpi eq, %arg2, %c0_i32 : i32
    %1 = arith.extui %0 : i1 to i32
    %c0_i32_0 = arith.constant 0 : i32
    %2 = arith.cmpi ne, %1, %c0_i32_0 : i32
    scf.if %2 {
      %cst_10 = arith.constant 0.000000e+00 : f32
      %12 = vector.broadcast %cst_10 : f32 to vector<16x512xf32>
      %c0_11 = arith.constant 0 : index
      %c0_12 = arith.constant 0 : index
      %13 = vector.load %arg7[%c0_11, %c0_12] : memref<16x512xf32, #tpu.memory_space<vmem>>, vector<16x512xf32>
      tpu.vector_store %arg7[%c0_11, %c0_12], %12 {strides = array<i32>} : memref<16x512xf32, #tpu.memory_space<vmem>>, vector<16x512xf32>,
    } else {
    }
    %c0 = arith.constant 0 : index
    %c0_1 = arith.constant 0 : index
    %3 = vector.load %arg7[%c0, %c0_1] : memref<16x512xf32, #tpu.memory_space<vmem>>, vector<16x512xf32>
    %c0_2 = arith.constant 0 : index
    %c0_3 = arith.constant 0 : index
    %4 = vector.load %arg3[%c0_2, %c0_3] : memref<16x128xbf16, #tpu.memory_space<vmem>>, vector<16x128xbf16>
    %c0_4 = arith.constant 0 : index
    %c0_5 = arith.constant 0 : index
    %5 = vector.load %arg4[%c0_4, %c0_5] : memref<128x512xbf16, #tpu.memory_space<vmem>>, vector<128x512xbf16>
    %cst = arith.constant dense<0.000000e+00> : vector<16x512xf32>
    %6 = tpu.matmul %4, %5, %cst {dimension_numbers = #tpu.dot_dimension_numbers<[1], [0], [0], [1], [0, 0, 1, 1], [], []>} : vector<16x128xbf16>, vector<128x512xbf16>, vector<16x512xf32> -> vector<16x512xf32>
    %7 = arith.addf %3, %6 : vector<16x512xf32>
    %c0_6 = arith.constant 0 : index
    %c0_7 = arith.constant 0 : index
    %8 = vector.load %arg7[%c0_6, %c0_7] : memref<16x512xf32, #tpu.memory_space<vmem>>, vector<16x512xf32>
    tpu.vector_store %arg7[%c0_6, %c0_7], %7 {strides = array<i32>} : memref<16x512xf32, #tpu.memory_space<vmem>>, vector<16x512xf32>,
    %c0_i32_8 = arith.constant 0 : i32
    %9 = arith.cmpi eq, %arg2, %c0_i32_8 : i32
    %10 = arith.extui %9 : i1 to i32
    %c0_i32_9 = arith.constant 0 : i32
    %11 = arith.cmpi ne, %10, %c0_i32_9 : i32
    scf.if %11 {
      %c0_10 = arith.constant 0 : index
      %c0_11 = arith.constant 0 : index
      %12 = vector.load %arg7[%c0_10, %c0_11] : memref<16x512xf32, #tpu.memory_space<vmem>>, vector<16x512xf32>
      %c0_12 = arith.constant 0 : index
      %c0_13 = arith.constant 0 : index
      %13 = vector.load %arg5[%c0_12, %c0_13] : memref<1x512xf32, #tpu.memory_space<vmem>>, vector<1x512xf32>
      %14 = vector.broadcast %13 : vector<1x512xf32> to vector<16x512xf32>
      %15 = arith.addf %12, %14 : vector<16x512xf32>
      %c0_14 = arith.constant 0 : index
      %c0_15 = arith.constant 0 : index
      %16 = vector.load %arg6[%c0_14, %c0_15] : memref<16x512xf32, #tpu.memory_space<vmem>>, vector<16x512xf32>
      tpu.vector_store %arg6[%c0_14, %c0_15], %15 {strides = array<i32>} : memref<16x512xf32, #tpu.memory_space<vmem>>, vector<16x512xf32>,
    } else {
    }
    return
  }
  func.func @transform_0(%arg0: i32, %arg1: i32, %arg2: i32) -> (i32, i32) {
    %c0_i32 = arith.constant 0 : i32
    return %arg0, %arg2 : i32, i32
  }
  func.func @transform_1(%arg0: i32, %arg1: i32, %arg2: i32) -> (i32, i32) {
    %c0_i32 = arith.constant 0 : i32
    return %arg2, %arg1 : i32, i32
  }
  func.func @transform_2(%arg0: i32, %arg1: i32, %arg2: i32) -> (i32, i32) {
    %c0_i32 = arith.constant 0 : i32
    %c0_i32_0 = arith.constant 0 : i32
    return %c0_i32, %arg1 : i32, i32
  }
  func.func @transform_3(%arg0: i32, %arg1: i32, %arg2: i32) -> (i32, i32) {
    %c0_i32 = arith.constant 0 : i32
    return %arg0, %arg1 : i32, i32
  }
}

module attributes {stable_mosaic.version = 11 : i64} {
  func.func @_lstm_recurrence_kernel(%arg0: i32, %arg1: memref<8x2x1024xf32, #tpu.memory_space<vmem>>, %arg2: memref<256x1024xbf16, #tpu.memory_space<vmem>>, %arg3: memref<8x2x256xbf16, #tpu.memory_space<vmem>>) attributes {dimension_semantics = [#tpu.dimension_semantics<arbitrary>], iteration_bounds = array<i64: 1>, scalar_prefetch = 0 : i64, scratch_operands = 0 : i64, tpu.core_type = #tpu.core_type<tc>, window_params = [{pipeline_mode = #tpu.pipeline_mode<synchronous>, transform_indices = @transform_0, window_bounds = array<i64: 8, 2, 1024>}, {pipeline_mode = #tpu.pipeline_mode<synchronous>, transform_indices = @transform_1, window_bounds = array<i64: 256, 1024>}, {pipeline_mode = #tpu.pipeline_mode<synchronous>, transform_indices = @transform_2, window_bounds = array<i64: 8, 2, 256>}]} {
    %cst = arith.constant 0.000000e+00 : f32
    %0 = vector.broadcast %cst : f32 to vector<2x256xf32>
    %cst_0 = arith.constant 0.000000e+00 : f32
    %1 = vector.broadcast %cst_0 : f32 to vector<2x256xf32>
    %c0_i32 = arith.constant 0 : i32
    %2 = arith.index_cast %c0_i32 : i32 to index
    %c0 = arith.constant 0 : index
    %c0_1 = arith.constant 0 : index
    %3 = vector.load %arg1[%2, %c0, %c0_1] : memref<8x2x1024xf32, #tpu.memory_space<vmem>>, vector<1x2x1024xf32>
    %4 = vector.shape_cast %3 : vector<1x2x1024xf32> to vector<2x1024xf32>
    %5 = arith.truncf %0 : vector<2x256xf32> to vector<2x256xbf16>
    %c0_2 = arith.constant 0 : index
    %c0_3 = arith.constant 0 : index
    %6 = vector.load %arg2[%c0_2, %c0_3] : memref<256x1024xbf16, #tpu.memory_space<vmem>>, vector<256x1024xbf16>
    %cst_4 = arith.constant dense<0.000000e+00> : vector<2x1024xf32>
    %7 = tpu.matmul %5, %6, %cst_4 {dimension_numbers = #tpu.dot_dimension_numbers<[1], [0], [0], [1], [0, 0, 1, 1], [], []>} : vector<2x256xbf16>, vector<256x1024xbf16>, vector<2x1024xf32> -> vector<2x1024xf32>
    %8 = arith.addf %4, %7 : vector<2x1024xf32>
    %9 = vector.extract_strided_slice %8 {offsets = [0, 0], sizes = [2, 256], strides = [1, 1]} : vector<2x1024xf32> to vector<2x256xf32>
    %10 = arith.negf %9 : vector<2x256xf32>
    %11 = math.exp %10 : vector<2x256xf32>
    %cst_5 = arith.constant 1.000000e+00 : f32
    %12 = vector.broadcast %cst_5 : f32 to vector<2x256xf32>
    %13 = arith.addf %12, %11 : vector<2x256xf32>
    %14 = arith.divf %12, %13 : vector<2x256xf32>
    %15 = vector.extract_strided_slice %8 {offsets = [0, 256], sizes = [2, 256], strides = [1, 1]} : vector<2x1024xf32> to vector<2x256xf32>
    %16 = arith.negf %15 : vector<2x256xf32>
    %17 = math.exp %16 : vector<2x256xf32>
    %cst_6 = arith.constant 1.000000e+00 : f32
    %18 = vector.broadcast %cst_6 : f32 to vector<2x256xf32>
    %19 = arith.addf %18, %17 : vector<2x256xf32>
    %20 = arith.divf %18, %19 : vector<2x256xf32>
    %21 = vector.extract_strided_slice %8 {offsets = [0, 512], sizes = [2, 256], strides = [1, 1]} : vector<2x1024xf32> to vector<2x256xf32>
    %22 = math.tanh %21 : vector<2x256xf32>
    %23 = vector.extract_strided_slice %8 {offsets = [0, 768], sizes = [2, 256], strides = [1, 1]} : vector<2x1024xf32> to vector<2x256xf32>
    %24 = arith.negf %23 : vector<2x256xf32>
    %25 = math.exp %24 : vector<2x256xf32>
    %cst_7 = arith.constant 1.000000e+00 : f32
    %26 = vector.broadcast %cst_7 : f32 to vector<2x256xf32>
    %27 = arith.addf %26, %25 : vector<2x256xf32>
    %28 = arith.divf %26, %27 : vector<2x256xf32>
    %29 = arith.mulf %20, %1 : vector<2x256xf32>
    %30 = arith.mulf %14, %22 : vector<2x256xf32>
    %31 = arith.addf %29, %30 : vector<2x256xf32>
    %32 = math.tanh %31 : vector<2x256xf32>
    %33 = arith.mulf %28, %32 : vector<2x256xf32>
    %34 = arith.truncf %33 : vector<2x256xf32> to vector<2x256xbf16>
    %35 = arith.index_cast %c0_i32 : i32 to index
    %c0_8 = arith.constant 0 : index
    %c0_9 = arith.constant 0 : index
    %36 = vector.load %arg3[%35, %c0_8, %c0_9] : memref<8x2x256xbf16, #tpu.memory_space<vmem>>, vector<1x2x256xbf16>
    %37 = vector.shape_cast %36 : vector<1x2x256xbf16> to vector<2x256xbf16>
    %38 = vector.shape_cast %34 : vector<2x256xbf16> to vector<1x2x256xbf16>
    tpu.vector_store %arg3[%35, %c0_8, %c0_9], %38 {strides = array<i32>} : memref<8x2x256xbf16, #tpu.memory_space<vmem>>, vector<1x2x256xbf16>,
    %c1_i32 = arith.constant 1 : i32
    %39 = arith.index_cast %c1_i32 : i32 to index
    %c0_10 = arith.constant 0 : index
    %c0_11 = arith.constant 0 : index
    %40 = vector.load %arg1[%39, %c0_10, %c0_11] : memref<8x2x1024xf32, #tpu.memory_space<vmem>>, vector<1x2x1024xf32>
    %41 = vector.shape_cast %40 : vector<1x2x1024xf32> to vector<2x1024xf32>
    %42 = arith.truncf %33 : vector<2x256xf32> to vector<2x256xbf16>
    %c0_12 = arith.constant 0 : index
    %c0_13 = arith.constant 0 : index
    %43 = vector.load %arg2[%c0_12, %c0_13] : memref<256x1024xbf16, #tpu.memory_space<vmem>>, vector<256x1024xbf16>
    %cst_14 = arith.constant dense<0.000000e+00> : vector<2x1024xf32>
    %44 = tpu.matmul %42, %43, %cst_14 {dimension_numbers = #tpu.dot_dimension_numbers<[1], [0], [0], [1], [0, 0, 1, 1], [], []>} : vector<2x256xbf16>, vector<256x1024xbf16>, vector<2x1024xf32> -> vector<2x1024xf32>
    %45 = arith.addf %41, %44 : vector<2x1024xf32>
    %46 = vector.extract_strided_slice %45 {offsets = [0, 0], sizes = [2, 256], strides = [1, 1]} : vector<2x1024xf32> to vector<2x256xf32>
    %47 = arith.negf %46 : vector<2x256xf32>
    %48 = math.exp %47 : vector<2x256xf32>
    %cst_15 = arith.constant 1.000000e+00 : f32
    %49 = vector.broadcast %cst_15 : f32 to vector<2x256xf32>
    %50 = arith.addf %49, %48 : vector<2x256xf32>
    %51 = arith.divf %49, %50 : vector<2x256xf32>
    %52 = vector.extract_strided_slice %45 {offsets = [0, 256], sizes = [2, 256], strides = [1, 1]} : vector<2x1024xf32> to vector<2x256xf32>
    %53 = arith.negf %52 : vector<2x256xf32>
    %54 = math.exp %53 : vector<2x256xf32>
    %cst_16 = arith.constant 1.000000e+00 : f32
    %55 = vector.broadcast %cst_16 : f32 to vector<2x256xf32>
    %56 = arith.addf %55, %54 : vector<2x256xf32>
    %57 = arith.divf %55, %56 : vector<2x256xf32>
    %58 = vector.extract_strided_slice %45 {offsets = [0, 512], sizes = [2, 256], strides = [1, 1]} : vector<2x1024xf32> to vector<2x256xf32>
    %59 = math.tanh %58 : vector<2x256xf32>
    %60 = vector.extract_strided_slice %45 {offsets = [0, 768], sizes = [2, 256], strides = [1, 1]} : vector<2x1024xf32> to vector<2x256xf32>
    %61 = arith.negf %60 : vector<2x256xf32>
    %62 = math.exp %61 : vector<2x256xf32>
    %cst_17 = arith.constant 1.000000e+00 : f32
    %63 = vector.broadcast %cst_17 : f32 to vector<2x256xf32>
    %64 = arith.addf %63, %62 : vector<2x256xf32>
    %65 = arith.divf %63, %64 : vector<2x256xf32>
    %66 = arith.mulf %57, %31 : vector<2x256xf32>
    %67 = arith.mulf %51, %59 : vector<2x256xf32>
    %68 = arith.addf %66, %67 : vector<2x256xf32>
    %69 = math.tanh %68 : vector<2x256xf32>
    %70 = arith.mulf %65, %69 : vector<2x256xf32>
    %71 = arith.truncf %70 : vector<2x256xf32> to vector<2x256xbf16>
    %72 = arith.index_cast %c1_i32 : i32 to index
    %c0_18 = arith.constant 0 : index
    %c0_19 = arith.constant 0 : index
    %73 = vector.load %arg3[%72, %c0_18, %c0_19] : memref<8x2x256xbf16, #tpu.memory_space<vmem>>, vector<1x2x256xbf16>
    %74 = vector.shape_cast %73 : vector<1x2x256xbf16> to vector<2x256xbf16>
    %75 = vector.shape_cast %71 : vector<2x256xbf16> to vector<1x2x256xbf16>
    tpu.vector_store %arg3[%72, %c0_18, %c0_19], %75 {strides = array<i32>} : memref<8x2x256xbf16, #tpu.memory_space<vmem>>, vector<1x2x256xbf16>,
    %c2_i32 = arith.constant 2 : i32
    %76 = arith.index_cast %c2_i32 : i32 to index
    %c0_20 = arith.constant 0 : index
    %c0_21 = arith.constant 0 : index
    %77 = vector.load %arg1[%76, %c0_20, %c0_21] : memref<8x2x1024xf32, #tpu.memory_space<vmem>>, vector<1x2x1024xf32>
    %78 = vector.shape_cast %77 : vector<1x2x1024xf32> to vector<2x1024xf32>
    %79 = arith.truncf %70 : vector<2x256xf32> to vector<2x256xbf16>
    %c0_22 = arith.constant 0 : index
    %c0_23 = arith.constant 0 : index
    %80 = vector.load %arg2[%c0_22, %c0_23] : memref<256x1024xbf16, #tpu.memory_space<vmem>>, vector<256x1024xbf16>
    %cst_24 = arith.constant dense<0.000000e+00> : vector<2x1024xf32>
    %81 = tpu.matmul %79, %80, %cst_24 {dimension_numbers = #tpu.dot_dimension_numbers<[1], [0], [0], [1], [0, 0, 1, 1], [], []>} : vector<2x256xbf16>, vector<256x1024xbf16>, vector<2x1024xf32> -> vector<2x1024xf32>
    %82 = arith.addf %78, %81 : vector<2x1024xf32>
    %83 = vector.extract_strided_slice %82 {offsets = [0, 0], sizes = [2, 256], strides = [1, 1]} : vector<2x1024xf32> to vector<2x256xf32>
    %84 = arith.negf %83 : vector<2x256xf32>
    %85 = math.exp %84 : vector<2x256xf32>
    %cst_25 = arith.constant 1.000000e+00 : f32
    %86 = vector.broadcast %cst_25 : f32 to vector<2x256xf32>
    %87 = arith.addf %86, %85 : vector<2x256xf32>
    %88 = arith.divf %86, %87 : vector<2x256xf32>
    %89 = vector.extract_strided_slice %82 {offsets = [0, 256], sizes = [2, 256], strides = [1, 1]} : vector<2x1024xf32> to vector<2x256xf32>
    %90 = arith.negf %89 : vector<2x256xf32>
    %91 = math.exp %90 : vector<2x256xf32>
    %cst_26 = arith.constant 1.000000e+00 : f32
    %92 = vector.broadcast %cst_26 : f32 to vector<2x256xf32>
    %93 = arith.addf %92, %91 : vector<2x256xf32>
    %94 = arith.divf %92, %93 : vector<2x256xf32>
    %95 = vector.extract_strided_slice %82 {offsets = [0, 512], sizes = [2, 256], strides = [1, 1]} : vector<2x1024xf32> to vector<2x256xf32>
    %96 = math.tanh %95 : vector<2x256xf32>
    %97 = vector.extract_strided_slice %82 {offsets = [0, 768], sizes = [2, 256], strides = [1, 1]} : vector<2x1024xf32> to vector<2x256xf32>
    %98 = arith.negf %97 : vector<2x256xf32>
    %99 = math.exp %98 : vector<2x256xf32>
    %cst_27 = arith.constant 1.000000e+00 : f32
    %100 = vector.broadcast %cst_27 : f32 to vector<2x256xf32>
    %101 = arith.addf %100, %99 : vector<2x256xf32>
    %102 = arith.divf %100, %101 : vector<2x256xf32>
    %103 = arith.mulf %94, %68 : vector<2x256xf32>
    %104 = arith.mulf %88, %96 : vector<2x256xf32>
    %105 = arith.addf %103, %104 : vector<2x256xf32>
    %106 = math.tanh %105 : vector<2x256xf32>
    %107 = arith.mulf %102, %106 : vector<2x256xf32>
    %108 = arith.truncf %107 : vector<2x256xf32> to vector<2x256xbf16>
    %109 = arith.index_cast %c2_i32 : i32 to index
    %c0_28 = arith.constant 0 : index
    %c0_29 = arith.constant 0 : index
    %110 = vector.load %arg3[%109, %c0_28, %c0_29] : memref<8x2x256xbf16, #tpu.memory_space<vmem>>, vector<1x2x256xbf16>
    %111 = vector.shape_cast %110 : vector<1x2x256xbf16> to vector<2x256xbf16>
    %112 = vector.shape_cast %108 : vector<2x256xbf16> to vector<1x2x256xbf16>
    tpu.vector_store %arg3[%109, %c0_28, %c0_29], %112 {strides = array<i32>} : memref<8x2x256xbf16, #tpu.memory_space<vmem>>, vector<1x2x256xbf16>,
    %c3_i32 = arith.constant 3 : i32
    %113 = arith.index_cast %c3_i32 : i32 to index
    %c0_30 = arith.constant 0 : index
    %c0_31 = arith.constant 0 : index
    %114 = vector.load %arg1[%113, %c0_30, %c0_31] : memref<8x2x1024xf32, #tpu.memory_space<vmem>>, vector<1x2x1024xf32>
    %115 = vector.shape_cast %114 : vector<1x2x1024xf32> to vector<2x1024xf32>
    %116 = arith.truncf %107 : vector<2x256xf32> to vector<2x256xbf16>
    %c0_32 = arith.constant 0 : index
    %c0_33 = arith.constant 0 : index
    %117 = vector.load %arg2[%c0_32, %c0_33] : memref<256x1024xbf16, #tpu.memory_space<vmem>>, vector<256x1024xbf16>
    %cst_34 = arith.constant dense<0.000000e+00> : vector<2x1024xf32>
    %118 = tpu.matmul %116, %117, %cst_34 {dimension_numbers = #tpu.dot_dimension_numbers<[1], [0], [0], [1], [0, 0, 1, 1], [], []>} : vector<2x256xbf16>, vector<256x1024xbf16>, vector<2x1024xf32> -> vector<2x1024xf32>
    %119 = arith.addf %115, %118 : vector<2x1024xf32>
    %120 = vector.extract_strided_slice %119 {offsets = [0, 0], sizes = [2, 256], strides = [1, 1]} : vector<2x1024xf32> to vector<2x256xf32>
    %121 = arith.negf %120 : vector<2x256xf32>
    %122 = math.exp %121 : vector<2x256xf32>
    %cst_35 = arith.constant 1.000000e+00 : f32
    %123 = vector.broadcast %cst_35 : f32 to vector<2x256xf32>
    %124 = arith.addf %123, %122 : vector<2x256xf32>
    %125 = arith.divf %123, %124 : vector<2x256xf32>
    %126 = vector.extract_strided_slice %119 {offsets = [0, 256], sizes = [2, 256], strides = [1, 1]} : vector<2x1024xf32> to vector<2x256xf32>
    %127 = arith.negf %126 : vector<2x256xf32>
    %128 = math.exp %127 : vector<2x256xf32>
    %cst_36 = arith.constant 1.000000e+00 : f32
    %129 = vector.broadcast %cst_36 : f32 to vector<2x256xf32>
    %130 = arith.addf %129, %128 : vector<2x256xf32>
    %131 = arith.divf %129, %130 : vector<2x256xf32>
    %132 = vector.extract_strided_slice %119 {offsets = [0, 512], sizes = [2, 256], strides = [1, 1]} : vector<2x1024xf32> to vector<2x256xf32>
    %133 = math.tanh %132 : vector<2x256xf32>
    %134 = vector.extract_strided_slice %119 {offsets = [0, 768], sizes = [2, 256], strides = [1, 1]} : vector<2x1024xf32> to vector<2x256xf32>
    %135 = arith.negf %134 : vector<2x256xf32>
    %136 = math.exp %135 : vector<2x256xf32>
    %cst_37 = arith.constant 1.000000e+00 : f32
    %137 = vector.broadcast %cst_37 : f32 to vector<2x256xf32>
    %138 = arith.addf %137, %136 : vector<2x256xf32>
    %139 = arith.divf %137, %138 : vector<2x256xf32>
    %140 = arith.mulf %131, %105 : vector<2x256xf32>
    %141 = arith.mulf %125, %133 : vector<2x256xf32>
    %142 = arith.addf %140, %141 : vector<2x256xf32>
    %143 = math.tanh %142 : vector<2x256xf32>
    %144 = arith.mulf %139, %143 : vector<2x256xf32>
    %145 = arith.truncf %144 : vector<2x256xf32> to vector<2x256xbf16>
    %146 = arith.index_cast %c3_i32 : i32 to index
    %c0_38 = arith.constant 0 : index
    %c0_39 = arith.constant 0 : index
    %147 = vector.load %arg3[%146, %c0_38, %c0_39] : memref<8x2x256xbf16, #tpu.memory_space<vmem>>, vector<1x2x256xbf16>
    %148 = vector.shape_cast %147 : vector<1x2x256xbf16> to vector<2x256xbf16>
    %149 = vector.shape_cast %145 : vector<2x256xbf16> to vector<1x2x256xbf16>
    tpu.vector_store %arg3[%146, %c0_38, %c0_39], %149 {strides = array<i32>} : memref<8x2x256xbf16, #tpu.memory_space<vmem>>, vector<1x2x256xbf16>,
    %c4_i32 = arith.constant 4 : i32
    %150 = arith.index_cast %c4_i32 : i32 to index
    %c0_40 = arith.constant 0 : index
    %c0_41 = arith.constant 0 : index
    %151 = vector.load %arg1[%150, %c0_40, %c0_41] : memref<8x2x1024xf32, #tpu.memory_space<vmem>>, vector<1x2x1024xf32>
    %152 = vector.shape_cast %151 : vector<1x2x1024xf32> to vector<2x1024xf32>
    %153 = arith.truncf %144 : vector<2x256xf32> to vector<2x256xbf16>
    %c0_42 = arith.constant 0 : index
    %c0_43 = arith.constant 0 : index
    %154 = vector.load %arg2[%c0_42, %c0_43] : memref<256x1024xbf16, #tpu.memory_space<vmem>>, vector<256x1024xbf16>
    %cst_44 = arith.constant dense<0.000000e+00> : vector<2x1024xf32>
    %155 = tpu.matmul %153, %154, %cst_44 {dimension_numbers = #tpu.dot_dimension_numbers<[1], [0], [0], [1], [0, 0, 1, 1], [], []>} : vector<2x256xbf16>, vector<256x1024xbf16>, vector<2x1024xf32> -> vector<2x1024xf32>
    %156 = arith.addf %152, %155 : vector<2x1024xf32>
    %157 = vector.extract_strided_slice %156 {offsets = [0, 0], sizes = [2, 256], strides = [1, 1]} : vector<2x1024xf32> to vector<2x256xf32>
    %158 = arith.negf %157 : vector<2x256xf32>
    %159 = math.exp %158 : vector<2x256xf32>
    %cst_45 = arith.constant 1.000000e+00 : f32
    %160 = vector.broadcast %cst_45 : f32 to vector<2x256xf32>
    %161 = arith.addf %160, %159 : vector<2x256xf32>
    %162 = arith.divf %160, %161 : vector<2x256xf32>
    %163 = vector.extract_strided_slice %156 {offsets = [0, 256], sizes = [2, 256], strides = [1, 1]} : vector<2x1024xf32> to vector<2x256xf32>
    %164 = arith.negf %163 : vector<2x256xf32>
    %165 = math.exp %164 : vector<2x256xf32>
    %cst_46 = arith.constant 1.000000e+00 : f32
    %166 = vector.broadcast %cst_46 : f32 to vector<2x256xf32>
    %167 = arith.addf %166, %165 : vector<2x256xf32>
    %168 = arith.divf %166, %167 : vector<2x256xf32>
    %169 = vector.extract_strided_slice %156 {offsets = [0, 512], sizes = [2, 256], strides = [1, 1]} : vector<2x1024xf32> to vector<2x256xf32>
    %170 = math.tanh %169 : vector<2x256xf32>
    %171 = vector.extract_strided_slice %156 {offsets = [0, 768], sizes = [2, 256], strides = [1, 1]} : vector<2x1024xf32> to vector<2x256xf32>
    %172 = arith.negf %171 : vector<2x256xf32>
    %173 = math.exp %172 : vector<2x256xf32>
    %cst_47 = arith.constant 1.000000e+00 : f32
    %174 = vector.broadcast %cst_47 : f32 to vector<2x256xf32>
    %175 = arith.addf %174, %173 : vector<2x256xf32>
    %176 = arith.divf %174, %175 : vector<2x256xf32>
    %177 = arith.mulf %168, %142 : vector<2x256xf32>
    %178 = arith.mulf %162, %170 : vector<2x256xf32>
    %179 = arith.addf %177, %178 : vector<2x256xf32>
    %180 = math.tanh %179 : vector<2x256xf32>
    %181 = arith.mulf %176, %180 : vector<2x256xf32>
    %182 = arith.truncf %181 : vector<2x256xf32> to vector<2x256xbf16>
    %183 = arith.index_cast %c4_i32 : i32 to index
    %c0_48 = arith.constant 0 : index
    %c0_49 = arith.constant 0 : index
    %184 = vector.load %arg3[%183, %c0_48, %c0_49] : memref<8x2x256xbf16, #tpu.memory_space<vmem>>, vector<1x2x256xbf16>
    %185 = vector.shape_cast %184 : vector<1x2x256xbf16> to vector<2x256xbf16>
    %186 = vector.shape_cast %182 : vector<2x256xbf16> to vector<1x2x256xbf16>
    tpu.vector_store %arg3[%183, %c0_48, %c0_49], %186 {strides = array<i32>} : memref<8x2x256xbf16, #tpu.memory_space<vmem>>, vector<1x2x256xbf16>,
    %c5_i32 = arith.constant 5 : i32
    %187 = arith.index_cast %c5_i32 : i32 to index
    %c0_50 = arith.constant 0 : index
    %c0_51 = arith.constant 0 : index
    %188 = vector.load %arg1[%187, %c0_50, %c0_51] : memref<8x2x1024xf32, #tpu.memory_space<vmem>>, vector<1x2x1024xf32>
    %189 = vector.shape_cast %188 : vector<1x2x1024xf32> to vector<2x1024xf32>
    %190 = arith.truncf %181 : vector<2x256xf32> to vector<2x256xbf16>
    %c0_52 = arith.constant 0 : index
    %c0_53 = arith.constant 0 : index
    %191 = vector.load %arg2[%c0_52, %c0_53] : memref<256x1024xbf16, #tpu.memory_space<vmem>>, vector<256x1024xbf16>
    %cst_54 = arith.constant dense<0.000000e+00> : vector<2x1024xf32>
    %192 = tpu.matmul %190, %191, %cst_54 {dimension_numbers = #tpu.dot_dimension_numbers<[1], [0], [0], [1], [0, 0, 1, 1], [], []>} : vector<2x256xbf16>, vector<256x1024xbf16>, vector<2x1024xf32> -> vector<2x1024xf32>
    %193 = arith.addf %189, %192 : vector<2x1024xf32>
    %194 = vector.extract_strided_slice %193 {offsets = [0, 0], sizes = [2, 256], strides = [1, 1]} : vector<2x1024xf32> to vector<2x256xf32>
    %195 = arith.negf %194 : vector<2x256xf32>
    %196 = math.exp %195 : vector<2x256xf32>
    %cst_55 = arith.constant 1.000000e+00 : f32
    %197 = vector.broadcast %cst_55 : f32 to vector<2x256xf32>
    %198 = arith.addf %197, %196 : vector<2x256xf32>
    %199 = arith.divf %197, %198 : vector<2x256xf32>
    %200 = vector.extract_strided_slice %193 {offsets = [0, 256], sizes = [2, 256], strides = [1, 1]} : vector<2x1024xf32> to vector<2x256xf32>
    %201 = arith.negf %200 : vector<2x256xf32>
    %202 = math.exp %201 : vector<2x256xf32>
    %cst_56 = arith.constant 1.000000e+00 : f32
    %203 = vector.broadcast %cst_56 : f32 to vector<2x256xf32>
    %204 = arith.addf %203, %202 : vector<2x256xf32>
    %205 = arith.divf %203, %204 : vector<2x256xf32>
    %206 = vector.extract_strided_slice %193 {offsets = [0, 512], sizes = [2, 256], strides = [1, 1]} : vector<2x1024xf32> to vector<2x256xf32>
    %207 = math.tanh %206 : vector<2x256xf32>
    %208 = vector.extract_strided_slice %193 {offsets = [0, 768], sizes = [2, 256], strides = [1, 1]} : vector<2x1024xf32> to vector<2x256xf32>
    %209 = arith.negf %208 : vector<2x256xf32>
    %210 = math.exp %209 : vector<2x256xf32>
    %cst_57 = arith.constant 1.000000e+00 : f32
    %211 = vector.broadcast %cst_57 : f32 to vector<2x256xf32>
    %212 = arith.addf %211, %210 : vector<2x256xf32>
    %213 = arith.divf %211, %212 : vector<2x256xf32>
    %214 = arith.mulf %205, %179 : vector<2x256xf32>
    %215 = arith.mulf %199, %207 : vector<2x256xf32>
    %216 = arith.addf %214, %215 : vector<2x256xf32>
    %217 = math.tanh %216 : vector<2x256xf32>
    %218 = arith.mulf %213, %217 : vector<2x256xf32>
    %219 = arith.truncf %218 : vector<2x256xf32> to vector<2x256xbf16>
    %220 = arith.index_cast %c5_i32 : i32 to index
    %c0_58 = arith.constant 0 : index
    %c0_59 = arith.constant 0 : index
    %221 = vector.load %arg3[%220, %c0_58, %c0_59] : memref<8x2x256xbf16, #tpu.memory_space<vmem>>, vector<1x2x256xbf16>
    %222 = vector.shape_cast %221 : vector<1x2x256xbf16> to vector<2x256xbf16>
    %223 = vector.shape_cast %219 : vector<2x256xbf16> to vector<1x2x256xbf16>
    tpu.vector_store %arg3[%220, %c0_58, %c0_59], %223 {strides = array<i32>} : memref<8x2x256xbf16, #tpu.memory_space<vmem>>, vector<1x2x256xbf16>,
    %c6_i32 = arith.constant 6 : i32
    %224 = arith.index_cast %c6_i32 : i32 to index
    %c0_60 = arith.constant 0 : index
    %c0_61 = arith.constant 0 : index
    %225 = vector.load %arg1[%224, %c0_60, %c0_61] : memref<8x2x1024xf32, #tpu.memory_space<vmem>>, vector<1x2x1024xf32>
    %226 = vector.shape_cast %225 : vector<1x2x1024xf32> to vector<2x1024xf32>
    %227 = arith.truncf %218 : vector<2x256xf32> to vector<2x256xbf16>
    %c0_62 = arith.constant 0 : index
    %c0_63 = arith.constant 0 : index
    %228 = vector.load %arg2[%c0_62, %c0_63] : memref<256x1024xbf16, #tpu.memory_space<vmem>>, vector<256x1024xbf16>
    %cst_64 = arith.constant dense<0.000000e+00> : vector<2x1024xf32>
    %229 = tpu.matmul %227, %228, %cst_64 {dimension_numbers = #tpu.dot_dimension_numbers<[1], [0], [0], [1], [0, 0, 1, 1], [], []>} : vector<2x256xbf16>, vector<256x1024xbf16>, vector<2x1024xf32> -> vector<2x1024xf32>
    %230 = arith.addf %226, %229 : vector<2x1024xf32>
    %231 = vector.extract_strided_slice %230 {offsets = [0, 0], sizes = [2, 256], strides = [1, 1]} : vector<2x1024xf32> to vector<2x256xf32>
    %232 = arith.negf %231 : vector<2x256xf32>
    %233 = math.exp %232 : vector<2x256xf32>
    %cst_65 = arith.constant 1.000000e+00 : f32
    %234 = vector.broadcast %cst_65 : f32 to vector<2x256xf32>
    %235 = arith.addf %234, %233 : vector<2x256xf32>
    %236 = arith.divf %234, %235 : vector<2x256xf32>
    %237 = vector.extract_strided_slice %230 {offsets = [0, 256], sizes = [2, 256], strides = [1, 1]} : vector<2x1024xf32> to vector<2x256xf32>
    %238 = arith.negf %237 : vector<2x256xf32>
    %239 = math.exp %238 : vector<2x256xf32>
    %cst_66 = arith.constant 1.000000e+00 : f32
    %240 = vector.broadcast %cst_66 : f32 to vector<2x256xf32>
    %241 = arith.addf %240, %239 : vector<2x256xf32>
    %242 = arith.divf %240, %241 : vector<2x256xf32>
    %243 = vector.extract_strided_slice %230 {offsets = [0, 512], sizes = [2, 256], strides = [1, 1]} : vector<2x1024xf32> to vector<2x256xf32>
    %244 = math.tanh %243 : vector<2x256xf32>
    %245 = vector.extract_strided_slice %230 {offsets = [0, 768], sizes = [2, 256], strides = [1, 1]} : vector<2x1024xf32> to vector<2x256xf32>
    %246 = arith.negf %245 : vector<2x256xf32>
    %247 = math.exp %246 : vector<2x256xf32>
    %cst_67 = arith.constant 1.000000e+00 : f32
    %248 = vector.broadcast %cst_67 : f32 to vector<2x256xf32>
    %249 = arith.addf %248, %247 : vector<2x256xf32>
    %250 = arith.divf %248, %249 : vector<2x256xf32>
    %251 = arith.mulf %242, %216 : vector<2x256xf32>
    %252 = arith.mulf %236, %244 : vector<2x256xf32>
    %253 = arith.addf %251, %252 : vector<2x256xf32>
    %254 = math.tanh %253 : vector<2x256xf32>
    %255 = arith.mulf %250, %254 : vector<2x256xf32>
    %256 = arith.truncf %255 : vector<2x256xf32> to vector<2x256xbf16>
    %257 = arith.index_cast %c6_i32 : i32 to index
    %c0_68 = arith.constant 0 : index
    %c0_69 = arith.constant 0 : index
    %258 = vector.load %arg3[%257, %c0_68, %c0_69] : memref<8x2x256xbf16, #tpu.memory_space<vmem>>, vector<1x2x256xbf16>
    %259 = vector.shape_cast %258 : vector<1x2x256xbf16> to vector<2x256xbf16>
    %260 = vector.shape_cast %256 : vector<2x256xbf16> to vector<1x2x256xbf16>
    tpu.vector_store %arg3[%257, %c0_68, %c0_69], %260 {strides = array<i32>} : memref<8x2x256xbf16, #tpu.memory_space<vmem>>, vector<1x2x256xbf16>,
    %c7_i32 = arith.constant 7 : i32
    %261 = arith.index_cast %c7_i32 : i32 to index
    %c0_70 = arith.constant 0 : index
    %c0_71 = arith.constant 0 : index
    %262 = vector.load %arg1[%261, %c0_70, %c0_71] : memref<8x2x1024xf32, #tpu.memory_space<vmem>>, vector<1x2x1024xf32>
    %263 = vector.shape_cast %262 : vector<1x2x1024xf32> to vector<2x1024xf32>
    %264 = arith.truncf %255 : vector<2x256xf32> to vector<2x256xbf16>
    %c0_72 = arith.constant 0 : index
    %c0_73 = arith.constant 0 : index
    %265 = vector.load %arg2[%c0_72, %c0_73] : memref<256x1024xbf16, #tpu.memory_space<vmem>>, vector<256x1024xbf16>
    %cst_74 = arith.constant dense<0.000000e+00> : vector<2x1024xf32>
    %266 = tpu.matmul %264, %265, %cst_74 {dimension_numbers = #tpu.dot_dimension_numbers<[1], [0], [0], [1], [0, 0, 1, 1], [], []>} : vector<2x256xbf16>, vector<256x1024xbf16>, vector<2x1024xf32> -> vector<2x1024xf32>
    %267 = arith.addf %263, %266 : vector<2x1024xf32>
    %268 = vector.extract_strided_slice %267 {offsets = [0, 0], sizes = [2, 256], strides = [1, 1]} : vector<2x1024xf32> to vector<2x256xf32>
    %269 = arith.negf %268 : vector<2x256xf32>
    %270 = math.exp %269 : vector<2x256xf32>
    %cst_75 = arith.constant 1.000000e+00 : f32
    %271 = vector.broadcast %cst_75 : f32 to vector<2x256xf32>
    %272 = arith.addf %271, %270 : vector<2x256xf32>
    %273 = arith.divf %271, %272 : vector<2x256xf32>
    %274 = vector.extract_strided_slice %267 {offsets = [0, 256], sizes = [2, 256], strides = [1, 1]} : vector<2x1024xf32> to vector<2x256xf32>
    %275 = arith.negf %274 : vector<2x256xf32>
    %276 = math.exp %275 : vector<2x256xf32>
    %cst_76 = arith.constant 1.000000e+00 : f32
    %277 = vector.broadcast %cst_76 : f32 to vector<2x256xf32>
    %278 = arith.addf %277, %276 : vector<2x256xf32>
    %279 = arith.divf %277, %278 : vector<2x256xf32>
    %280 = vector.extract_strided_slice %267 {offsets = [0, 512], sizes = [2, 256], strides = [1, 1]} : vector<2x1024xf32> to vector<2x256xf32>
    %281 = math.tanh %280 : vector<2x256xf32>
    %282 = vector.extract_strided_slice %267 {offsets = [0, 768], sizes = [2, 256], strides = [1, 1]} : vector<2x1024xf32> to vector<2x256xf32>
    %283 = arith.negf %282 : vector<2x256xf32>
    %284 = math.exp %283 : vector<2x256xf32>
    %cst_77 = arith.constant 1.000000e+00 : f32
    %285 = vector.broadcast %cst_77 : f32 to vector<2x256xf32>
    %286 = arith.addf %285, %284 : vector<2x256xf32>
    %287 = arith.divf %285, %286 : vector<2x256xf32>
    %288 = arith.mulf %279, %253 : vector<2x256xf32>
    %289 = arith.mulf %273, %281 : vector<2x256xf32>
    %290 = arith.addf %288, %289 : vector<2x256xf32>
    %291 = math.tanh %290 : vector<2x256xf32>
    %292 = arith.mulf %287, %291 : vector<2x256xf32>
    %293 = arith.truncf %292 : vector<2x256xf32> to vector<2x256xbf16>
    %294 = arith.index_cast %c7_i32 : i32 to index
    %c0_78 = arith.constant 0 : index
    %c0_79 = arith.constant 0 : index
    %295 = vector.load %arg3[%294, %c0_78, %c0_79] : memref<8x2x256xbf16, #tpu.memory_space<vmem>>, vector<1x2x256xbf16>
    %296 = vector.shape_cast %295 : vector<1x2x256xbf16> to vector<2x256xbf16>
    %297 = vector.shape_cast %293 : vector<2x256xbf16> to vector<1x2x256xbf16>
    tpu.vector_store %arg3[%294, %c0_78, %c0_79], %297 {strides = array<i32>} : memref<8x2x256xbf16, #tpu.memory_space<vmem>>, vector<1x2x256xbf16>,
    %c8_i32 = arith.constant 8 : i32
    return
  }
  func.func @transform_0(%arg0: i32) -> (i32, i32, i32) {
    %c0_i32 = arith.constant 0 : i32
    %c0_i32_0 = arith.constant 0 : i32
    %c0_i32_1 = arith.constant 0 : i32
    %c0_i32_2 = arith.constant 0 : i32
    return %c0_i32, %c0_i32_0, %c0_i32_1 : i32, i32, i32
  }
  func.func @transform_1(%arg0: i32) -> (i32, i32) {
    %c0_i32 = arith.constant 0 : i32
    %c0_i32_0 = arith.constant 0 : i32
    %c0_i32_1 = arith.constant 0 : i32
    return %c0_i32, %c0_i32_0 : i32, i32
  }
  func.func @transform_2(%arg0: i32) -> (i32, i32, i32) {
    %c0_i32 = arith.constant 0 : i32
    %c0_i32_0 = arith.constant 0 : i32
    %c0_i32_1 = arith.constant 0 : i32
    %c0_i32_2 = arith.constant 0 : i32
    return %c0_i32, %c0_i32_0, %c0_i32_1 : i32, i32, i32
  }
}

module attributes {stable_mosaic.version = 11 : i64} {
  func.func @_matmul_bias_kernel(%arg0: i32, %arg1: i32, %arg2: i32, %arg3: memref<16x256xbf16, #tpu.memory_space<vmem>>, %arg4: memref<256x512xbf16, #tpu.memory_space<vmem>>, %arg5: memref<1x512xf32, #tpu.memory_space<vmem>>, %arg6: memref<16x512xf32, #tpu.memory_space<vmem>>, %arg7: memref<16x512xf32, #tpu.memory_space<vmem>>) attributes {dimension_semantics = [#tpu.dimension_semantics<parallel>, #tpu.dimension_semantics<parallel>, #tpu.dimension_semantics<arbitrary>], iteration_bounds = array<i64: 1, 1, 1>, scalar_prefetch = 0 : i64, scratch_operands = 1 : i64, tpu.core_type = #tpu.core_type<tc>, window_params = [{transform_indices = @transform_0, window_bounds = array<i64: 16, 256>}, {transform_indices = @transform_1, window_bounds = array<i64: 256, 512>}, {transform_indices = @transform_2, window_bounds = array<i64: 1, 512>}, {transform_indices = @transform_3, window_bounds = array<i64: 16, 512>}]} {
    %c0_i32 = arith.constant 0 : i32
    %0 = arith.cmpi eq, %arg2, %c0_i32 : i32
    %1 = arith.extui %0 : i1 to i32
    %c0_i32_0 = arith.constant 0 : i32
    %2 = arith.cmpi ne, %1, %c0_i32_0 : i32
    scf.if %2 {
      %cst_10 = arith.constant 0.000000e+00 : f32
      %12 = vector.broadcast %cst_10 : f32 to vector<16x512xf32>
      %c0_11 = arith.constant 0 : index
      %c0_12 = arith.constant 0 : index
      %13 = vector.load %arg7[%c0_11, %c0_12] : memref<16x512xf32, #tpu.memory_space<vmem>>, vector<16x512xf32>
      tpu.vector_store %arg7[%c0_11, %c0_12], %12 {strides = array<i32>} : memref<16x512xf32, #tpu.memory_space<vmem>>, vector<16x512xf32>,
    } else {
    }
    %c0 = arith.constant 0 : index
    %c0_1 = arith.constant 0 : index
    %3 = vector.load %arg7[%c0, %c0_1] : memref<16x512xf32, #tpu.memory_space<vmem>>, vector<16x512xf32>
    %c0_2 = arith.constant 0 : index
    %c0_3 = arith.constant 0 : index
    %4 = vector.load %arg3[%c0_2, %c0_3] : memref<16x256xbf16, #tpu.memory_space<vmem>>, vector<16x256xbf16>
    %c0_4 = arith.constant 0 : index
    %c0_5 = arith.constant 0 : index
    %5 = vector.load %arg4[%c0_4, %c0_5] : memref<256x512xbf16, #tpu.memory_space<vmem>>, vector<256x512xbf16>
    %cst = arith.constant dense<0.000000e+00> : vector<16x512xf32>
    %6 = tpu.matmul %4, %5, %cst {dimension_numbers = #tpu.dot_dimension_numbers<[1], [0], [0], [1], [0, 0, 1, 1], [], []>} : vector<16x256xbf16>, vector<256x512xbf16>, vector<16x512xf32> -> vector<16x512xf32>
    %7 = arith.addf %3, %6 : vector<16x512xf32>
    %c0_6 = arith.constant 0 : index
    %c0_7 = arith.constant 0 : index
    %8 = vector.load %arg7[%c0_6, %c0_7] : memref<16x512xf32, #tpu.memory_space<vmem>>, vector<16x512xf32>
    tpu.vector_store %arg7[%c0_6, %c0_7], %7 {strides = array<i32>} : memref<16x512xf32, #tpu.memory_space<vmem>>, vector<16x512xf32>,
    %c0_i32_8 = arith.constant 0 : i32
    %9 = arith.cmpi eq, %arg2, %c0_i32_8 : i32
    %10 = arith.extui %9 : i1 to i32
    %c0_i32_9 = arith.constant 0 : i32
    %11 = arith.cmpi ne, %10, %c0_i32_9 : i32
    scf.if %11 {
      %c0_10 = arith.constant 0 : index
      %c0_11 = arith.constant 0 : index
      %12 = vector.load %arg7[%c0_10, %c0_11] : memref<16x512xf32, #tpu.memory_space<vmem>>, vector<16x512xf32>
      %c0_12 = arith.constant 0 : index
      %c0_13 = arith.constant 0 : index
      %13 = vector.load %arg5[%c0_12, %c0_13] : memref<1x512xf32, #tpu.memory_space<vmem>>, vector<1x512xf32>
      %14 = vector.broadcast %13 : vector<1x512xf32> to vector<16x512xf32>
      %15 = arith.addf %12, %14 : vector<16x512xf32>
      %c0_14 = arith.constant 0 : index
      %c0_15 = arith.constant 0 : index
      %16 = vector.load %arg6[%c0_14, %c0_15] : memref<16x512xf32, #tpu.memory_space<vmem>>, vector<16x512xf32>
      tpu.vector_store %arg6[%c0_14, %c0_15], %15 {strides = array<i32>} : memref<16x512xf32, #tpu.memory_space<vmem>>, vector<16x512xf32>,
    } else {
    }
    return
  }
  func.func @transform_0(%arg0: i32, %arg1: i32, %arg2: i32) -> (i32, i32) {
    %c0_i32 = arith.constant 0 : i32
    return %arg0, %arg2 : i32, i32
  }
  func.func @transform_1(%arg0: i32, %arg1: i32, %arg2: i32) -> (i32, i32) {
    %c0_i32 = arith.constant 0 : i32
    return %arg2, %arg1 : i32, i32
  }
  func.func @transform_2(%arg0: i32, %arg1: i32, %arg2: i32) -> (i32, i32) {
    %c0_i32 = arith.constant 0 : i32
    %c0_i32_0 = arith.constant 0 : i32
    return %c0_i32, %arg1 : i32, i32
  }
  func.func @transform_3(%arg0: i32, %arg1: i32, %arg2: i32) -> (i32, i32) {
    %c0_i32 = arith.constant 0 : i32
    return %arg0, %arg1 : i32, i32
  }
}

</mosaic_0001>

<llo_original>
// kernel: lstm_model_forward.3
$region0: #{lstm_model_forward.3}
  #allocation0 [shape = 'u32[]', space=smem, size = 0x4, offset = 0x4, fixed_abs, tag = 'smem constant byte address 0x4 - core index']
  #allocation1 [shape = 'u32[144,128]{1,0:T(1,128)}', space=vmem, size = 0x12000, scoped, tag = 'internal scratch']
  #allocation2 [shape = 'f32[16,512]{1,0:T(8,128)}', space=vmem, size = 0x8000, scoped, tag = 'scratch operand']
  %s0 = inlined_call_operand.vmem [shape: bf16[16,128], index: 0, kind: input, shape index: {}]
  %s1 = inlined_call_operand.vmem [shape: bf16[128,1024], index: 1, kind: input, shape index: {}]
  %s2 = inlined_call_operand.hbm [shape: f32[1,1024], index: 2, kind: input, shape index: {}]
  %s3 = inlined_call_operand.vmem [shape: f32[16,1024], index: 3, kind: output, shape index: {}]
  %s4 = sld [smem:[#allocation0]]
  $region99: #{lstm_model_forward.3} parent=0
    _
  %s6 = ssub.s32 1, %s4
  %s7 = scalar_select 0, %s6, %s4
  $region1: #{lstm_model_forward.3} parent=0
    #allocation3 [shape = 'u8[262144]{0}', space=vmem, size = 0x40000, scoped, tag = 'input window, operand 1']
    #allocation4 [shape = 'u8[4096]{0}', space=vmem, size = 0x1000, scoped, tag = 'input window, operand 2']
    #allocation5 [shape = 's32[2]{0}', space=sflag, size = 0x8, scoped, tag = 'scoped memory for lstm_model_forward.3']
    #allocation6 [shape = 'u8[65536]{0}', space=vmem, size = 0x10000, scoped, tag = 'output window, operand 0']
    %8 = vsyncpa [#allocation5], 0
    %s9 = scalar_lea.sflag [#allocation5], 1
    %10 = vsyncpa %s9, 0
    loop: start=0, step=1, limit=4
    $region2: #{lstm_model_forward.3} parent=1 // loop_pre_header
      _
    $region3: #{lstm_model_forward.3} parent=1 // loop_header
      %s12 = sphi 0, %s16
      %p13 = scmp.ge.s32.totalorder %s12, 4
      %s19 = sphi 0, %s38
      %s20 = sphi 0, %s34
      %s21 = sphi 0, %s30
      %s22 = sphi 0, %s19
      %s23 = sphi 0, %s20
      %s24 = sphi 0, %s21
      %s25 = sphi 0, %s22
      %s26 = sphi 0, %s23
      %s27 = sphi 0, %s24
      %s43 = sphi 0, %s45
      %s46 = sphi 0, %s43
      %s47 = sphi 0, %s46
      %s63 = sphi 0, %s47
      %s71 = sphi 0, %s73
      %s74 = sphi 0, %s71
      %s75 = sphi 0, %s74
      %s91 = sphi 0, %s75
      %s97 = sphi 0, %s99
      %s100 = sphi 0, %s97
      %s101 = sphi 0, %s100
      %s117 = sphi 0, %s101
      %s125 = sphi 0, %s127
      %s128 = sphi 0, %s125
      %s129 = sphi 0, %s128
      %s145 = sphi 0, %s129
    $region4: #{lstm_model_forward.3} parent=1 // loop_header_branch
      %15 = sbr.rel (%p13) target = $region8
    $region5: #{lstm_model_forward.3} parent=1 // loop_body
      %s17 = ssub.s32 %s12, 1
      %s18 = ssub.s32 %s12, 2
      %s28 = sadd.s32 1, %s21
      %p29 = scmp.ge.s32.totalorder %s28, 1
      %s30 = scalar_select %p29, 0, %s28
      %s31 = sadd.s32 1, %s20
      %s32 = scalar_select %p29, %s31, %s20
      %p33 = scmp.ge.s32.totalorder %s32, 2
      %s34 = scalar_select %p33, 0, %s32
      %s35 = sadd.s32 1, %s19
      %s36 = scalar_select %p33, %s35, %s19
      %p37 = scmp.ge.s32.totalorder %s36, 1
      %s38 = scalar_select %p37, 0, %s36
      %s39 = ssub.s32 %s19, %s38
      %s40 = ssub.s32 %s21, %s30
      %s41 = sor.u32 %s39, %s40
      %p42 = scmp.eq.s32.totalorder %s41, 0
      %s44 = sadd.s32 %s43, 1
      %s45 = scalar_select %p42, %s43, %s44
      %p48 = pneg %p42
      %p49 = scmp.eq.s32.totalorder %s12, 1
      %p50 = por %p48, %p49
      %p51 = scmp.ne.s32.totalorder %s43, %s46
      %p52 = scmp.eq.s32.totalorder %s12, 0
      %p53 = por %p51, %p52
      %p54 = scmp.ne.s32.totalorder %s43, %s46
      %p55 = scmp.eq.s32.totalorder %s17, 1
      %p56 = por %p54, %p55
      %p57 = scmp.ne.s32.totalorder %s46, %s47
      %p58 = scmp.eq.s32.totalorder %s17, 0
      %p59 = por %p57, %p58
      %p60 = scmp.ne.s32.totalorder %s46, %s47
      %p61 = scmp.eq.s32.totalorder %s18, 1
      %p62 = por %p60, %p61
      %p64 = scmp.ne.s32.totalorder %s47, %s63
      %p65 = scmp.eq.s32.totalorder %s18, 0
      %p66 = por %p64, %p65
      %s67 = ssub.s32 %s21, %s30
      %s68 = ssub.s32 %s20, %s34
      %s69 = sor.u32 %s67, %s68
      %p70 = scmp.eq.s32.totalorder %s69, 0
      %s72 = sadd.s32 %s71, 1
      %s73 = scalar_select %p70, %s71, %s72
      %p76 = pneg %p70
      %p77 = scmp.eq.s32.totalorder %s12, 1
      %p78 = por %p76, %p77
      %p79 = scmp.ne.s32.totalorder %s71, %s74
      %p80 = scmp.eq.s32.totalorder %s12, 0
      %p81 = por %p79, %p80
      %p82 = scmp.ne.s32.totalorder %s71, %s74
      %p83 = scmp.eq.s32.totalorder %s17, 1
      %p84 = por %p82, %p83
      %p85 = scmp.ne.s32.totalorder %s74, %s75
      %p86 = scmp.eq.s32.totalorder %s17, 0
      %p87 = por %p85, %p86
      %p88 = scmp.ne.s32.totalorder %s74, %s75
      %p89 = scmp.eq.s32.totalorder %s18, 1
      %p90 = por %p88, %p89
      %p92 = scmp.ne.s32.totalorder %s75, %s91
      %p93 = scmp.eq.s32.totalorder %s18, 0
      %p94 = por %p92, %p93
      %s95 = ssub.s32 %s20, %s34
      %p96 = scmp.eq.s32.totalorder %s95, 0
      %s98 = sadd.s32 %s97, 1
      %s99 = scalar_select %p96, %s97, %s98
      %p102 = pneg %p96
      %p103 = scmp.eq.s32.totalorder %s12, 1
      %p104 = por %p102, %p103
      %p105 = scmp.ne.s32.totalorder %s97, %s100
      %p106 = scmp.eq.s32.totalorder %s12, 0
      %p107 = por %p105, %p106
      %p108 = scmp.ne.s32.totalorder %s97, %s100
      %p109 = scmp.eq.s32.totalorder %s17, 1
      %p110 = por %p108, %p109
      %p111 = scmp.ne.s32.totalorder %s100, %s101
      %p112 = scmp.eq.s32.totalorder %s17, 0
      %p113 = por %p111, %p112
      %p114 = scmp.ne.s32.totalorder %s100, %s101
      %p115 = scmp.eq.s32.totalorder %s18, 1
      %p116 = por %p114, %p115
      %p118 = scmp.ne.s32.totalorder %s101, %s117
      %p119 = scmp.eq.s32.totalorder %s18, 0
      %p120 = por %p118, %p119
      %s121 = ssub.s32 %s19, %s38
      %s122 = ssub.s32 %s20, %s34
      %s123 = sor.u32 %s121, %s122
      %p124 = scmp.eq.s32.totalorder %s123, 0
      %s126 = sadd.s32 %s125, 1
      %s127 = scalar_select %p124, %s125, %s126
      %p130 = pneg %p124
      %p131 = scmp.eq.s32.totalorder %s12, 1
      %p132 = por %p130, %p131
      %p133 = scmp.ne.s32.totalorder %s125, %s128
      %p134 = scmp.eq.s32.totalorder %s12, 0
      %p135 = por %p133, %p134
      %p136 = scmp.ne.s32.totalorder %s125, %s128
      %p137 = scmp.eq.s32.totalorder %s17, 1
      %p138 = por %p136, %p137
      %p139 = scmp.ne.s32.totalorder %s128, %s129
      %p140 = scmp.eq.s32.totalorder %s17, 0
      %p141 = por %p139, %p140
      %p142 = scmp.ne.s32.totalorder %s128, %s129
      %p143 = scmp.eq.s32.totalorder %s18, 1
      %p144 = por %p142, %p143
      %p146 = scmp.ne.s32.totalorder %s129, %s145
      %p147 = scmp.eq.s32.totalorder %s18, 0
      %p148 = por %p146, %p147
      %p149 = scmp.le.s32.totalorder 1, %s12
      %p150 = scmp.lt.s32.totalorder %s12, 3
      %p151 = pnand %p149, %p150
      %p152 = pneg %p151
      // Predicated region
      $region9: #{lstm_model_forward.3} parent=5 // pred_check
        _
      $region10: #{lstm_model_forward.3} parent=5 // pred_check_branch
        %154 = sbr.rel (%p151) target = $region12
      $region11: #{lstm_model_forward.3} parent=5 // pred_region
        %s155 = ssub.s32 %s12, 1
        // Predicated region
        $region13: #{lstm_model_forward.3} parent=11 // pred_check
          %p156 = pneg %p59
        $region14: #{lstm_model_forward.3} parent=11 // pred_check_branch
          %158 = sbr.rel (%p156) target = $region16
        $region15: #{lstm_model_forward.3} parent=11 // pred_region
          %s159 = smul.u32 2, %s22
          %p160 = scmp.lt.s32.totalorder %s159, 1
          %s161 = scalar_select %p160, %s159, 1
          %p162 = scmp.lt.s32.totalorder %s24, 0
          %s163 = scalar_select %p162, %s24, 0
          %s164 = sadd.s32 %s163, %s161
          %s165 = smul.addr %s164, 4
          %s166 = scalar_lea.vmem %s0, %s165
          %s167 = smul.u32 2, %s22
        $region16: #{lstm_model_forward.3} parent=11 // pred_fallthru
          _
      $region12: #{lstm_model_forward.3} parent=5 // pred_fallthru
        _
      %p168 = scmp.lt.s32.totalorder %s12, 2
      // Predicated region
      $region17: #{lstm_model_forward.3} parent=5 // pred_check
        %p169 = pneg %p168
      $region18: #{lstm_model_forward.3} parent=5 // pred_check_branch
        %171 = sbr.rel (%p169) target = $region20
      $region19: #{lstm_model_forward.3} parent=5 // pred_region
        // Predicated region
        $region21: #{lstm_model_forward.3} parent=19 // pred_check
          %p172 = pneg %p81
        $region22: #{lstm_model_forward.3} parent=19 // pred_check_branch
          %174 = sbr.rel (%p172) target = $region24
        $region23: #{lstm_model_forward.3} parent=19 // pred_region
          %s175 = sand.u32 %s71, 1
          %s176 = sand.u32 %s71, 1
          %s177 = smul.addr %s176, 256
          %s178 = scalar_lea.vmem [#allocation3], %s177
          %s179 = smul.u32 16, %s21
          %s180 = smul.u32 4, %s20
          %s181 = smul.addr %s179, 8
          %s182 = sadd.s32 %s180, %s181
          %s183 = smul.addr %s182, 4
          %s184 = scalar_lea.vmem %s1, %s183
          // Predicated region
          $region25: #{lstm_model_forward.3} parent=23 // pred_check
            _
          $region26: #{lstm_model_forward.3} parent=23 // pred_check_branch
            %186 = sbr.rel (0) target = $region28
          $region27: #{lstm_model_forward.3} parent=23 // pred_region
            // Predicated region
            $region29: #{lstm_model_forward.3} parent=27 // pred_check
              _
            $region30: #{lstm_model_forward.3} parent=27 // pred_check_branch
              %188 = sbr.rel (0) target = $region32
            $region31: #{lstm_model_forward.3} parent=27 // pred_region
              loop: start=0, step=1, limit=1
              $region33: #{lstm_model_forward.3} parent=31 // loop_pre_header
                _
              $region34: #{lstm_model_forward.3} parent=31 // loop_header
                %s190 = sphi 0, %s194
                %p191 = scmp.ge.s32.totalorder %s190, 1
                %s195 = sphi %s184, %s184
                %s196 = sphi %s178, %s178
              $region35: #{lstm_model_forward.3} parent=31 // loop_header_branch
                %193 = sbr.rel (%p191) target = $region39
              $region36: #{lstm_model_forward.3} parent=31 // loop_body
                %v197 = vld [vmem:[%s195] sm:$0xff]
                %198 = vst [vmem:[%s196] sm:$0xff] %v197
                %v199 = vld [vmem:[%s195 + $0x8] sm:$0xff]
                %200 = vst [vmem:[%s196 + $0x8] sm:$0xff] %v199
                %v201 = vld [vmem:[%s195 + $0x20] sm:$0xff]
                %202 = vst [vmem:[%s196 + $0x10] sm:$0xff] %v201
                %v203 = vld [vmem:[%s195 + $0x28] sm:$0xff]
                %204 = vst [vmem:[%s196 + $0x18] sm:$0xff] %v203
                %v205 = vld [vmem:[%s195 + $0x40] sm:$0xff]
                %206 = vst [vmem:[%s196 + $0x20] sm:$0xff] %v205
                %v207 = vld [vmem:[%s195 + $0x48] sm:$0xff]
                %208 = vst [vmem:[%s196 + $0x28] sm:$0xff] %v207
                %v209 = vld [vmem:[%s195 + $0x60] sm:$0xff]
                %210 = vst [vmem:[%s196 + $0x30] sm:$0xff] %v209
                %v211 = vld [vmem:[%s195 + $0x68] sm:$0xff]
                %212 = vst [vmem:[%s196 + $0x38] sm:$0xff] %v211
                %v213 = vld [vmem:[%s195 + $0x80] sm:$0xff]
                %214 = vst [vmem:[%s196 + $0x40] sm:$0xff] %v213
                %v215 = vld [vmem:[%s195 + $0x88] sm:$0xff]
                %216 = vst [vmem:[%s196 + $0x48] sm:$0xff] %v215
                %v217 = vld [vmem:[%s195 + $0xa0] sm:$0xff]
                %218 = vst [vmem:[%s196 + $0x50] sm:$0xff] %v217
                %v219 = vld [vmem:[%s195 + $0xa8] sm:$0xff]
                %220 = vst [vmem:[%s196 + $0x58] sm:$0xff] %v219
                %v221 = vld [vmem:[%s195 + $0xc0] sm:$0xff]
                %222 = vst [vmem:[%s196 + $0x60] sm:$0xff] %v221
                %v223 = vld [vmem:[%s195 + $0xc8] sm:$0xff]
                %224 = vst [vmem:[%s196 + $0x68] sm:$0xff] %v223
                %v225 = vld [vmem:[%s195 + $0xe0] sm:$0xff]
                %226 = vst [vmem:[%s196 + $0x70] sm:$0xff] %v225
                %v227 = vld [vmem:[%s195 + $0xe8] sm:$0xff]
                %228 = vst [vmem:[%s196 + $0x78] sm:$0xff] %v227
                %v229 = vld [vmem:[%s195 + $0x100] sm:$0xff]
                %230 = vst [vmem:[%s196 + $0x80] sm:$0xff] %v229
                %v231 = vld [vmem:[%s195 + $0x108] sm:$0xff]
                %232 = vst [vmem:[%s196 + $0x88] sm:$0xff] %v231
                %v233 = vld [vmem:[%s195 + $0x120] sm:$0xff]
                %234 = vst [vmem:[%s196 + $0x90] sm:$0xff] %v233
                %v235 = vld [vmem:[%s195 + $0x128] sm:$0xff]
                %236 = vst [vmem:[%s196 + $0x98] sm:$0xff] %v235
                %v237 = vld [vmem:[%s195 + $0x140] sm:$0xff]
                %238 = vst [vmem:[%s196 + $0xa0] sm:$0xff] %v237
                %v239 = vld [vmem:[%s195 + $0x148] sm:$0xff]
                %240 = vst [vmem:[%s196 + $0xa8] sm:$0xff] %v239
                %v241 = vld [vmem:[%s195 + $0x160] sm:$0xff]
                %242 = vst [vmem:[%s196 + $0xb0] sm:$0xff] %v241
                %v243 = vld [vmem:[%s195 + $0x168] sm:$0xff]
                %244 = vst [vmem:[%s196 + $0xb8] sm:$0xff] %v243
                %v245 = vld [vmem:[%s195 + $0x180] sm:$0xff]
                %246 = vst [vmem:[%s196 + $0xc0] sm:$0xff] %v245
                %v247 = vld [vmem:[%s195 + $0x188] sm:$0xff]
                %248 = vst [vmem:[%s196 + $0xc8] sm:$0xff] %v247
                %v249 = vld [vmem:[%s195 + $0x1a0] sm:$0xff]
                %250 = vst [vmem:[%s196 + $0xd0] sm:$0xff] %v249
                %v251 = vld [vmem:[%s195 + $0x1a8] sm:$0xff]
                %252 = vst [vmem:[%s196 + $0xd8] sm:$0xff] %v251
                %v253 = vld [vmem:[%s195 + $0x1c0] sm:$0xff]
                %254 = vst [vmem:[%s196 + $0xe0] sm:$0xff] %v253
                %v255 = vld [vmem:[%s195 + $0x1c8] sm:$0xff]
                %256 = vst [vmem:[%s196 + $0xe8] sm:$0xff] %v255
                %v257 = vld [vmem:[%s195 + $0x1e0] sm:$0xff]
                %258 = vst [vmem:[%s196 + $0xf0] sm:$0xff] %v257
                %v259 = vld [vmem:[%s195 + $0x1e8] sm:$0xff]
                %260 = vst [vmem:[%s196 + $0xf8] sm:$0xff] %v259
              $region37: #{lstm_model_forward.3} parent=31 // loop_footer
                %s194 = sadd.s32 1, %s190
              $region38: #{lstm_model_forward.3} parent=31 // loop_footer_branch
                %189 = sbr.rel target = $region34
              $region39: #{lstm_model_forward.3} parent=31 // loop_exit
                _
            $region32: #{lstm_model_forward.3} parent=27 // pred_fallthru
              _
            // Predicated region
            $region40: #{lstm_model_forward.3} parent=27 // pred_check
              _
            $region41: #{lstm_model_forward.3} parent=27 // pred_check_branch
              %262 = sbr.rel target = $region43
            $region42: #{lstm_model_forward.3} parent=27 // pred_region
              _
            $region43: #{lstm_model_forward.3} parent=27 // pred_fallthru
              _
          $region28: #{lstm_model_forward.3} parent=23 // pred_fallthru
            _
          %263 = vnop
        $region24: #{lstm_model_forward.3} parent=19 // pred_fallthru
          _
        // Predicated region
        $region44: #{lstm_model_forward.3} parent=19 // pred_check
          %p264 = pneg %p107
        $region45: #{lstm_model_forward.3} parent=19 // pred_check_branch
          %266 = sbr.rel (%p264) target = $region47
        $region46: #{lstm_model_forward.3} parent=19 // pred_region
          %s267 = sand.u32 %s97, 1
          %s268 = scalar_lea.sflag [#allocation5], %s267
          %s269 = sand.u32 %s97, 1
          %s270 = smul.addr %s269, 4
          %s271 = scalar_lea.vmem [#allocation4], %s270
          %s272 = smul.u32 4, %s20
          %s274 = ssub.s32 64, 64
          %275 = vsyncadd %s268, %s274
          %s276 = smul.addr %s272, 16
          %s277 = scalar_lea.hbm %s2, %s276
          %s279 = sshll.u32 %s271, 4
          %s280 = int_to_ptr.vmem [resolvable:$true] %s279
          %282 = dma.hbm_to_vmem [thread:$0]  %s277, 64, %s280, %s268
        $region47: #{lstm_model_forward.3} parent=19 // pred_fallthru
          _
      $region20: #{lstm_model_forward.3} parent=5 // pred_fallthru
        _
      %p283 = scmp.le.s32.totalorder 1, %s12
      %p284 = scmp.lt.s32.totalorder %s12, 3
      %p285 = pnand %p283, %p284
      %p286 = pneg %p285
      // Predicated region
      $region48: #{lstm_model_forward.3} parent=5 // pred_check
        _
      $region49: #{lstm_model_forward.3} parent=5 // pred_check_branch
        %288 = sbr.rel (%p285) target = $region51
      $region50: #{lstm_model_forward.3} parent=5 // pred_region
        %s289 = ssub.s32 %s12, 1
        %s290 = sand.u32 %s74, 1
        %s291 = sand.u32 %s74, 1
        %s292 = smul.addr %s291, 256
        %s293 = scalar_lea.vmem [#allocation3], %s292
        // Predicated region
        $region52: #{lstm_model_forward.3} parent=50 // pred_check
          %p294 = pneg %p87
        $region53: #{lstm_model_forward.3} parent=50 // pred_check_branch
          %296 = sbr.rel (%p294) target = $region55
        $region54: #{lstm_model_forward.3} parent=50 // pred_region
          _
        $region55: #{lstm_model_forward.3} parent=50 // pred_fallthru
          _
        %s297 = sand.u32 %s100, 1
        %s298 = scalar_lea.sflag [#allocation5], %s297
        %s299 = sand.u32 %s100, 1
        %s300 = smul.addr %s299, 4
        %s301 = scalar_lea.vmem [#allocation4], %s300
        // Predicated region
        $region56: #{lstm_model_forward.3} parent=50 // pred_check
          %p302 = pneg %p113
        $region57: #{lstm_model_forward.3} parent=50 // pred_check_branch
          %304 = sbr.rel (%p302) target = $region59
        $region58: #{lstm_model_forward.3} parent=50 // pred_region
          %305 = dma.done %s298, 64
        $region59: #{lstm_model_forward.3} parent=50 // pred_fallthru
          _
        %s306 = smul.u32 2, %s22
        %p307 = scmp.lt.s32.totalorder %s306, 1
        %s308 = scalar_select %p307, %s306, 1
        %p309 = scmp.lt.s32.totalorder %s24, 0
        %s310 = scalar_select %p309, %s24, 0
        %s311 = sadd.s32 %s310, %s308
        %s312 = smul.addr %s311, 4
        %s313 = scalar_lea.vmem %s0, %s312
        %p314 = pneg %p59
        %p315 = pneg %p56
        %s316 = sand.u32 %s74, 1
        %s317 = sand.u32 %s74, 1
        %s318 = smul.addr %s317, 256
        %s319 = scalar_lea.vmem [#allocation3], %s318
        %p320 = pneg %p87
        %p321 = pneg %p84
        %s322 = sand.u32 %s100, 1
        %s323 = scalar_lea.sflag [#allocation5], %s322
        %s324 = sand.u32 %s100, 1
        %s325 = smul.addr %s324, 4
        %s326 = scalar_lea.vmem [#allocation4], %s325
        %p327 = pneg %p113
        %p328 = pneg %p110
        %p329 = pneg %p141
        %p330 = pneg %p138
        %s331 = sand.u32 %s128, 1
        %s332 = sand.u32 %s128, 1
        %s333 = smul.addr %s332, 64
        %s334 = scalar_lea.vmem [#allocation6], %s333
        %s335 = smul.u32 2, %s22
        %p336 = scmp.lt.s32.totalorder %s335, 1
        %s337 = scalar_select %p336, %s335, 1
        %p338 = scmp.lt.s32.totalorder %s24, 0
        %s339 = scalar_select %p338, %s24, 0
        %s340 = sadd.s32 %s339, %s337
        %s341 = smul.addr %s340, 4
        %s342 = scalar_lea.vmem %s0, %s341
        %s343 = smul.u32 2, %s22
        %s344 = smul.u32 16, %s24
        %s345 = smul.u32 4, %s23
        %s346 = smul.u32 4, %s23
        %s347 = smul.u32 2, %s22
        %s348 = smul.u32 4, %s23
        %p350 = scmp.eq.s32.totalorder %s24, 0
        // Predicated region
        $region60: #{lstm_model_forward.3} parent=50 // pred_check
          %p351 = pneg %p350
        $region61: #{lstm_model_forward.3} parent=50 // pred_check_branch
          %353 = sbr.rel (%p351) target = $region63
        $region62: #{lstm_model_forward.3} parent=50 // pred_region
          %354 = vst [vmem:[#allocation2] sm:$0xff] 0.0
          %355 = vst [vmem:[#allocation2 + $0x8] sm:$0xff] 0.0
          %356 = vst [vmem:[#allocation2 + $0x10] sm:$0xff] 0.0
          %357 = vst [vmem:[#allocation2 + $0x18] sm:$0xff] 0.0
          %358 = vst [vmem:[#allocation2 + $0x20] sm:$0xff] 0.0
          %359 = vst [vmem:[#allocation2 + $0x28] sm:$0xff] 0.0
          %360 = vst [vmem:[#allocation2 + $0x30] sm:$0xff] 0.0
          %361 = vst [vmem:[#allocation2 + $0x38] sm:$0xff] 0.0
        $region63: #{lstm_model_forward.3} parent=50 // pred_fallthru
          _
        %v362 = vld [vmem:[#allocation2] sm:$0xff]
        %v363 = vld [vmem:[#allocation2 + $0x8] sm:$0xff]
        %v364 = vld [vmem:[#allocation2 + $0x10] sm:$0xff]
        %v365 = vld [vmem:[#allocation2 + $0x18] sm:$0xff]
        %v366 = vld [vmem:[#allocation2 + $0x20] sm:$0xff]
        %v367 = vld [vmem:[#allocation2 + $0x28] sm:$0xff]
        %v368 = vld [vmem:[#allocation2 + $0x30] sm:$0xff]
        %v369 = vld [vmem:[#allocation2 + $0x38] sm:$0xff]
        %v370 = vld [vmem:[%s342] sm:$0xf]
        %v371 = vld [vmem:[%s342 + $0x4] sm:$0xf]
        %v372 = vld [vmem:[%s293] sm:$0xff]
        %v373 = vld [vmem:[%s293 + $0x8] sm:$0xff]
        %v374 = vld [vmem:[%s293 + $0x10] sm:$0xff]
        %v375 = vld [vmem:[%s293 + $0x18] sm:$0xff]
        %v376 = vld [vmem:[%s293 + $0x20] sm:$0xff]
        %v377 = vld [vmem:[%s293 + $0x28] sm:$0xff]
        %v378 = vld [vmem:[%s293 + $0x30] sm:$0xff]
        %v379 = vld [vmem:[%s293 + $0x38] sm:$0xff]
        %v380 = vld [vmem:[%s293 + $0x40] sm:$0xff]
        %v381 = vld [vmem:[%s293 + $0x48] sm:$0xff]
        %v382 = vld [vmem:[%s293 + $0x50] sm:$0xff]
        %v383 = vld [vmem:[%s293 + $0x58] sm:$0xff]
        %v384 = vld [vmem:[%s293 + $0x60] sm:$0xff]
        %v385 = vld [vmem:[%s293 + $0x68] sm:$0xff]
        %v386 = vld [vmem:[%s293 + $0x70] sm:$0xff]
        %v387 = vld [vmem:[%s293 + $0x78] sm:$0xff]
        %v388 = vld [vmem:[%s293 + $0x80] sm:$0xff]
        %v389 = vld [vmem:[%s293 + $0x88] sm:$0xff]
        %v390 = vld [vmem:[%s293 + $0x90] sm:$0xff]
        %v391 = vld [vmem:[%s293 + $0x98] sm:$0xff]
        %v392 = vld [vmem:[%s293 + $0xa0] sm:$0xff]
        %v393 = vld [vmem:[%s293 + $0xa8] sm:$0xff]
        %v394 = vld [vmem:[%s293 + $0xb0] sm:$0xff]
        %v395 = vld [vmem:[%s293 + $0xb8] sm:$0xff]
        %v396 = vld [vmem:[%s293 + $0xc0] sm:$0xff]
        %v397 = vld [vmem:[%s293 + $0xc8] sm:$0xff]
        %v398 = vld [vmem:[%s293 + $0xd0] sm:$0xff]
        %v399 = vld [vmem:[%s293 + $0xd8] sm:$0xff]
        %v400 = vld [vmem:[%s293 + $0xe0] sm:$0xff]
        %v401 = vld [vmem:[%s293 + $0xe8] sm:$0xff]
        %v402 = vld [vmem:[%s293 + $0xf0] sm:$0xff]
        %v403 = vld [vmem:[%s293 + $0xf8] sm:$0xff]
        %v406 = vunpack.c.l.b16 %v370
        %v407 = vunpack.c.l.b16 %v371
        %v408 = vpack.c.b16 %v407, %v406
        %v442 = vunpack.c.l.b16 %v372
        %v443 = vunpack.c.h.b16 %v372
        %v444 = vunpack.c.l.b16 %v373
        %v445 = vunpack.c.h.b16 %v373
        %v446 = vunpack.c.l.b16 %v374
        %v447 = vunpack.c.h.b16 %v374
        %v448 = vunpack.c.l.b16 %v375
        %v449 = vunpack.c.h.b16 %v375
        %v450 = vunpack.c.l.b16 %v376
        %v451 = vunpack.c.h.b16 %v376
        %v452 = vunpack.c.l.b16 %v377
        %v453 = vunpack.c.h.b16 %v377
        %v454 = vunpack.c.l.b16 %v378
        %v455 = vunpack.c.h.b16 %v378
        %v456 = vunpack.c.l.b16 %v379
        %v457 = vunpack.c.h.b16 %v379
        %v458 = vunpack.c.l.b16 %v380
        %v459 = vunpack.c.h.b16 %v380
        %v460 = vunpack.c.l.b16 %v381
        %v461 = vunpack.c.h.b16 %v381
        %v462 = vunpack.c.l.b16 %v382
        %v463 = vunpack.c.h.b16 %v382
        %v464 = vunpack.c.l.b16 %v383
        %v465 = vunpack.c.h.b16 %v383
        %v466 = vunpack.c.l.b16 %v384
        %v467 = vunpack.c.h.b16 %v384
        %v468 = vunpack.c.l.b16 %v385
        %v469 = vunpack.c.h.b16 %v385
        %v470 = vunpack.c.l.b16 %v386
        %v471 = vunpack.c.h.b16 %v386
        %v472 = vunpack.c.l.b16 %v387
        %v473 = vunpack.c.h.b16 %v387
        %v474 = vunpack.c.l.b16 %v388
        %v475 = vunpack.c.h.b16 %v388
        %v476 = vunpack.c.l.b16 %v389
        %v477 = vunpack.c.h.b16 %v389
        %v478 = vunpack.c.l.b16 %v390
        %v479 = vunpack.c.h.b16 %v390
        %v480 = vunpack.c.l.b16 %v391
        %v481 = vunpack.c.h.b16 %v391
        %v482 = vunpack.c.l.b16 %v392
        %v483 = vunpack.c.h.b16 %v392
        %v484 = vunpack.c.l.b16 %v393
        %v485 = vunpack.c.h.b16 %v393
        %v486 = vunpack.c.l.b16 %v394
        %v487 = vunpack.c.h.b16 %v394
        %v488 = vunpack.c.l.b16 %v395
        %v489 = vunpack.c.h.b16 %v395
        %v490 = vunpack.c.l.b16 %v396
        %v491 = vunpack.c.h.b16 %v396
        %v492 = vunpack.c.l.b16 %v397
        %v493 = vunpack.c.h.b16 %v397
        %v494 = vunpack.c.l.b16 %v398
        %v495 = vunpack.c.h.b16 %v398
        %v496 = vunpack.c.l.b16 %v399
        %v497 = vunpack.c.h.b16 %v399
        %v498 = vunpack.c.l.b16 %v400
        %v499 = vunpack.c.h.b16 %v400
        %v500 = vunpack.c.l.b16 %v401
        %v501 = vunpack.c.h.b16 %v401
        %v502 = vunpack.c.l.b16 %v402
        %v503 = vunpack.c.h.b16 %v402
        %v504 = vunpack.c.l.b16 %v403
        %v505 = vunpack.c.h.b16 %v403
        %v506 = vpack.c.b16 %v446, %v442
        %v507 = vpack.c.b16 %v447, %v443
        %v508 = vpack.c.b16 %v448, %v444
        %v509 = vpack.c.b16 %v449, %v445
        %v510 = vpack.c.b16 %v454, %v450
        %v511 = vpack.c.b16 %v455, %v451
        %v512 = vpack.c.b16 %v456, %v452
        %v513 = vpack.c.b16 %v457, %v453
        %v514 = vpack.c.b16 %v462, %v458
        %v515 = vpack.c.b16 %v463, %v459
        %v516 = vpack.c.b16 %v464, %v460
        %v517 = vpack.c.b16 %v465, %v461
        %v518 = vpack.c.b16 %v470, %v466
        %v519 = vpack.c.b16 %v471, %v467
        %v520 = vpack.c.b16 %v472, %v468
        %v521 = vpack.c.b16 %v473, %v469
        %v522 = vpack.c.b16 %v478, %v474
        %v523 = vpack.c.b16 %v479, %v475
        %v524 = vpack.c.b16 %v480, %v476
        %v525 = vpack.c.b16 %v481, %v477
        %v526 = vpack.c.b16 %v486, %v482
        %v527 = vpack.c.b16 %v487, %v483
        %v528 = vpack.c.b16 %v488, %v484
        %v529 = vpack.c.b16 %v489, %v485
        %v530 = vpack.c.b16 %v494, %v490
        %v531 = vpack.c.b16 %v495, %v491
        %v532 = vpack.c.b16 %v496, %v492
        %v533 = vpack.c.b16 %v497, %v493
        %v534 = vpack.c.b16 %v502, %v498
        %v535 = vpack.c.b16 %v503, %v499
        %v536 = vpack.c.b16 %v504, %v500
        %v537 = vpack.c.b16 %v505, %v501
        %570 = vmatprep.subr.bf16.mxu0 %v507
        %571 = vmatpush1.bf16.msra.mxu0 %v506
        %572 = vmatprep.subr.bf16.mxu0 %v511
        %573 = vmatpush1.bf16.msra.mxu0 %v510
        %574 = vmatprep.subr.bf16.mxu0 %v515
        %575 = vmatpush1.bf16.msra.mxu0 %v514
        %576 = vmatprep.subr.bf16.mxu0 %v519
        %577 = vmatpush1.bf16.msra.mxu0 %v518
        %578 = vmatprep.subr.bf16.mxu0 %v523
        %579 = vmatpush1.bf16.msra.mxu0 %v522
        %580 = vmatprep.subr.bf16.mxu0 %v527
        %581 = vmatpush1.bf16.msra.mxu0 %v526
        %582 = vmatprep.subr.bf16.mxu0 %v531
        %583 = vmatpush1.bf16.msra.mxu0 %v530
        %584 = vmatprep.subr.bf16.mxu0 %v535
        %585 = vmatpush1.bf16.msra.mxu0 %v534
        %586 = vmatprep.subr.bf16.mxu0 0
        %587 = vmatpush1.bf16.msra.mxu0 0
        %588 = vmatprep.subr.bf16.mxu0 0
        %589 = vmatpush1.bf16.msra.mxu0 0
        %590 = vmatprep.subr.bf16.mxu0 0
        %591 = vmatpush1.bf16.msra.mxu0 0
        %592 = vmatprep.subr.bf16.mxu0 0
        %593 = vmatpush1.bf16.msra.mxu0 0
        %594 = vmatprep.subr.bf16.mxu0 0
        %595 = vmatpush1.bf16.msra.mxu0 0
        %596 = vmatprep.subr.bf16.mxu0 0
        %597 = vmatpush1.bf16.msra.mxu0 0
        %598 = vmatprep.subr.bf16.mxu0 0
        %599 = vmatpush1.bf16.msra.mxu0 0
        %600 = vmatprep.subr.bf16.mxu0 0
        %601 = vmatpush1.bf16.msra.mxu0 0
        %602 = vmatprep.mubr.bf16.mxu0 0
        %603 = vmatmul.mubr.bf16.gmra.mrb[0].mxu0 %v408
        %v604 = vpop.f32.mrb[0].mxu0
        %v605 = vadd.f32 0.0, %v604
        %v606 = vpop.f32.mrb[0].mxu0
        %v607 = vadd.f32 0.0, %v606
        %v608 = vpop.f32.mrb[0].mxu0
        %v609 = vadd.f32 0.0, %v608
        %v610 = vpop.f32.mrb[0].mxu0
        %v611 = vadd.f32 0.0, %v610
        %612 = vdwg.mxu0
        %613 = vmatprep.subr.bf16.mxu0 %v509
        %614 = vmatpush1.bf16.msra.mxu0 %v508
        %615 = vmatprep.subr.bf16.mxu0 %v513
        %616 = vmatpush1.bf16.msra.mxu0 %v512
        %617 = vmatprep.subr.bf16.mxu0 %v517
        %618 = vmatpush1.bf16.msra.mxu0 %v516
        %619 = vmatprep.subr.bf16.mxu0 %v521
        %620 = vmatpush1.bf16.msra.mxu0 %v520
        %621 = vmatprep.subr.bf16.mxu0 %v525
        %622 = vmatpush1.bf16.msra.mxu0 %v524
        %623 = vmatprep.subr.bf16.mxu0 %v529
        %624 = vmatpush1.bf16.msra.mxu0 %v528
        %625 = vmatprep.subr.bf16.mxu0 %v533
        %626 = vmatpush1.bf16.msra.mxu0 %v532
        %627 = vmatprep.subr.bf16.mxu0 %v537
        %628 = vmatpush1.bf16.msra.mxu0 %v536
        %629 = vmatprep.subr.bf16.mxu0 0
        %630 = vmatpush1.bf16.msra.mxu0 0
        %631 = vmatprep.subr.bf16.mxu0 0
        %632 = vmatpush1.bf16.msra.mxu0 0
        %633 = vmatprep.subr.bf16.mxu0 0
        %634 = vmatpush1.bf16.msra.mxu0 0
        %635 = vmatprep.subr.bf16.mxu0 0
        %636 = vmatpush1.bf16.msra.mxu0 0
        %637 = vmatprep.subr.bf16.mxu0 0
        %638 = vmatpush1.bf16.msra.mxu0 0
        %639 = vmatprep.subr.bf16.mxu0 0
        %640 = vmatpush1.bf16.msra.mxu0 0
        %641 = vmatprep.subr.bf16.mxu0 0
        %642 = vmatpush1.bf16.msra.mxu0 0
        %643 = vmatprep.subr.bf16.mxu0 0
        %644 = vmatpush1.bf16.msra.mxu0 0
        %645 = vmatprep.mubr.bf16.mxu0 0
        %646 = vmatmul.mubr.bf16.gmra.mrb[0].mxu0 %v408
        %v647 = vpop.f32.mrb[0].mxu0
        %v648 = vadd.f32 0.0, %v647
        %v649 = vpop.f32.mrb[0].mxu0
        %v650 = vadd.f32 0.0, %v649
        %v651 = vpop.f32.mrb[0].mxu0
        %v652 = vadd.f32 0.0, %v651
        %v653 = vpop.f32.mrb[0].mxu0
        %v654 = vadd.f32 0.0, %v653
        %655 = vdwg.mxu0
        %v656 = vadd.f32 %v362, %v605
        %v657 = vadd.f32 %v363, %v607
        %v658 = vadd.f32 %v364, %v648
        %v659 = vadd.f32 %v365, %v650
        %v660 = vadd.f32 %v366, %v609
        %v661 = vadd.f32 %v367, %v611
        %v662 = vadd.f32 %v368, %v652
        %v663 = vadd.f32 %v369, %v654
        %664 = vst [vmem:[#allocation2] sm:$0xff] %v656
        %665 = vst [vmem:[#allocation2 + $0x8] sm:$0xff] %v657
        %666 = vst [vmem:[#allocation2 + $0x10] sm:$0xff] %v658
        %667 = vst [vmem:[#allocation2 + $0x18] sm:$0xff] %v659
        %668 = vst [vmem:[#allocation2 + $0x20] sm:$0xff] %v660
        %669 = vst [vmem:[#allocation2 + $0x28] sm:$0xff] %v661
        %670 = vst [vmem:[#allocation2 + $0x30] sm:$0xff] %v662
        %671 = vst [vmem:[#allocation2 + $0x38] sm:$0xff] %v663
        // Predicated region
        $region64: #{lstm_model_forward.3} parent=50 // pred_check
          %p672 = pneg %p350
        $region65: #{lstm_model_forward.3} parent=50 // pred_check_branch
          %674 = sbr.rel (%p672) target = $region67
        $region66: #{lstm_model_forward.3} parent=50 // pred_region
          %v675 = vld [vmem:[#allocation2] sm:$0xff]
          %v676 = vld [vmem:[#allocation2 + $0x8] sm:$0xff]
          %v677 = vld [vmem:[#allocation2 + $0x10] sm:$0xff]
          %v678 = vld [vmem:[#allocation2 + $0x18] sm:$0xff]
          %v679 = vld [vmem:[#allocation2 + $0x20] sm:$0xff]
          %v680 = vld [vmem:[#allocation2 + $0x28] sm:$0xff]
          %v681 = vld [vmem:[#allocation2 + $0x30] sm:$0xff]
          %v682 = vld [vmem:[#allocation2 + $0x38] sm:$0xff]
          %v683 = vld [vmem:[%s301] sm:$0xf]
          %v685 = vlaneseq
          %v686 = vshrl.u32 %v685, 7
          %v687 = vsub.s32 0, %v686
          %v688 = vrot.slane %v683, %v687
          %v689 = vlaneseq
          %v690 = vshrl.u32 %v689, 7
          %v691 = vsub.s32 1, %v690
          %v692 = vrot.slane %v683, %v691
          %v693 = vlaneseq
          %v694 = vshrl.u32 %v693, 7
          %v695 = vsub.s32 2, %v694
          %v696 = vrot.slane %v683, %v695
          %v697 = vlaneseq
          %v698 = vshrl.u32 %v697, 7
          %v699 = vsub.s32 3, %v698
          %v700 = vrot.slane %v683, %v699
          %v705 = vadd.f32 %v675, %v688
          %v706 = vadd.f32 %v676, %v692
          %v707 = vadd.f32 %v677, %v696
          %v708 = vadd.f32 %v678, %v700
          %v709 = vadd.f32 %v679, %v688
          %v710 = vadd.f32 %v680, %v692
          %v711 = vadd.f32 %v681, %v696
          %v712 = vadd.f32 %v682, %v700
          %713 = vst [vmem:[%s334] sm:$0xff] %v705
          %714 = vst [vmem:[%s334 + $0x8] sm:$0xff] %v706
          %715 = vst [vmem:[%s334 + $0x10] sm:$0xff] %v707
          %716 = vst [vmem:[%s334 + $0x18] sm:$0xff] %v708
          %717 = vst [vmem:[%s334 + $0x20] sm:$0xff] %v709
          %718 = vst [vmem:[%s334 + $0x28] sm:$0xff] %v710
          %719 = vst [vmem:[%s334 + $0x30] sm:$0xff] %v711
          %720 = vst [vmem:[%s334 + $0x38] sm:$0xff] %v712
        $region67: #{lstm_model_forward.3} parent=50 // pred_fallthru
          _
        %s721 = sand.u32 %s128, 1
        %s722 = sand.u32 %s128, 1
        %s723 = smul.addr %s722, 64
        %s724 = scalar_lea.vmem [#allocation6], %s723
        // Predicated region
        $region68: #{lstm_model_forward.3} parent=50 // pred_check
          %p725 = pneg %p138
        $region69: #{lstm_model_forward.3} parent=50 // pred_check_branch
          %727 = sbr.rel (%p725) target = $region71
        $region70: #{lstm_model_forward.3} parent=50 // pred_region
          %s728 = smul.u32 2, %s22
          %s729 = smul.u32 4, %s23
          %s730 = smul.addr %s728, 8
          %s731 = sadd.s32 %s729, %s730
          %s732 = smul.addr %s731, 8
          %s733 = scalar_lea.vmem %s3, %s732
          // Predicated region
          $region72: #{lstm_model_forward.3} parent=70 // pred_check
            _
          $region73: #{lstm_model_forward.3} parent=70 // pred_check_branch
            %735 = sbr.rel (0) target = $region75
          $region74: #{lstm_model_forward.3} parent=70 // pred_region
            // Predicated region
            $region76: #{lstm_model_forward.3} parent=74 // pred_check
              _
            $region77: #{lstm_model_forward.3} parent=74 // pred_check_branch
              %737 = sbr.rel (0) target = $region79
            $region78: #{lstm_model_forward.3} parent=74 // pred_region
              loop: start=0, step=1, limit=1
              $region80: #{lstm_model_forward.3} parent=78 // loop_pre_header
                _
              $region81: #{lstm_model_forward.3} parent=78 // loop_header
                %s739 = sphi 0, %s743
                %p740 = scmp.ge.s32.totalorder %s739, 1
                %s744 = sphi %s724, %s724
                %s745 = sphi %s733, %s733
              $region82: #{lstm_model_forward.3} parent=78 // loop_header_branch
                %742 = sbr.rel (%p740) target = $region86
              $region83: #{lstm_model_forward.3} parent=78 // loop_body
                %v746 = vld [vmem:[%s744] sm:$0xff]
                %747 = vst [vmem:[%s745] sm:$0xff] %v746
                %v748 = vld [vmem:[%s744 + $0x8] sm:$0xff]
                %749 = vst [vmem:[%s745 + $0x8] sm:$0xff] %v748
                %v750 = vld [vmem:[%s744 + $0x10] sm:$0xff]
                %751 = vst [vmem:[%s745 + $0x10] sm:$0xff] %v750
                %v752 = vld [vmem:[%s744 + $0x18] sm:$0xff]
                %753 = vst [vmem:[%s745 + $0x18] sm:$0xff] %v752
                %v754 = vld [vmem:[%s744 + $0x20] sm:$0xff]
                %755 = vst [vmem:[%s745 + $0x40] sm:$0xff] %v754
                %v756 = vld [vmem:[%s744 + $0x28] sm:$0xff]
                %757 = vst [vmem:[%s745 + $0x48] sm:$0xff] %v756
                %v758 = vld [vmem:[%s744 + $0x30] sm:$0xff]
                %759 = vst [vmem:[%s745 + $0x50] sm:$0xff] %v758
                %v760 = vld [vmem:[%s744 + $0x38] sm:$0xff]
                %761 = vst [vmem:[%s745 + $0x58] sm:$0xff] %v760
              $region84: #{lstm_model_forward.3} parent=78 // loop_footer
                %s743 = sadd.s32 1, %s739
              $region85: #{lstm_model_forward.3} parent=78 // loop_footer_branch
                %738 = sbr.rel target = $region81
              $region86: #{lstm_model_forward.3} parent=78 // loop_exit
                _
            $region79: #{lstm_model_forward.3} parent=74 // pred_fallthru
              _
            // Predicated region
            $region87: #{lstm_model_forward.3} parent=74 // pred_check
              _
            $region88: #{lstm_model_forward.3} parent=74 // pred_check_branch
              %763 = sbr.rel target = $region90
            $region89: #{lstm_model_forward.3} parent=74 // pred_region
              _
            $region90: #{lstm_model_forward.3} parent=74 // pred_fallthru
              _
          $region75: #{lstm_model_forward.3} parent=70 // pred_fallthru
            _
          %764 = vnop
        $region71: #{lstm_model_forward.3} parent=50 // pred_fallthru
          _
      $region51: #{lstm_model_forward.3} parent=5 // pred_fallthru
        _
      %p765 = scmp.le.s32.totalorder 2, %s12
      // Predicated region
      $region91: #{lstm_model_forward.3} parent=5 // pred_check
        %p766 = pneg %p765
      $region92: #{lstm_model_forward.3} parent=5 // pred_check_branch
        %768 = sbr.rel (%p766) target = $region94
      $region93: #{lstm_model_forward.3} parent=5 // pred_region
        %s769 = ssub.s32 %s12, 2
        // Predicated region
        $region95: #{lstm_model_forward.3} parent=93 // pred_check
          %p770 = pneg %p144
        $region96: #{lstm_model_forward.3} parent=93 // pred_check_branch
          %772 = sbr.rel (%p770) target = $region98
        $region97: #{lstm_model_forward.3} parent=93 // pred_region
          %s773 = sand.u32 %s129, 1
          %s774 = sand.u32 %s129, 1
          %s775 = smul.addr %s774, 64
          %s776 = scalar_lea.vmem [#allocation6], %s775
        $region98: #{lstm_model_forward.3} parent=93 // pred_fallthru
          _
      $region94: #{lstm_model_forward.3} parent=5 // pred_fallthru
        _
    $region6: #{lstm_model_forward.3} parent=1 // loop_footer
      %s16 = sadd.s32 1, %s12
    $region7: #{lstm_model_forward.3} parent=1 // loop_footer_branch
      %11 = sbr.rel target = $region3
    $region8: #{lstm_model_forward.3} parent=1 // loop_exit
      _
    %777 = vsyncpa [#allocation5], 1
    %s778 = scalar_lea.sflag [#allocation5], 1
    %779 = vsyncpa %s778, 1

// kernel: lstm_model_forward.5
$region0: #{lstm_model_forward.5}
  #allocation0 [shape = 'u32[]', space=smem, size = 0x4, offset = 0x4, fixed_abs, tag = 'smem constant byte address 0x4 - core index']
  #allocation1 [shape = 'u32[144,128]{1,0:T(1,128)}', space=vmem, size = 0x12000, scoped, tag = 'internal scratch']
  #allocation2 [shape = 'f32[16,512]{1,0:T(8,128)}', space=vmem, size = 0x8000, scoped, tag = 'scratch operand']
  %s0 = inlined_call_operand.vmem [shape: bf16[16,256], index: 0, kind: input, shape index: {}]
  %s1 = inlined_call_operand.vmem [shape: bf16[256,512], index: 1, kind: input, shape index: {}]
  %s2 = inlined_call_operand.vmem [shape: f32[1,512], index: 2, kind: input, shape index: {}]
  %s3 = inlined_call_operand.hbm [shape: f32[16,512], index: 3, kind: output, shape index: {}]
  %s4 = sld [smem:[#allocation0]]
  $region30: #{lstm_model_forward.5} parent=0
    _
  %s6 = ssub.s32 1, %s4
  %s7 = scalar_select 0, %s6, %s4
  $region1: #{lstm_model_forward.5} parent=0
    #allocation3 [shape = 'u8[32768]{0}', space=vmem, size = 0x8000, scoped, tag = 'output window, operand 0, single buffered']
    #allocation4 [shape = 's32[1]{0}', space=sflag, size = 0x4, scoped, tag = 'scoped memory for lstm_model_forward.5']
    %8 = vsyncpa [#allocation4], 0
    // Predicated region
    $region2: #{lstm_model_forward.5} parent=1 // pred_check
      _
    $region3: #{lstm_model_forward.5} parent=1 // pred_check_branch
      %10 = sbr.rel (0) target = $region5
    $region4: #{lstm_model_forward.5} parent=1 // pred_region
      _
    $region5: #{lstm_model_forward.5} parent=1 // pred_fallthru
      _
    // Predicated region
    $region6: #{lstm_model_forward.5} parent=1 // pred_check
      _
    $region7: #{lstm_model_forward.5} parent=1 // pred_check_branch
      %12 = sbr.rel (0) target = $region9
    $region8: #{lstm_model_forward.5} parent=1 // pred_region
      _
    $region9: #{lstm_model_forward.5} parent=1 // pred_fallthru
      _
    // Predicated region
    $region10: #{lstm_model_forward.5} parent=1 // pred_check
      _
    $region11: #{lstm_model_forward.5} parent=1 // pred_check_branch
      %14 = sbr.rel (0) target = $region13
    $region12: #{lstm_model_forward.5} parent=1 // pred_region
      _
    $region13: #{lstm_model_forward.5} parent=1 // pred_fallthru
      _
    %p15 = scmp.eq.s32.totalorder 0, 0
    // Predicated region
    $region14: #{lstm_model_forward.5} parent=1 // pred_check
      %p16 = pneg %p15
    $region15: #{lstm_model_forward.5} parent=1 // pred_check_branch
      %18 = sbr.rel (%p16) target = $region17
    $region16: #{lstm_model_forward.5} parent=1 // pred_region
      %19 = vst [vmem:[#allocation2] sm:$0xff] 0.0
      %20 = vst [vmem:[#allocation2 + $0x8] sm:$0xff] 0.0
      %21 = vst [vmem:[#allocation2 + $0x10] sm:$0xff] 0.0
      %22 = vst [vmem:[#allocation2 + $0x18] sm:$0xff] 0.0
      %23 = vst [vmem:[#allocation2 + $0x20] sm:$0xff] 0.0
      %24 = vst [vmem:[#allocation2 + $0x28] sm:$0xff] 0.0
      %25 = vst [vmem:[#allocation2 + $0x30] sm:$0xff] 0.0
      %26 = vst [vmem:[#allocation2 + $0x38] sm:$0xff] 0.0
    $region17: #{lstm_model_forward.5} parent=1 // pred_fallthru
      _
    %v27 = vld [vmem:[#allocation2] sm:$0xff]
    %v28 = vld [vmem:[#allocation2 + $0x8] sm:$0xff]
    %v29 = vld [vmem:[#allocation2 + $0x10] sm:$0xff]
    %v30 = vld [vmem:[#allocation2 + $0x18] sm:$0xff]
    %v31 = vld [vmem:[#allocation2 + $0x20] sm:$0xff]
    %v32 = vld [vmem:[#allocation2 + $0x28] sm:$0xff]
    %v33 = vld [vmem:[#allocation2 + $0x30] sm:$0xff]
    %v34 = vld [vmem:[#allocation2 + $0x38] sm:$0xff]
    %v35 = vld [vmem:[%s0] sm:$0xff]
    %v36 = vld [vmem:[%s0 + $0x8] sm:$0xff]
    %v37 = vld [vmem:[%s1] sm:$0xff]
    %v38 = vld [vmem:[%s1 + $0x8] sm:$0xff]
    %v39 = vld [vmem:[%s1 + $0x10] sm:$0xff]
    %v40 = vld [vmem:[%s1 + $0x18] sm:$0xff]
    %v41 = vld [vmem:[%s1 + $0x20] sm:$0xff]
    %v42 = vld [vmem:[%s1 + $0x28] sm:$0xff]
    %v43 = vld [vmem:[%s1 + $0x30] sm:$0xff]
    %v44 = vld [vmem:[%s1 + $0x38] sm:$0xff]
    %v45 = vld [vmem:[%s1 + $0x40] sm:$0xff]
    %v46 = vld [vmem:[%s1 + $0x48] sm:$0xff]
    %v47 = vld [vmem:[%s1 + $0x50] sm:$0xff]
    %v48 = vld [vmem:[%s1 + $0x58] sm:$0xff]
    %v49 = vld [vmem:[%s1 + $0x60] sm:$0xff]
    %v50 = vld [vmem:[%s1 + $0x68] sm:$0xff]
    %v51 = vld [vmem:[%s1 + $0x70] sm:$0xff]
    %v52 = vld [vmem:[%s1 + $0x78] sm:$0xff]
    %v53 = vld [vmem:[%s1 + $0x80] sm:$0xff]
    %v54 = vld [vmem:[%s1 + $0x88] sm:$0xff]
    %v55 = vld [vmem:[%s1 + $0x90] sm:$0xff]
    %v56 = vld [vmem:[%s1 + $0x98] sm:$0xff]
    %v57 = vld [vmem:[%s1 + $0xa0] sm:$0xff]
    %v58 = vld [vmem:[%s1 + $0xa8] sm:$0xff]
    %v59 = vld [vmem:[%s1 + $0xb0] sm:$0xff]
    %v60 = vld [vmem:[%s1 + $0xb8] sm:$0xff]
    %v61 = vld [vmem:[%s1 + $0xc0] sm:$0xff]
    %v62 = vld [vmem:[%s1 + $0xc8] sm:$0xff]
    %v63 = vld [vmem:[%s1 + $0xd0] sm:$0xff]
    %v64 = vld [vmem:[%s1 + $0xd8] sm:$0xff]
    %v65 = vld [vmem:[%s1 + $0xe0] sm:$0xff]
    %v66 = vld [vmem:[%s1 + $0xe8] sm:$0xff]
    %v67 = vld [vmem:[%s1 + $0xf0] sm:$0xff]
    %v68 = vld [vmem:[%s1 + $0xf8] sm:$0xff]
    %v69 = vld [vmem:[%s1 + $0x100] sm:$0xff]
    %v70 = vld [vmem:[%s1 + $0x108] sm:$0xff]
    %v71 = vld [vmem:[%s1 + $0x110] sm:$0xff]
    %v72 = vld [vmem:[%s1 + $0x118] sm:$0xff]
    %v73 = vld [vmem:[%s1 + $0x120] sm:$0xff]
    %v74 = vld [vmem:[%s1 + $0x128] sm:$0xff]
    %v75 = vld [vmem:[%s1 + $0x130] sm:$0xff]
    %v76 = vld [vmem:[%s1 + $0x138] sm:$0xff]
    %v77 = vld [vmem:[%s1 + $0x140] sm:$0xff]
    %v78 = vld [vmem:[%s1 + $0x148] sm:$0xff]
    %v79 = vld [vmem:[%s1 + $0x150] sm:$0xff]
    %v80 = vld [vmem:[%s1 + $0x158] sm:$0xff]
    %v81 = vld [vmem:[%s1 + $0x160] sm:$0xff]
    %v82 = vld [vmem:[%s1 + $0x168] sm:$0xff]
    %v83 = vld [vmem:[%s1 + $0x170] sm:$0xff]
    %v84 = vld [vmem:[%s1 + $0x178] sm:$0xff]
    %v85 = vld [vmem:[%s1 + $0x180] sm:$0xff]
    %v86 = vld [vmem:[%s1 + $0x188] sm:$0xff]
    %v87 = vld [vmem:[%s1 + $0x190] sm:$0xff]
    %v88 = vld [vmem:[%s1 + $0x198] sm:$0xff]
    %v89 = vld [vmem:[%s1 + $0x1a0] sm:$0xff]
    %v90 = vld [vmem:[%s1 + $0x1a8] sm:$0xff]
    %v91 = vld [vmem:[%s1 + $0x1b0] sm:$0xff]
    %v92 = vld [vmem:[%s1 + $0x1b8] sm:$0xff]
    %v93 = vld [vmem:[%s1 + $0x1c0] sm:$0xff]
    %v94 = vld [vmem:[%s1 + $0x1c8] sm:$0xff]
    %v95 = vld [vmem:[%s1 + $0x1d0] sm:$0xff]
    %v96 = vld [vmem:[%s1 + $0x1d8] sm:$0xff]
    %v97 = vld [vmem:[%s1 + $0x1e0] sm:$0xff]
    %v98 = vld [vmem:[%s1 + $0x1e8] sm:$0xff]
    %v99 = vld [vmem:[%s1 + $0x1f0] sm:$0xff]
    %v100 = vld [vmem:[%s1 + $0x1f8] sm:$0xff]
    %v103 = vunpack.c.l.b16 %v35
    %v104 = vunpack.c.h.b16 %v35
    %v105 = vunpack.c.l.b16 %v36
    %v106 = vunpack.c.h.b16 %v36
    %v107 = vpack.c.b16 %v105, %v103
    %v108 = vpack.c.b16 %v106, %v104
    %v175 = vunpack.c.l.b16 %v37
    %v176 = vunpack.c.h.b16 %v37
    %v177 = vunpack.c.l.b16 %v38
    %v178 = vunpack.c.h.b16 %v38
    %v179 = vunpack.c.l.b16 %v39
    %v180 = vunpack.c.h.b16 %v39
    %v181 = vunpack.c.l.b16 %v40
    %v182 = vunpack.c.h.b16 %v40
    %v183 = vunpack.c.l.b16 %v41
    %v184 = vunpack.c.h.b16 %v41
    %v185 = vunpack.c.l.b16 %v42
    %v186 = vunpack.c.h.b16 %v42
    %v187 = vunpack.c.l.b16 %v43
    %v188 = vunpack.c.h.b16 %v43
    %v189 = vunpack.c.l.b16 %v44
    %v190 = vunpack.c.h.b16 %v44
    %v191 = vunpack.c.l.b16 %v45
    %v192 = vunpack.c.h.b16 %v45
    %v193 = vunpack.c.l.b16 %v46
    %v194 = vunpack.c.h.b16 %v46
    %v195 = vunpack.c.l.b16 %v47
    %v196 = vunpack.c.h.b16 %v47
    %v197 = vunpack.c.l.b16 %v48
    %v198 = vunpack.c.h.b16 %v48
    %v199 = vunpack.c.l.b16 %v49
    %v200 = vunpack.c.h.b16 %v49
    %v201 = vunpack.c.l.b16 %v50
    %v202 = vunpack.c.h.b16 %v50
    %v203 = vunpack.c.l.b16 %v51
    %v204 = vunpack.c.h.b16 %v51
    %v205 = vunpack.c.l.b16 %v52
    %v206 = vunpack.c.h.b16 %v52
    %v207 = vunpack.c.l.b16 %v53
    %v208 = vunpack.c.h.b16 %v53
    %v209 = vunpack.c.l.b16 %v54
    %v210 = vunpack.c.h.b16 %v54
    %v211 = vunpack.c.l.b16 %v55
    %v212 = vunpack.c.h.b16 %v55
    %v213 = vunpack.c.l.b16 %v56
    %v214 = vunpack.c.h.b16 %v56
    %v215 = vunpack.c.l.b16 %v57
    %v216 = vunpack.c.h.b16 %v57
    %v217 = vunpack.c.l.b16 %v58
    %v218 = vunpack.c.h.b16 %v58
    %v219 = vunpack.c.l.b16 %v59
    %v220 = vunpack.c.h.b16 %v59
    %v221 = vunpack.c.l.b16 %v60
    %v222 = vunpack.c.h.b16 %v60
    %v223 = vunpack.c.l.b16 %v61
    %v224 = vunpack.c.h.b16 %v61
    %v225 = vunpack.c.l.b16 %v62
    %v226 = vunpack.c.h.b16 %v62
    %v227 = vunpack.c.l.b16 %v63
    %v228 = vunpack.c.h.b16 %v63
    %v229 = vunpack.c.l.b16 %v64
    %v230 = vunpack.c.h.b16 %v64
    %v231 = vunpack.c.l.b16 %v65
    %v232 = vunpack.c.h.b16 %v65
    %v233 = vunpack.c.l.b16 %v66
    %v234 = vunpack.c.h.b16 %v66
    %v235 = vunpack.c.l.b16 %v67
    %v236 = vunpack.c.h.b16 %v67
    %v237 = vunpack.c.l.b16 %v68
    %v238 = vunpack.c.h.b16 %v68
    %v239 = vunpack.c.l.b16 %v69
    %v240 = vunpack.c.h.b16 %v69
    %v241 = vunpack.c.l.b16 %v70
    %v242 = vunpack.c.h.b16 %v70
    %v243 = vunpack.c.l.b16 %v71
    %v244 = vunpack.c.h.b16 %v71
    %v245 = vunpack.c.l.b16 %v72
    %v246 = vunpack.c.h.b16 %v72
    %v247 = vunpack.c.l.b16 %v73
    %v248 = vunpack.c.h.b16 %v73
    %v249 = vunpack.c.l.b16 %v74
    %v250 = vunpack.c.h.b16 %v74
    %v251 = vunpack.c.l.b16 %v75
    %v252 = vunpack.c.h.b16 %v75
    %v253 = vunpack.c.l.b16 %v76
    %v254 = vunpack.c.h.b16 %v76
    %v255 = vunpack.c.l.b16 %v77
    %v256 = vunpack.c.h.b16 %v77
    %v257 = vunpack.c.l.b16 %v78
    %v258 = vunpack.c.h.b16 %v78
    %v259 = vunpack.c.l.b16 %v79
    %v260 = vunpack.c.h.b16 %v79
    %v261 = vunpack.c.l.b16 %v80
    %v262 = vunpack.c.h.b16 %v80
    %v263 = vunpack.c.l.b16 %v81
    %v264 = vunpack.c.h.b16 %v81
    %v265 = vunpack.c.l.b16 %v82
    %v266 = vunpack.c.h.b16 %v82
    %v267 = vunpack.c.l.b16 %v83
    %v268 = vunpack.c.h.b16 %v83
    %v269 = vunpack.c.l.b16 %v84
    %v270 = vunpack.c.h.b16 %v84
    %v271 = vunpack.c.l.b16 %v85
    %v272 = vunpack.c.h.b16 %v85
    %v273 = vunpack.c.l.b16 %v86
    %v274 = vunpack.c.h.b16 %v86
    %v275 = vunpack.c.l.b16 %v87
    %v276 = vunpack.c.h.b16 %v87
    %v277 = vunpack.c.l.b16 %v88
    %v278 = vunpack.c.h.b16 %v88
    %v279 = vunpack.c.l.b16 %v89
    %v280 = vunpack.c.h.b16 %v89
    %v281 = vunpack.c.l.b16 %v90
    %v282 = vunpack.c.h.b16 %v90
    %v283 = vunpack.c.l.b16 %v91
    %v284 = vunpack.c.h.b16 %v91
    %v285 = vunpack.c.l.b16 %v92
    %v286 = vunpack.c.h.b16 %v92
    %v287 = vunpack.c.l.b16 %v93
    %v288 = vunpack.c.h.b16 %v93
    %v289 = vunpack.c.l.b16 %v94
    %v290 = vunpack.c.h.b16 %v94
    %v291 = vunpack.c.l.b16 %v95
    %v292 = vunpack.c.h.b16 %v95
    %v293 = vunpack.c.l.b16 %v96
    %v294 = vunpack.c.h.b16 %v96
    %v295 = vunpack.c.l.b16 %v97
    %v296 = vunpack.c.h.b16 %v97
    %v297 = vunpack.c.l.b16 %v98
    %v298 = vunpack.c.h.b16 %v98
    %v299 = vunpack.c.l.b16 %v99
    %v300 = vunpack.c.h.b16 %v99
    %v301 = vunpack.c.l.b16 %v100
    %v302 = vunpack.c.h.b16 %v100
    %v303 = vpack.c.b16 %v179, %v175
    %v304 = vpack.c.b16 %v180, %v176
    %v305 = vpack.c.b16 %v181, %v177
    %v306 = vpack.c.b16 %v182, %v178
    %v307 = vpack.c.b16 %v187, %v183
    %v308 = vpack.c.b16 %v188, %v184
    %v309 = vpack.c.b16 %v189, %v185
    %v310 = vpack.c.b16 %v190, %v186
    %v311 = vpack.c.b16 %v195, %v191
    %v312 = vpack.c.b16 %v196, %v192
    %v313 = vpack.c.b16 %v197, %v193
    %v314 = vpack.c.b16 %v198, %v194
    %v315 = vpack.c.b16 %v203, %v199
    %v316 = vpack.c.b16 %v204, %v200
    %v317 = vpack.c.b16 %v205, %v201
    %v318 = vpack.c.b16 %v206, %v202
    %v319 = vpack.c.b16 %v211, %v207
    %v320 = vpack.c.b16 %v212, %v208
    %v321 = vpack.c.b16 %v213, %v209
    %v322 = vpack.c.b16 %v214, %v210
    %v323 = vpack.c.b16 %v219, %v215
    %v324 = vpack.c.b16 %v220, %v216
    %v325 = vpack.c.b16 %v221, %v217
    %v326 = vpack.c.b16 %v222, %v218
    %v327 = vpack.c.b16 %v227, %v223
    %v328 = vpack.c.b16 %v228, %v224
    %v329 = vpack.c.b16 %v229, %v225
    %v330 = vpack.c.b16 %v230, %v226
    %v331 = vpack.c.b16 %v235, %v231
    %v332 = vpack.c.b16 %v236, %v232
    %v333 = vpack.c.b16 %v237, %v233
    %v334 = vpack.c.b16 %v238, %v234
    %v335 = vpack.c.b16 %v243, %v239
    %v336 = vpack.c.b16 %v244, %v240
    %v337 = vpack.c.b16 %v245, %v241
    %v338 = vpack.c.b16 %v246, %v242
    %v339 = vpack.c.b16 %v251, %v247
    %v340 = vpack.c.b16 %v252, %v248
    %v341 = vpack.c.b16 %v253, %v249
    %v342 = vpack.c.b16 %v254, %v250
    %v343 = vpack.c.b16 %v259, %v255
    %v344 = vpack.c.b16 %v260, %v256
    %v345 = vpack.c.b16 %v261, %v257
    %v346 = vpack.c.b16 %v262, %v258
    %v347 = vpack.c.b16 %v267, %v263
    %v348 = vpack.c.b16 %v268, %v264
    %v349 = vpack.c.b16 %v269, %v265
    %v350 = vpack.c.b16 %v270, %v266
    %v351 = vpack.c.b16 %v275, %v271
    %v352 = vpack.c.b16 %v276, %v272
    %v353 = vpack.c.b16 %v277, %v273
    %v354 = vpack.c.b16 %v278, %v274
    %v355 = vpack.c.b16 %v283, %v279
    %v356 = vpack.c.b16 %v284, %v280
    %v357 = vpack.c.b16 %v285, %v281
    %v358 = vpack.c.b16 %v286, %v282
    %v359 = vpack.c.b16 %v291, %v287
    %v360 = vpack.c.b16 %v292, %v288
    %v361 = vpack.c.b16 %v293, %v289
    %v362 = vpack.c.b16 %v294, %v290
    %v363 = vpack.c.b16 %v299, %v295
    %v364 = vpack.c.b16 %v300, %v296
    %v365 = vpack.c.b16 %v301, %v297
    %v366 = vpack.c.b16 %v302, %v298
    %431 = vmatprep.subr.bf16.mxu0 %v304
    %432 = vmatpush1.bf16.msra.mxu0 %v303
    %433 = vmatprep.subr.bf16.mxu0 %v308
    %434 = vmatpush1.bf16.msra.mxu0 %v307
    %435 = vmatprep.subr.bf16.mxu0 %v312
    %436 = vmatpush1.bf16.msra.mxu0 %v311
    %437 = vmatprep.subr.bf16.mxu0 %v316
    %438 = vmatpush1.bf16.msra.mxu0 %v315
    %439 = vmatprep.subr.bf16.mxu0 %v320
    %440 = vmatpush1.bf16.msra.mxu0 %v319
    %441 = vmatprep.subr.bf16.mxu0 %v324
    %442 = vmatpush1.bf16.msra.mxu0 %v323
    %443 = vmatprep.subr.bf16.mxu0 %v328
    %444 = vmatpush1.bf16.msra.mxu0 %v327
    %445 = vmatprep.subr.bf16.mxu0 %v332
    %446 = vmatpush1.bf16.msra.mxu0 %v331
    %447 = vmatprep.subr.bf16.mxu0 %v336
    %448 = vmatpush1.bf16.msra.mxu0 %v335
    %449 = vmatprep.subr.bf16.mxu0 %v340
    %450 = vmatpush1.bf16.msra.mxu0 %v339
    %451 = vmatprep.subr.bf16.mxu0 %v344
    %452 = vmatpush1.bf16.msra.mxu0 %v343
    %453 = vmatprep.subr.bf16.mxu0 %v348
    %454 = vmatpush1.bf16.msra.mxu0 %v347
    %455 = vmatprep.subr.bf16.mxu0 %v352
    %456 = vmatpush1.bf16.msra.mxu0 %v351
    %457 = vmatprep.subr.bf16.mxu0 %v356
    %458 = vmatpush1.bf16.msra.mxu0 %v355
    %459 = vmatprep.subr.bf16.mxu0 %v360
    %460 = vmatpush1.bf16.msra.mxu0 %v359
    %461 = vmatprep.subr.bf16.mxu0 %v364
    %462 = vmatpush1.bf16.msra.mxu0 %v363
    %463 = vmatprep.mubr.bf16.mxu0 %v108
    %464 = vmatmul.mubr.bf16.gmra.mrb[0].mxu0 %v107
    %v465 = vpop.f32.mrb[0].mxu0
    %v466 = vadd.f32 0.0, %v465
    %v467 = vpop.f32.mrb[0].mxu0
    %v468 = vadd.f32 0.0, %v467
    %v469 = vpop.f32.mrb[0].mxu0
    %v470 = vadd.f32 0.0, %v469
    %v471 = vpop.f32.mrb[0].mxu0
    %v472 = vadd.f32 0.0, %v471
    %473 = vdwg.mxu0
    %474 = vmatprep.subr.bf16.mxu0 %v306
    %475 = vmatpush1.bf16.msra.mxu0 %v305
    %476 = vmatprep.subr.bf16.mxu0 %v310
    %477 = vmatpush1.bf16.msra.mxu0 %v309
    %478 = vmatprep.subr.bf16.mxu0 %v314
    %479 = vmatpush1.bf16.msra.mxu0 %v313
    %480 = vmatprep.subr.bf16.mxu0 %v318
    %481 = vmatpush1.bf16.msra.mxu0 %v317
    %482 = vmatprep.subr.bf16.mxu0 %v322
    %483 = vmatpush1.bf16.msra.mxu0 %v321
    %484 = vmatprep.subr.bf16.mxu0 %v326
    %485 = vmatpush1.bf16.msra.mxu0 %v325
    %486 = vmatprep.subr.bf16.mxu0 %v330
    %487 = vmatpush1.bf16.msra.mxu0 %v329
    %488 = vmatprep.subr.bf16.mxu0 %v334
    %489 = vmatpush1.bf16.msra.mxu0 %v333
    %490 = vmatprep.subr.bf16.mxu0 %v338
    %491 = vmatpush1.bf16.msra.mxu0 %v337
    %492 = vmatprep.subr.bf16.mxu0 %v342
    %493 = vmatpush1.bf16.msra.mxu0 %v341
    %494 = vmatprep.subr.bf16.mxu0 %v346
    %495 = vmatpush1.bf16.msra.mxu0 %v345
    %496 = vmatprep.subr.bf16.mxu0 %v350
    %497 = vmatpush1.bf16.msra.mxu0 %v349
    %498 = vmatprep.subr.bf16.mxu0 %v354
    %499 = vmatpush1.bf16.msra.mxu0 %v353
    %500 = vmatprep.subr.bf16.mxu0 %v358
    %501 = vmatpush1.bf16.msra.mxu0 %v357
    %502 = vmatprep.subr.bf16.mxu0 %v362
    %503 = vmatpush1.bf16.msra.mxu0 %v361
    %504 = vmatprep.subr.bf16.mxu0 %v366
    %505 = vmatpush1.bf16.msra.mxu0 %v365
    %506 = vmatprep.mubr.bf16.mxu0 %v108
    %507 = vmatmul.mubr.bf16.gmra.mrb[0].mxu0 %v107
    %v508 = vpop.f32.mrb[0].mxu0
    %v509 = vadd.f32 0.0, %v508
    %v510 = vpop.f32.mrb[0].mxu0
    %v511 = vadd.f32 0.0, %v510
    %v512 = vpop.f32.mrb[0].mxu0
    %v513 = vadd.f32 0.0, %v512
    %v514 = vpop.f32.mrb[0].mxu0
    %v515 = vadd.f32 0.0, %v514
    %516 = vdwg.mxu0
    %v517 = vadd.f32 %v27, %v466
    %v518 = vadd.f32 %v28, %v468
    %v519 = vadd.f32 %v29, %v509
    %v520 = vadd.f32 %v30, %v511
    %v521 = vadd.f32 %v31, %v470
    %v522 = vadd.f32 %v32, %v472
    %v523 = vadd.f32 %v33, %v513
    %v524 = vadd.f32 %v34, %v515
    %525 = vst [vmem:[#allocation2] sm:$0xff] %v517
    %526 = vst [vmem:[#allocation2 + $0x8] sm:$0xff] %v518
    %527 = vst [vmem:[#allocation2 + $0x10] sm:$0xff] %v519
    %528 = vst [vmem:[#allocation2 + $0x18] sm:$0xff] %v520
    %529 = vst [vmem:[#allocation2 + $0x20] sm:$0xff] %v521
    %530 = vst [vmem:[#allocation2 + $0x28] sm:$0xff] %v522
    %531 = vst [vmem:[#allocation2 + $0x30] sm:$0xff] %v523
    %532 = vst [vmem:[#allocation2 + $0x38] sm:$0xff] %v524
    // Predicated region
    $region18: #{lstm_model_forward.5} parent=1 // pred_check
      %p533 = pneg %p15
    $region19: #{lstm_model_forward.5} parent=1 // pred_check_branch
      %535 = sbr.rel (%p533) target = $region21
    $region20: #{lstm_model_forward.5} parent=1 // pred_region
      %v536 = vld [vmem:[#allocation2] sm:$0xff]
      %v537 = vld [vmem:[#allocation2 + $0x8] sm:$0xff]
      %v538 = vld [vmem:[#allocation2 + $0x10] sm:$0xff]
      %v539 = vld [vmem:[#allocation2 + $0x18] sm:$0xff]
      %v540 = vld [vmem:[#allocation2 + $0x20] sm:$0xff]
      %v541 = vld [vmem:[#allocation2 + $0x28] sm:$0xff]
      %v542 = vld [vmem:[#allocation2 + $0x30] sm:$0xff]
      %v543 = vld [vmem:[#allocation2 + $0x38] sm:$0xff]
      %v544 = vld [vmem:[%s2] sm:$0xf]
      %v546 = vlaneseq
      %v547 = vshrl.u32 %v546, 7
      %v548 = vsub.s32 0, %v547
      %v549 = vrot.slane %v544, %v548
      %v550 = vlaneseq
      %v551 = vshrl.u32 %v550, 7
      %v552 = vsub.s32 1, %v551
      %v553 = vrot.slane %v544, %v552
      %v554 = vlaneseq
      %v555 = vshrl.u32 %v554, 7
      %v556 = vsub.s32 2, %v555
      %v557 = vrot.slane %v544, %v556
      %v558 = vlaneseq
      %v559 = vshrl.u32 %v558, 7
      %v560 = vsub.s32 3, %v559
      %v561 = vrot.slane %v544, %v560
      %v566 = vadd.f32 %v536, %v549
      %v567 = vadd.f32 %v537, %v553
      %v568 = vadd.f32 %v538, %v557
      %v569 = vadd.f32 %v539, %v561
      %v570 = vadd.f32 %v540, %v549
      %v571 = vadd.f32 %v541, %v553
      %v572 = vadd.f32 %v542, %v557
      %v573 = vadd.f32 %v543, %v561
      %574 = vst [vmem:[#allocation3] sm:$0xff] %v566
      %575 = vst [vmem:[#allocation3 + $0x8] sm:$0xff] %v567
      %576 = vst [vmem:[#allocation3 + $0x10] sm:$0xff] %v568
      %577 = vst [vmem:[#allocation3 + $0x18] sm:$0xff] %v569
      %578 = vst [vmem:[#allocation3 + $0x20] sm:$0xff] %v570
      %579 = vst [vmem:[#allocation3 + $0x28] sm:$0xff] %v571
      %580 = vst [vmem:[#allocation3 + $0x30] sm:$0xff] %v572
      %581 = vst [vmem:[#allocation3 + $0x38] sm:$0xff] %v573
    $region21: #{lstm_model_forward.5} parent=1 // pred_fallthru
      _
    // Predicated region
    $region22: #{lstm_model_forward.5} parent=1 // pred_check
      _
    $region23: #{lstm_model_forward.5} parent=1 // pred_check_branch
      %583 = sbr.rel (0) target = $region25
    $region24: #{lstm_model_forward.5} parent=1 // pred_region
      %s585 = ssub.s32 1024, 1024
      %586 = vsyncadd [#allocation4], %s585
      %s587 = sshll.u32 [#allocation3], 4
      %s588 = int_to_ptr.vmem [resolvable:$true] %s587
      %593 = dma.vmem_to_hbm [thread:$0]  %s588, 1024, %s3, [#allocation4], 512, 512, 32
    $region25: #{lstm_model_forward.5} parent=1 // pred_fallthru
      _
    // Predicated region
    $region26: #{lstm_model_forward.5} parent=1 // pred_check
      _
    $region27: #{lstm_model_forward.5} parent=1 // pred_check_branch
      %595 = sbr.rel (0) target = $region29
    $region28: #{lstm_model_forward.5} parent=1 // pred_region
      %596 = dma.done [#allocation4], 1024
    $region29: #{lstm_model_forward.5} parent=1 // pred_fallthru
      _
    %597 = vsyncpa [#allocation4], 1

// kernel: lstm_model_forward.4
$region0: #{lstm_model_forward.4}
  #allocation0 [shape = 'u32[]', space=smem, size = 0x4, offset = 0x4, fixed_abs, tag = 'smem constant byte address 0x4 - core index']
  #allocation1 [shape = 'u32[144,128]{1,0:T(1,128)}', space=vmem, size = 0x12000, scoped, tag = 'internal scratch']
  %s0 = inlined_call_operand.vmem [shape: f32[8,2,1024], index: 0, kind: input, shape index: {}]
  %s1 = inlined_call_operand.vmem [shape: bf16[256,1024], index: 1, kind: input, shape index: {}]
  %s2 = inlined_call_operand.vmem [shape: bf16[8,2,256], index: 2, kind: output, shape index: {}]
  %s3 = sld [smem:[#allocation0]]
  $region18: #{lstm_model_forward.4} parent=0
    _
  %s5 = ssub.s32 1, %s3
  %s6 = scalar_select 0, %s5, %s3
  // Predicated region
  $region2: #{lstm_model_forward.4} parent=0 // pred_check
    _
  $region3: #{lstm_model_forward.4} parent=0 // pred_check_branch
    %8 = sbr.rel (0) target = $region5
  $region4: #{lstm_model_forward.4} parent=0 // pred_region
    _
  $region5: #{lstm_model_forward.4} parent=0 // pred_fallthru
    _
  // Predicated region
  $region6: #{lstm_model_forward.4} parent=0 // pred_check
    _
  $region7: #{lstm_model_forward.4} parent=0 // pred_check_branch
    %10 = sbr.rel (0) target = $region9
  $region8: #{lstm_model_forward.4} parent=0 // pred_region
    _
  $region9: #{lstm_model_forward.4} parent=0 // pred_fallthru
    _
  %v12 = vld [vmem:[%s0] sm:$0xff]
  %v13 = vld [vmem:[%s0 + $0x8] sm:$0xff]
  %v14 = vld [vmem:[%s1] sm:$0xff]
  %v15 = vld [vmem:[%s1 + $0x8] sm:$0xff]
  %v16 = vld [vmem:[%s1 + $0x10] sm:$0xff]
  %v17 = vld [vmem:[%s1 + $0x18] sm:$0xff]
  %v18 = vld [vmem:[%s1 + $0x20] sm:$0xff]
  %v19 = vld [vmem:[%s1 + $0x28] sm:$0xff]
  %v20 = vld [vmem:[%s1 + $0x30] sm:$0xff]
  %v21 = vld [vmem:[%s1 + $0x38] sm:$0xff]
  %v22 = vld [vmem:[%s1 + $0x40] sm:$0xff]
  %v23 = vld [vmem:[%s1 + $0x48] sm:$0xff]
  %v24 = vld [vmem:[%s1 + $0x50] sm:$0xff]
  %v25 = vld [vmem:[%s1 + $0x58] sm:$0xff]
  %v26 = vld [vmem:[%s1 + $0x60] sm:$0xff]
  %v27 = vld [vmem:[%s1 + $0x68] sm:$0xff]
  %v28 = vld [vmem:[%s1 + $0x70] sm:$0xff]
  %v29 = vld [vmem:[%s1 + $0x78] sm:$0xff]
  %v30 = vld [vmem:[%s1 + $0x80] sm:$0xff]
  %v31 = vld [vmem:[%s1 + $0x88] sm:$0xff]
  %v32 = vld [vmem:[%s1 + $0x90] sm:$0xff]
  %v33 = vld [vmem:[%s1 + $0x98] sm:$0xff]
  %v34 = vld [vmem:[%s1 + $0xa0] sm:$0xff]
  %v35 = vld [vmem:[%s1 + $0xa8] sm:$0xff]
  %v36 = vld [vmem:[%s1 + $0xb0] sm:$0xff]
  %v37 = vld [vmem:[%s1 + $0xb8] sm:$0xff]
  %v38 = vld [vmem:[%s1 + $0xc0] sm:$0xff]
  %v39 = vld [vmem:[%s1 + $0xc8] sm:$0xff]
  %v40 = vld [vmem:[%s1 + $0xd0] sm:$0xff]
  %v41 = vld [vmem:[%s1 + $0xd8] sm:$0xff]
  %v42 = vld [vmem:[%s1 + $0xe0] sm:$0xff]
  %v43 = vld [vmem:[%s1 + $0xe8] sm:$0xff]
  %v44 = vld [vmem:[%s1 + $0xf0] sm:$0xff]
  %v45 = vld [vmem:[%s1 + $0xf8] sm:$0xff]
  %v46 = vld [vmem:[%s1 + $0x100] sm:$0xff]
  %v47 = vld [vmem:[%s1 + $0x108] sm:$0xff]
  %v48 = vld [vmem:[%s1 + $0x110] sm:$0xff]
  %v49 = vld [vmem:[%s1 + $0x118] sm:$0xff]
  %v50 = vld [vmem:[%s1 + $0x120] sm:$0xff]
  %v51 = vld [vmem:[%s1 + $0x128] sm:$0xff]
  %v52 = vld [vmem:[%s1 + $0x130] sm:$0xff]
  %v53 = vld [vmem:[%s1 + $0x138] sm:$0xff]
  %v54 = vld [vmem:[%s1 + $0x140] sm:$0xff]
  %v55 = vld [vmem:[%s1 + $0x148] sm:$0xff]
  %v56 = vld [vmem:[%s1 + $0x150] sm:$0xff]
  %v57 = vld [vmem:[%s1 + $0x158] sm:$0xff]
  %v58 = vld [vmem:[%s1 + $0x160] sm:$0xff]
  %v59 = vld [vmem:[%s1 + $0x168] sm:$0xff]
  %v60 = vld [vmem:[%s1 + $0x170] sm:$0xff]
  %v61 = vld [vmem:[%s1 + $0x178] sm:$0xff]
  %v62 = vld [vmem:[%s1 + $0x180] sm:$0xff]
  %v63 = vld [vmem:[%s1 + $0x188] sm:$0xff]
  %v64 = vld [vmem:[%s1 + $0x190] sm:$0xff]
  %v65 = vld [vmem:[%s1 + $0x198] sm:$0xff]
  %v66 = vld [vmem:[%s1 + $0x1a0] sm:$0xff]
  %v67 = vld [vmem:[%s1 + $0x1a8] sm:$0xff]
  %v68 = vld [vmem:[%s1 + $0x1b0] sm:$0xff]
  %v69 = vld [vmem:[%s1 + $0x1b8] sm:$0xff]
  %v70 = vld [vmem:[%s1 + $0x1c0] sm:$0xff]
  %v71 = vld [vmem:[%s1 + $0x1c8] sm:$0xff]
  %v72 = vld [vmem:[%s1 + $0x1d0] sm:$0xff]
  %v73 = vld [vmem:[%s1 + $0x1d8] sm:$0xff]
  %v74 = vld [vmem:[%s1 + $0x1e0] sm:$0xff]
  %v75 = vld [vmem:[%s1 + $0x1e8] sm:$0xff]
  %v76 = vld [vmem:[%s1 + $0x1f0] sm:$0xff]
  %v77 = vld [vmem:[%s1 + $0x1f8] sm:$0xff]
  %v78 = vld [vmem:[%s1 + $0x200] sm:$0xff]
  %v79 = vld [vmem:[%s1 + $0x208] sm:$0xff]
  %v80 = vld [vmem:[%s1 + $0x210] sm:$0xff]
  %v81 = vld [vmem:[%s1 + $0x218] sm:$0xff]
  %v82 = vld [vmem:[%s1 + $0x220] sm:$0xff]
  %v83 = vld [vmem:[%s1 + $0x228] sm:$0xff]
  %v84 = vld [vmem:[%s1 + $0x230] sm:$0xff]
  %v85 = vld [vmem:[%s1 + $0x238] sm:$0xff]
  %v86 = vld [vmem:[%s1 + $0x240] sm:$0xff]
  %v87 = vld [vmem:[%s1 + $0x248] sm:$0xff]
  %v88 = vld [vmem:[%s1 + $0x250] sm:$0xff]
  %v89 = vld [vmem:[%s1 + $0x258] sm:$0xff]
  %v90 = vld [vmem:[%s1 + $0x260] sm:$0xff]
  %v91 = vld [vmem:[%s1 + $0x268] sm:$0xff]
  %v92 = vld [vmem:[%s1 + $0x270] sm:$0xff]
  %v93 = vld [vmem:[%s1 + $0x278] sm:$0xff]
  %v94 = vld [vmem:[%s1 + $0x280] sm:$0xff]
  %v95 = vld [vmem:[%s1 + $0x288] sm:$0xff]
  %v96 = vld [vmem:[%s1 + $0x290] sm:$0xff]
  %v97 = vld [vmem:[%s1 + $0x298] sm:$0xff]
  %v98 = vld [vmem:[%s1 + $0x2a0] sm:$0xff]
  %v99 = vld [vmem:[%s1 + $0x2a8] sm:$0xff]
  %v100 = vld [vmem:[%s1 + $0x2b0] sm:$0xff]
  %v101 = vld [vmem:[%s1 + $0x2b8] sm:$0xff]
  %v102 = vld [vmem:[%s1 + $0x2c0] sm:$0xff]
  %v103 = vld [vmem:[%s1 + $0x2c8] sm:$0xff]
  %v104 = vld [vmem:[%s1 + $0x2d0] sm:$0xff]
  %v105 = vld [vmem:[%s1 + $0x2d8] sm:$0xff]
  %v106 = vld [vmem:[%s1 + $0x2e0] sm:$0xff]
  %v107 = vld [vmem:[%s1 + $0x2e8] sm:$0xff]
  %v108 = vld [vmem:[%s1 + $0x2f0] sm:$0xff]
  %v109 = vld [vmem:[%s1 + $0x2f8] sm:$0xff]
  %v110 = vld [vmem:[%s1 + $0x300] sm:$0xff]
  %v111 = vld [vmem:[%s1 + $0x308] sm:$0xff]
  %v112 = vld [vmem:[%s1 + $0x310] sm:$0xff]
  %v113 = vld [vmem:[%s1 + $0x318] sm:$0xff]
  %v114 = vld [vmem:[%s1 + $0x320] sm:$0xff]
  %v115 = vld [vmem:[%s1 + $0x328] sm:$0xff]
  %v116 = vld [vmem:[%s1 + $0x330] sm:$0xff]
  %v117 = vld [vmem:[%s1 + $0x338] sm:$0xff]
  %v118 = vld [vmem:[%s1 + $0x340] sm:$0xff]
  %v119 = vld [vmem:[%s1 + $0x348] sm:$0xff]
  %v120 = vld [vmem:[%s1 + $0x350] sm:$0xff]
  %v121 = vld [vmem:[%s1 + $0x358] sm:$0xff]
  %v122 = vld [vmem:[%s1 + $0x360] sm:$0xff]
  %v123 = vld [vmem:[%s1 + $0x368] sm:$0xff]
  %v124 = vld [vmem:[%s1 + $0x370] sm:$0xff]
  %v125 = vld [vmem:[%s1 + $0x378] sm:$0xff]
  %v126 = vld [vmem:[%s1 + $0x380] sm:$0xff]
  %v127 = vld [vmem:[%s1 + $0x388] sm:$0xff]
  %v128 = vld [vmem:[%s1 + $0x390] sm:$0xff]
  %v129 = vld [vmem:[%s1 + $0x398] sm:$0xff]
  %v130 = vld [vmem:[%s1 + $0x3a0] sm:$0xff]
  %v131 = vld [vmem:[%s1 + $0x3a8] sm:$0xff]
  %v132 = vld [vmem:[%s1 + $0x3b0] sm:$0xff]
  %v133 = vld [vmem:[%s1 + $0x3b8] sm:$0xff]
  %v134 = vld [vmem:[%s1 + $0x3c0] sm:$0xff]
  %v135 = vld [vmem:[%s1 + $0x3c8] sm:$0xff]
  %v136 = vld [vmem:[%s1 + $0x3d0] sm:$0xff]
  %v137 = vld [vmem:[%s1 + $0x3d8] sm:$0xff]
  %v138 = vld [vmem:[%s1 + $0x3e0] sm:$0xff]
  %v139 = vld [vmem:[%s1 + $0x3e8] sm:$0xff]
  %v140 = vld [vmem:[%s1 + $0x3f0] sm:$0xff]
  %v141 = vld [vmem:[%s1 + $0x3f8] sm:$0xff]
  %v270 = vunpack.c.l.b16 %v14
  %v271 = vunpack.c.h.b16 %v14
  %v272 = vunpack.c.l.b16 %v15
  %v273 = vunpack.c.h.b16 %v15
  %v274 = vunpack.c.l.b16 %v16
  %v275 = vunpack.c.h.b16 %v16
  %v276 = vunpack.c.l.b16 %v17
  %v277 = vunpack.c.h.b16 %v17
  %v278 = vunpack.c.l.b16 %v18
  %v279 = vunpack.c.h.b16 %v18
  %v280 = vunpack.c.l.b16 %v19
  %v281 = vunpack.c.h.b16 %v19
  %v282 = vunpack.c.l.b16 %v20
  %v283 = vunpack.c.h.b16 %v20
  %v284 = vunpack.c.l.b16 %v21
  %v285 = vunpack.c.h.b16 %v21
  %v286 = vunpack.c.l.b16 %v22
  %v287 = vunpack.c.h.b16 %v22
  %v288 = vunpack.c.l.b16 %v23
  %v289 = vunpack.c.h.b16 %v23
  %v290 = vunpack.c.l.b16 %v24
  %v291 = vunpack.c.h.b16 %v24
  %v292 = vunpack.c.l.b16 %v25
  %v293 = vunpack.c.h.b16 %v25
  %v294 = vunpack.c.l.b16 %v26
  %v295 = vunpack.c.h.b16 %v26
  %v296 = vunpack.c.l.b16 %v27
  %v297 = vunpack.c.h.b16 %v27
  %v298 = vunpack.c.l.b16 %v28
  %v299 = vunpack.c.h.b16 %v28
  %v300 = vunpack.c.l.b16 %v29
  %v301 = vunpack.c.h.b16 %v29
  %v302 = vunpack.c.l.b16 %v30
  %v303 = vunpack.c.h.b16 %v30
  %v304 = vunpack.c.l.b16 %v31
  %v305 = vunpack.c.h.b16 %v31
  %v306 = vunpack.c.l.b16 %v32
  %v307 = vunpack.c.h.b16 %v32
  %v308 = vunpack.c.l.b16 %v33
  %v309 = vunpack.c.h.b16 %v33
  %v310 = vunpack.c.l.b16 %v34
  %v311 = vunpack.c.h.b16 %v34
  %v312 = vunpack.c.l.b16 %v35
  %v313 = vunpack.c.h.b16 %v35
  %v314 = vunpack.c.l.b16 %v36
  %v315 = vunpack.c.h.b16 %v36
  %v316 = vunpack.c.l.b16 %v37
  %v317 = vunpack.c.h.b16 %v37
  %v318 = vunpack.c.l.b16 %v38
  %v319 = vunpack.c.h.b16 %v38
  %v320 = vunpack.c.l.b16 %v39
  %v321 = vunpack.c.h.b16 %v39
  %v322 = vunpack.c.l.b16 %v40
  %v323 = vunpack.c.h.b16 %v40
  %v324 = vunpack.c.l.b16 %v41
  %v325 = vunpack.c.h.b16 %v41
  %v326 = vunpack.c.l.b16 %v42
  %v327 = vunpack.c.h.b16 %v42
  %v328 = vunpack.c.l.b16 %v43
  %v329 = vunpack.c.h.b16 %v43
  %v330 = vunpack.c.l.b16 %v44
  %v331 = vunpack.c.h.b16 %v44
  %v332 = vunpack.c.l.b16 %v45
  %v333 = vunpack.c.h.b16 %v45
  %v334 = vunpack.c.l.b16 %v46
  %v335 = vunpack.c.h.b16 %v46
  %v336 = vunpack.c.l.b16 %v47
  %v337 = vunpack.c.h.b16 %v47
  %v338 = vunpack.c.l.b16 %v48
  %v339 = vunpack.c.h.b16 %v48
  %v340 = vunpack.c.l.b16 %v49
  %v341 = vunpack.c.h.b16 %v49
  %v342 = vunpack.c.l.b16 %v50
  %v343 = vunpack.c.h.b16 %v50
  %v344 = vunpack.c.l.b16 %v51
  %v345 = vunpack.c.h.b16 %v51
  %v346 = vunpack.c.l.b16 %v52
  %v347 = vunpack.c.h.b16 %v52
  %v348 = vunpack.c.l.b16 %v53
  %v349 = vunpack.c.h.b16 %v53
  %v350 = vunpack.c.l.b16 %v54
  %v351 = vunpack.c.h.b16 %v54
  %v352 = vunpack.c.l.b16 %v55
  %v353 = vunpack.c.h.b16 %v55
  %v354 = vunpack.c.l.b16 %v56
  %v355 = vunpack.c.h.b16 %v56
  %v356 = vunpack.c.l.b16 %v57
  %v357 = vunpack.c.h.b16 %v57
  %v358 = vunpack.c.l.b16 %v58
  %v359 = vunpack.c.h.b16 %v58
  %v360 = vunpack.c.l.b16 %v59
  %v361 = vunpack.c.h.b16 %v59
  %v362 = vunpack.c.l.b16 %v60
  %v363 = vunpack.c.h.b16 %v60
  %v364 = vunpack.c.l.b16 %v61
  %v365 = vunpack.c.h.b16 %v61
  %v366 = vunpack.c.l.b16 %v62
  %v367 = vunpack.c.h.b16 %v62
  %v368 = vunpack.c.l.b16 %v63
  %v369 = vunpack.c.h.b16 %v63
  %v370 = vunpack.c.l.b16 %v64
  %v371 = vunpack.c.h.b16 %v64
  %v372 = vunpack.c.l.b16 %v65
  %v373 = vunpack.c.h.b16 %v65
  %v374 = vunpack.c.l.b16 %v66
  %v375 = vunpack.c.h.b16 %v66
  %v376 = vunpack.c.l.b16 %v67
  %v377 = vunpack.c.h.b16 %v67
  %v378 = vunpack.c.l.b16 %v68
  %v379 = vunpack.c.h.b16 %v68
  %v380 = vunpack.c.l.b16 %v69
  %v381 = vunpack.c.h.b16 %v69
  %v382 = vunpack.c.l.b16 %v70
  %v383 = vunpack.c.h.b16 %v70
  %v384 = vunpack.c.l.b16 %v71
  %v385 = vunpack.c.h.b16 %v71
  %v386 = vunpack.c.l.b16 %v72
  %v387 = vunpack.c.h.b16 %v72
  %v388 = vunpack.c.l.b16 %v73
  %v389 = vunpack.c.h.b16 %v73
  %v390 = vunpack.c.l.b16 %v74
  %v391 = vunpack.c.h.b16 %v74
  %v392 = vunpack.c.l.b16 %v75
  %v393 = vunpack.c.h.b16 %v75
  %v394 = vunpack.c.l.b16 %v76
  %v395 = vunpack.c.h.b16 %v76
  %v396 = vunpack.c.l.b16 %v77
  %v397 = vunpack.c.h.b16 %v77
  %v398 = vunpack.c.l.b16 %v78
  %v399 = vunpack.c.h.b16 %v78
  %v400 = vunpack.c.l.b16 %v79
  %v401 = vunpack.c.h.b16 %v79
  %v402 = vunpack.c.l.b16 %v80
  %v403 = vunpack.c.h.b16 %v80
  %v404 = vunpack.c.l.b16 %v81
  %v405 = vunpack.c.h.b16 %v81
  %v406 = vunpack.c.l.b16 %v82
  %v407 = vunpack.c.h.b16 %v82
  %v408 = vunpack.c.l.b16 %v83
  %v409 = vunpack.c.h.b16 %v83
  %v410 = vunpack.c.l.b16 %v84
  %v411 = vunpack.c.h.b16 %v84
  %v412 = vunpack.c.l.b16 %v85
  %v413 = vunpack.c.h.b16 %v85
  %v414 = vunpack.c.l.b16 %v86
  %v415 = vunpack.c.h.b16 %v86
  %v416 = vunpack.c.l.b16 %v87
  %v417 = vunpack.c.h.b16 %v87
  %v418 = vunpack.c.l.b16 %v88
  %v419 = vunpack.c.h.b16 %v88
  %v420 = vunpack.c.l.b16 %v89
  %v421 = vunpack.c.h.b16 %v89
  %v422 = vunpack.c.l.b16 %v90
  %v423 = vunpack.c.h.b16 %v90
  %v424 = vunpack.c.l.b16 %v91
  %v425 = vunpack.c.h.b16 %v91
  %v426 = vunpack.c.l.b16 %v92
  %v427 = vunpack.c.h.b16 %v92
  %v428 = vunpack.c.l.b16 %v93
  %v429 = vunpack.c.h.b16 %v93
  %v430 = vunpack.c.l.b16 %v94
  %v431 = vunpack.c.h.b16 %v94
  %v432 = vunpack.c.l.b16 %v95
  %v433 = vunpack.c.h.b16 %v95
  %v434 = vunpack.c.l.b16 %v96
  %v435 = vunpack.c.h.b16 %v96
  %v436 = vunpack.c.l.b16 %v97
  %v437 = vunpack.c.h.b16 %v97
  %v438 = vunpack.c.l.b16 %v98
  %v439 = vunpack.c.h.b16 %v98
  %v440 = vunpack.c.l.b16 %v99
  %v441 = vunpack.c.h.b16 %v99
  %v442 = vunpack.c.l.b16 %v100
  %v443 = vunpack.c.h.b16 %v100
  %v444 = vunpack.c.l.b16 %v101
  %v445 = vunpack.c.h.b16 %v101
  %v446 = vunpack.c.l.b16 %v102
  %v447 = vunpack.c.h.b16 %v102
  %v448 = vunpack.c.l.b16 %v103
  %v449 = vunpack.c.h.b16 %v103
  %v450 = vunpack.c.l.b16 %v104
  %v451 = vunpack.c.h.b16 %v104
  %v452 = vunpack.c.l.b16 %v105
  %v453 = vunpack.c.h.b16 %v105
  %v454 = vunpack.c.l.b16 %v106
  %v455 = vunpack.c.h.b16 %v106
  %v456 = vunpack.c.l.b16 %v107
  %v457 = vunpack.c.h.b16 %v107
  %v458 = vunpack.c.l.b16 %v108
  %v459 = vunpack.c.h.b16 %v108
  %v460 = vunpack.c.l.b16 %v109
  %v461 = vunpack.c.h.b16 %v109
  %v462 = vunpack.c.l.b16 %v110
  %v463 = vunpack.c.h.b16 %v110
  %v464 = vunpack.c.l.b16 %v111
  %v465 = vunpack.c.h.b16 %v111
  %v466 = vunpack.c.l.b16 %v112
  %v467 = vunpack.c.h.b16 %v112
  %v468 = vunpack.c.l.b16 %v113
  %v469 = vunpack.c.h.b16 %v113
  %v470 = vunpack.c.l.b16 %v114
  %v471 = vunpack.c.h.b16 %v114
  %v472 = vunpack.c.l.b16 %v115
  %v473 = vunpack.c.h.b16 %v115
  %v474 = vunpack.c.l.b16 %v116
  %v475 = vunpack.c.h.b16 %v116
  %v476 = vunpack.c.l.b16 %v117
  %v477 = vunpack.c.h.b16 %v117
  %v478 = vunpack.c.l.b16 %v118
  %v479 = vunpack.c.h.b16 %v118
  %v480 = vunpack.c.l.b16 %v119
  %v481 = vunpack.c.h.b16 %v119
  %v482 = vunpack.c.l.b16 %v120
  %v483 = vunpack.c.h.b16 %v120
  %v484 = vunpack.c.l.b16 %v121
  %v485 = vunpack.c.h.b16 %v121
  %v486 = vunpack.c.l.b16 %v122
  %v487 = vunpack.c.h.b16 %v122
  %v488 = vunpack.c.l.b16 %v123
  %v489 = vunpack.c.h.b16 %v123
  %v490 = vunpack.c.l.b16 %v124
  %v491 = vunpack.c.h.b16 %v124
  %v492 = vunpack.c.l.b16 %v125
  %v493 = vunpack.c.h.b16 %v125
  %v494 = vunpack.c.l.b16 %v126
  %v495 = vunpack.c.h.b16 %v126
  %v496 = vunpack.c.l.b16 %v127
  %v497 = vunpack.c.h.b16 %v127
  %v498 = vunpack.c.l.b16 %v128
  %v499 = vunpack.c.h.b16 %v128
  %v500 = vunpack.c.l.b16 %v129
  %v501 = vunpack.c.h.b16 %v129
  %v502 = vunpack.c.l.b16 %v130
  %v503 = vunpack.c.h.b16 %v130
  %v504 = vunpack.c.l.b16 %v131
  %v505 = vunpack.c.h.b16 %v131
  %v506 = vunpack.c.l.b16 %v132
  %v507 = vunpack.c.h.b16 %v132
  %v508 = vunpack.c.l.b16 %v133
  %v509 = vunpack.c.h.b16 %v133
  %v510 = vunpack.c.l.b16 %v134
  %v511 = vunpack.c.h.b16 %v134
  %v512 = vunpack.c.l.b16 %v135
  %v513 = vunpack.c.h.b16 %v135
  %v514 = vunpack.c.l.b16 %v136
  %v515 = vunpack.c.h.b16 %v136
  %v516 = vunpack.c.l.b16 %v137
  %v517 = vunpack.c.h.b16 %v137
  %v518 = vunpack.c.l.b16 %v138
  %v519 = vunpack.c.h.b16 %v138
  %v520 = vunpack.c.l.b16 %v139
  %v521 = vunpack.c.h.b16 %v139
  %v522 = vunpack.c.l.b16 %v140
  %v523 = vunpack.c.h.b16 %v140
  %v524 = vunpack.c.l.b16 %v141
  %v525 = vunpack.c.h.b16 %v141
  %v526 = vpack.c.b16 %v278, %v270
  %v527 = vpack.c.b16 %v279, %v271
  %v528 = vpack.c.b16 %v280, %v272
  %v529 = vpack.c.b16 %v281, %v273
  %v530 = vpack.c.b16 %v282, %v274
  %v531 = vpack.c.b16 %v283, %v275
  %v532 = vpack.c.b16 %v284, %v276
  %v533 = vpack.c.b16 %v285, %v277
  %v534 = vpack.c.b16 %v294, %v286
  %v535 = vpack.c.b16 %v295, %v287
  %v536 = vpack.c.b16 %v296, %v288
  %v537 = vpack.c.b16 %v297, %v289
  %v538 = vpack.c.b16 %v298, %v290
  %v539 = vpack.c.b16 %v299, %v291
  %v540 = vpack.c.b16 %v300, %v292
  %v541 = vpack.c.b16 %v301, %v293
  %v542 = vpack.c.b16 %v310, %v302
  %v543 = vpack.c.b16 %v311, %v303
  %v544 = vpack.c.b16 %v312, %v304
  %v545 = vpack.c.b16 %v313, %v305
  %v546 = vpack.c.b16 %v314, %v306
  %v547 = vpack.c.b16 %v315, %v307
  %v548 = vpack.c.b16 %v316, %v308
  %v549 = vpack.c.b16 %v317, %v309
  %v550 = vpack.c.b16 %v326, %v318
  %v551 = vpack.c.b16 %v327, %v319
  %v552 = vpack.c.b16 %v328, %v320
  %v553 = vpack.c.b16 %v329, %v321
  %v554 = vpack.c.b16 %v330, %v322
  %v555 = vpack.c.b16 %v331, %v323
  %v556 = vpack.c.b16 %v332, %v324
  %v557 = vpack.c.b16 %v333, %v325
  %v558 = vpack.c.b16 %v342, %v334
  %v559 = vpack.c.b16 %v343, %v335
  %v560 = vpack.c.b16 %v344, %v336
  %v561 = vpack.c.b16 %v345, %v337
  %v562 = vpack.c.b16 %v346, %v338
  %v563 = vpack.c.b16 %v347, %v339
  %v564 = vpack.c.b16 %v348, %v340
  %v565 = vpack.c.b16 %v349, %v341
  %v566 = vpack.c.b16 %v358, %v350
  %v567 = vpack.c.b16 %v359, %v351
  %v568 = vpack.c.b16 %v360, %v352
  %v569 = vpack.c.b16 %v361, %v353
  %v570 = vpack.c.b16 %v362, %v354
  %v571 = vpack.c.b16 %v363, %v355
  %v572 = vpack.c.b16 %v364, %v356
  %v573 = vpack.c.b16 %v365, %v357
  %v574 = vpack.c.b16 %v374, %v366
  %v575 = vpack.c.b16 %v375, %v367
  %v576 = vpack.c.b16 %v376, %v368
  %v577 = vpack.c.b16 %v377, %v369
  %v578 = vpack.c.b16 %v378, %v370
  %v579 = vpack.c.b16 %v379, %v371
  %v580 = vpack.c.b16 %v380, %v372
  %v581 = vpack.c.b16 %v381, %v373
  %v582 = vpack.c.b16 %v390, %v382
  %v583 = vpack.c.b16 %v391, %v383
  %v584 = vpack.c.b16 %v392, %v384
  %v585 = vpack.c.b16 %v393, %v385
  %v586 = vpack.c.b16 %v394, %v386
  %v587 = vpack.c.b16 %v395, %v387
  %v588 = vpack.c.b16 %v396, %v388
  %v589 = vpack.c.b16 %v397, %v389
  %v590 = vpack.c.b16 %v406, %v398
  %v591 = vpack.c.b16 %v407, %v399
  %v592 = vpack.c.b16 %v408, %v400
  %v593 = vpack.c.b16 %v409, %v401
  %v594 = vpack.c.b16 %v410, %v402
  %v595 = vpack.c.b16 %v411, %v403
  %v596 = vpack.c.b16 %v412, %v404
  %v597 = vpack.c.b16 %v413, %v405
  %v598 = vpack.c.b16 %v422, %v414
  %v599 = vpack.c.b16 %v423, %v415
  %v600 = vpack.c.b16 %v424, %v416
  %v601 = vpack.c.b16 %v425, %v417
  %v602 = vpack.c.b16 %v426, %v418
  %v603 = vpack.c.b16 %v427, %v419
  %v604 = vpack.c.b16 %v428, %v420
  %v605 = vpack.c.b16 %v429, %v421
  %v606 = vpack.c.b16 %v438, %v430
  %v607 = vpack.c.b16 %v439, %v431
  %v608 = vpack.c.b16 %v440, %v432
  %v609 = vpack.c.b16 %v441, %v433
  %v610 = vpack.c.b16 %v442, %v434
  %v611 = vpack.c.b16 %v443, %v435
  %v612 = vpack.c.b16 %v444, %v436
  %v613 = vpack.c.b16 %v445, %v437
  %v614 = vpack.c.b16 %v454, %v446
  %v615 = vpack.c.b16 %v455, %v447
  %v616 = vpack.c.b16 %v456, %v448
  %v617 = vpack.c.b16 %v457, %v449
  %v618 = vpack.c.b16 %v458, %v450
  %v619 = vpack.c.b16 %v459, %v451
  %v620 = vpack.c.b16 %v460, %v452
  %v621 = vpack.c.b16 %v461, %v453
  %v622 = vpack.c.b16 %v470, %v462
  %v623 = vpack.c.b16 %v471, %v463
  %v624 = vpack.c.b16 %v472, %v464
  %v625 = vpack.c.b16 %v473, %v465
  %v626 = vpack.c.b16 %v474, %v466
  %v627 = vpack.c.b16 %v475, %v467
  %v628 = vpack.c.b16 %v476, %v468
  %v629 = vpack.c.b16 %v477, %v469
  %v630 = vpack.c.b16 %v486, %v478
  %v631 = vpack.c.b16 %v487, %v479
  %v632 = vpack.c.b16 %v488, %v480
  %v633 = vpack.c.b16 %v489, %v481
  %v634 = vpack.c.b16 %v490, %v482
  %v635 = vpack.c.b16 %v491, %v483
  %v636 = vpack.c.b16 %v492, %v484
  %v637 = vpack.c.b16 %v493, %v485
  %v638 = vpack.c.b16 %v502, %v494
  %v639 = vpack.c.b16 %v503, %v495
  %v640 = vpack.c.b16 %v504, %v496
  %v641 = vpack.c.b16 %v505, %v497
  %v642 = vpack.c.b16 %v506, %v498
  %v643 = vpack.c.b16 %v507, %v499
  %v644 = vpack.c.b16 %v508, %v500
  %v645 = vpack.c.b16 %v509, %v501
  %v646 = vpack.c.b16 %v518, %v510
  %v647 = vpack.c.b16 %v519, %v511
  %v648 = vpack.c.b16 %v520, %v512
  %v649 = vpack.c.b16 %v521, %v513
  %v650 = vpack.c.b16 %v522, %v514
  %v651 = vpack.c.b16 %v523, %v515
  %v652 = vpack.c.b16 %v524, %v516
  %v653 = vpack.c.b16 %v525, %v517
  %782 = vmatprep.subr.bf16.mxu0 %v527
  %783 = vmatpush1.bf16.msra.mxu0 %v526
  %784 = vmatprep.subr.bf16.mxu0 %v535
  %785 = vmatpush1.bf16.msra.mxu0 %v534
  %786 = vmatprep.subr.bf16.mxu0 %v543
  %787 = vmatpush1.bf16.msra.mxu0 %v542
  %788 = vmatprep.subr.bf16.mxu0 %v551
  %789 = vmatpush1.bf16.msra.mxu0 %v550
  %790 = vmatprep.subr.bf16.mxu0 %v559
  %791 = vmatpush1.bf16.msra.mxu0 %v558
  %792 = vmatprep.subr.bf16.mxu0 %v567
  %793 = vmatpush1.bf16.msra.mxu0 %v566
  %794 = vmatprep.subr.bf16.mxu0 %v575
  %795 = vmatpush1.bf16.msra.mxu0 %v574
  %796 = vmatprep.subr.bf16.mxu0 %v583
  %797 = vmatpush1.bf16.msra.mxu0 %v582
  %798 = vmatprep.subr.bf16.mxu0 %v591
  %799 = vmatpush1.bf16.msra.mxu0 %v590
  %800 = vmatprep.subr.bf16.mxu0 %v599
  %801 = vmatpush1.bf16.msra.mxu0 %v598
  %802 = vmatprep.subr.bf16.mxu0 %v607
  %803 = vmatpush1.bf16.msra.mxu0 %v606
  %804 = vmatprep.subr.bf16.mxu0 %v615
  %805 = vmatpush1.bf16.msra.mxu0 %v614
  %806 = vmatprep.subr.bf16.mxu0 %v623
  %807 = vmatpush1.bf16.msra.mxu0 %v622
  %808 = vmatprep.subr.bf16.mxu0 %v631
  %809 = vmatpush1.bf16.msra.mxu0 %v630
  %810 = vmatprep.subr.bf16.mxu0 %v639
  %811 = vmatpush1.bf16.msra.mxu0 %v638
  %812 = vmatprep.subr.bf16.mxu0 %v647
  %813 = vmatpush1.bf16.msra.mxu0 %v646
  %814 = vmatprep.mubr.bf16.mxu0 0
  %815 = vmatmul.mubr.bf16.gmra.mrb[0].mxu0 0
  %v816 = vpop.f32.mrb[0].mxu0
  %v817 = vadd.f32 0.0, %v816
  %v818 = vpop.f32.mrb[0].mxu0
  %v819 = vadd.f32 0.0, %v818
  %v820 = vpop.f32.mrb[0].mxu0
  %v821 = vpop.f32.mrb[0].mxu0
  %822 = vdwg.mxu0
  %823 = vmatprep.subr.bf16.mxu0 %v529
  %824 = vmatpush1.bf16.msra.mxu0 %v528
  %825 = vmatprep.subr.bf16.mxu0 %v537
  %826 = vmatpush1.bf16.msra.mxu0 %v536
  %827 = vmatprep.subr.bf16.mxu0 %v545
  %828 = vmatpush1.bf16.msra.mxu0 %v544
  %829 = vmatprep.subr.bf16.mxu0 %v553
  %830 = vmatpush1.bf16.msra.mxu0 %v552
  %831 = vmatprep.subr.bf16.mxu0 %v561
  %832 = vmatpush1.bf16.msra.mxu0 %v560
  %833 = vmatprep.subr.bf16.mxu0 %v569
  %834 = vmatpush1.bf16.msra.mxu0 %v568
  %835 = vmatprep.subr.bf16.mxu0 %v577
  %836 = vmatpush1.bf16.msra.mxu0 %v576
  %837 = vmatprep.subr.bf16.mxu0 %v585
  %838 = vmatpush1.bf16.msra.mxu0 %v584
  %839 = vmatprep.subr.bf16.mxu0 %v593
  %840 = vmatpush1.bf16.msra.mxu0 %v592
  %841 = vmatprep.subr.bf16.mxu0 %v601
  %842 = vmatpush1.bf16.msra.mxu0 %v600
  %843 = vmatprep.subr.bf16.mxu0 %v609
  %844 = vmatpush1.bf16.msra.mxu0 %v608
  %845 = vmatprep.subr.bf16.mxu0 %v617
  %846 = vmatpush1.bf16.msra.mxu0 %v616
  %847 = vmatprep.subr.bf16.mxu0 %v625
  %848 = vmatpush1.bf16.msra.mxu0 %v624
  %849 = vmatprep.subr.bf16.mxu0 %v633
  %850 = vmatpush1.bf16.msra.mxu0 %v632
  %851 = vmatprep.subr.bf16.mxu0 %v641
  %852 = vmatpush1.bf16.msra.mxu0 %v640
  %853 = vmatprep.subr.bf16.mxu0 %v649
  %854 = vmatpush1.bf16.msra.mxu0 %v648
  %855 = vmatprep.mubr.bf16.mxu0 0
  %856 = vmatmul.mubr.bf16.gmra.mrb[0].mxu0 0
  %v857 = vpop.f32.mrb[0].mxu0
  %v858 = vadd.f32 0.0, %v857
  %v859 = vpop.f32.mrb[0].mxu0
  %v860 = vadd.f32 0.0, %v859
  %v861 = vpop.f32.mrb[0].mxu0
  %v862 = vpop.f32.mrb[0].mxu0
  %863 = vdwg.mxu0
  %864 = vmatprep.subr.bf16.mxu0 %v531
  %865 = vmatpush1.bf16.msra.mxu0 %v530
  %866 = vmatprep.subr.bf16.mxu0 %v539
  %867 = vmatpush1.bf16.msra.mxu0 %v538
  %868 = vmatprep.subr.bf16.mxu0 %v547
  %869 = vmatpush1.bf16.msra.mxu0 %v546
  %870 = vmatprep.subr.bf16.mxu0 %v555
  %871 = vmatpush1.bf16.msra.mxu0 %v554
  %872 = vmatprep.subr.bf16.mxu0 %v563
  %873 = vmatpush1.bf16.msra.mxu0 %v562
  %874 = vmatprep.subr.bf16.mxu0 %v571
  %875 = vmatpush1.bf16.msra.mxu0 %v570
  %876 = vmatprep.subr.bf16.mxu0 %v579
  %877 = vmatpush1.bf16.msra.mxu0 %v578
  %878 = vmatprep.subr.bf16.mxu0 %v587
  %879 = vmatpush1.bf16.msra.mxu0 %v586
  %880 = vmatprep.subr.bf16.mxu0 %v595
  %881 = vmatpush1.bf16.msra.mxu0 %v594
  %882 = vmatprep.subr.bf16.mxu0 %v603
  %883 = vmatpush1.bf16.msra.mxu0 %v602
  %884 = vmatprep.subr.bf16.mxu0 %v611
  %885 = vmatpush1.bf16.msra.mxu0 %v610
  %886 = vmatprep.subr.bf16.mxu0 %v619
  %887 = vmatpush1.bf16.msra.mxu0 %v618
  %888 = vmatprep.subr.bf16.mxu0 %v627
  %889 = vmatpush1.bf16.msra.mxu0 %v626
  %890 = vmatprep.subr.bf16.mxu0 %v635
  %891 = vmatpush1.bf16.msra.mxu0 %v634
  %892 = vmatprep.subr.bf16.mxu0 %v643
  %893 = vmatpush1.bf16.msra.mxu0 %v642
  %894 = vmatprep.subr.bf16.mxu0 %v651
  %895 = vmatpush1.bf16.msra.mxu0 %v650
  %896 = vmatprep.mubr.bf16.mxu0 0
  %897 = vmatmul.mubr.bf16.gmra.mrb[0].mxu0 0
  %v898 = vpop.f32.mrb[0].mxu0
  %v899 = vadd.f32 0.0, %v898
  %v900 = vpop.f32.mrb[0].mxu0
  %v901 = vadd.f32 0.0, %v900
  %v902 = vpop.f32.mrb[0].mxu0
  %v903 = vpop.f32.mrb[0].mxu0
  %904 = vdwg.mxu0
  %905 = vmatprep.subr.bf16.mxu0 %v533
  %906 = vmatpush1.bf16.msra.mxu0 %v532
  %907 = vmatprep.subr.bf16.mxu0 %v541
  %908 = vmatpush1.bf16.msra.mxu0 %v540
  %909 = vmatprep.subr.bf16.mxu0 %v549
  %910 = vmatpush1.bf16.msra.mxu0 %v548
  %911 = vmatprep.subr.bf16.mxu0 %v557
  %912 = vmatpush1.bf16.msra.mxu0 %v556
  %913 = vmatprep.subr.bf16.mxu0 %v565
  %914 = vmatpush1.bf16.msra.mxu0 %v564
  %915 = vmatprep.subr.bf16.mxu0 %v573
  %916 = vmatpush1.bf16.msra.mxu0 %v572
  %917 = vmatprep.subr.bf16.mxu0 %v581
  %918 = vmatpush1.bf16.msra.mxu0 %v580
  %919 = vmatprep.subr.bf16.mxu0 %v589
  %920 = vmatpush1.bf16.msra.mxu0 %v588
  %921 = vmatprep.subr.bf16.mxu0 %v597
  %922 = vmatpush1.bf16.msra.mxu0 %v596
  %923 = vmatprep.subr.bf16.mxu0 %v605
  %924 = vmatpush1.bf16.msra.mxu0 %v604
  %925 = vmatprep.subr.bf16.mxu0 %v613
  %926 = vmatpush1.bf16.msra.mxu0 %v612
  %927 = vmatprep.subr.bf16.mxu0 %v621
  %928 = vmatpush1.bf16.msra.mxu0 %v620
  %929 = vmatprep.subr.bf16.mxu0 %v629
  %930 = vmatpush1.bf16.msra.mxu0 %v628
  %931 = vmatprep.subr.bf16.mxu0 %v637
  %932 = vmatpush1.bf16.msra.mxu0 %v636
  %933 = vmatprep.subr.bf16.mxu0 %v645
  %934 = vmatpush1.bf16.msra.mxu0 %v644
  %935 = vmatprep.subr.bf16.mxu0 %v653
  %936 = vmatpush1.bf16.msra.mxu0 %v652
  %937 = vmatprep.mubr.bf16.mxu0 0
  %938 = vmatmul.mubr.bf16.gmra.mrb[0].mxu0 0
  %v939 = vpop.f32.mrb[0].mxu0
  %v940 = vadd.f32 0.0, %v939
  %v941 = vpop.f32.mrb[0].mxu0
  %v942 = vadd.f32 0.0, %v941
  %v943 = vpop.f32.mrb[0].mxu0
  %v944 = vpop.f32.mrb[0].mxu0
  %945 = vdwg.mxu0
  %v954 = vcombine.low %v817, %v819
  %v955 = vcombine.low %v858, %v860
  %v957 = vunpack.c.l.s4 1983009808
  %v958 = vunpack.c.0.s8 %v957
  %v959 = vlaneseq
  %v960 = vshrl.u32 %v959, 7
  %v961 = vsub.s32 %v958, %v960
  %v962 = vrot.slane %v954, %v961
  %v964 = vunpack.c.l.s4 1983009808
  %v965 = vunpack.c.0.s8 %v964
  %v966 = vlaneseq
  %v967 = vshrl.u32 %v966, 7
  %v968 = vsub.s32 %v965, %v967
  %v969 = vrot.slane %v955, %v968
  %v970 = vcombine.low %v962, %v969
  %v971 = vcombine.low %v899, %v901
  %v972 = vcombine.low %v940, %v942
  %v974 = vunpack.c.l.s4 1983009808
  %v975 = vunpack.c.0.s8 %v974
  %v976 = vlaneseq
  %v977 = vshrl.u32 %v976, 7
  %v978 = vsub.s32 %v975, %v977
  %v979 = vrot.slane %v971, %v978
  %v981 = vunpack.c.l.s4 1983009808
  %v982 = vunpack.c.0.s8 %v981
  %v983 = vlaneseq
  %v984 = vshrl.u32 %v983, 7
  %v985 = vsub.s32 %v982, %v984
  %v986 = vrot.slane %v972, %v985
  %v987 = vcombine.low %v979, %v986
  %v990 = vadd.f32 %v12, %v970
  %v991 = vadd.f32 %v13, %v987
  %v992 = vxor.u32 %v990, 2147483648
  %v993 = vmul.f32 %v992, 1.442695
  %v994 = vpow.pop %v993
  %v995 = vadd.f32 %v994, 1.0
  %v996 = vrcp.pop %v995
  %v997 = vmul.f32 1.0, %v996
  %v999 = vrot.slane %v990, 4
  %v1001 = vxor.u32 %v999, 2147483648
  %v1002 = vmul.f32 %v1001, 1.442695
  %v1003 = vpow.pop %v1002
  %v1004 = vadd.f32 %v1003, 1.0
  %v1005 = vrcp.pop %v1004
  %v1006 = vmul.f32 1.0, %v1005
  %v1007 = vtanh.pop %v991
  %v1009 = vrot.slane %v991, 4
  %v1011 = vxor.u32 %v1009, 2147483648
  %v1012 = vmul.f32 %v1011, 1.442695
  %v1013 = vpow.pop %v1012
  %v1014 = vadd.f32 %v1013, 1.0
  %v1015 = vrcp.pop %v1014
  %v1016 = vmul.f32 1.0, %v1015
  %v1017 = vmul.f32 %v1006, 0.0
  %v1018 = vmul.f32 %v997, %v1007
  %v1019 = vadd.f32 %v1017, %v1018
  %v1020 = vtanh.pop %v1019
  %v1021 = vmul.f32 %v1016, %v1020
  %v1024 = vunpack.c.l.s4 1983009808
  %v1025 = vunpack.c.0.s8 %v1024
  %v1026 = vlaneseq
  %v1027 = vshrl.u32 %v1026, 7
  %v1028 = vsub.s32 %v1025, %v1027
  %v1029 = vrot.slane %v1021, %v1028
  %v1030 = vcombine.high %v1029, %v1029
  %v1033 = vpack.c.bf16 %v1029, %v1029
  %v1034 = vpack.c.bf16 %v1030, %v1030
  %v1037 = vcombine.low %v1033, %v1034
  %v1039 = vunpack.c.l.s4 1966171168
  %v1040 = vunpack.c.0.s8 %v1039
  %v1041 = vlaneseq
  %v1042 = vshrl.u32 %v1041, 7
  %v1043 = vsub.s32 %v1040, %v1042
  %v1044 = vrot.slane %v1037, %v1043
  %v1046 = vunpack.c.l.s4 1966171168
  %v1047 = vunpack.c.0.s8 %v1046
  %v1048 = vlaneseq
  %v1049 = vshrl.u32 %v1048, 7
  %v1050 = vsub.s32 %v1047, %v1049
  %v1051 = vrot.slane %v1044, %v1050
  %1053 = vst [vmem:[%s2] sm:$0x3] %v1051
  %s1054 = scalar_lea.vmem %s0, 16
  %v1055 = vld [vmem:[%s1054] sm:$0xff]
  %v1056 = vld [vmem:[%s1054 + $0x8] sm:$0xff]
  %v1057 = vld [vmem:[%s1] sm:$0xff]
  %v1058 = vld [vmem:[%s1 + $0x8] sm:$0xff]
  %v1059 = vld [vmem:[%s1 + $0x10] sm:$0xff]
  %v1060 = vld [vmem:[%s1 + $0x18] sm:$0xff]
  %v1061 = vld [vmem:[%s1 + $0x20] sm:$0xff]
  %v1062 = vld [vmem:[%s1 + $0x28] sm:$0xff]
  %v1063 = vld [vmem:[%s1 + $0x30] sm:$0xff]
  %v1064 = vld [vmem:[%s1 + $0x38] sm:$0xff]
  %v1065 = vld [vmem:[%s1 + $0x40] sm:$0xff]
  %v1066 = vld [vmem:[%s1 + $0x48] sm:$0xff]
  %v1067 = vld [vmem:[%s1 + $0x50] sm:$0xff]
  %v1068 = vld [vmem:[%s1 + $0x58] sm:$0xff]
  %v1069 = vld [vmem:[%s1 + $0x60] sm:$0xff]
  %v1070 = vld [vmem:[%s1 + $0x68] sm:$0xff]
  %v1071 = vld [vmem:[%s1 + $0x70] sm:$0xff]
  %v1072 = vld [vmem:[%s1 + $0x78] sm:$0xff]
  %v1073 = vld [vmem:[%s1 + $0x80] sm:$0xff]
  %v1074 = vld [vmem:[%s1 + $0x88] sm:$0xff]
  %v1075 = vld [vmem:[%s1 + $0x90] sm:$0xff]
  %v1076 = vld [vmem:[%s1 + $0x98] sm:$0xff]
  %v1077 = vld [vmem:[%s1 + $0xa0] sm:$0xff]
  %v1078 = vld [vmem:[%s1 + $0xa8] sm:$0xff]
  %v1079 = vld [vmem:[%s1 + $0xb0] sm:$0xff]
  %v1080 = vld [vmem:[%s1 + $0xb8] sm:$0xff]
  %v1081 = vld [vmem:[%s1 + $0xc0] sm:$0xff]
  %v1082 = vld [vmem:[%s1 + $0xc8] sm:$0xff]
  %v1083 = vld [vmem:[%s1 + $0xd0] sm:$0xff]
  %v1084 = vld [vmem:[%s1 + $0xd8] sm:$0xff]
  %v1085 = vld [vmem:[%s1 + $0xe0] sm:$0xff]
  %v1086 = vld [vmem:[%s1 + $0xe8] sm:$0xff]
  %v1087 = vld [vmem:[%s1 + $0xf0] sm:$0xff]
  %v1088 = vld [vmem:[%s1 + $0xf8] sm:$0xff]
  %v1089 = vld [vmem:[%s1 + $0x100] sm:$0xff]
  %v1090 = vld [vmem:[%s1 + $0x108] sm:$0xff]
  %v1091 = vld [vmem:[%s1 + $0x110] sm:$0xff]
  %v1092 = vld [vmem:[%s1 + $0x118] sm:$0xff]
  %v1093 = vld [vmem:[%s1 + $0x120] sm:$0xff]
  %v1094 = vld [vmem:[%s1 + $0x128] sm:$0xff]
  %v1095 = vld [vmem:[%s1 + $0x130] sm:$0xff]
  %v1096 = vld [vmem:[%s1 + $0x138] sm:$0xff]
  %v1097 = vld [vmem:[%s1 + $0x140] sm:$0xff]
  %v1098 = vld [vmem:[%s1 + $0x148] sm:$0xff]
  %v1099 = vld [vmem:[%s1 + $0x150] sm:$0xff]
  %v1100 = vld [vmem:[%s1 + $0x158] sm:$0xff]
  %v1101 = vld [vmem:[%s1 + $0x160] sm:$0xff]
  %v1102 = vld [vmem:[%s1 + $0x168] sm:$0xff]
  %v1103 = vld [vmem:[%s1 + $0x170] sm:$0xff]
  %v1104 = vld [vmem:[%s1 + $0x178] sm:$0xff]
  %v1105 = vld [vmem:[%s1 + $0x180] sm:$0xff]
  %v1106 = vld [vmem:[%s1 + $0x188] sm:$0xff]
  %v1107 = vld [vmem:[%s1 + $0x190] sm:$0xff]
  %v1108 = vld [vmem:[%s1 + $0x198] sm:$0xff]
  %v1109 = vld [vmem:[%s1 + $0x1a0] sm:$0xff]
  %v1110 = vld [vmem:[%s1 + $0x1a8] sm:$0xff]
  %v1111 = vld [vmem:[%s1 + $0x1b0] sm:$0xff]
  %v1112 = vld [vmem:[%s1 + $0x1b8] sm:$0xff]
  %v1113 = vld [vmem:[%s1 + $0x1c0] sm:$0xff]
  %v1114 = vld [vmem:[%s1 + $0x1c8] sm:$0xff]
  %v1115 = vld [vmem:[%s1 + $0x1d0] sm:$0xff]
  %v1116 = vld [vmem:[%s1 + $0x1d8] sm:$0xff]
  %v1117 = vld [vmem:[%s1 + $0x1e0] sm:$0xff]
  %v1118 = vld [vmem:[%s1 + $0x1e8] sm:$0xff]
  %v1119 = vld [vmem:[%s1 + $0x1f0] sm:$0xff]
  %v1120 = vld [vmem:[%s1 + $0x1f8] sm:$0xff]
  %v1121 = vld [vmem:[%s1 + $0x200] sm:$0xff]
  %v1122 = vld [vmem:[%s1 + $0x208] sm:$0xff]
  %v1123 = vld [vmem:[%s1 + $0x210] sm:$0xff]
  %v1124 = vld [vmem:[%s1 + $0x218] sm:$0xff]
  %v1125 = vld [vmem:[%s1 + $0x220] sm:$0xff]
  %v1126 = vld [vmem:[%s1 + $0x228] sm:$0xff]
  %v1127 = vld [vmem:[%s1 + $0x230] sm:$0xff]
  %v1128 = vld [vmem:[%s1 + $0x238] sm:$0xff]
  %v1129 = vld [vmem:[%s1 + $0x240] sm:$0xff]
  %v1130 = vld [vmem:[%s1 + $0x248] sm:$0xff]
  %v1131 = vld [vmem:[%s1 + $0x250] sm:$0xff]
  %v1132 = vld [vmem:[%s1 + $0x258] sm:$0xff]
  %v1133 = vld [vmem:[%s1 + $0x260] sm:$0xff]
  %v1134 = vld [vmem:[%s1 + $0x268] sm:$0xff]
  %v1135 = vld [vmem:[%s1 + $0x270] sm:$0xff]
  %v1136 = vld [vmem:[%s1 + $0x278] sm:$0xff]
  %v1137 = vld [vmem:[%s1 + $0x280] sm:$0xff]
  %v1138 = vld [vmem:[%s1 + $0x288] sm:$0xff]
  %v1139 = vld [vmem:[%s1 + $0x290] sm:$0xff]
  %v1140 = vld [vmem:[%s1 + $0x298] sm:$0xff]
  %v1141 = vld [vmem:[%s1 + $0x2a0] sm:$0xff]
  %v1142 = vld [vmem:[%s1 + $0x2a8] sm:$0xff]
  %v1143 = vld [vmem:[%s1 + $0x2b0] sm:$0xff]
  %v1144 = vld [vmem:[%s1 + $0x2b8] sm:$0xff]
  %v1145 = vld [vmem:[%s1 + $0x2c0] sm:$0xff]
  %v1146 = vld [vmem:[%s1 + $0x2c8] sm:$0xff]
  %v1147 = vld [vmem:[%s1 + $0x2d0] sm:$0xff]
  %v1148 = vld [vmem:[%s1 + $0x2d8] sm:$0xff]
  %v1149 = vld [vmem:[%s1 + $0x2e0] sm:$0xff]
  %v1150 = vld [vmem:[%s1 + $0x2e8] sm:$0xff]
  %v1151 = vld [vmem:[%s1 + $0x2f0] sm:$0xff]
  %v1152 = vld [vmem:[%s1 + $0x2f8] sm:$0xff]
  %v1153 = vld [vmem:[%s1 + $0x300] sm:$0xff]
  %v1154 = vld [vmem:[%s1 + $0x308] sm:$0xff]
  %v1155 = vld [vmem:[%s1 + $0x310] sm:$0xff]
  %v1156 = vld [vmem:[%s1 + $0x318] sm:$0xff]
  %v1157 = vld [vmem:[%s1 + $0x320] sm:$0xff]
  %v1158 = vld [vmem:[%s1 + $0x328] sm:$0xff]
  %v1159 = vld [vmem:[%s1 + $0x330] sm:$0xff]
  %v1160 = vld [vmem:[%s1 + $0x338] sm:$0xff]
  %v1161 = vld [vmem:[%s1 + $0x340] sm:$0xff]
  %v1162 = vld [vmem:[%s1 + $0x348] sm:$0xff]
  %v1163 = vld [vmem:[%s1 + $0x350] sm:$0xff]
  %v1164 = vld [vmem:[%s1 + $0x358] sm:$0xff]
  %v1165 = vld [vmem:[%s1 + $0x360] sm:$0xff]
  %v1166 = vld [vmem:[%s1 + $0x368] sm:$0xff]
  %v1167 = vld [vmem:[%s1 + $0x370] sm:$0xff]
  %v1168 = vld [vmem:[%s1 + $0x378] sm:$0xff]
  %v1169 = vld [vmem:[%s1 + $0x380] sm:$0xff]
  %v1170 = vld [vmem:[%s1 + $0x388] sm:$0xff]
  %v1171 = vld [vmem:[%s1 + $0x390] sm:$0xff]
  %v1172 = vld [vmem:[%s1 + $0x398] sm:$0xff]
  %v1173 = vld [vmem:[%s1 + $0x3a0] sm:$0xff]
  %v1174 = vld [vmem:[%s1 + $0x3a8] sm:$0xff]
  %v1175 = vld [vmem:[%s1 + $0x3b0] sm:$0xff]
  %v1176 = vld [vmem:[%s1 + $0x3b8] sm:$0xff]
  %v1177 = vld [vmem:[%s1 + $0x3c0] sm:$0xff]
  %v1178 = vld [vmem:[%s1 + $0x3c8] sm:$0xff]
  %v1179 = vld [vmem:[%s1 + $0x3d0] sm:$0xff]
  %v1180 = vld [vmem:[%s1 + $0x3d8] sm:$0xff]
  %v1181 = vld [vmem:[%s1 + $0x3e0] sm:$0xff]
  %v1182 = vld [vmem:[%s1 + $0x3e8] sm:$0xff]
  %v1183 = vld [vmem:[%s1 + $0x3f0] sm:$0xff]
  %v1184 = vld [vmem:[%s1 + $0x3f8] sm:$0xff]
  %v1313 = vunpack.c.l.b16 %v1057
  %v1314 = vunpack.c.h.b16 %v1057
  %v1315 = vunpack.c.l.b16 %v1058
  %v1316 = vunpack.c.h.b16 %v1058
  %v1317 = vunpack.c.l.b16 %v1059
  %v1318 = vunpack.c.h.b16 %v1059
  %v1319 = vunpack.c.l.b16 %v1060
  %v1320 = vunpack.c.h.b16 %v1060
  %v1321 = vunpack.c.l.b16 %v1061
  %v1322 = vunpack.c.h.b16 %v1061
  %v1323 = vunpack.c.l.b16 %v1062
  %v1324 = vunpack.c.h.b16 %v1062
  %v1325 = vunpack.c.l.b16 %v1063
  %v1326 = vunpack.c.h.b16 %v1063
  %v1327 = vunpack.c.l.b16 %v1064
  %v1328 = vunpack.c.h.b16 %v1064
  %v1329 = vunpack.c.l.b16 %v1065
  %v1330 = vunpack.c.h.b16 %v1065
  %v1331 = vunpack.c.l.b16 %v1066
  %v1332 = vunpack.c.h.b16 %v1066
  %v1333 = vunpack.c.l.b16 %v1067
  %v1334 = vunpack.c.h.b16 %v1067
  %v1335 = vunpack.c.l.b16 %v1068
  %v1336 = vunpack.c.h.b16 %v1068
  %v1337 = vunpack.c.l.b16 %v1069
  %v1338 = vunpack.c.h.b16 %v1069
  %v1339 = vunpack.c.l.b16 %v1070
  %v1340 = vunpack.c.h.b16 %v1070
  %v1341 = vunpack.c.l.b16 %v1071
  %v1342 = vunpack.c.h.b16 %v1071
  %v1343 = vunpack.c.l.b16 %v1072
  %v1344 = vunpack.c.h.b16 %v1072
  %v1345 = vunpack.c.l.b16 %v1073
  %v1346 = vunpack.c.h.b16 %v1073
  %v1347 = vunpack.c.l.b16 %v1074
  %v1348 = vunpack.c.h.b16 %v1074
  %v1349 = vunpack.c.l.b16 %v1075
  %v1350 = vunpack.c.h.b16 %v1075
  %v1351 = vunpack.c.l.b16 %v1076
  %v1352 = vunpack.c.h.b16 %v1076
  %v1353 = vunpack.c.l.b16 %v1077
  %v1354 = vunpack.c.h.b16 %v1077
  %v1355 = vunpack.c.l.b16 %v1078
  %v1356 = vunpack.c.h.b16 %v1078
  %v1357 = vunpack.c.l.b16 %v1079
  %v1358 = vunpack.c.h.b16 %v1079
  %v1359 = vunpack.c.l.b16 %v1080
  %v1360 = vunpack.c.h.b16 %v1080
  %v1361 = vunpack.c.l.b16 %v1081
  %v1362 = vunpack.c.h.b16 %v1081
  %v1363 = vunpack.c.l.b16 %v1082
  %v1364 = vunpack.c.h.b16 %v1082
  %v1365 = vunpack.c.l.b16 %v1083
  %v1366 = vunpack.c.h.b16 %v1083
  %v1367 = vunpack.c.l.b16 %v1084
  %v1368 = vunpack.c.h.b16 %v1084
  %v1369 = vunpack.c.l.b16 %v1085
  %v1370 = vunpack.c.h.b16 %v1085
  %v1371 = vunpack.c.l.b16 %v1086
  %v1372 = vunpack.c.h.b16 %v1086
  %v1373 = vunpack.c.l.b16 %v1087
  %v1374 = vunpack.c.h.b16 %v1087
  %v1375 = vunpack.c.l.b16 %v1088
  %v1376 = vunpack.c.h.b16 %v1088
  %v1377 = vunpack.c.l.b16 %v1089
  %v1378 = vunpack.c.h.b16 %v1089
  %v1379 = vunpack.c.l.b16 %v1090
  %v1380 = vunpack.c.h.b16 %v1090
  %v1381 = vunpack.c.l.b16 %v1091
  %v1382 = vunpack.c.h.b16 %v1091
  %v1383 = vunpack.c.l.b16 %v1092
  %v1384 = vunpack.c.h.b16 %v1092
  %v1385 = vunpack.c.l.b16 %v1093
  %v1386 = vunpack.c.h.b16 %v1093
  %v1387 = vunpack.c.l.b16 %v1094
  %v1388 = vunpack.c.h.b16 %v1094
  %v1389 = vunpack.c.l.b16 %v1095
  %v1390 = vunpack.c.h.b16 %v1095
  %v1391 = vunpack.c.l.b16 %v1096
  %v1392 = vunpack.c.h.b16 %v1096
  %v1393 = vunpack.c.l.b16 %v1097
  %v1394 = vunpack.c.h.b16 %v1097
  %v1395 = vunpack.c.l.b16 %v1098
  %v1396 = vunpack.c.h.b16 %v1098
  %v1397 = vunpack.c.l.b16 %v1099
  %v1398 = vunpack.c.h.b16 %v1099
  %v1399 = vunpack.c.l.b16 %v1100
  %v1400 = vunpack.c.h.b16 %v1100
  %v1401 = vunpack.c.l.b16 %v1101
  %v1402 = vunpack.c.h.b16 %v1101
  %v1403 = vunpack.c.l.b16 %v1102
  %v1404 = vunpack.c.h.b16 %v1102
  %v1405 = vunpack.c.l.b16 %v1103
  %v1406 = vunpack.c.h.b16 %v1103
  %v1407 = vunpack.c.l.b16 %v1104
  %v1408 = vunpack.c.h.b16 %v1104
  %v1409 = vunpack.c.l.b16 %v1105
  %v1410 = vunpack.c.h.b16 %v1105
  %v1411 = vunpack.c.l.b16 %v1106
  %v1412 = vunpack.c.h.b16 %v1106
  %v1413 = vunpack.c.l.b16 %v1107
  %v1414 = vunpack.c.h.b16 %v1107
  %v1415 = vunpack.c.l.b16 %v1108
  %v1416 = vunpack.c.h.b16 %v1108
  %v1417 = vunpack.c.l.b16 %v1109
  %v1418 = vunpack.c.h.b16 %v1109
  %v1419 = vunpack.c.l.b16 %v1110
  %v1420 = vunpack.c.h.b16 %v1110
  %v1421 = vunpack.c.l.b16 %v1111
  %v1422 = vunpack.c.h.b16 %v1111
  %v1423 = vunpack.c.l.b16 %v1112
  %v1424 = vunpack.c.h.b16 %v1112
  %v1425 = vunpack.c.l.b16 %v1113
  %v1426 = vunpack.c.h.b16 %v1113
  %v1427 = vunpack.c.l.b16 %v1114
  %v1428 = vunpack.c.h.b16 %v1114
  %v1429 = vunpack.c.l.b16 %v1115
  %v1430 = vunpack.c.h.b16 %v1115
  %v1431 = vunpack.c.l.b16 %v1116
  %v1432 = vunpack.c.h.b16 %v1116
  %v1433 = vunpack.c.l.b16 %v1117
  %v1434 = vunpack.c.h.b16 %v1117
  %v1435 = vunpack.c.l.b16 %v1118
  %v1436 = vunpack.c.h.b16 %v1118
  %v1437 = vunpack.c.l.b16 %v1119
  %v1438 = vunpack.c.h.b16 %v1119
  %v1439 = vunpack.c.l.b16 %v1120
  %v1440 = vunpack.c.h.b16 %v1120
  %v1441 = vunpack.c.l.b16 %v1121
  %v1442 = vunpack.c.h.b16 %v1121
  %v1443 = vunpack.c.l.b16 %v1122
  %v1444 = vunpack.c.h.b16 %v1122
  %v1445 = vunpack.c.l.b16 %v1123
  %v1446 = vunpack.c.h.b16 %v1123
  %v1447 = vunpack.c.l.b16 %v1124
  %v1448 = vunpack.c.h.b16 %v1124
  %v1449 = vunpack.c.l.b16 %v1125
  %v1450 = vunpack.c.h.b16 %v1125
  %v1451 = vunpack.c.l.b16 %v1126
  %v1452 = vunpack.c.h.b16 %v1126
  %v1453 = vunpack.c.l.b16 %v1127
  %v1454 = vunpack.c.h.b16 %v1127
  %v1455 = vunpack.c.l.b16 %v1128
  %v1456 = vunpack.c.h.b16 %v1128
  %v1457 = vunpack.c.l.b16 %v1129
  %v1458 = vunpack.c.h.b16 %v1129
  %v1459 = vunpack.c.l.b16 %v1130
  %v1460 = vunpack.c.h.b16 %v1130
  %v1461 = vunpack.c.l.b16 %v1131
  %v1462 = vunpack.c.h.b16 %v1131
  %v1463 = vunpack.c.l.b16 %v1132
  %v1464 = vunpack.c.h.b16 %v1132
  %v1465 = vunpack.c.l.b16 %v1133
  %v1466 = vunpack.c.h.b16 %v1133
  %v1467 = vunpack.c.l.b16 %v1134
  %v1468 = vunpack.c.h.b16 %v1134
  %v1469 = vunpack.c.l.b16 %v1135
  %v1470 = vunpack.c.h.b16 %v1135
  %v1471 = vunpack.c.l.b16 %v1136
  %v1472 = vunpack.c.h.b16 %v1136
  %v1473 = vunpack.c.l.b16 %v1137
  %v1474 = vunpack.c.h.b16 %v1137
  %v1475 = vunpack.c.l.b16 %v1138
  %v1476 = vunpack.c.h.b16 %v1138
  %v1477 = vunpack.c.l.b16 %v1139
  %v1478 = vunpack.c.h.b16 %v1139
  %v1479 = vunpack.c.l.b16 %v1140
  %v1480 = vunpack.c.h.b16 %v1140
  %v1481 = vunpack.c.l.b16 %v1141
  %v1482 = vunpack.c.h.b16 %v1141
  %v1483 = vunpack.c.l.b16 %v1142
  %v1484 = vunpack.c.h.b16 %v1142
  %v1485 = vunpack.c.l.b16 %v1143
  %v1486 = vunpack.c.h.b16 %v1143
  %v1487 = vunpack.c.l.b16 %v1144
  %v1488 = vunpack.c.h.b16 %v1144
  %v1489 = vunpack.c.l.b16 %v1145
  %v1490 = vunpack.c.h.b16 %v1145
  %v1491 = vunpack.c.l.b16 %v1146
  %v1492 = vunpack.c.h.b16 %v1146
  %v1493 = vunpack.c.l.b16 %v1147
  %v1494 = vunpack.c.h.b16 %v1147
  %v1495 = vunpack.c.l.b16 %v1148
  %v1496 = vunpack.c.h.b16 %v1148
  %v1497 = vunpack.c.l.b16 %v1149
  %v1498 = vunpack.c.h.b16 %v1149
  %v1499 = vunpack.c.l.b16 %v1150
  %v1500 = vunpack.c.h.b16 %v1150
  %v1501 = vunpack.c.l.b16 %v1151
  %v1502 = vunpack.c.h.b16 %v1151
  %v1503 = vunpack.c.l.b16 %v1152
  %v1504 = vunpack.c.h.b16 %v1152
  %v1505 = vunpack.c.l.b16 %v1153
  %v1506 = vunpack.c.h.b16 %v1153
  %v1507 = vunpack.c.l.b16 %v1154
  %v1508 = vunpack.c.h.b16 %v1154
  %v1509 = vunpack.c.l.b16 %v1155
  %v1510 = vunpack.c.h.b16 %v1155
  %v1511 = vunpack.c.l.b16 %v1156
  %v1512 = vunpack.c.h.b16 %v1156
  %v1513 = vunpack.c.l.b16 %v1157
  %v1514 = vunpack.c.h.b16 %v1157
  %v1515 = vunpack.c.l.b16 %v1158
  %v1516 = vunpack.c.h.b16 %v1158
  %v1517 = vunpack.c.l.b16 %v1159
  %v1518 = vunpack.c.h.b16 %v1159
  %v1519 = vunpack.c.l.b16 %v1160
  %v1520 = vunpack.c.h.b16 %v1160
  %v1521 = vunpack.c.l.b16 %v1161
  %v1522 = vunpack.c.h.b16 %v1161
  %v1523 = vunpack.c.l.b16 %v1162
  %v1524 = vunpack.c.h.b16 %v1162
  %v1525 = vunpack.c.l.b16 %v1163
  %v1526 = vunpack.c.h.b16 %v1163
  %v1527 = vunpack.c.l.b16 %v1164
  %v1528 = vunpack.c.h.b16 %v1164
  %v1529 = vunpack.c.l.b16 %v1165
  %v1530 = vunpack.c.h.b16 %v1165
  %v1531 = vunpack.c.l.b16 %v1166
  %v1532 = vunpack.c.h.b16 %v1166
  %v1533 = vunpack.c.l.b16 %v1167
  %v1534 = vunpack.c.h.b16 %v1167
  %v1535 = vunpack.c.l.b16 %v1168
  %v1536 = vunpack.c.h.b16 %v1168
  %v1537 = vunpack.c.l.b16 %v1169
  %v1538 = vunpack.c.h.b16 %v1169
  %v1539 = vunpack.c.l.b16 %v1170
  %v1540 = vunpack.c.h.b16 %v1170
  %v1541 = vunpack.c.l.b16 %v1171
  %v1542 = vunpack.c.h.b16 %v1171
  %v1543 = vunpack.c.l.b16 %v1172
  %v1544 = vunpack.c.h.b16 %v1172
  %v1545 = vunpack.c.l.b16 %v1173
  %v1546 = vunpack.c.h.b16 %v1173
  %v1547 = vunpack.c.l.b16 %v1174
  %v1548 = vunpack.c.h.b16 %v1174
  %v1549 = vunpack.c.l.b16 %v1175
  %v1550 = vunpack.c.h.b16 %v1175
  %v1551 = vunpack.c.l.b16 %v1176
  %v1552 = vunpack.c.h.b16 %v1176
  %v1553 = vunpack.c.l.b16 %v1177
  %v1554 = vunpack.c.h.b16 %v1177
  %v1555 = vunpack.c.l.b16 %v1178
  %v1556 = vunpack.c.h.b16 %v1178
  %v1557 = vunpack.c.l.b16 %v1179
  %v1558 = vunpack.c.h.b16 %v1179
  %v1559 = vunpack.c.l.b16 %v1180
  %v1560 = vunpack.c.h.b16 %v1180
  %v1561 = vunpack.c.l.b16 %v1181
  %v1562 = vunpack.c.h.b16 %v1181
  %v1563 = vunpack.c.l.b16 %v1182
  %v1564 = vunpack.c.h.b16 %v1182
  %v1565 = vunpack.c.l.b16 %v1183
  %v1566 = vunpack.c.h.b16 %v1183
  %v1567 = vunpack.c.l.b16 %v1184
  %v1568 = vunpack.c.h.b16 %v1184
  %v1569 = vpack.c.b16 %v1321, %v1313
  %v1570 = vpack.c.b16 %v1322, %v1314
  %v1571 = vpack.c.b16 %v1323, %v1315
  %v1572 = vpack.c.b16 %v1324, %v1316
  %v1573 = vpack.c.b16 %v1325, %v1317
  %v1574 = vpack.c.b16 %v1326, %v1318
  %v1575 = vpack.c.b16 %v1327, %v1319
  %v1576 = vpack.c.b16 %v1328, %v1320
  %v1577 = vpack.c.b16 %v1337, %v1329
  %v1578 = vpack.c.b16 %v1338, %v1330
  %v1579 = vpack.c.b16 %v1339, %v1331
  %v1580 = vpack.c.b16 %v1340, %v1332
  %v1581 = vpack.c.b16 %v1341, %v1333
  %v1582 = vpack.c.b16 %v1342, %v1334
  %v1583 = vpack.c.b16 %v1343, %v1335
  %v1584 = vpack.c.b16 %v1344, %v1336
  %v1585 = vpack.c.b16 %v1353, %v1345
  %v1586 = vpack.c.b16 %v1354, %v1346
  %v1587 = vpack.c.b16 %v1355, %v1347
  %v1588 = vpack.c.b16 %v1356, %v1348
  %v1589 = vpack.c.b16 %v1357, %v1349
  %v1590 = vpack.c.b16 %v1358, %v1350
  %v1591 = vpack.c.b16 %v1359, %v1351
  %v1592 = vpack.c.b16 %v1360, %v1352
  %v1593 = vpack.c.b16 %v1369, %v1361
  %v1594 = vpack.c.b16 %v1370, %v1362
  %v1595 = vpack.c.b16 %v1371, %v1363
  %v1596 = vpack.c.b16 %v1372, %v1364
  %v1597 = vpack.c.b16 %v1373, %v1365
  %v1598 = vpack.c.b16 %v1374, %v1366
  %v1599 = vpack.c.b16 %v1375, %v1367
  %v1600 = vpack.c.b16 %v1376, %v1368
  %v1601 = vpack.c.b16 %v1385, %v1377
  %v1602 = vpack.c.b16 %v1386, %v1378
  %v1603 = vpack.c.b16 %v1387, %v1379
  %v1604 = vpack.c.b16 %v1388, %v1380
  %v1605 = vpack.c.b16 %v1389, %v1381
  %v1606 = vpack.c.b16 %v1390, %v1382
  %v1607 = vpack.c.b16 %v1391, %v1383
  %v1608 = vpack.c.b16 %v1392, %v1384
  %v1609 = vpack.c.b16 %v1401, %v1393
  %v1610 = vpack.c.b16 %v1402, %v1394
  %v1611 = vpack.c.b16 %v1403, %v1395
  %v1612 = vpack.c.b16 %v1404, %v1396
  %v1613 = vpack.c.b16 %v1405, %v1397
  %v1614 = vpack.c.b16 %v1406, %v1398
  %v1615 = vpack.c.b16 %v1407, %v1399
  %v1616 = vpack.c.b16 %v1408, %v1400
  %v1617 = vpack.c.b16 %v1417, %v1409
  %v1618 = vpack.c.b16 %v1418, %v1410
  %v1619 = vpack.c.b16 %v1419, %v1411
  %v1620 = vpack.c.b16 %v1420, %v1412
  %v1621 = vpack.c.b16 %v1421, %v1413
  %v1622 = vpack.c.b16 %v1422, %v1414
  %v1623 = vpack.c.b16 %v1423, %v1415
  %v1624 = vpack.c.b16 %v1424, %v1416
  %v1625 = vpack.c.b16 %v1433, %v1425
  %v1626 = vpack.c.b16 %v1434, %v1426
  %v1627 = vpack.c.b16 %v1435, %v1427
  %v1628 = vpack.c.b16 %v1436, %v1428
  %v1629 = vpack.c.b16 %v1437, %v1429
  %v1630 = vpack.c.b16 %v1438, %v1430
  %v1631 = vpack.c.b16 %v1439, %v1431
  %v1632 = vpack.c.b16 %v1440, %v1432
  %v1633 = vpack.c.b16 %v1449, %v1441
  %v1634 = vpack.c.b16 %v1450, %v1442
  %v1635 = vpack.c.b16 %v1451, %v1443
  %v1636 = vpack.c.b16 %v1452, %v1444
  %v1637 = vpack.c.b16 %v1453, %v1445
  %v1638 = vpack.c.b16 %v1454, %v1446
  %v1639 = vpack.c.b16 %v1455, %v1447
  %v1640 = vpack.c.b16 %v1456, %v1448
  %v1641 = vpack.c.b16 %v1465, %v1457
  %v1642 = vpack.c.b16 %v1466, %v1458
  %v1643 = vpack.c.b16 %v1467, %v1459
  %v1644 = vpack.c.b16 %v1468, %v1460
  %v1645 = vpack.c.b16 %v1469, %v1461
  %v1646 = vpack.c.b16 %v1470, %v1462
  %v1647 = vpack.c.b16 %v1471, %v1463
  %v1648 = vpack.c.b16 %v1472, %v1464
  %v1649 = vpack.c.b16 %v1481, %v1473
  %v1650 = vpack.c.b16 %v1482, %v1474
  %v1651 = vpack.c.b16 %v1483, %v1475
  %v1652 = vpack.c.b16 %v1484, %v1476
  %v1653 = vpack.c.b16 %v1485, %v1477
  %v1654 = vpack.c.b16 %v1486, %v1478
  %v1655 = vpack.c.b16 %v1487, %v1479
  %v1656 = vpack.c.b16 %v1488, %v1480
  %v1657 = vpack.c.b16 %v1497, %v1489
  %v1658 = vpack.c.b16 %v1498, %v1490
  %v1659 = vpack.c.b16 %v1499, %v1491
  %v1660 = vpack.c.b16 %v1500, %v1492
  %v1661 = vpack.c.b16 %v1501, %v1493
  %v1662 = vpack.c.b16 %v1502, %v1494
  %v1663 = vpack.c.b16 %v1503, %v1495
  %v1664 = vpack.c.b16 %v1504, %v1496
  %v1665 = vpack.c.b16 %v1513, %v1505
  %v1666 = vpack.c.b16 %v1514, %v1506
  %v1667 = vpack.c.b16 %v1515, %v1507
  %v1668 = vpack.c.b16 %v1516, %v1508
  %v1669 = vpack.c.b16 %v1517, %v1509
  %v1670 = vpack.c.b16 %v1518, %v1510
  %v1671 = vpack.c.b16 %v1519, %v1511
  %v1672 = vpack.c.b16 %v1520, %v1512
  %v1673 = vpack.c.b16 %v1529, %v1521
  %v1674 = vpack.c.b16 %v1530, %v1522
  %v1675 = vpack.c.b16 %v1531, %v1523
  %v1676 = vpack.c.b16 %v1532, %v1524
  %v1677 = vpack.c.b16 %v1533, %v1525
  %v1678 = vpack.c.b16 %v1534, %v1526
  %v1679 = vpack.c.b16 %v1535, %v1527
  %v1680 = vpack.c.b16 %v1536, %v1528
  %v1681 = vpack.c.b16 %v1545, %v1537
  %v1682 = vpack.c.b16 %v1546, %v1538
  %v1683 = vpack.c.b16 %v1547, %v1539
  %v1684 = vpack.c.b16 %v1548, %v1540
  %v1685 = vpack.c.b16 %v1549, %v1541
  %v1686 = vpack.c.b16 %v1550, %v1542
  %v1687 = vpack.c.b16 %v1551, %v1543
  %v1688 = vpack.c.b16 %v1552, %v1544
  %v1689 = vpack.c.b16 %v1561, %v1553
  %v1690 = vpack.c.b16 %v1562, %v1554
  %v1691 = vpack.c.b16 %v1563, %v1555
  %v1692 = vpack.c.b16 %v1564, %v1556
  %v1693 = vpack.c.b16 %v1565, %v1557
  %v1694 = vpack.c.b16 %v1566, %v1558
  %v1695 = vpack.c.b16 %v1567, %v1559
  %v1696 = vpack.c.b16 %v1568, %v1560
  %1825 = vmatprep.subr.bf16.mxu0 %v1570
  %1826 = vmatpush1.bf16.msra.mxu0 %v1569
  %1827 = vmatprep.subr.bf16.mxu0 %v1578
  %1828 = vmatpush1.bf16.msra.mxu0 %v1577
  %1829 = vmatprep.subr.bf16.mxu0 %v1586
  %1830 = vmatpush1.bf16.msra.mxu0 %v1585
  %1831 = vmatprep.subr.bf16.mxu0 %v1594
  %1832 = vmatpush1.bf16.msra.mxu0 %v1593
  %1833 = vmatprep.subr.bf16.mxu0 %v1602
  %1834 = vmatpush1.bf16.msra.mxu0 %v1601
  %1835 = vmatprep.subr.bf16.mxu0 %v1610
  %1836 = vmatpush1.bf16.msra.mxu0 %v1609
  %1837 = vmatprep.subr.bf16.mxu0 %v1618
  %1838 = vmatpush1.bf16.msra.mxu0 %v1617
  %1839 = vmatprep.subr.bf16.mxu0 %v1626
  %1840 = vmatpush1.bf16.msra.mxu0 %v1625
  %1841 = vmatprep.subr.bf16.mxu0 %v1634
  %1842 = vmatpush1.bf16.msra.mxu0 %v1633
  %1843 = vmatprep.subr.bf16.mxu0 %v1642
  %1844 = vmatpush1.bf16.msra.mxu0 %v1641
  %1845 = vmatprep.subr.bf16.mxu0 %v1650
  %1846 = vmatpush1.bf16.msra.mxu0 %v1649
  %1847 = vmatprep.subr.bf16.mxu0 %v1658
  %1848 = vmatpush1.bf16.msra.mxu0 %v1657
  %1849 = vmatprep.subr.bf16.mxu0 %v1666
  %1850 = vmatpush1.bf16.msra.mxu0 %v1665
  %1851 = vmatprep.subr.bf16.mxu0 %v1674
  %1852 = vmatpush1.bf16.msra.mxu0 %v1673
  %1853 = vmatprep.subr.bf16.mxu0 %v1682
  %1854 = vmatpush1.bf16.msra.mxu0 %v1681
  %1855 = vmatprep.subr.bf16.mxu0 %v1690
  %1856 = vmatpush1.bf16.msra.mxu0 %v1689
  %1857 = vmatprep.mubr.bf16.mxu0 %v1034
  %1858 = vmatmul.mubr.bf16.gmra.mrb[0].mxu0 %v1033
  %v1859 = vpop.f32.mrb[0].mxu0
  %v1860 = vadd.f32 0.0, %v1859
  %v1861 = vpop.f32.mrb[0].mxu0
  %v1862 = vadd.f32 0.0, %v1861
  %v1863 = vpop.f32.mrb[0].mxu0
  %v1864 = vpop.f32.mrb[0].mxu0
  %1865 = vdwg.mxu0
  %1866 = vmatprep.subr.bf16.mxu0 %v1572
  %1867 = vmatpush1.bf16.msra.mxu0 %v1571
  %1868 = vmatprep.subr.bf16.mxu0 %v1580
  %1869 = vmatpush1.bf16.msra.mxu0 %v1579
  %1870 = vmatprep.subr.bf16.mxu0 %v1588
  %1871 = vmatpush1.bf16.msra.mxu0 %v1587
  %1872 = vmatprep.subr.bf16.mxu0 %v1596
  %1873 = vmatpush1.bf16.msra.mxu0 %v1595
  %1874 = vmatprep.subr.bf16.mxu0 %v1604
  %1875 = vmatpush1.bf16.msra.mxu0 %v1603
  %1876 = vmatprep.subr.bf16.mxu0 %v1612
  %1877 = vmatpush1.bf16.msra.mxu0 %v1611
  %1878 = vmatprep.subr.bf16.mxu0 %v1620
  %1879 = vmatpush1.bf16.msra.mxu0 %v1619
  %1880 = vmatprep.subr.bf16.mxu0 %v1628
  %1881 = vmatpush1.bf16.msra.mxu0 %v1627
  %1882 = vmatprep.subr.bf16.mxu0 %v1636
  %1883 = vmatpush1.bf16.msra.mxu0 %v1635
  %1884 = vmatprep.subr.bf16.mxu0 %v1644
  %1885 = vmatpush1.bf16.msra.mxu0 %v1643
  %1886 = vmatprep.subr.bf16.mxu0 %v1652
  %1887 = vmatpush1.bf16.msra.mxu0 %v1651
  %1888 = vmatprep.subr.bf16.mxu0 %v1660
  %1889 = vmatpush1.bf16.msra.mxu0 %v1659
  %1890 = vmatprep.subr.bf16.mxu0 %v1668
  %1891 = vmatpush1.bf16.msra.mxu0 %v1667
  %1892 = vmatprep.subr.bf16.mxu0 %v1676
  %1893 = vmatpush1.bf16.msra.mxu0 %v1675
  %1894 = vmatprep.subr.bf16.mxu0 %v1684
  %1895 = vmatpush1.bf16.msra.mxu0 %v1683
  %1896 = vmatprep.subr.bf16.mxu0 %v1692
  %1897 = vmatpush1.bf16.msra.mxu0 %v1691
  %1898 = vmatprep.mubr.bf16.mxu0 %v1034
  %1899 = vmatmul.mubr.bf16.gmra.mrb[0].mxu0 %v1033
  %v1900 = vpop.f32.mrb[0].mxu0
  %v1901 = vadd.f32 0.0, %v1900
  %v1902 = vpop.f32.mrb[0].mxu0
  %v1903 = vadd.f32 0.0, %v1902
  %v1904 = vpop.f32.mrb[0].mxu0
  %v1905 = vpop.f32.mrb[0].mxu0
  %1906 = vdwg.mxu0
  %1907 = vmatprep.subr.bf16.mxu0 %v1574
  %1908 = vmatpush1.bf16.msra.mxu0 %v1573
  %1909 = vmatprep.subr.bf16.mxu0 %v1582
  %1910 = vmatpush1.bf16.msra.mxu0 %v1581
  %1911 = vmatprep.subr.bf16.mxu0 %v1590
  %1912 = vmatpush1.bf16.msra.mxu0 %v1589
  %1913 = vmatprep.subr.bf16.mxu0 %v1598
  %1914 = vmatpush1.bf16.msra.mxu0 %v1597
  %1915 = vmatprep.subr.bf16.mxu0 %v1606
  %1916 = vmatpush1.bf16.msra.mxu0 %v1605
  %1917 = vmatprep.subr.bf16.mxu0 %v1614
  %1918 = vmatpush1.bf16.msra.mxu0 %v1613
  %1919 = vmatprep.subr.bf16.mxu0 %v1622
  %1920 = vmatpush1.bf16.msra.mxu0 %v1621
  %1921 = vmatprep.subr.bf16.mxu0 %v1630
  %1922 = vmatpush1.bf16.msra.mxu0 %v1629
  %1923 = vmatprep.subr.bf16.mxu0 %v1638
  %1924 = vmatpush1.bf16.msra.mxu0 %v1637
  %1925 = vmatprep.subr.bf16.mxu0 %v1646
  %1926 = vmatpush1.bf16.msra.mxu0 %v1645
  %1927 = vmatprep.subr.bf16.mxu0 %v1654
  %1928 = vmatpush1.bf16.msra.mxu0 %v1653
  %1929 = vmatprep.subr.bf16.mxu0 %v1662
  %1930 = vmatpush1.bf16.msra.mxu0 %v1661
  %1931 = vmatprep.subr.bf16.mxu0 %v1670
  %1932 = vmatpush1.bf16.msra.mxu0 %v1669
  %1933 = vmatprep.subr.bf16.mxu0 %v1678
  %1934 = vmatpush1.bf16.msra.mxu0 %v1677
  %1935 = vmatprep.subr.bf16.mxu0 %v1686
  %1936 = vmatpush1.bf16.msra.mxu0 %v1685
  %1937 = vmatprep.subr.bf16.mxu0 %v1694
  %1938 = vmatpush1.bf16.msra.mxu0 %v1693
  %1939 = vmatprep.mubr.bf16.mxu0 %v1034
  %1940 = vmatmul.mubr.bf16.gmra.mrb[0].mxu0 %v1033
  %v1941 = vpop.f32.mrb[0].mxu0
  %v1942 = vadd.f32 0.0, %v1941
  %v1943 = vpop.f32.mrb[0].mxu0
  %v1944 = vadd.f32 0.0, %v1943
  %v1945 = vpop.f32.mrb[0].mxu0
  %v1946 = vpop.f32.mrb[0].mxu0
  %1947 = vdwg.mxu0
  %1948 = vmatprep.subr.bf16.mxu0 %v1576
  %1949 = vmatpush1.bf16.msra.mxu0 %v1575
  %1950 = vmatprep.subr.bf16.mxu0 %v1584
  %1951 = vmatpush1.bf16.msra.mxu0 %v1583
  %1952 = vmatprep.subr.bf16.mxu0 %v1592
  %1953 = vmatpush1.bf16.msra.mxu0 %v1591
  %1954 = vmatprep.subr.bf16.mxu0 %v1600
  %1955 = vmatpush1.bf16.msra.mxu0 %v1599
  %1956 = vmatprep.subr.bf16.mxu0 %v1608
  %1957 = vmatpush1.bf16.msra.mxu0 %v1607
  %1958 = vmatprep.subr.bf16.mxu0 %v1616
  %1959 = vmatpush1.bf16.msra.mxu0 %v1615
  %1960 = vmatprep.subr.bf16.mxu0 %v1624
  %1961 = vmatpush1.bf16.msra.mxu0 %v1623
  %1962 = vmatprep.subr.bf16.mxu0 %v1632
  %1963 = vmatpush1.bf16.msra.mxu0 %v1631
  %1964 = vmatprep.subr.bf16.mxu0 %v1640
  %1965 = vmatpush1.bf16.msra.mxu0 %v1639
  %1966 = vmatprep.subr.bf16.mxu0 %v1648
  %1967 = vmatpush1.bf16.msra.mxu0 %v1647
  %1968 = vmatprep.subr.bf16.mxu0 %v1656
  %1969 = vmatpush1.bf16.msra.mxu0 %v1655
  %1970 = vmatprep.subr.bf16.mxu0 %v1664
  %1971 = vmatpush1.bf16.msra.mxu0 %v1663
  %1972 = vmatprep.subr.bf16.mxu0 %v1672
  %1973 = vmatpush1.bf16.msra.mxu0 %v1671
  %1974 = vmatprep.subr.bf16.mxu0 %v1680
  %1975 = vmatpush1.bf16.msra.mxu0 %v1679
  %1976 = vmatprep.subr.bf16.mxu0 %v1688
  %1977 = vmatpush1.bf16.msra.mxu0 %v1687
  %1978 = vmatprep.subr.bf16.mxu0 %v1696
  %1979 = vmatpush1.bf16.msra.mxu0 %v1695
  %1980 = vmatprep.mubr.bf16.mxu0 %v1034
  %1981 = vmatmul.mubr.bf16.gmra.mrb[0].mxu0 %v1033
  %v1982 = vpop.f32.mrb[0].mxu0
  %v1983 = vadd.f32 0.0, %v1982
  %v1984 = vpop.f32.mrb[0].mxu0
  %v1985 = vadd.f32 0.0, %v1984
  %v1986 = vpop.f32.mrb[0].mxu0
  %v1987 = vpop.f32.mrb[0].mxu0
  %1988 = vdwg.mxu0
  %v1997 = vcombine.low %v1860, %v1862
  %v1998 = vcombine.low %v1901, %v1903
  %v2000 = vunpack.c.l.s4 1983009808
  %v2001 = vunpack.c.0.s8 %v2000
  %v2002 = vlaneseq
  %v2003 = vshrl.u32 %v2002, 7
  %v2004 = vsub.s32 %v2001, %v2003
  %v2005 = vrot.slane %v1997, %v2004
  %v2007 = vunpack.c.l.s4 1983009808
  %v2008 = vunpack.c.0.s8 %v2007
  %v2009 = vlaneseq
  %v2010 = vshrl.u32 %v2009, 7
  %v2011 = vsub.s32 %v2008, %v2010
  %v2012 = vrot.slane %v1998, %v2011
  %v2013 = vcombine.low %v2005, %v2012
  %v2014 = vcombine.low %v1942, %v1944
  %v2015 = vcombine.low %v1983, %v1985
  %v2017 = vunpack.c.l.s4 1983009808
  %v2018 = vunpack.c.0.s8 %v2017
  %v2019 = vlaneseq
  %v2020 = vshrl.u32 %v2019, 7
  %v2021 = vsub.s32 %v2018, %v2020
  %v2022 = vrot.slane %v2014, %v2021
  %v2024 = vunpack.c.l.s4 1983009808
  %v2025 = vunpack.c.0.s8 %v2024
  %v2026 = vlaneseq
  %v2027 = vshrl.u32 %v2026, 7
  %v2028 = vsub.s32 %v2025, %v2027
  %v2029 = vrot.slane %v2015, %v2028
  %v2030 = vcombine.low %v2022, %v2029
  %v2033 = vadd.f32 %v1055, %v2013
  %v2034 = vadd.f32 %v1056, %v2030
  %v2035 = vxor.u32 %v2033, 2147483648
  %v2036 = vmul.f32 %v2035, 1.442695
  %v2037 = vpow.pop %v2036
  %v2038 = vadd.f32 %v2037, 1.0
  %v2039 = vrcp.pop %v2038
  %v2040 = vmul.f32 1.0, %v2039
  %v2042 = vrot.slane %v2033, 4
  %v2044 = vxor.u32 %v2042, 2147483648
  %v2045 = vmul.f32 %v2044, 1.442695
  %v2046 = vpow.pop %v2045
  %v2047 = vadd.f32 %v2046, 1.0
  %v2048 = vrcp.pop %v2047
  %v2049 = vmul.f32 1.0, %v2048
  %v2050 = vtanh.pop %v2034
  %v2052 = vrot.slane %v2034, 4
  %v2054 = vxor.u32 %v2052, 2147483648
  %v2055 = vmul.f32 %v2054, 1.442695
  %v2056 = vpow.pop %v2055
  %v2057 = vadd.f32 %v2056, 1.0
  %v2058 = vrcp.pop %v2057
  %v2059 = vmul.f32 1.0, %v2058
  %v2060 = vmul.f32 %v2049, %v1019
  %v2061 = vmul.f32 %v2040, %v2050
  %v2062 = vadd.f32 %v2060, %v2061
  %v2063 = vtanh.pop %v2062
  %v2064 = vmul.f32 %v2059, %v2063
  %v2067 = vunpack.c.l.s4 1983009808
  %v2068 = vunpack.c.0.s8 %v2067
  %v2069 = vlaneseq
  %v2070 = vshrl.u32 %v2069, 7
  %v2071 = vsub.s32 %v2068, %v2070
  %v2072 = vrot.slane %v2064, %v2071
  %v2073 = vcombine.high %v2072, %v2072
  %v2076 = vpack.c.bf16 %v2072, %v2072
  %v2077 = vpack.c.bf16 %v2073, %v2073
  %v2080 = vcombine.low %v2076, %v2077
  %v2082 = vunpack.c.l.s4 1966171168
  %v2083 = vunpack.c.0.s8 %v2082
  %v2084 = vlaneseq
  %v2085 = vshrl.u32 %v2084, 7
  %v2086 = vsub.s32 %v2083, %v2085
  %v2087 = vrot.slane %v2080, %v2086
  %v2089 = vunpack.c.l.s4 1966171168
  %v2090 = vunpack.c.0.s8 %v2089
  %v2091 = vlaneseq
  %v2092 = vshrl.u32 %v2091, 7
  %v2093 = vsub.s32 %v2090, %v2092
  %v2094 = vrot.slane %v2087, %v2093
  %s2096 = scalar_lea.vmem %s2, 2
  %2097 = vst [vmem:[%s2096] sm:$0x3] %v2094
  %s2098 = scalar_lea.vmem %s0, 32
  %v2099 = vld [vmem:[%s2098] sm:$0xff]
  %v2100 = vld [vmem:[%s2098 + $0x8] sm:$0xff]
  %v2101 = vld [vmem:[%s1] sm:$0xff]
  %v2102 = vld [vmem:[%s1 + $0x8] sm:$0xff]
  %v2103 = vld [vmem:[%s1 + $0x10] sm:$0xff]
  %v2104 = vld [vmem:[%s1 + $0x18] sm:$0xff]
  %v2105 = vld [vmem:[%s1 + $0x20] sm:$0xff]
  %v2106 = vld [vmem:[%s1 + $0x28] sm:$0xff]
  %v2107 = vld [vmem:[%s1 + $0x30] sm:$0xff]
  %v2108 = vld [vmem:[%s1 + $0x38] sm:$0xff]
  %v2109 = vld [vmem:[%s1 + $0x40] sm:$0xff]
  %v2110 = vld [vmem:[%s1 + $0x48] sm:$0xff]
  %v2111 = vld [vmem:[%s1 + $0x50] sm:$0xff]
  %v2112 = vld [vmem:[%s1 + $0x58] sm:$0xff]
  %v2113 = vld [vmem:[%s1 + $0x60] sm:$0xff]
  %v2114 = vld [vmem:[%s1 + $0x68] sm:$0xff]
  %v2115 = vld [vmem:[%s1 + $0x70] sm:$0xff]
  %v2116 = vld [vmem:[%s1 + $0x78] sm:$0xff]
  %v2117 = vld [vmem:[%s1 + $0x80] sm:$0xff]
  %v2118 = vld [vmem:[%s1 + $0x88] sm:$0xff]
  %v2119 = vld [vmem:[%s1 + $0x90] sm:$0xff]
  %v2120 = vld [vmem:[%s1 + $0x98] sm:$0xff]
  %v2121 = vld [vmem:[%s1 + $0xa0] sm:$0xff]
  %v2122 = vld [vmem:[%s1 + $0xa8] sm:$0xff]
  %v2123 = vld [vmem:[%s1 + $0xb0] sm:$0xff]
  %v2124 = vld [vmem:[%s1 + $0xb8] sm:$0xff]
  %v2125 = vld [vmem:[%s1 + $0xc0] sm:$0xff]
  %v2126 = vld [vmem:[%s1 + $0xc8] sm:$0xff]
  %v2127 = vld [vmem:[%s1 + $0xd0] sm:$0xff]
  %v2128 = vld [vmem:[%s1 + $0xd8] sm:$0xff]
  %v2129 = vld [vmem:[%s1 + $0xe0] sm:$0xff]
  %v2130 = vld [vmem:[%s1 + $0xe8] sm:$0xff]
  %v2131 = vld [vmem:[%s1 + $0xf0] sm:$0xff]
  %v2132 = vld [vmem:[%s1 + $0xf8] sm:$0xff]
  %v2133 = vld [vmem:[%s1 + $0x100] sm:$0xff]
  %v2134 = vld [vmem:[%s1 + $0x108] sm:$0xff]
  %v2135 = vld [vmem:[%s1 + $0x110] sm:$0xff]
  %v2136 = vld [vmem:[%s1 + $0x118] sm:$0xff]
  %v2137 = vld [vmem:[%s1 + $0x120] sm:$0xff]
  %v2138 = vld [vmem:[%s1 + $0x128] sm:$0xff]
  %v2139 = vld [vmem:[%s1 + $0x130] sm:$0xff]
  %v2140 = vld [vmem:[%s1 + $0x138] sm:$0xff]
  %v2141 = vld [vmem:[%s1 + $0x140] sm:$0xff]
  %v2142 = vld [vmem:[%s1 + $0x148] sm:$0xff]
  %v2143 = vld [vmem:[%s1 + $0x150] sm:$0xff]
  %v2144 = vld [vmem:[%s1 + $0x158] sm:$0xff]
  %v2145 = vld [vmem:[%s1 + $0x160] sm:$0xff]
  %v2146 = vld [vmem:[%s1 + $0x168] sm:$0xff]
  %v2147 = vld [vmem:[%s1 + $0x170] sm:$0xff]
  %v2148 = vld [vmem:[%s1 + $0x178] sm:$0xff]
  %v2149 = vld [vmem:[%s1 + $0x180] sm:$0xff]
  %v2150 = vld [vmem:[%s1 + $0x188] sm:$0xff]
  %v2151 = vld [vmem:[%s1 + $0x190] sm:$0xff]
  %v2152 = vld [vmem:[%s1 + $0x198] sm:$0xff]
  %v2153 = vld [vmem:[%s1 + $0x1a0] sm:$0xff]
  %v2154 = vld [vmem:[%s1 + $0x1a8] sm:$0xff]
  %v2155 = vld [vmem:[%s1 + $0x1b0] sm:$0xff]
  %v2156 = vld [vmem:[%s1 + $0x1b8] sm:$0xff]
  %v2157 = vld [vmem:[%s1 + $0x1c0] sm:$0xff]
  %v2158 = vld [vmem:[%s1 + $0x1c8] sm:$0xff]
  %v2159 = vld [vmem:[%s1 + $0x1d0] sm:$0xff]
  %v2160 = vld [vmem:[%s1 + $0x1d8] sm:$0xff]
  %v2161 = vld [vmem:[%s1 + $0x1e0] sm:$0xff]
  %v2162 = vld [vmem:[%s1 + $0x1e8] sm:$0xff]
  %v2163 = vld [vmem:[%s1 + $0x1f0] sm:$0xff]
  %v2164 = vld [vmem:[%s1 + $0x1f8] sm:$0xff]
  %v2165 = vld [vmem:[%s1 + $0x200] sm:$0xff]
  %v2166 = vld [vmem:[%s1 + $0x208] sm:$0xff]
  %v2167 = vld [vmem:[%s1 + $0x210] sm:$0xff]
  %v2168 = vld [vmem:[%s1 + $0x218] sm:$0xff]
  %v2169 = vld [vmem:[%s1 + $0x220] sm:$0xff]
  %v2170 = vld [vmem:[%s1 + $0x228] sm:$0xff]
  %v2171 = vld [vmem:[%s1 + $0x230] sm:$0xff]
  %v2172 = vld [vmem:[%s1 + $0x238] sm:$0xff]
  %v2173 = vld [vmem:[%s1 + $0x240] sm:$0xff]
  %v2174 = vld [vmem:[%s1 + $0x248] sm:$0xff]
  %v2175 = vld [vmem:[%s1 + $0x250] sm:$0xff]
  %v2176 = vld [vmem:[%s1 + $0x258] sm:$0xff]
  %v2177 = vld [vmem:[%s1 + $0x260] sm:$0xff]
  %v2178 = vld [vmem:[%s1 + $0x268] sm:$0xff]
  %v2179 = vld [vmem:[%s1 + $0x270] sm:$0xff]
  %v2180 = vld [vmem:[%s1 + $0x278] sm:$0xff]
  %v2181 = vld [vmem:[%s1 + $0x280] sm:$0xff]
  %v2182 = vld [vmem:[%s1 + $0x288] sm:$0xff]
  %v2183 = vld [vmem:[%s1 + $0x290] sm:$0xff]
  %v2184 = vld [vmem:[%s1 + $0x298] sm:$0xff]
  %v2185 = vld [vmem:[%s1 + $0x2a0] sm:$0xff]
  %v2186 = vld [vmem:[%s1 + $0x2a8] sm:$0xff]
  %v2187 = vld [vmem:[%s1 + $0x2b0] sm:$0xff]
  %v2188 = vld [vmem:[%s1 + $0x2b8] sm:$0xff]
  %v2189 = vld [vmem:[%s1 + $0x2c0] sm:$0xff]
  %v2190 = vld [vmem:[%s1 + $0x2c8] sm:$0xff]
  %v2191 = vld [vmem:[%s1 + $0x2d0] sm:$0xff]
  %v2192 = vld [vmem:[%s1 + $0x2d8] sm:$0xff]
  %v2193 = vld [vmem:[%s1 + $0x2e0] sm:$0xff]
  %v2194 = vld [vmem:[%s1 + $0x2e8] sm:$0xff]
  %v2195 = vld [vmem:[%s1 + $0x2f0] sm:$0xff]
  %v2196 = vld [vmem:[%s1 + $0x2f8] sm:$0xff]
  %v2197 = vld [vmem:[%s1 + $0x300] sm:$0xff]
  %v2198 = vld [vmem:[%s1 + $0x308] sm:$0xff]
  %v2199 = vld [vmem:[%s1 + $0x310] sm:$0xff]
  %v2200 = vld [vmem:[%s1 + $0x318] sm:$0xff]
  %v2201 = vld [vmem:[%s1 + $0x320] sm:$0xff]
  %v2202 = vld [vmem:[%s1 + $0x328] sm:$0xff]
  %v2203 = vld [vmem:[%s1 + $0x330] sm:$0xff]
  %v2204 = vld [vmem:[%s1 + $0x338] sm:$0xff]
  %v2205 = vld [vmem:[%s1 + $0x340] sm:$0xff]
  %v2206 = vld [vmem:[%s1 + $0x348] sm:$0xff]
  %v2207 = vld [vmem:[%s1 + $0x350] sm:$0xff]
  %v2208 = vld [vmem:[%s1 + $0x358] sm:$0xff]
  %v2209 = vld [vmem:[%s1 + $0x360] sm:$0xff]
  %v2210 = vld [vmem:[%s1 + $0x368] sm:$0xff]
  %v2211 = vld [vmem:[%s1 + $0x370] sm:$0xff]
  %v2212 = vld [vmem:[%s1 + $0x378] sm:$0xff]
  %v2213 = vld [vmem:[%s1 + $0x380] sm:$0xff]
  %v2214 = vld [vmem:[%s1 + $0x388] sm:$0xff]
  %v2215 = vld [vmem:[%s1 + $0x390] sm:$0xff]
  %v2216 = vld [vmem:[%s1 + $0x398] sm:$0xff]
  %v2217 = vld [vmem:[%s1 + $0x3a0] sm:$0xff]
  %v2218 = vld [vmem:[%s1 + $0x3a8] sm:$0xff]
  %v2219 = vld [vmem:[%s1 + $0x3b0] sm:$0xff]
  %v2220 = vld [vmem:[%s1 + $0x3b8] sm:$0xff]
  %v2221 = vld [vmem:[%s1 + $0x3c0] sm:$0xff]
  %v2222 = vld [vmem:[%s1 + $0x3c8] sm:$0xff]
  %v2223 = vld [vmem:[%s1 + $0x3d0] sm:$0xff]
  %v2224 = vld [vmem:[%s1 + $0x3d8] sm:$0xff]
  %v2225 = vld [vmem:[%s1 + $0x3e0] sm:$0xff]
  %v2226 = vld [vmem:[%s1 + $0x3e8] sm:$0xff]
  %v2227 = vld [vmem:[%s1 + $0x3f0] sm:$0xff]
  %v2228 = vld [vmem:[%s1 + $0x3f8] sm:$0xff]
  %v2357 = vunpack.c.l.b16 %v2101
  %v2358 = vunpack.c.h.b16 %v2101
  %v2359 = vunpack.c.l.b16 %v2102
  %v2360 = vunpack.c.h.b16 %v2102
  %v2361 = vunpack.c.l.b16 %v2103
  %v2362 = vunpack.c.h.b16 %v2103
  %v2363 = vunpack.c.l.b16 %v2104
  %v2364 = vunpack.c.h.b16 %v2104
  %v2365 = vunpack.c.l.b16 %v2105
  %v2366 = vunpack.c.h.b16 %v2105
  %v2367 = vunpack.c.l.b16 %v2106
  %v2368 = vunpack.c.h.b16 %v2106
  %v2369 = vunpack.c.l.b16 %v2107
  %v2370 = vunpack.c.h.b16 %v2107
  %v2371 = vunpack.c.l.b16 %v2108
  %v2372 = vunpack.c.h.b16 %v2108
  %v2373 = vunpack.c.l.b16 %v2109
  %v2374 = vunpack.c.h.b16 %v2109
  %v2375 = vunpack.c.l.b16 %v2110
  %v2376 = vunpack.c.h.b16 %v2110
  %v2377 = vunpack.c.l.b16 %v2111
  %v2378 = vunpack.c.h.b16 %v2111
  %v2379 = vunpack.c.l.b16 %v2112
  %v2380 = vunpack.c.h.b16 %v2112
  %v2381 = vunpack.c.l.b16 %v2113
  %v2382 = vunpack.c.h.b16 %v2113
  %v2383 = vunpack.c.l.b16 %v2114
  %v2384 = vunpack.c.h.b16 %v2114
  %v2385 = vunpack.c.l.b16 %v2115
  %v2386 = vunpack.c.h.b16 %v2115
  %v2387 = vunpack.c.l.b16 %v2116
  %v2388 = vunpack.c.h.b16 %v2116
  %v2389 = vunpack.c.l.b16 %v2117
  %v2390 = vunpack.c.h.b16 %v2117
  %v2391 = vunpack.c.l.b16 %v2118
  %v2392 = vunpack.c.h.b16 %v2118
  %v2393 = vunpack.c.l.b16 %v2119
  %v2394 = vunpack.c.h.b16 %v2119
  %v2395 = vunpack.c.l.b16 %v2120
  %v2396 = vunpack.c.h.b16 %v2120
  %v2397 = vunpack.c.l.b16 %v2121
  %v2398 = vunpack.c.h.b16 %v2121
  %v2399 = vunpack.c.l.b16 %v2122
  %v2400 = vunpack.c.h.b16 %v2122
  %v2401 = vunpack.c.l.b16 %v2123
  %v2402 = vunpack.c.h.b16 %v2123
  %v2403 = vunpack.c.l.b16 %v2124
  %v2404 = vunpack.c.h.b16 %v2124
  %v2405 = vunpack.c.l.b16 %v2125
  %v2406 = vunpack.c.h.b16 %v2125
  %v2407 = vunpack.c.l.b16 %v2126
  %v2408 = vunpack.c.h.b16 %v2126
  %v2409 = vunpack.c.l.b16 %v2127
  %v2410 = vunpack.c.h.b16 %v2127
  %v2411 = vunpack.c.l.b16 %v2128
  %v2412 = vunpack.c.h.b16 %v2128
  %v2413 = vunpack.c.l.b16 %v2129
  %v2414 = vunpack.c.h.b16 %v2129
  %v2415 = vunpack.c.l.b16 %v2130
  %v2416 = vunpack.c.h.b16 %v2130
  %v2417 = vunpack.c.l.b16 %v2131
  %v2418 = vunpack.c.h.b16 %v2131
  %v2419 = vunpack.c.l.b16 %v2132
  %v2420 = vunpack.c.h.b16 %v2132
  %v2421 = vunpack.c.l.b16 %v2133
  %v2422 = vunpack.c.h.b16 %v2133
  %v2423 = vunpack.c.l.b16 %v2134
  %v2424 = vunpack.c.h.b16 %v2134
  %v2425 = vunpack.c.l.b16 %v2135
  %v2426 = vunpack.c.h.b16 %v2135
  %v2427 = vunpack.c.l.b16 %v2136
  %v2428 = vunpack.c.h.b16 %v2136
  %v2429 = vunpack.c.l.b16 %v2137
  %v2430 = vunpack.c.h.b16 %v2137
  %v2431 = vunpack.c.l.b16 %v2138
  %v2432 = vunpack.c.h.b16 %v2138
  %v2433 = vunpack.c.l.b16 %v2139
  %v2434 = vunpack.c.h.b16 %v2139
  %v2435 = vunpack.c.l.b16 %v2140
  %v2436 = vunpack.c.h.b16 %v2140
  %v2437 = vunpack.c.l.b16 %v2141
  %v2438 = vunpack.c.h.b16 %v2141
  %v2439 = vunpack.c.l.b16 %v2142
  %v2440 = vunpack.c.h.b16 %v2142
  %v2441 = vunpack.c.l.b16 %v2143
  %v2442 = vunpack.c.h.b16 %v2143
  %v2443 = vunpack.c.l.b16 %v2144
  %v2444 = vunpack.c.h.b16 %v2144
  %v2445 = vunpack.c.l.b16 %v2145
  %v2446 = vunpack.c.h.b16 %v2145
  %v2447 = vunpack.c.l.b16 %v2146
  %v2448 = vunpack.c.h.b16 %v2146
  %v2449 = vunpack.c.l.b16 %v2147
  %v2450 = vunpack.c.h.b16 %v2147
  %v2451 = vunpack.c.l.b16 %v2148
  %v2452 = vunpack.c.h.b16 %v2148
  %v2453 = vunpack.c.l.b16 %v2149
  %v2454 = vunpack.c.h.b16 %v2149
  %v2455 = vunpack.c.l.b16 %v2150
  %v2456 = vunpack.c.h.b16 %v2150
  %v2457 = vunpack.c.l.b16 %v2151
  %v2458 = vunpack.c.h.b16 %v2151
  %v2459 = vunpack.c.l.b16 %v2152
  %v2460 = vunpack.c.h.b16 %v2152
  %v2461 = vunpack.c.l.b16 %v2153
  %v2462 = vunpack.c.h.b16 %v2153
  %v2463 = vunpack.c.l.b16 %v2154
  %v2464 = vunpack.c.h.b16 %v2154
  %v2465 = vunpack.c.l.b16 %v2155
  %v2466 = vunpack.c.h.b16 %v2155
  %v2467 = vunpack.c.l.b16 %v2156
  %v2468 = vunpack.c.h.b16 %v2156
  %v2469 = vunpack.c.l.b16 %v2157
  %v2470 = vunpack.c.h.b16 %v2157
  %v2471 = vunpack.c.l.b16 %v2158
  %v2472 = vunpack.c.h.b16 %v2158
  %v2473 = vunpack.c.l.b16 %v2159
  %v2474 = vunpack.c.h.b16 %v2159
  %v2475 = vunpack.c.l.b16 %v2160
  %v2476 = vunpack.c.h.b16 %v2160
  %v2477 = vunpack.c.l.b16 %v2161
  %v2478 = vunpack.c.h.b16 %v2161
  %v2479 = vunpack.c.l.b16 %v2162
  %v2480 = vunpack.c.h.b16 %v2162
  %v2481 = vunpack.c.l.b16 %v2163
  %v2482 = vunpack.c.h.b16 %v2163
  %v2483 = vunpack.c.l.b16 %v2164
  %v2484 = vunpack.c.h.b16 %v2164
  %v2485 = vunpack.c.l.b16 %v2165
  %v2486 = vunpack.c.h.b16 %v2165
  %v2487 = vunpack.c.l.b16 %v2166
  %v2488 = vunpack.c.h.b16 %v2166
  %v2489 = vunpack.c.l.b16 %v2167
  %v2490 = vunpack.c.h.b16 %v2167
  %v2491 = vunpack.c.l.b16 %v2168
  %v2492 = vunpack.c.h.b16 %v2168
  %v2493 = vunpack.c.l.b16 %v2169
  %v2494 = vunpack.c.h.b16 %v2169
  %v2495 = vunpack.c.l.b16 %v2170
  %v2496 = vunpack.c.h.b16 %v2170
  %v2497 = vunpack.c.l.b16 %v2171
  %v2498 = vunpack.c.h.b16 %v2171
  %v2499 = vunpack.c.l.b16 %v2172
  %v2500 = vunpack.c.h.b16 %v2172
  %v2501 = vunpack.c.l.b16 %v2173
  %v2502 = vunpack.c.h.b16 %v2173
  %v2503 = vunpack.c.l.b16 %v2174
  %v2504 = vunpack.c.h.b16 %v2174
  %v2505 = vunpack.c.l.b16 %v2175
  %v2506 = vunpack.c.h.b16 %v2175
  %v2507 = vunpack.c.l.b16 %v2176
  %v2508 = vunpack.c.h.b16 %v2176
  %v2509 = vunpack.c.l.b16 %v2177
  %v2510 = vunpack.c.h.b16 %v2177
  %v2511 = vunpack.c.l.b16 %v2178
  %v2512 = vunpack.c.h.b16 %v2178
  %v2513 = vunpack.c.l.b16 %v2179
  %v2514 = vunpack.c.h.b16 %v2179
  %v2515 = vunpack.c.l.b16 %v2180
  %v2516 = vunpack.c.h.b16 %v2180
  %v2517 = vunpack.c.l.b16 %v2181
  %v2518 = vunpack.c.h.b16 %v2181
  %v2519 = vunpack.c.l.b16 %v2182
  %v2520 = vunpack.c.h.b16 %v2182
  %v2521 = vunpack.c.l.b16 %v2183
  %v2522 = vunpack.c.h.b16 %v2183
  %v2523 = vunpack.c.l.b16 %v2184
  %v2524 = vunpack.c.h.b16 %v2184
  %v2525 = vunpack.c.l.b16 %v2185
  %v2526 = vunpack.c.h.b16 %v2185
  %v2527 = vunpack.c.l.b16 %v2186
  %v2528 = vunpack.c.h.b16 %v2186
  %v2529 = vunpack.c.l.b16 %v2187
  %v2530 = vunpack.c.h.b16 %v2187
  %v2531 = vunpack.c.l.b16 %v2188
  %v2532 = vunpack.c.h.b16 %v2188
  %v2533 = vunpack.c.l.b16 %v2189
  %v2534 = vunpack.c.h.b16 %v2189
  %v2535 = vunpack.c.l.b16 %v2190
  %v2536 = vunpack.c.h.b16 %v2190
  %v2537 = vunpack.c.l.b16 %v2191
  %v2538 = vunpack.c.h.b16 %v2191
  %v2539 = vunpack.c.l.b16 %v2192
  %v2540 = vunpack.c.h.b16 %v2192
  %v2541 = vunpack.c.l.b16 %v2193
  %v2542 = vunpack.c.h.b16 %v2193
  %v2543 = vunpack.c.l.b16 %v2194
  %v2544 = vunpack.c.h.b16 %v2194
  %v2545 = vunpack.c.l.b16 %v2195
  %v2546 = vunpack.c.h.b16 %v2195
  %v2547 = vunpack.c.l.b16 %v2196
  %v2548 = vunpack.c.h.b16 %v2196
  %v2549 = vunpack.c.l.b16 %v2197
  %v2550 = vunpack.c.h.b16 %v2197
  %v2551 = vunpack.c.l.b16 %v2198
  %v2552 = vunpack.c.h.b16 %v2198
  %v2553 = vunpack.c.l.b16 %v2199
  %v2554 = vunpack.c.h.b16 %v2199
  %v2555 = vunpack.c.l.b16 %v2200
  %v2556 = vunpack.c.h.b16 %v2200
  %v2557 = vunpack.c.l.b16 %v2201
  %v2558 = vunpack.c.h.b16 %v2201
  %v2559 = vunpack.c.l.b16 %v2202
  %v2560 = vunpack.c.h.b16 %v2202
  %v2561 = vunpack.c.l.b16 %v2203
  %v2562 = vunpack.c.h.b16 %v2203
  %v2563 = vunpack.c.l.b16 %v2204
  %v2564 = vunpack.c.h.b16 %v2204
  %v2565 = vunpack.c.l.b16 %v2205
  %v2566 = vunpack.c.h.b16 %v2205
  %v2567 = vunpack.c.l.b16 %v2206
  %v2568 = vunpack.c.h.b16 %v2206
  %v2569 = vunpack.c.l.b16 %v2207
  %v2570 = vunpack.c.h.b16 %v2207
  %v2571 = vunpack.c.l.b16 %v2208
  %v2572 = vunpack.c.h.b16 %v2208
  %v2573 = vunpack.c.l.b16 %v2209
  %v2574 = vunpack.c.h.b16 %v2209
  %v2575 = vunpack.c.l.b16 %v2210
  %v2576 = vunpack.c.h.b16 %v2210
  %v2577 = vunpack.c.l.b16 %v2211
  %v2578 = vunpack.c.h.b16 %v2211
  %v2579 = vunpack.c.l.b16 %v2212
  %v2580 = vunpack.c.h.b16 %v2212
  %v2581 = vunpack.c.l.b16 %v2213
  %v2582 = vunpack.c.h.b16 %v2213
  %v2583 = vunpack.c.l.b16 %v2214
  %v2584 = vunpack.c.h.b16 %v2214
  %v2585 = vunpack.c.l.b16 %v2215
  %v2586 = vunpack.c.h.b16 %v2215
  %v2587 = vunpack.c.l.b16 %v2216
  %v2588 = vunpack.c.h.b16 %v2216
  %v2589 = vunpack.c.l.b16 %v2217
  %v2590 = vunpack.c.h.b16 %v2217
  %v2591 = vunpack.c.l.b16 %v2218
  %v2592 = vunpack.c.h.b16 %v2218
  %v2593 = vunpack.c.l.b16 %v2219
  %v2594 = vunpack.c.h.b16 %v2219
  %v2595 = vunpack.c.l.b16 %v2220
  %v2596 = vunpack.c.h.b16 %v2220
  %v2597 = vunpack.c.l.b16 %v2221
  %v2598 = vunpack.c.h.b16 %v2221
  %v2599 = vunpack.c.l.b16 %v2222
  %v2600 = vunpack.c.h.b16 %v2222
  %v2601 = vunpack.c.l.b16 %v2223
  %v2602 = vunpack.c.h.b16 %v2223
  %v2603 = vunpack.c.l.b16 %v2224
  %v2604 = vunpack.c.h.b16 %v2224
  %v2605 = vunpack.c.l.b16 %v2225
  %v2606 = vunpack.c.h.b16 %v2225
  %v2607 = vunpack.c.l.b16 %v2226
  %v2608 = vunpack.c.h.b16 %v2226
  %v2609 = vunpack.c.l.b16 %v2227
  %v2610 = vunpack.c.h.b16 %v2227
  %v2611 = vunpack.c.l.b16 %v2228
  %v2612 = vunpack.c.h.b16 %v2228
  %v2613 = vpack.c.b16 %v2365, %v2357
  %v2614 = vpack.c.b16 %v2366, %v2358
  %v2615 = vpack.c.b16 %v2367, %v2359
  %v2616 = vpack.c.b16 %v2368, %v2360
  %v2617 = vpack.c.b16 %v2369, %v2361
  %v2618 = vpack.c.b16 %v2370, %v2362
  %v2619 = vpack.c.b16 %v2371, %v2363
  %v2620 = vpack.c.b16 %v2372, %v2364
  %v2621 = vpack.c.b16 %v2381, %v2373
  %v2622 = vpack.c.b16 %v2382, %v2374
  %v2623 = vpack.c.b16 %v2383, %v2375
  %v2624 = vpack.c.b16 %v2384, %v2376
  %v2625 = vpack.c.b16 %v2385, %v2377
  %v2626 = vpack.c.b16 %v2386, %v2378
  %v2627 = vpack.c.b16 %v2387, %v2379
  %v2628 = vpack.c.b16 %v2388, %v2380
  %v2629 = vpack.c.b16 %v2397, %v2389
  %v2630 = vpack.c.b16 %v2398, %v2390
  %v2631 = vpack.c.b16 %v2399, %v2391
  %v2632 = vpack.c.b16 %v2400, %v2392
  %v2633 = vpack.c.b16 %v2401, %v2393
  %v2634 = vpack.c.b16 %v2402, %v2394
  %v2635 = vpack.c.b16 %v2403, %v2395
  %v2636 = vpack.c.b16 %v2404, %v2396
  %v2637 = vpack.c.b16 %v2413, %v2405
  %v2638 = vpack.c.b16 %v2414, %v2406
  %v2639 = vpack.c.b16 %v2415, %v2407
  %v2640 = vpack.c.b16 %v2416, %v2408
  %v2641 = vpack.c.b16 %v2417, %v2409
  %v2642 = vpack.c.b16 %v2418, %v2410
  %v2643 = vpack.c.b16 %v2419, %v2411
  %v2644 = vpack.c.b16 %v2420, %v2412
  %v2645 = vpack.c.b16 %v2429, %v2421
  %v2646 = vpack.c.b16 %v2430, %v2422
  %v2647 = vpack.c.b16 %v2431, %v2423
  %v2648 = vpack.c.b16 %v2432, %v2424
  %v2649 = vpack.c.b16 %v2433, %v2425
  %v2650 = vpack.c.b16 %v2434, %v2426
  %v2651 = vpack.c.b16 %v2435, %v2427
  %v2652 = vpack.c.b16 %v2436, %v2428
  %v2653 = vpack.c.b16 %v2445, %v2437
  %v2654 = vpack.c.b16 %v2446, %v2438
  %v2655 = vpack.c.b16 %v2447, %v2439
  %v2656 = vpack.c.b16 %v2448, %v2440
  %v2657 = vpack.c.b16 %v2449, %v2441
  %v2658 = vpack.c.b16 %v2450, %v2442
  %v2659 = vpack.c.b16 %v2451, %v2443
  %v2660 = vpack.c.b16 %v2452, %v2444
  %v2661 = vpack.c.b16 %v2461, %v2453
  %v2662 = vpack.c.b16 %v2462, %v2454
  %v2663 = vpack.c.b16 %v2463, %v2455
  %v2664 = vpack.c.b16 %v2464, %v2456
  %v2665 = vpack.c.b16 %v2465, %v2457
  %v2666 = vpack.c.b16 %v2466, %v2458
  %v2667 = vpack.c.b16 %v2467, %v2459
  %v2668 = vpack.c.b16 %v2468, %v2460
  %v2669 = vpack.c.b16 %v2477, %v2469
  %v2670 = vpack.c.b16 %v2478, %v2470
  %v2671 = vpack.c.b16 %v2479, %v2471
  %v2672 = vpack.c.b16 %v2480, %v2472
  %v2673 = vpack.c.b16 %v2481, %v2473
  %v2674 = vpack.c.b16 %v2482, %v2474
  %v2675 = vpack.c.b16 %v2483, %v2475
  %v2676 = vpack.c.b16 %v2484, %v2476
  %v2677 = vpack.c.b16 %v2493, %v2485
  %v2678 = vpack.c.b16 %v2494, %v2486
  %v2679 = vpack.c.b16 %v2495, %v2487
  %v2680 = vpack.c.b16 %v2496, %v2488
  %v2681 = vpack.c.b16 %v2497, %v2489
  %v2682 = vpack.c.b16 %v2498, %v2490
  %v2683 = vpack.c.b16 %v2499, %v2491
  %v2684 = vpack.c.b16 %v2500, %v2492
  %v2685 = vpack.c.b16 %v2509, %v2501
  %v2686 = vpack.c.b16 %v2510, %v2502
  %v2687 = vpack.c.b16 %v2511, %v2503
  %v2688 = vpack.c.b16 %v2512, %v2504
  %v2689 = vpack.c.b16 %v2513, %v2505
  %v2690 = vpack.c.b16 %v2514, %v2506
  %v2691 = vpack.c.b16 %v2515, %v2507
  %v2692 = vpack.c.b16 %v2516, %v2508
  %v2693 = vpack.c.b16 %v2525, %v2517
  %v2694 = vpack.c.b16 %v2526, %v2518
  %v2695 = vpack.c.b16 %v2527, %v2519
  %v2696 = vpack.c.b16 %v2528, %v2520
  %v2697 = vpack.c.b16 %v2529, %v2521
  %v2698 = vpack.c.b16 %v2530, %v2522
  %v2699 = vpack.c.b16 %v2531, %v2523
  %v2700 = vpack.c.b16 %v2532, %v2524
  %v2701 = vpack.c.b16 %v2541, %v2533
  %v2702 = vpack.c.b16 %v2542, %v2534
  %v2703 = vpack.c.b16 %v2543, %v2535
  %v2704 = vpack.c.b16 %v2544, %v2536
  %v2705 = vpack.c.b16 %v2545, %v2537
  %v2706 = vpack.c.b16 %v2546, %v2538
  %v2707 = vpack.c.b16 %v2547, %v2539
  %v2708 = vpack.c.b16 %v2548, %v2540
  %v2709 = vpack.c.b16 %v2557, %v2549
  %v2710 = vpack.c.b16 %v2558, %v2550
  %v2711 = vpack.c.b16 %v2559, %v2551
  %v2712 = vpack.c.b16 %v2560, %v2552
  %v2713 = vpack.c.b16 %v2561, %v2553
  %v2714 = vpack.c.b16 %v2562, %v2554
  %v2715 = vpack.c.b16 %v2563, %v2555
  %v2716 = vpack.c.b16 %v2564, %v2556
  %v2717 = vpack.c.b16 %v2573, %v2565
  %v2718 = vpack.c.b16 %v2574, %v2566
  %v2719 = vpack.c.b16 %v2575, %v2567
  %v2720 = vpack.c.b16 %v2576, %v2568
  %v2721 = vpack.c.b16 %v2577, %v2569
  %v2722 = vpack.c.b16 %v2578, %v2570
  %v2723 = vpack.c.b16 %v2579, %v2571
  %v2724 = vpack.c.b16 %v2580, %v2572
  %v2725 = vpack.c.b16 %v2589, %v2581
  %v2726 = vpack.c.b16 %v2590, %v2582
  %v2727 = vpack.c.b16 %v2591, %v2583
  %v2728 = vpack.c.b16 %v2592, %v2584
  %v2729 = vpack.c.b16 %v2593, %v2585
  %v2730 = vpack.c.b16 %v2594, %v2586
  %v2731 = vpack.c.b16 %v2595, %v2587
  %v2732 = vpack.c.b16 %v2596, %v2588
  %v2733 = vpack.c.b16 %v2605, %v2597
  %v2734 = vpack.c.b16 %v2606, %v2598
  %v2735 = vpack.c.b16 %v2607, %v2599
  %v2736 = vpack.c.b16 %v2608, %v2600
  %v2737 = vpack.c.b16 %v2609, %v2601
  %v2738 = vpack.c.b16 %v2610, %v2602
  %v2739 = vpack.c.b16 %v2611, %v2603
  %v2740 = vpack.c.b16 %v2612, %v2604
  %2869 = vmatprep.subr.bf16.mxu0 %v2614
  %2870 = vmatpush1.bf16.msra.mxu0 %v2613
  %2871 = vmatprep.subr.bf16.mxu0 %v2622
  %2872 = vmatpush1.bf16.msra.mxu0 %v2621
  %2873 = vmatprep.subr.bf16.mxu0 %v2630
  %2874 = vmatpush1.bf16.msra.mxu0 %v2629
  %2875 = vmatprep.subr.bf16.mxu0 %v2638
  %2876 = vmatpush1.bf16.msra.mxu0 %v2637
  %2877 = vmatprep.subr.bf16.mxu0 %v2646
  %2878 = vmatpush1.bf16.msra.mxu0 %v2645
  %2879 = vmatprep.subr.bf16.mxu0 %v2654
  %2880 = vmatpush1.bf16.msra.mxu0 %v2653
  %2881 = vmatprep.subr.bf16.mxu0 %v2662
  %2882 = vmatpush1.bf16.msra.mxu0 %v2661
  %2883 = vmatprep.subr.bf16.mxu0 %v2670
  %2884 = vmatpush1.bf16.msra.mxu0 %v2669
  %2885 = vmatprep.subr.bf16.mxu0 %v2678
  %2886 = vmatpush1.bf16.msra.mxu0 %v2677
  %2887 = vmatprep.subr.bf16.mxu0 %v2686
  %2888 = vmatpush1.bf16.msra.mxu0 %v2685
  %2889 = vmatprep.subr.bf16.mxu0 %v2694
  %2890 = vmatpush1.bf16.msra.mxu0 %v2693
  %2891 = vmatprep.subr.bf16.mxu0 %v2702
  %2892 = vmatpush1.bf16.msra.mxu0 %v2701
  %2893 = vmatprep.subr.bf16.mxu0 %v2710
  %2894 = vmatpush1.bf16.msra.mxu0 %v2709
  %2895 = vmatprep.subr.bf16.mxu0 %v2718
  %2896 = vmatpush1.bf16.msra.mxu0 %v2717
  %2897 = vmatprep.subr.bf16.mxu0 %v2726
  %2898 = vmatpush1.bf16.msra.mxu0 %v2725
  %2899 = vmatprep.subr.bf16.mxu0 %v2734
  %2900 = vmatpush1.bf16.msra.mxu0 %v2733
  %2901 = vmatprep.mubr.bf16.mxu0 %v2077
  %2902 = vmatmul.mubr.bf16.gmra.mrb[0].mxu0 %v2076
  %v2903 = vpop.f32.mrb[0].mxu0
  %v2904 = vadd.f32 0.0, %v2903
  %v2905 = vpop.f32.mrb[0].mxu0
  %v2906 = vadd.f32 0.0, %v2905
  %v2907 = vpop.f32.mrb[0].mxu0
  %v2908 = vpop.f32.mrb[0].mxu0
  %2909 = vdwg.mxu0
  %2910 = vmatprep.subr.bf16.mxu0 %v2616
  %2911 = vmatpush1.bf16.msra.mxu0 %v2615
  %2912 = vmatprep.subr.bf16.mxu0 %v2624
  %2913 = vmatpush1.bf16.msra.mxu0 %v2623
  %2914 = vmatprep.subr.bf16.mxu0 %v2632
  %2915 = vmatpush1.bf16.msra.mxu0 %v2631
  %2916 = vmatprep.subr.bf16.mxu0 %v2640
  %2917 = vmatpush1.bf16.msra.mxu0 %v2639
  %2918 = vmatprep.subr.bf16.mxu0 %v2648
  %2919 = vmatpush1.bf16.msra.mxu0 %v2647
  %2920 = vmatprep.subr.bf16.mxu0 %v2656
  %2921 = vmatpush1.bf16.msra.mxu0 %v2655
  %2922 = vmatprep.subr.bf16.mxu0 %v2664
  %2923 = vmatpush1.bf16.msra.mxu0 %v2663
  %2924 = vmatprep.subr.bf16.mxu0 %v2672
  %2925 = vmatpush1.bf16.msra.mxu0 %v2671
  %2926 = vmatprep.subr.bf16.mxu0 %v2680
  %2927 = vmatpush1.bf16.msra.mxu0 %v2679
  %2928 = vmatprep.subr.bf16.mxu0 %v2688
  %2929 = vmatpush1.bf16.msra.mxu0 %v2687
  %2930 = vmatprep.subr.bf16.mxu0 %v2696
  %2931 = vmatpush1.bf16.msra.mxu0 %v2695
  %2932 = vmatprep.subr.bf16.mxu0 %v2704
  %2933 = vmatpush1.bf16.msra.mxu0 %v2703
  %2934 = vmatprep.subr.bf16.mxu0 %v2712
  %2935 = vmatpush1.bf16.msra.mxu0 %v2711
  %2936 = vmatprep.subr.bf16.mxu0 %v2720
  %2937 = vmatpush1.bf16.msra.mxu0 %v2719
  %2938 = vmatprep.subr.bf16.mxu0 %v2728
  %2939 = vmatpush1.bf16.msra.mxu0 %v2727
  %2940 = vmatprep.subr.bf16.mxu0 %v2736
  %2941 = vmatpush1.bf16.msra.mxu0 %v2735
  %2942 = vmatprep.mubr.bf16.mxu0 %v2077
  %2943 = vmatmul.mubr.bf16.gmra.mrb[0].mxu0 %v2076
  %v2944 = vpop.f32.mrb[0].mxu0
  %v2945 = vadd.f32 0.0, %v2944
  %v2946 = vpop.f32.mrb[0].mxu0
  %v2947 = vadd.f32 0.0, %v2946
  %v2948 = vpop.f32.mrb[0].mxu0
  %v2949 = vpop.f32.mrb[0].mxu0
  %2950 = vdwg.mxu0
  %2951 = vmatprep.subr.bf16.mxu0 %v2618
  %2952 = vmatpush1.bf16.msra.mxu0 %v2617
  %2953 = vmatprep.subr.bf16.mxu0 %v2626
  %2954 = vmatpush1.bf16.msra.mxu0 %v2625
  %2955 = vmatprep.subr.bf16.mxu0 %v2634
  %2956 = vmatpush1.bf16.msra.mxu0 %v2633
  %2957 = vmatprep.subr.bf16.mxu0 %v2642
  %2958 = vmatpush1.bf16.msra.mxu0 %v2641
  %2959 = vmatprep.subr.bf16.mxu0 %v2650
  %2960 = vmatpush1.bf16.msra.mxu0 %v2649
  %2961 = vmatprep.subr.bf16.mxu0 %v2658
  %2962 = vmatpush1.bf16.msra.mxu0 %v2657
  %2963 = vmatprep.subr.bf16.mxu0 %v2666
  %2964 = vmatpush1.bf16.msra.mxu0 %v2665
  %2965 = vmatprep.subr.bf16.mxu0 %v2674
  %2966 = vmatpush1.bf16.msra.mxu0 %v2673
  %2967 = vmatprep.subr.bf16.mxu0 %v2682
  %2968 = vmatpush1.bf16.msra.mxu0 %v2681
  %2969 = vmatprep.subr.bf16.mxu0 %v2690
  %2970 = vmatpush1.bf16.msra.mxu0 %v2689
  %2971 = vmatprep.subr.bf16.mxu0 %v2698
  %2972 = vmatpush1.bf16.msra.mxu0 %v2697
  %2973 = vmatprep.subr.bf16.mxu0 %v2706
  %2974 = vmatpush1.bf16.msra.mxu0 %v2705
  %2975 = vmatprep.subr.bf16.mxu0 %v2714
  %2976 = vmatpush1.bf16.msra.mxu0 %v2713
  %2977 = vmatprep.subr.bf16.mxu0 %v2722
  %2978 = vmatpush1.bf16.msra.mxu0 %v2721
  %2979 = vmatprep.subr.bf16.mxu0 %v2730
  %2980 = vmatpush1.bf16.msra.mxu0 %v2729
  %2981 = vmatprep.subr.bf16.mxu0 %v2738
  %2982 = vmatpush1.bf16.msra.mxu0 %v2737
  %2983 = vmatprep.mubr.bf16.mxu0 %v2077
  %2984 = vmatmul.mubr.bf16.gmra.mrb[0].mxu0 %v2076
  %v2985 = vpop.f32.mrb[0].mxu0
  %v2986 = vadd.f32 0.0, %v2985
  %v2987 = vpop.f32.mrb[0].mxu0
  %v2988 = vadd.f32 0.0, %v2987
  %v2989 = vpop.f32.mrb[0].mxu0
  %v2990 = vpop.f32.mrb[0].mxu0
  %2991 = vdwg.mxu0
  %2992 = vmatprep.subr.bf16.mxu0 %v2620
  %2993 = vmatpush1.bf16.msra.mxu0 %v2619
  %2994 = vmatprep.subr.bf16.mxu0 %v2628
  %2995 = vmatpush1.bf16.msra.mxu0 %v2627
  %2996 = vmatprep.subr.bf16.mxu0 %v2636
  %2997 = vmatpush1.bf16.msra.mxu0 %v2635
  %2998 = vmatprep.subr.bf16.mxu0 %v2644
  %2999 = vmatpush1.bf16.msra.mxu0 %v2643
  %3000 = vmatprep.subr.bf16.mxu0 %v2652
  %3001 = vmatpush1.bf16.msra.mxu0 %v2651
  %3002 = vmatprep.subr.bf16.mxu0 %v2660
  %3003 = vmatpush1.bf16.msra.mxu0 %v2659
  %3004 = vmatprep.subr.bf16.mxu0 %v2668
  %3005 = vmatpush1.bf16.msra.mxu0 %v2667
  %3006 = vmatprep.subr.bf16.mxu0 %v2676
  %3007 = vmatpush1.bf16.msra.mxu0 %v2675
  %3008 = vmatprep.subr.bf16.mxu0 %v2684
  %3009 = vmatpush1.bf16.msra.mxu0 %v2683
  %3010 = vmatprep.subr.bf16.mxu0 %v2692
  %3011 = vmatpush1.bf16.msra.mxu0 %v2691
  %3012 = vmatprep.subr.bf16.mxu0 %v2700
  %3013 = vmatpush1.bf16.msra.mxu0 %v2699
  %3014 = vmatprep.subr.bf16.mxu0 %v2708
  %3015 = vmatpush1.bf16.msra.mxu0 %v2707
  %3016 = vmatprep.subr.bf16.mxu0 %v2716
  %3017 = vmatpush1.bf16.msra.mxu0 %v2715
  %3018 = vmatprep.subr.bf16.mxu0 %v2724
  %3019 = vmatpush1.bf16.msra.mxu0 %v2723
  %3020 = vmatprep.subr.bf16.mxu0 %v2732
  %3021 = vmatpush1.bf16.msra.mxu0 %v2731
  %3022 = vmatprep.subr.bf16.mxu0 %v2740
  %3023 = vmatpush1.bf16.msra.mxu0 %v2739
  %3024 = vmatprep.mubr.bf16.mxu0 %v2077
  %3025 = vmatmul.mubr.bf16.gmra.mrb[0].mxu0 %v2076
  %v3026 = vpop.f32.mrb[0].mxu0
  %v3027 = vadd.f32 0.0, %v3026
  %v3028 = vpop.f32.mrb[0].mxu0
  %v3029 = vadd.f32 0.0, %v3028
  %v3030 = vpop.f32.mrb[0].mxu0
  %v3031 = vpop.f32.mrb[0].mxu0
  %3032 = vdwg.mxu0
  %v3041 = vcombine.low %v2904, %v2906
  %v3042 = vcombine.low %v2945, %v2947
  %v3044 = vunpack.c.l.s4 1983009808
  %v3045 = vunpack.c.0.s8 %v3044
  %v3046 = vlaneseq
  %v3047 = vshrl.u32 %v3046, 7
  %v3048 = vsub.s32 %v3045, %v3047
  %v3049 = vrot.slane %v3041, %v3048
  %v3051 = vunpack.c.l.s4 1983009808
  %v3052 = vunpack.c.0.s8 %v3051
  %v3053 = vlaneseq
  %v3054 = vshrl.u32 %v3053, 7
  %v3055 = vsub.s32 %v3052, %v3054
  %v3056 = vrot.slane %v3042, %v3055
  %v3057 = vcombine.low %v3049, %v3056
  %v3058 = vcombine.low %v2986, %v2988
  %v3059 = vcombine.low %v3027, %v3029
  %v3061 = vunpack.c.l.s4 1983009808
  %v3062 = vunpack.c.0.s8 %v3061
  %v3063 = vlaneseq
  %v3064 = vshrl.u32 %v3063, 7
  %v3065 = vsub.s32 %v3062, %v3064
  %v3066 = vrot.slane %v3058, %v3065
  %v3068 = vunpack.c.l.s4 1983009808
  %v3069 = vunpack.c.0.s8 %v3068
  %v3070 = vlaneseq
  %v3071 = vshrl.u32 %v3070, 7
  %v3072 = vsub.s32 %v3069, %v3071
  %v3073 = vrot.slane %v3059, %v3072
  %v3074 = vcombine.low %v3066, %v3073
  %v3077 = vadd.f32 %v2099, %v3057
  %v3078 = vadd.f32 %v2100, %v3074
  %v3079 = vxor.u32 %v3077, 2147483648
  %v3080 = vmul.f32 %v3079, 1.442695
  %v3081 = vpow.pop %v3080
  %v3082 = vadd.f32 %v3081, 1.0
  %v3083 = vrcp.pop %v3082
  %v3084 = vmul.f32 1.0, %v3083
  %v3086 = vrot.slane %v3077, 4
  %v3088 = vxor.u32 %v3086, 2147483648
  %v3089 = vmul.f32 %v3088, 1.442695
  %v3090 = vpow.pop %v3089
  %v3091 = vadd.f32 %v3090, 1.0
  %v3092 = vrcp.pop %v3091
  %v3093 = vmul.f32 1.0, %v3092
  %v3094 = vtanh.pop %v3078
  %v3096 = vrot.slane %v3078, 4
  %v3098 = vxor.u32 %v3096, 2147483648
  %v3099 = vmul.f32 %v3098, 1.442695
  %v3100 = vpow.pop %v3099
  %v3101 = vadd.f32 %v3100, 1.0
  %v3102 = vrcp.pop %v3101
  %v3103 = vmul.f32 1.0, %v3102
  %v3104 = vmul.f32 %v3093, %v2062
  %v3105 = vmul.f32 %v3084, %v3094
  %v3106 = vadd.f32 %v3104, %v3105
  %v3107 = vtanh.pop %v3106
  %v3108 = vmul.f32 %v3103, %v3107
  %v3111 = vunpack.c.l.s4 1983009808
  %v3112 = vunpack.c.0.s8 %v3111
  %v3113 = vlaneseq
  %v3114 = vshrl.u32 %v3113, 7
  %v3115 = vsub.s32 %v3112, %v3114
  %v3116 = vrot.slane %v3108, %v3115
  %v3117 = vcombine.high %v3116, %v3116
  %v3120 = vpack.c.bf16 %v3116, %v3116
  %v3121 = vpack.c.bf16 %v3117, %v3117
  %v3124 = vcombine.low %v3120, %v3121
  %v3126 = vunpack.c.l.s4 1966171168
  %v3127 = vunpack.c.0.s8 %v3126
  %v3128 = vlaneseq
  %v3129 = vshrl.u32 %v3128, 7
  %v3130 = vsub.s32 %v3127, %v3129
  %v3131 = vrot.slane %v3124, %v3130
  %v3133 = vunpack.c.l.s4 1966171168
  %v3134 = vunpack.c.0.s8 %v3133
  %v3135 = vlaneseq
  %v3136 = vshrl.u32 %v3135, 7
  %v3137 = vsub.s32 %v3134, %v3136
  %v3138 = vrot.slane %v3131, %v3137
  %s3140 = scalar_lea.vmem %s2, 4
  %3141 = vst [vmem:[%s3140] sm:$0x3] %v3138
  %s3142 = scalar_lea.vmem %s0, 48
  %v3143 = vld [vmem:[%s3142] sm:$0xff]
  %v3144 = vld [vmem:[%s3142 + $0x8] sm:$0xff]
  %v3145 = vld [vmem:[%s1] sm:$0xff]
  %v3146 = vld [vmem:[%s1 + $0x8] sm:$0xff]
  %v3147 = vld [vmem:[%s1 + $0x10] sm:$0xff]
  %v3148 = vld [vmem:[%s1 + $0x18] sm:$0xff]
  %v3149 = vld [vmem:[%s1 + $0x20] sm:$0xff]
  %v3150 = vld [vmem:[%s1 + $0x28] sm:$0xff]
  %v3151 = vld [vmem:[%s1 + $0x30] sm:$0xff]
  %v3152 = vld [vmem:[%s1 + $0x38] sm:$0xff]
  %v3153 = vld [vmem:[%s1 + $0x40] sm:$0xff]
  %v3154 = vld [vmem:[%s1 + $0x48] sm:$0xff]
  %v3155 = vld [vmem:[%s1 + $0x50] sm:$0xff]
  %v3156 = vld [vmem:[%s1 + $0x58] sm:$0xff]
  %v3157 = vld [vmem:[%s1 + $0x60] sm:$0xff]
  %v3158 = vld [vmem:[%s1 + $0x68] sm:$0xff]
  %v3159 = vld [vmem:[%s1 + $0x70] sm:$0xff]
  %v3160 = vld [vmem:[%s1 + $0x78] sm:$0xff]
  %v3161 = vld [vmem:[%s1 + $0x80] sm:$0xff]
  %v3162 = vld [vmem:[%s1 + $0x88] sm:$0xff]
  %v3163 = vld [vmem:[%s1 + $0x90] sm:$0xff]
  %v3164 = vld [vmem:[%s1 + $0x98] sm:$0xff]
  %v3165 = vld [vmem:[%s1 + $0xa0] sm:$0xff]
  %v3166 = vld [vmem:[%s1 + $0xa8] sm:$0xff]
  %v3167 = vld [vmem:[%s1 + $0xb0] sm:$0xff]
  %v3168 = vld [vmem:[%s1 + $0xb8] sm:$0xff]
  %v3169 = vld [vmem:[%s1 + $0xc0] sm:$0xff]
  %v3170 = vld [vmem:[%s1 + $0xc8] sm:$0xff]
  %v3171 = vld [vmem:[%s1 + $0xd0] sm:$0xff]
  %v3172 = vld [vmem:[%s1 + $0xd8] sm:$0xff]
  %v3173 = vld [vmem:[%s1 + $0xe0] sm:$0xff]
  %v3174 = vld [vmem:[%s1 + $0xe8] sm:$0xff]
  %v3175 = vld [vmem:[%s1 + $0xf0] sm:$0xff]
  %v3176 = vld [vmem:[%s1 + $0xf8] sm:$0xff]
  %v3177 = vld [vmem:[%s1 + $0x100] sm:$0xff]
  %v3178 = vld [vmem:[%s1 + $0x108] sm:$0xff]
  %v3179 = vld [vmem:[%s1 + $0x110] sm:$0xff]
  %v3180 = vld [vmem:[%s1 + $0x118] sm:$0xff]
  %v3181 = vld [vmem:[%s1 + $0x120] sm:$0xff]
  %v3182 = vld [vmem:[%s1 + $0x128] sm:$0xff]
  %v3183 = vld [vmem:[%s1 + $0x130] sm:$0xff]
  %v3184 = vld [vmem:[%s1 + $0x138] sm:$0xff]
  %v3185 = vld [vmem:[%s1 + $0x140] sm:$0xff]
  %v3186 = vld [vmem:[%s1 + $0x148] sm:$0xff]
  %v3187 = vld [vmem:[%s1 + $0x150] sm:$0xff]
  %v3188 = vld [vmem:[%s1 + $0x158] sm:$0xff]
  %v3189 = vld [vmem:[%s1 + $0x160] sm:$0xff]
  %v3190 = vld [vmem:[%s1 + $0x168] sm:$0xff]
  %v3191 = vld [vmem:[%s1 + $0x170] sm:$0xff]
  %v3192 = vld [vmem:[%s1 + $0x178] sm:$0xff]
  %v3193 = vld [vmem:[%s1 + $0x180] sm:$0xff]
  %v3194 = vld [vmem:[%s1 + $0x188] sm:$0xff]
  %v3195 = vld [vmem:[%s1 + $0x190] sm:$0xff]
  %v3196 = vld [vmem:[%s1 + $0x198] sm:$0xff]
  %v3197 = vld [vmem:[%s1 + $0x1a0] sm:$0xff]
  %v3198 = vld [vmem:[%s1 + $0x1a8] sm:$0xff]
  %v3199 = vld [vmem:[%s1 + $0x1b0] sm:$0xff]
  %v3200 = vld [vmem:[%s1 + $0x1b8] sm:$0xff]
  %v3201 = vld [vmem:[%s1 + $0x1c0] sm:$0xff]
  %v3202 = vld [vmem:[%s1 + $0x1c8] sm:$0xff]
  %v3203 = vld [vmem:[%s1 + $0x1d0] sm:$0xff]
  %v3204 = vld [vmem:[%s1 + $0x1d8] sm:$0xff]
  %v3205 = vld [vmem:[%s1 + $0x1e0] sm:$0xff]
  %v3206 = vld [vmem:[%s1 + $0x1e8] sm:$0xff]
  %v3207 = vld [vmem:[%s1 + $0x1f0] sm:$0xff]
  %v3208 = vld [vmem:[%s1 + $0x1f8] sm:$0xff]
  %v3209 = vld [vmem:[%s1 + $0x200] sm:$0xff]
  %v3210 = vld [vmem:[%s1 + $0x208] sm:$0xff]
  %v3211 = vld [vmem:[%s1 + $0x210] sm:$0xff]
  %v3212 = vld [vmem:[%s1 + $0x218] sm:$0xff]
  %v3213 = vld [vmem:[%s1 + $0x220] sm:$0xff]
  %v3214 = vld [vmem:[%s1 + $0x228] sm:$0xff]
  %v3215 = vld [vmem:[%s1 + $0x230] sm:$0xff]
  %v3216 = vld [vmem:[%s1 + $0x238] sm:$0xff]
  %v3217 = vld [vmem:[%s1 + $0x240] sm:$0xff]
  %v3218 = vld [vmem:[%s1 + $0x248] sm:$0xff]
  %v3219 = vld [vmem:[%s1 + $0x250] sm:$0xff]
  %v3220 = vld [vmem:[%s1 + $0x258] sm:$0xff]
  %v3221 = vld [vmem:[%s1 + $0x260] sm:$0xff]
  %v3222 = vld [vmem:[%s1 + $0x268] sm:$0xff]
  %v3223 = vld [vmem:[%s1 + $0x270] sm:$0xff]
  %v3224 = vld [vmem:[%s1 + $0x278] sm:$0xff]
  %v3225 = vld [vmem:[%s1 + $0x280] sm:$0xff]
  %v3226 = vld [vmem:[%s1 + $0x288] sm:$0xff]
  %v3227 = vld [vmem:[%s1 + $0x290] sm:$0xff]
  %v3228 = vld [vmem:[%s1 + $0x298] sm:$0xff]
  %v3229 = vld [vmem:[%s1 + $0x2a0] sm:$0xff]
  %v3230 = vld [vmem:[%s1 + $0x2a8] sm:$0xff]
  %v3231 = vld [vmem:[%s1 + $0x2b0] sm:$0xff]
  %v3232 = vld [vmem:[%s1 + $0x2b8] sm:$0xff]
  %v3233 = vld [vmem:[%s1 + $0x2c0] sm:$0xff]
  %v3234 = vld [vmem:[%s1 + $0x2c8] sm:$0xff]
  %v3235 = vld [vmem:[%s1 + $0x2d0] sm:$0xff]
  %v3236 = vld [vmem:[%s1 + $0x2d8] sm:$0xff]
  %v3237 = vld [vmem:[%s1 + $0x2e0] sm:$0xff]
  %v3238 = vld [vmem:[%s1 + $0x2e8] sm:$0xff]
  %v3239 = vld [vmem:[%s1 + $0x2f0] sm:$0xff]
  %v3240 = vld [vmem:[%s1 + $0x2f8] sm:$0xff]
  %v3241 = vld [vmem:[%s1 + $0x300] sm:$0xff]
  %v3242 = vld [vmem:[%s1 + $0x308] sm:$0xff]
  %v3243 = vld [vmem:[%s1 + $0x310] sm:$0xff]
  %v3244 = vld [vmem:[%s1 + $0x318] sm:$0xff]
  %v3245 = vld [vmem:[%s1 + $0x320] sm:$0xff]
  %v3246 = vld [vmem:[%s1 + $0x328] sm:$0xff]
  %v3247 = vld [vmem:[%s1 + $0x330] sm:$0xff]
  %v3248 = vld [vmem:[%s1 + $0x338] sm:$0xff]
  %v3249 = vld [vmem:[%s1 + $0x340] sm:$0xff]
  %v3250 = vld [vmem:[%s1 + $0x348] sm:$0xff]
  %v3251 = vld [vmem:[%s1 + $0x350] sm:$0xff]
  %v3252 = vld [vmem:[%s1 + $0x358] sm:$0xff]
  %v3253 = vld [vmem:[%s1 + $0x360] sm:$0xff]
  %v3254 = vld [vmem:[%s1 + $0x368] sm:$0xff]
  %v3255 = vld [vmem:[%s1 + $0x370] sm:$0xff]
  %v3256 = vld [vmem:[%s1 + $0x378] sm:$0xff]
  %v3257 = vld [vmem:[%s1 + $0x380] sm:$0xff]
  %v3258 = vld [vmem:[%s1 + $0x388] sm:$0xff]
  %v3259 = vld [vmem:[%s1 + $0x390] sm:$0xff]
  %v3260 = vld [vmem:[%s1 + $0x398] sm:$0xff]
  %v3261 = vld [vmem:[%s1 + $0x3a0] sm:$0xff]
  %v3262 = vld [vmem:[%s1 + $0x3a8] sm:$0xff]
  %v3263 = vld [vmem:[%s1 + $0x3b0] sm:$0xff]
  %v3264 = vld [vmem:[%s1 + $0x3b8] sm:$0xff]
  %v3265 = vld [vmem:[%s1 + $0x3c0] sm:$0xff]
  %v3266 = vld [vmem:[%s1 + $0x3c8] sm:$0xff]
  %v3267 = vld [vmem:[%s1 + $0x3d0] sm:$0xff]
  %v3268 = vld [vmem:[%s1 + $0x3d8] sm:$0xff]
  %v3269 = vld [vmem:[%s1 + $0x3e0] sm:$0xff]
  %v3270 = vld [vmem:[%s1 + $0x3e8] sm:$0xff]
  %v3271 = vld [vmem:[%s1 + $0x3f0] sm:$0xff]
  %v3272 = vld [vmem:[%s1 + $0x3f8] sm:$0xff]
  %v3401 = vunpack.c.l.b16 %v3145
  %v3402 = vunpack.c.h.b16 %v3145
  %v3403 = vunpack.c.l.b16 %v3146
  %v3404 = vunpack.c.h.b16 %v3146
  %v3405 = vunpack.c.l.b16 %v3147
  %v3406 = vunpack.c.h.b16 %v3147
  %v3407 = vunpack.c.l.b16 %v3148
  %v3408 = vunpack.c.h.b16 %v3148
  %v3409 = vunpack.c.l.b16 %v3149
  %v3410 = vunpack.c.h.b16 %v3149
  %v3411 = vunpack.c.l.b16 %v3150
  %v3412 = vunpack.c.h.b16 %v3150
  %v3413 = vunpack.c.l.b16 %v3151
  %v3414 = vunpack.c.h.b16 %v3151
  %v3415 = vunpack.c.l.b16 %v3152
  %v3416 = vunpack.c.h.b16 %v3152
  %v3417 = vunpack.c.l.b16 %v3153
  %v3418 = vunpack.c.h.b16 %v3153
  %v3419 = vunpack.c.l.b16 %v3154
  %v3420 = vunpack.c.h.b16 %v3154
  %v3421 = vunpack.c.l.b16 %v3155
  %v3422 = vunpack.c.h.b16 %v3155
  %v3423 = vunpack.c.l.b16 %v3156
  %v3424 = vunpack.c.h.b16 %v3156
  %v3425 = vunpack.c.l.b16 %v3157
  %v3426 = vunpack.c.h.b16 %v3157
  %v3427 = vunpack.c.l.b16 %v3158
  %v3428 = vunpack.c.h.b16 %v3158
  %v3429 = vunpack.c.l.b16 %v3159
  %v3430 = vunpack.c.h.b16 %v3159
  %v3431 = vunpack.c.l.b16 %v3160
  %v3432 = vunpack.c.h.b16 %v3160
  %v3433 = vunpack.c.l.b16 %v3161
  %v3434 = vunpack.c.h.b16 %v3161
  %v3435 = vunpack.c.l.b16 %v3162
  %v3436 = vunpack.c.h.b16 %v3162
  %v3437 = vunpack.c.l.b16 %v3163
  %v3438 = vunpack.c.h.b16 %v3163
  %v3439 = vunpack.c.l.b16 %v3164
  %v3440 = vunpack.c.h.b16 %v3164
  %v3441 = vunpack.c.l.b16 %v3165
  %v3442 = vunpack.c.h.b16 %v3165
  %v3443 = vunpack.c.l.b16 %v3166
  %v3444 = vunpack.c.h.b16 %v3166
  %v3445 = vunpack.c.l.b16 %v3167
  %v3446 = vunpack.c.h.b16 %v3167
  %v3447 = vunpack.c.l.b16 %v3168
  %v3448 = vunpack.c.h.b16 %v3168
  %v3449 = vunpack.c.l.b16 %v3169
  %v3450 = vunpack.c.h.b16 %v3169
  %v3451 = vunpack.c.l.b16 %v3170
  %v3452 = vunpack.c.h.b16 %v3170
  %v3453 = vunpack.c.l.b16 %v3171
  %v3454 = vunpack.c.h.b16 %v3171
  %v3455 = vunpack.c.l.b16 %v3172
  %v3456 = vunpack.c.h.b16 %v3172
  %v3457 = vunpack.c.l.b16 %v3173
  %v3458 = vunpack.c.h.b16 %v3173
  %v3459 = vunpack.c.l.b16 %v3174
  %v3460 = vunpack.c.h.b16 %v3174
  %v3461 = vunpack.c.l.b16 %v3175
  %v3462 = vunpack.c.h.b16 %v3175
  %v3463 = vunpack.c.l.b16 %v3176
  %v3464 = vunpack.c.h.b16 %v3176
  %v3465 = vunpack.c.l.b16 %v3177
  %v3466 = vunpack.c.h.b16 %v3177
  %v3467 = vunpack.c.l.b16 %v3178
  %v3468 = vunpack.c.h.b16 %v3178
  %v3469 = vunpack.c.l.b16 %v3179
  %v3470 = vunpack.c.h.b16 %v3179
  %v3471 = vunpack.c.l.b16 %v3180
  %v3472 = vunpack.c.h.b16 %v3180
  %v3473 = vunpack.c.l.b16 %v3181
  %v3474 = vunpack.c.h.b16 %v3181
  %v3475 = vunpack.c.l.b16 %v3182
  %v3476 = vunpack.c.h.b16 %v3182
  %v3477 = vunpack.c.l.b16 %v3183
  %v3478 = vunpack.c.h.b16 %v3183
  %v3479 = vunpack.c.l.b16 %v3184
  %v3480 = vunpack.c.h.b16 %v3184
  %v3481 = vunpack.c.l.b16 %v3185
  %v3482 = vunpack.c.h.b16 %v3185
  %v3483 = vunpack.c.l.b16 %v3186
  %v3484 = vunpack.c.h.b16 %v3186
  %v3485 = vunpack.c.l.b16 %v3187
  %v3486 = vunpack.c.h.b16 %v3187
  %v3487 = vunpack.c.l.b16 %v3188
  %v3488 = vunpack.c.h.b16 %v3188
  %v3489 = vunpack.c.l.b16 %v3189
  %v3490 = vunpack.c.h.b16 %v3189
  %v3491 = vunpack.c.l.b16 %v3190
  %v3492 = vunpack.c.h.b16 %v3190
  %v3493 = vunpack.c.l.b16 %v3191
  %v3494 = vunpack.c.h.b16 %v3191
  %v3495 = vunpack.c.l.b16 %v3192
  %v3496 = vunpack.c.h.b16 %v3192
  %v3497 = vunpack.c.l.b16 %v3193
  %v3498 = vunpack.c.h.b16 %v3193
  %v3499 = vunpack.c.l.b16 %v3194
  %v3500 = vunpack.c.h.b16 %v3194
  %v3501 = vunpack.c.l.b16 %v3195
  %v3502 = vunpack.c.h.b16 %v3195
  %v3503 = vunpack.c.l.b16 %v3196
  %v3504 = vunpack.c.h.b16 %v3196
  %v3505 = vunpack.c.l.b16 %v3197
  %v3506 = vunpack.c.h.b16 %v3197
  %v3507 = vunpack.c.l.b16 %v3198
  %v3508 = vunpack.c.h.b16 %v3198
  %v3509 = vunpack.c.l.b16 %v3199
  %v3510 = vunpack.c.h.b16 %v3199
  %v3511 = vunpack.c.l.b16 %v3200
  %v3512 = vunpack.c.h.b16 %v3200
  %v3513 = vunpack.c.l.b16 %v3201
  %v3514 = vunpack.c.h.b16 %v3201
  %v3515 = vunpack.c.l.b16 %v3202
  %v3516 = vunpack.c.h.b16 %v3202
  %v3517 = vunpack.c.l.b16 %v3203
  %v3518 = vunpack.c.h.b16 %v3203
  %v3519 = vunpack.c.l.b16 %v3204
  %v3520 = vunpack.c.h.b16 %v3204
  %v3521 = vunpack.c.l.b16 %v3205
  %v3522 = vunpack.c.h.b16 %v3205
  %v3523 = vunpack.c.l.b16 %v3206
  %v3524 = vunpack.c.h.b16 %v3206
  %v3525 = vunpack.c.l.b16 %v3207
  %v3526 = vunpack.c.h.b16 %v3207
  %v3527 = vunpack.c.l.b16 %v3208
  %v3528 = vunpack.c.h.b16 %v3208
  %v3529 = vunpack.c.l.b16 %v3209
  %v3530 = vunpack.c.h.b16 %v3209
  %v3531 = vunpack.c.l.b16 %v3210
  %v3532 = vunpack.c.h.b16 %v3210
  %v3533 = vunpack.c.l.b16 %v3211
  %v3534 = vunpack.c.h.b16 %v3211
  %v3535 = vunpack.c.l.b16 %v3212
  %v3536 = vunpack.c.h.b16 %v3212
  %v3537 = vunpack.c.l.b16 %v3213
  %v3538 = vunpack.c.h.b16 %v3213
  %v3539 = vunpack.c.l.b16 %v3214
  %v3540 = vunpack.c.h.b16 %v3214
  %v3541 = vunpack.c.l.b16 %v3215
  %v3542 = vunpack.c.h.b16 %v3215
  %v3543 = vunpack.c.l.b16 %v3216
  %v3544 = vunpack.c.h.b16 %v3216
  %v3545 = vunpack.c.l.b16 %v3217
  %v3546 = vunpack.c.h.b16 %v3217
  %v3547 = vunpack.c.l.b16 %v3218
  %v3548 = vunpack.c.h.b16 %v3218
  %v3549 = vunpack.c.l.b16 %v3219
  %v3550 = vunpack.c.h.b16 %v3219
  %v3551 = vunpack.c.l.b16 %v3220
  %v3552 = vunpack.c.h.b16 %v3220
  %v3553 = vunpack.c.l.b16 %v3221
  %v3554 = vunpack.c.h.b16 %v3221
  %v3555 = vunpack.c.l.b16 %v3222
  %v3556 = vunpack.c.h.b16 %v3222
  %v3557 = vunpack.c.l.b16 %v3223
  %v3558 = vunpack.c.h.b16 %v3223
  %v3559 = vunpack.c.l.b16 %v3224
  %v3560 = vunpack.c.h.b16 %v3224
  %v3561 = vunpack.c.l.b16 %v3225
  %v3562 = vunpack.c.h.b16 %v3225
  %v3563 = vunpack.c.l.b16 %v3226
  %v3564 = vunpack.c.h.b16 %v3226
  %v3565 = vunpack.c.l.b16 %v3227
  %v3566 = vunpack.c.h.b16 %v3227
  %v3567 = vunpack.c.l.b16 %v3228
  %v3568 = vunpack.c.h.b16 %v3228
  %v3569 = vunpack.c.l.b16 %v3229
  %v3570 = vunpack.c.h.b16 %v3229
  %v3571 = vunpack.c.l.b16 %v3230
  %v3572 = vunpack.c.h.b16 %v3230
  %v3573 = vunpack.c.l.b16 %v3231
  %v3574 = vunpack.c.h.b16 %v3231
  %v3575 = vunpack.c.l.b16 %v3232
  %v3576 = vunpack.c.h.b16 %v3232
  %v3577 = vunpack.c.l.b16 %v3233
  %v3578 = vunpack.c.h.b16 %v3233
  %v3579 = vunpack.c.l.b16 %v3234
  %v3580 = vunpack.c.h.b16 %v3234
  %v3581 = vunpack.c.l.b16 %v3235
  %v3582 = vunpack.c.h.b16 %v3235
  %v3583 = vunpack.c.l.b16 %v3236
  %v3584 = vunpack.c.h.b16 %v3236
  %v3585 = vunpack.c.l.b16 %v3237
  %v3586 = vunpack.c.h.b16 %v3237
  %v3587 = vunpack.c.l.b16 %v3238
  %v3588 = vunpack.c.h.b16 %v3238
  %v3589 = vunpack.c.l.b16 %v3239
  %v3590 = vunpack.c.h.b16 %v3239
  %v3591 = vunpack.c.l.b16 %v3240
  %v3592 = vunpack.c.h.b16 %v3240
  %v3593 = vunpack.c.l.b16 %v3241
  %v3594 = vunpack.c.h.b16 %v3241
  %v3595 = vunpack.c.l.b16 %v3242
  %v3596 = vunpack.c.h.b16 %v3242
  %v3597 = vunpack.c.l.b16 %v3243
  %v3598 = vunpack.c.h.b16 %v3243
  %v3599 = vunpack.c.l.b16 %v3244
  %v3600 = vunpack.c.h.b16 %v3244
  %v3601 = vunpack.c.l.b16 %v3245
  %v3602 = vunpack.c.h.b16 %v3245
  %v3603 = vunpack.c.l.b16 %v3246
  %v3604 = vunpack.c.h.b16 %v3246
  %v3605 = vunpack.c.l.b16 %v3247
  %v3606 = vunpack.c.h.b16 %v3247
  %v3607 = vunpack.c.l.b16 %v3248
  %v3608 = vunpack.c.h.b16 %v3248
  %v3609 = vunpack.c.l.b16 %v3249
  %v3610 = vunpack.c.h.b16 %v3249
  %v3611 = vunpack.c.l.b16 %v3250
  %v3612 = vunpack.c.h.b16 %v3250
  %v3613 = vunpack.c.l.b16 %v3251
  %v3614 = vunpack.c.h.b16 %v3251
  %v3615 = vunpack.c.l.b16 %v3252
  %v3616 = vunpack.c.h.b16 %v3252
  %v3617 = vunpack.c.l.b16 %v3253
  %v3618 = vunpack.c.h.b16 %v3253
  %v3619 = vunpack.c.l.b16 %v3254
  %v3620 = vunpack.c.h.b16 %v3254
  %v3621 = vunpack.c.l.b16 %v3255
  %v3622 = vunpack.c.h.b16 %v3255
  %v3623 = vunpack.c.l.b16 %v3256
  %v3624 = vunpack.c.h.b16 %v3256
  %v3625 = vunpack.c.l.b16 %v3257
  %v3626 = vunpack.c.h.b16 %v3257
  %v3627 = vunpack.c.l.b16 %v3258
  %v3628 = vunpack.c.h.b16 %v3258
  %v3629 = vunpack.c.l.b16 %v3259
  %v3630 = vunpack.c.h.b16 %v3259
  %v3631 = vunpack.c.l.b16 %v3260
  %v3632 = vunpack.c.h.b16 %v3260
  %v3633 = vunpack.c.l.b16 %v3261
  %v3634 = vunpack.c.h.b16 %v3261
  %v3635 = vunpack.c.l.b16 %v3262
  %v3636 = vunpack.c.h.b16 %v3262
  %v3637 = vunpack.c.l.b16 %v3263
  %v3638 = vunpack.c.h.b16 %v3263
  %v3639 = vunpack.c.l.b16 %v3264
  %v3640 = vunpack.c.h.b16 %v3264
  %v3641 = vunpack.c.l.b16 %v3265
  %v3642 = vunpack.c.h.b16 %v3265
  %v3643 = vunpack.c.l.b16 %v3266
  %v3644 = vunpack.c.h.b16 %v3266
  %v3645 = vunpack.c.l.b16 %v3267
  %v3646 = vunpack.c.h.b16 %v3267
  %v3647 = vunpack.c.l.b16 %v3268
  %v3648 = vunpack.c.h.b16 %v3268
  %v3649 = vunpack.c.l.b16 %v3269
  %v3650 = vunpack.c.h.b16 %v3269
  %v3651 = vunpack.c.l.b16 %v3270
  %v3652 = vunpack.c.h.b16 %v3270
  %v3653 = vunpack.c.l.b16 %v3271
  %v3654 = vunpack.c.h.b16 %v3271
  %v3655 = vunpack.c.l.b16 %v3272
  %v3656 = vunpack.c.h.b16 %v3272
  %v3657 = vpack.c.b16 %v3409, %v3401
  %v3658 = vpack.c.b16 %v3410, %v3402
  %v3659 = vpack.c.b16 %v3411, %v3403
  %v3660 = vpack.c.b16 %v3412, %v3404
  %v3661 = vpack.c.b16 %v3413, %v3405
  %v3662 = vpack.c.b16 %v3414, %v3406
  %v3663 = vpack.c.b16 %v3415, %v3407
  %v3664 = vpack.c.b16 %v3416, %v3408
  %v3665 = vpack.c.b16 %v3425, %v3417
  %v3666 = vpack.c.b16 %v3426, %v3418
  %v3667 = vpack.c.b16 %v3427, %v3419
  %v3668 = vpack.c.b16 %v3428, %v3420
  %v3669 = vpack.c.b16 %v3429, %v3421
  %v3670 = vpack.c.b16 %v3430, %v3422
  %v3671 = vpack.c.b16 %v3431, %v3423
  %v3672 = vpack.c.b16 %v3432, %v3424
  %v3673 = vpack.c.b16 %v3441, %v3433
  %v3674 = vpack.c.b16 %v3442, %v3434
  %v3675 = vpack.c.b16 %v3443, %v3435
  %v3676 = vpack.c.b16 %v3444, %v3436
  %v3677 = vpack.c.b16 %v3445, %v3437
  %v3678 = vpack.c.b16 %v3446, %v3438
  %v3679 = vpack.c.b16 %v3447, %v3439
  %v3680 = vpack.c.b16 %v3448, %v3440
  %v3681 = vpack.c.b16 %v3457, %v3449
  %v3682 = vpack.c.b16 %v3458, %v3450
  %v3683 = vpack.c.b16 %v3459, %v3451
  %v3684 = vpack.c.b16 %v3460, %v3452
  %v3685 = vpack.c.b16 %v3461, %v3453
  %v3686 = vpack.c.b16 %v3462, %v3454
  %v3687 = vpack.c.b16 %v3463, %v3455
  %v3688 = vpack.c.b16 %v3464, %v3456
  %v3689 = vpack.c.b16 %v3473, %v3465
  %v3690 = vpack.c.b16 %v3474, %v3466
  %v3691 = vpack.c.b16 %v3475, %v3467
  %v3692 = vpack.c.b16 %v3476, %v3468
  %v3693 = vpack.c.b16 %v3477, %v3469
  %v3694 = vpack.c.b16 %v3478, %v3470
  %v3695 = vpack.c.b16 %v3479, %v3471
  %v3696 = vpack.c.b16 %v3480, %v3472
  %v3697 = vpack.c.b16 %v3489, %v3481
  %v3698 = vpack.c.b16 %v3490, %v3482
  %v3699 = vpack.c.b16 %v3491, %v3483
  %v3700 = vpack.c.b16 %v3492, %v3484
  %v3701 = vpack.c.b16 %v3493, %v3485
  %v3702 = vpack.c.b16 %v3494, %v3486
  %v3703 = vpack.c.b16 %v3495, %v3487
  %v3704 = vpack.c.b16 %v3496, %v3488
  %v3705 = vpack.c.b16 %v3505, %v3497
  %v3706 = vpack.c.b16 %v3506, %v3498
  %v3707 = vpack.c.b16 %v3507, %v3499
  %v3708 = vpack.c.b16 %v3508, %v3500
  %v3709 = vpack.c.b16 %v3509, %v3501
  %v3710 = vpack.c.b16 %v3510, %v3502
  %v3711 = vpack.c.b16 %v3511, %v3503
  %v3712 = vpack.c.b16 %v3512, %v3504
  %v3713 = vpack.c.b16 %v3521, %v3513
  %v3714 = vpack.c.b16 %v3522, %v3514
  %v3715 = vpack.c.b16 %v3523, %v3515
  %v3716 = vpack.c.b16 %v3524, %v3516
  %v3717 = vpack.c.b16 %v3525, %v3517
  %v3718 = vpack.c.b16 %v3526, %v3518
  %v3719 = vpack.c.b16 %v3527, %v3519
  %v3720 = vpack.c.b16 %v3528, %v3520
  %v3721 = vpack.c.b16 %v3537, %v3529
  %v3722 = vpack.c.b16 %v3538, %v3530
  %v3723 = vpack.c.b16 %v3539, %v3531
  %v3724 = vpack.c.b16 %v3540, %v3532
  %v3725 = vpack.c.b16 %v3541, %v3533
  %v3726 = vpack.c.b16 %v3542, %v3534
  %v3727 = vpack.c.b16 %v3543, %v3535
  %v3728 = vpack.c.b16 %v3544, %v3536
  %v3729 = vpack.c.b16 %v3553, %v3545
  %v3730 = vpack.c.b16 %v3554, %v3546
  %v3731 = vpack.c.b16 %v3555, %v3547
  %v3732 = vpack.c.b16 %v3556, %v3548
  %v3733 = vpack.c.b16 %v3557, %v3549
  %v3734 = vpack.c.b16 %v3558, %v3550
  %v3735 = vpack.c.b16 %v3559, %v3551
  %v3736 = vpack.c.b16 %v3560, %v3552
  %v3737 = vpack.c.b16 %v3569, %v3561
  %v3738 = vpack.c.b16 %v3570, %v3562
  %v3739 = vpack.c.b16 %v3571, %v3563
  %v3740 = vpack.c.b16 %v3572, %v3564
  %v3741 = vpack.c.b16 %v3573, %v3565
  %v3742 = vpack.c.b16 %v3574, %v3566
  %v3743 = vpack.c.b16 %v3575, %v3567
  %v3744 = vpack.c.b16 %v3576, %v3568
  %v3745 = vpack.c.b16 %v3585, %v3577
  %v3746 = vpack.c.b16 %v3586, %v3578
  %v3747 = vpack.c.b16 %v3587, %v3579
  %v3748 = vpack.c.b16 %v3588, %v3580
  %v3749 = vpack.c.b16 %v3589, %v3581
  %v3750 = vpack.c.b16 %v3590, %v3582
  %v3751 = vpack.c.b16 %v3591, %v3583
  %v3752 = vpack.c.b16 %v3592, %v3584
  %v3753 = vpack.c.b16 %v3601, %v3593
  %v3754 = vpack.c.b16 %v3602, %v3594
  %v3755 = vpack.c.b16 %v3603, %v3595
  %v3756 = vpack.c.b16 %v3604, %v3596
  %v3757 = vpack.c.b16 %v3605, %v3597
  %v3758 = vpack.c.b16 %v3606, %v3598
  %v3759 = vpack.c.b16 %v3607, %v3599
  %v3760 = vpack.c.b16 %v3608, %v3600
  %v3761 = vpack.c.b16 %v3617, %v3609
  %v3762 = vpack.c.b16 %v3618, %v3610
  %v3763 = vpack.c.b16 %v3619, %v3611
  %v3764 = vpack.c.b16 %v3620, %v3612
  %v3765 = vpack.c.b16 %v3621, %v3613
  %v3766 = vpack.c.b16 %v3622, %v3614
  %v3767 = vpack.c.b16 %v3623, %v3615
  %v3768 = vpack.c.b16 %v3624, %v3616
  %v3769 = vpack.c.b16 %v3633, %v3625
  %v3770 = vpack.c.b16 %v3634, %v3626
  %v3771 = vpack.c.b16 %v3635, %v3627
  %v3772 = vpack.c.b16 %v3636, %v3628
  %v3773 = vpack.c.b16 %v3637, %v3629
  %v3774 = vpack.c.b16 %v3638, %v3630
  %v3775 = vpack.c.b16 %v3639, %v3631
  %v3776 = vpack.c.b16 %v3640, %v3632
  %v3777 = vpack.c.b16 %v3649, %v3641
  %v3778 = vpack.c.b16 %v3650, %v3642
  %v3779 = vpack.c.b16 %v3651, %v3643
  %v3780 = vpack.c.b16 %v3652, %v3644
  %v3781 = vpack.c.b16 %v3653, %v3645
  %v3782 = vpack.c.b16 %v3654, %v3646
  %v3783 = vpack.c.b16 %v3655, %v3647
  %v3784 = vpack.c.b16 %v3656, %v3648
  %3913 = vmatprep.subr.bf16.mxu0 %v3658
  %3914 = vmatpush1.bf16.msra.mxu0 %v3657
  %3915 = vmatprep.subr.bf16.mxu0 %v3666
  %3916 = vmatpush1.bf16.msra.mxu0 %v3665
  %3917 = vmatprep.subr.bf16.mxu0 %v3674
  %3918 = vmatpush1.bf16.msra.mxu0 %v3673
  %3919 = vmatprep.subr.bf16.mxu0 %v3682
  %3920 = vmatpush1.bf16.msra.mxu0 %v3681
  %3921 = vmatprep.subr.bf16.mxu0 %v3690
  %3922 = vmatpush1.bf16.msra.mxu0 %v3689
  %3923 = vmatprep.subr.bf16.mxu0 %v3698
  %3924 = vmatpush1.bf16.msra.mxu0 %v3697
  %3925 = vmatprep.subr.bf16.mxu0 %v3706
  %3926 = vmatpush1.bf16.msra.mxu0 %v3705
  %3927 = vmatprep.subr.bf16.mxu0 %v3714
  %3928 = vmatpush1.bf16.msra.mxu0 %v3713
  %3929 = vmatprep.subr.bf16.mxu0 %v3722
  %3930 = vmatpush1.bf16.msra.mxu0 %v3721
  %3931 = vmatprep.subr.bf16.mxu0 %v3730
  %3932 = vmatpush1.bf16.msra.mxu0 %v3729
  %3933 = vmatprep.subr.bf16.mxu0 %v3738
  %3934 = vmatpush1.bf16.msra.mxu0 %v3737
  %3935 = vmatprep.subr.bf16.mxu0 %v3746
  %3936 = vmatpush1.bf16.msra.mxu0 %v3745
  %3937 = vmatprep.subr.bf16.mxu0 %v3754
  %3938 = vmatpush1.bf16.msra.mxu0 %v3753
  %3939 = vmatprep.subr.bf16.mxu0 %v3762
  %3940 = vmatpush1.bf16.msra.mxu0 %v3761
  %3941 = vmatprep.subr.bf16.mxu0 %v3770
  %3942 = vmatpush1.bf16.msra.mxu0 %v3769
  %3943 = vmatprep.subr.bf16.mxu0 %v3778
  %3944 = vmatpush1.bf16.msra.mxu0 %v3777
  %3945 = vmatprep.mubr.bf16.mxu0 %v3121
  %3946 = vmatmul.mubr.bf16.gmra.mrb[0].mxu0 %v3120
  %v3947 = vpop.f32.mrb[0].mxu0
  %v3948 = vadd.f32 0.0, %v3947
  %v3949 = vpop.f32.mrb[0].mxu0
  %v3950 = vadd.f32 0.0, %v3949
  %v3951 = vpop.f32.mrb[0].mxu0
  %v3952 = vpop.f32.mrb[0].mxu0
  %3953 = vdwg.mxu0
  %3954 = vmatprep.subr.bf16.mxu0 %v3660
  %3955 = vmatpush1.bf16.msra.mxu0 %v3659
  %3956 = vmatprep.subr.bf16.mxu0 %v3668
  %3957 = vmatpush1.bf16.msra.mxu0 %v3667
  %3958 = vmatprep.subr.bf16.mxu0 %v3676
  %3959 = vmatpush1.bf16.msra.mxu0 %v3675
  %3960 = vmatprep.subr.bf16.mxu0 %v3684
  %3961 = vmatpush1.bf16.msra.mxu0 %v3683
  %3962 = vmatprep.subr.bf16.mxu0 %v3692
  %3963 = vmatpush1.bf16.msra.mxu0 %v3691
  %3964 = vmatprep.subr.bf16.mxu0 %v3700
  %3965 = vmatpush1.bf16.msra.mxu0 %v3699
  %3966 = vmatprep.subr.bf16.mxu0 %v3708
  %3967 = vmatpush1.bf16.msra.mxu0 %v3707
  %3968 = vmatprep.subr.bf16.mxu0 %v3716
  %3969 = vmatpush1.bf16.msra.mxu0 %v3715
  %3970 = vmatprep.subr.bf16.mxu0 %v3724
  %3971 = vmatpush1.bf16.msra.mxu0 %v3723
  %3972 = vmatprep.subr.bf16.mxu0 %v3732
  %3973 = vmatpush1.bf16.msra.mxu0 %v3731
  %3974 = vmatprep.subr.bf16.mxu0 %v3740
  %3975 = vmatpush1.bf16.msra.mxu0 %v3739
  %3976 = vmatprep.subr.bf16.mxu0 %v3748
  %3977 = vmatpush1.bf16.msra.mxu0 %v3747
  %3978 = vmatprep.subr.bf16.mxu0 %v3756
  %3979 = vmatpush1.bf16.msra.mxu0 %v3755
  %3980 = vmatprep.subr.bf16.mxu0 %v3764
  %3981 = vmatpush1.bf16.msra.mxu0 %v3763
  %3982 = vmatprep.subr.bf16.mxu0 %v3772
  %3983 = vmatpush1.bf16.msra.mxu0 %v3771
  %3984 = vmatprep.subr.bf16.mxu0 %v3780
  %3985 = vmatpush1.bf16.msra.mxu0 %v3779
  %3986 = vmatprep.mubr.bf16.mxu0 %v3121
  %3987 = vmatmul.mubr.bf16.gmra.mrb[0].mxu0 %v3120
  %v3988 = vpop.f32.mrb[0].mxu0
  %v3989 = vadd.f32 0.0, %v3988
  %v3990 = vpop.f32.mrb[0].mxu0
  %v3991 = vadd.f32 0.0, %v3990
  %v3992 = vpop.f32.mrb[0].mxu0
  %v3993 = vpop.f32.mrb[0].mxu0
  %3994 = vdwg.mxu0
  %3995 = vmatprep.subr.bf16.mxu0 %v3662
  %3996 = vmatpush1.bf16.msra.mxu0 %v3661
  %3997 = vmatprep.subr.bf16.mxu0 %v3670
  %3998 = vmatpush1.bf16.msra.mxu0 %v3669
  %3999 = vmatprep.subr.bf16.mxu0 %v3678
  %4000 = vmatpush1.bf16.msra.mxu0 %v3677
  %4001 = vmatprep.subr.bf16.mxu0 %v3686
  %4002 = vmatpush1.bf16.msra.mxu0 %v3685
  %4003 = vmatprep.subr.bf16.mxu0 %v3694
  %4004 = vmatpush1.bf16.msra.mxu0 %v3693
  %4005 = vmatprep.subr.bf16.mxu0 %v3702
  %4006 = vmatpush1.bf16.msra.mxu0 %v3701
  %4007 = vmatprep.subr.bf16.mxu0 %v3710
  %4008 = vmatpush1.bf16.msra.mxu0 %v3709
  %4009 = vmatprep.subr.bf16.mxu0 %v3718
  %4010 = vmatpush1.bf16.msra.mxu0 %v3717
  %4011 = vmatprep.subr.bf16.mxu0 %v3726
  %4012 = vmatpush1.bf16.msra.mxu0 %v3725
  %4013 = vmatprep.subr.bf16.mxu0 %v3734
  %4014 = vmatpush1.bf16.msra.mxu0 %v3733
  %4015 = vmatprep.subr.bf16.mxu0 %v3742
  %4016 = vmatpush1.bf16.msra.mxu0 %v3741
  %4017 = vmatprep.subr.bf16.mxu0 %v3750
  %4018 = vmatpush1.bf16.msra.mxu0 %v3749
  %4019 = vmatprep.subr.bf16.mxu0 %v3758
  %4020 = vmatpush1.bf16.msra.mxu0 %v3757
  %4021 = vmatprep.subr.bf16.mxu0 %v3766
  %4022 = vmatpush1.bf16.msra.mxu0 %v3765
  %4023 = vmatprep.subr.bf16.mxu0 %v3774
  %4024 = vmatpush1.bf16.msra.mxu0 %v3773
  %4025 = vmatprep.subr.bf16.mxu0 %v3782
  %4026 = vmatpush1.bf16.msra.mxu0 %v3781
  %4027 = vmatprep.mubr.bf16.mxu0 %v3121
  %4028 = vmatmul.mubr.bf16.gmra.mrb[0].mxu0 %v3120
  %v4029 = vpop.f32.mrb[0].mxu0
  %v4030 = vadd.f32 0.0, %v4029
  %v4031 = vpop.f32.mrb[0].mxu0
  %v4032 = vadd.f32 0.0, %v4031
  %v4033 = vpop.f32.mrb[0].mxu0
  %v4034 = vpop.f32.mrb[0].mxu0
  %4035 = vdwg.mxu0
  %4036 = vmatprep.subr.bf16.mxu0 %v3664
  %4037 = vmatpush1.bf16.msra.mxu0 %v3663
  %4038 = vmatprep.subr.bf16.mxu0 %v3672
  %4039 = vmatpush1.bf16.msra.mxu0 %v3671
  %4040 = vmatprep.subr.bf16.mxu0 %v3680
  %4041 = vmatpush1.bf16.msra.mxu0 %v3679
  %4042 = vmatprep.subr.bf16.mxu0 %v3688
  %4043 = vmatpush1.bf16.msra.mxu0 %v3687
  %4044 = vmatprep.subr.bf16.mxu0 %v3696
  %4045 = vmatpush1.bf16.msra.mxu0 %v3695
  %4046 = vmatprep.subr.bf16.mxu0 %v3704
  %4047 = vmatpush1.bf16.msra.mxu0 %v3703
  %4048 = vmatprep.subr.bf16.mxu0 %v3712
  %4049 = vmatpush1.bf16.msra.mxu0 %v3711
  %4050 = vmatprep.subr.bf16.mxu0 %v3720
  %4051 = vmatpush1.bf16.msra.mxu0 %v3719
  %4052 = vmatprep.subr.bf16.mxu0 %v3728
  %4053 = vmatpush1.bf16.msra.mxu0 %v3727
  %4054 = vmatprep.subr.bf16.mxu0 %v3736
  %4055 = vmatpush1.bf16.msra.mxu0 %v3735
  %4056 = vmatprep.subr.bf16.mxu0 %v3744
  %4057 = vmatpush1.bf16.msra.mxu0 %v3743
  %4058 = vmatprep.subr.bf16.mxu0 %v3752
  %4059 = vmatpush1.bf16.msra.mxu0 %v3751
  %4060 = vmatprep.subr.bf16.mxu0 %v3760
  %4061 = vmatpush1.bf16.msra.mxu0 %v3759
  %4062 = vmatprep.subr.bf16.mxu0 %v3768
  %4063 = vmatpush1.bf16.msra.mxu0 %v3767
  %4064 = vmatprep.subr.bf16.mxu0 %v3776
  %4065 = vmatpush1.bf16.msra.mxu0 %v3775
  %4066 = vmatprep.subr.bf16.mxu0 %v3784
  %4067 = vmatpush1.bf16.msra.mxu0 %v3783
  %4068 = vmatprep.mubr.bf16.mxu0 %v3121
  %4069 = vmatmul.mubr.bf16.gmra.mrb[0].mxu0 %v3120
  %v4070 = vpop.f32.mrb[0].mxu0
  %v4071 = vadd.f32 0.0, %v4070
  %v4072 = vpop.f32.mrb[0].mxu0
  %v4073 = vadd.f32 0.0, %v4072
  %v4074 = vpop.f32.mrb[0].mxu0
  %v4075 = vpop.f32.mrb[0].mxu0
  %4076 = vdwg.mxu0
  %v4085 = vcombine.low %v3948, %v3950
  %v4086 = vcombine.low %v3989, %v3991
  %v4088 = vunpack.c.l.s4 1983009808
  %v4089 = vunpack.c.0.s8 %v4088
  %v4090 = vlaneseq
  %v4091 = vshrl.u32 %v4090, 7
  %v4092 = vsub.s32 %v4089, %v4091
  %v4093 = vrot.slane %v4085, %v4092
  %v4095 = vunpack.c.l.s4 1983009808
  %v4096 = vunpack.c.0.s8 %v4095
  %v4097 = vlaneseq
  %v4098 = vshrl.u32 %v4097, 7
  %v4099 = vsub.s32 %v4096, %v4098
  %v4100 = vrot.slane %v4086, %v4099
  %v4101 = vcombine.low %v4093, %v4100
  %v4102 = vcombine.low %v4030, %v4032
  %v4103 = vcombine.low %v4071, %v4073
  %v4105 = vunpack.c.l.s4 1983009808
  %v4106 = vunpack.c.0.s8 %v4105
  %v4107 = vlaneseq
  %v4108 = vshrl.u32 %v4107, 7
  %v4109 = vsub.s32 %v4106, %v4108
  %v4110 = vrot.slane %v4102, %v4109
  %v4112 = vunpack.c.l.s4 1983009808
  %v4113 = vunpack.c.0.s8 %v4112
  %v4114 = vlaneseq
  %v4115 = vshrl.u32 %v4114, 7
  %v4116 = vsub.s32 %v4113, %v4115
  %v4117 = vrot.slane %v4103, %v4116
  %v4118 = vcombine.low %v4110, %v4117
  %v4121 = vadd.f32 %v3143, %v4101
  %v4122 = vadd.f32 %v3144, %v4118
  %v4123 = vxor.u32 %v4121, 2147483648
  %v4124 = vmul.f32 %v4123, 1.442695
  %v4125 = vpow.pop %v4124
  %v4126 = vadd.f32 %v4125, 1.0
  %v4127 = vrcp.pop %v4126
  %v4128 = vmul.f32 1.0, %v4127
  %v4130 = vrot.slane %v4121, 4
  %v4132 = vxor.u32 %v4130, 2147483648
  %v4133 = vmul.f32 %v4132, 1.442695
  %v4134 = vpow.pop %v4133
  %v4135 = vadd.f32 %v4134, 1.0
  %v4136 = vrcp.pop %v4135
  %v4137 = vmul.f32 1.0, %v4136
  %v4138 = vtanh.pop %v4122
  %v4140 = vrot.slane %v4122, 4
  %v4142 = vxor.u32 %v4140, 2147483648
  %v4143 = vmul.f32 %v4142, 1.442695
  %v4144 = vpow.pop %v4143
  %v4145 = vadd.f32 %v4144, 1.0
  %v4146 = vrcp.pop %v4145
  %v4147 = vmul.f32 1.0, %v4146
  %v4148 = vmul.f32 %v4137, %v3106
  %v4149 = vmul.f32 %v4128, %v4138
  %v4150 = vadd.f32 %v4148, %v4149
  %v4151 = vtanh.pop %v4150
  %v4152 = vmul.f32 %v4147, %v4151
  %v4155 = vunpack.c.l.s4 1983009808
  %v4156 = vunpack.c.0.s8 %v4155
  %v4157 = vlaneseq
  %v4158 = vshrl.u32 %v4157, 7
  %v4159 = vsub.s32 %v4156, %v4158
  %v4160 = vrot.slane %v4152, %v4159
  %v4161 = vcombine.high %v4160, %v4160
  %v4164 = vpack.c.bf16 %v4160, %v4160
  %v4165 = vpack.c.bf16 %v4161, %v4161
  %v4168 = vcombine.low %v4164, %v4165
  %v4170 = vunpack.c.l.s4 1966171168
  %v4171 = vunpack.c.0.s8 %v4170
  %v4172 = vlaneseq
  %v4173 = vshrl.u32 %v4172, 7
  %v4174 = vsub.s32 %v4171, %v4173
  %v4175 = vrot.slane %v4168, %v4174
  %v4177 = vunpack.c.l.s4 1966171168
  %v4178 = vunpack.c.0.s8 %v4177
  %v4179 = vlaneseq
  %v4180 = vshrl.u32 %v4179, 7
  %v4181 = vsub.s32 %v4178, %v4180
  %v4182 = vrot.slane %v4175, %v4181
  %s4184 = scalar_lea.vmem %s2, 6
  %4185 = vst [vmem:[%s4184] sm:$0x3] %v4182
  %s4186 = scalar_lea.vmem %s0, 64
  %v4187 = vld [vmem:[%s4186] sm:$0xff]
  %v4188 = vld [vmem:[%s4186 + $0x8] sm:$0xff]
  %v4189 = vld [vmem:[%s1] sm:$0xff]
  %v4190 = vld [vmem:[%s1 + $0x8] sm:$0xff]
  %v4191 = vld [vmem:[%s1 + $0x10] sm:$0xff]
  %v4192 = vld [vmem:[%s1 + $0x18] sm:$0xff]
  %v4193 = vld [vmem:[%s1 + $0x20] sm:$0xff]
  %v4194 = vld [vmem:[%s1 + $0x28] sm:$0xff]
  %v4195 = vld [vmem:[%s1 + $0x30] sm:$0xff]
  %v4196 = vld [vmem:[%s1 + $0x38] sm:$0xff]
  %v4197 = vld [vmem:[%s1 + $0x40] sm:$0xff]
  %v4198 = vld [vmem:[%s1 + $0x48] sm:$0xff]
  %v4199 = vld [vmem:[%s1 + $0x50] sm:$0xff]
  %v4200 = vld [vmem:[%s1 + $0x58] sm:$0xff]
  %v4201 = vld [vmem:[%s1 + $0x60] sm:$0xff]
  %v4202 = vld [vmem:[%s1 + $0x68] sm:$0xff]
  %v4203 = vld [vmem:[%s1 + $0x70] sm:$0xff]
  %v4204 = vld [vmem:[%s1 + $0x78] sm:$0xff]
  %v4205 = vld [vmem:[%s1 + $0x80] sm:$0xff]
  %v4206 = vld [vmem:[%s1 + $0x88] sm:$0xff]
  %v4207 = vld [vmem:[%s1 + $0x90] sm:$0xff]
  %v4208 = vld [vmem:[%s1 + $0x98] sm:$0xff]
  %v4209 = vld [vmem:[%s1 + $0xa0] sm:$0xff]
  %v4210 = vld [vmem:[%s1 + $0xa8] sm:$0xff]
  %v4211 = vld [vmem:[%s1 + $0xb0] sm:$0xff]
  %v4212 = vld [vmem:[%s1 + $0xb8] sm:$0xff]
  %v4213 = vld [vmem:[%s1 + $0xc0] sm:$0xff]
  %v4214 = vld [vmem:[%s1 + $0xc8] sm:$0xff]
  %v4215 = vld [vmem:[%s1 + $0xd0] sm:$0xff]
  %v4216 = vld [vmem:[%s1 + $0xd8] sm:$0xff]
  %v4217 = vld [vmem:[%s1 + $0xe0] sm:$0xff]
  %v4218 = vld [vmem:[%s1 + $0xe8] sm:$0xff]
  %v4219 = vld [vmem:[%s1 + $0xf0] sm:$0xff]
  %v4220 = vld [vmem:[%s1 + $0xf8] sm:$0xff]
  %v4221 = vld [vmem:[%s1 + $0x100] sm:$0xff]
  %v4222 = vld [vmem:[%s1 + $0x108] sm:$0xff]
  %v4223 = vld [vmem:[%s1 + $0x110] sm:$0xff]
  %v4224 = vld [vmem:[%s1 + $0x118] sm:$0xff]
  %v4225 = vld [vmem:[%s1 + $0x120] sm:$0xff]
  %v4226 = vld [vmem:[%s1 + $0x128] sm:$0xff]
  %v4227 = vld [vmem:[%s1 + $0x130] sm:$0xff]
  %v4228 = vld [vmem:[%s1 + $0x138] sm:$0xff]
  %v4229 = vld [vmem:[%s1 + $0x140] sm:$0xff]
  %v4230 = vld [vmem:[%s1 + $0x148] sm:$0xff]
  %v4231 = vld [vmem:[%s1 + $0x150] sm:$0xff]
  %v4232 = vld [vmem:[%s1 + $0x158] sm:$0xff]
  %v4233 = vld [vmem:[%s1 + $0x160] sm:$0xff]
  %v4234 = vld [vmem:[%s1 + $0x168] sm:$0xff]
  %v4235 = vld [vmem:[%s1 + $0x170] sm:$0xff]
  %v4236 = vld [vmem:[%s1 + $0x178] sm:$0xff]
  %v4237 = vld [vmem:[%s1 + $0x180] sm:$0xff]
  %v4238 = vld [vmem:[%s1 + $0x188] sm:$0xff]
  %v4239 = vld [vmem:[%s1 + $0x190] sm:$0xff]
  %v4240 = vld [vmem:[%s1 + $0x198] sm:$0xff]
  %v4241 = vld [vmem:[%s1 + $0x1a0] sm:$0xff]
  %v4242 = vld [vmem:[%s1 + $0x1a8] sm:$0xff]
  %v4243 = vld [vmem:[%s1 + $0x1b0] sm:$0xff]
  %v4244 = vld [vmem:[%s1 + $0x1b8] sm:$0xff]
  %v4245 = vld [vmem:[%s1 + $0x1c0] sm:$0xff]
  %v4246 = vld [vmem:[%s1 + $0x1c8] sm:$0xff]
  %v4247 = vld [vmem:[%s1 + $0x1d0] sm:$0xff]
  %v4248 = vld [vmem:[%s1 + $0x1d8] sm:$0xff]
  %v4249 = vld [vmem:[%s1 + $0x1e0] sm:$0xff]
  %v4250 = vld [vmem:[%s1 + $0x1e8] sm:$0xff]
  %v4251 = vld [vmem:[%s1 + $0x1f0] sm:$0xff]
  %v4252 = vld [vmem:[%s1 + $0x1f8] sm:$0xff]
  %v4253 = vld [vmem:[%s1 + $0x200] sm:$0xff]
  %v4254 = vld [vmem:[%s1 + $0x208] sm:$0xff]
  %v4255 = vld [vmem:[%s1 + $0x210] sm:$0xff]
  %v4256 = vld [vmem:[%s1 + $0x218] sm:$0xff]
  %v4257 = vld [vmem:[%s1 + $0x220] sm:$0xff]
  %v4258 = vld [vmem:[%s1 + $0x228] sm:$0xff]
  %v4259 = vld [vmem:[%s1 + $0x230] sm:$0xff]
  %v4260 = vld [vmem:[%s1 + $0x238] sm:$0xff]
  %v4261 = vld [vmem:[%s1 + $0x240] sm:$0xff]
  %v4262 = vld [vmem:[%s1 + $0x248] sm:$0xff]
  %v4263 = vld [vmem:[%s1 + $0x250] sm:$0xff]
  %v4264 = vld [vmem:[%s1 + $0x258] sm:$0xff]
  %v4265 = vld [vmem:[%s1 + $0x260] sm:$0xff]
  %v4266 = vld [vmem:[%s1 + $0x268] sm:$0xff]
  %v4267 = vld [vmem:[%s1 + $0x270] sm:$0xff]
  %v4268 = vld [vmem:[%s1 + $0x278] sm:$0xff]
  %v4269 = vld [vmem:[%s1 + $0x280] sm:$0xff]
  %v4270 = vld [vmem:[%s1 + $0x288] sm:$0xff]
  %v4271 = vld [vmem:[%s1 + $0x290] sm:$0xff]
  %v4272 = vld [vmem:[%s1 + $0x298] sm:$0xff]
  %v4273 = vld [vmem:[%s1 + $0x2a0] sm:$0xff]
  %v4274 = vld [vmem:[%s1 + $0x2a8] sm:$0xff]
  %v4275 = vld [vmem:[%s1 + $0x2b0] sm:$0xff]
  %v4276 = vld [vmem:[%s1 + $0x2b8] sm:$0xff]
  %v4277 = vld [vmem:[%s1 + $0x2c0] sm:$0xff]
  %v4278 = vld [vmem:[%s1 + $0x2c8] sm:$0xff]
  %v4279 = vld [vmem:[%s1 + $0x2d0] sm:$0xff]
  %v4280 = vld [vmem:[%s1 + $0x2d8] sm:$0xff]
  %v4281 = vld [vmem:[%s1 + $0x2e0] sm:$0xff]
  %v4282 = vld [vmem:[%s1 + $0x2e8] sm:$0xff]
  %v4283 = vld [vmem:[%s1 + $0x2f0] sm:$0xff]
  %v4284 = vld [vmem:[%s1 + $0x2f8] sm:$0xff]
  %v4285 = vld [vmem:[%s1 + $0x300] sm:$0xff]
  %v4286 = vld [vmem:[%s1 + $0x308] sm:$0xff]
  %v4287 = vld [vmem:[%s1 + $0x310] sm:$0xff]
  %v4288 = vld [vmem:[%s1 + $0x318] sm:$0xff]
  %v4289 = vld [vmem:[%s1 + $0x320] sm:$0xff]
  %v4290 = vld [vmem:[%s1 + $0x328] sm:$0xff]
  %v4291 = vld [vmem:[%s1 + $0x330] sm:$0xff]
  %v4292 = vld [vmem:[%s1 + $0x338] sm:$0xff]
  %v4293 = vld [vmem:[%s1 + $0x340] sm:$0xff]
  %v4294 = vld [vmem:[%s1 + $0x348] sm:$0xff]
  %v4295 = vld [vmem:[%s1 + $0x350] sm:$0xff]
  %v4296 = vld [vmem:[%s1 + $0x358] sm:$0xff]
  %v4297 = vld [vmem:[%s1 + $0x360] sm:$0xff]
  %v4298 = vld [vmem:[%s1 + $0x368] sm:$0xff]
  %v4299 = vld [vmem:[%s1 + $0x370] sm:$0xff]
  %v4300 = vld [vmem:[%s1 + $0x378] sm:$0xff]
  %v4301 = vld [vmem:[%s1 + $0x380] sm:$0xff]
  %v4302 = vld [vmem:[%s1 + $0x388] sm:$0xff]
  %v4303 = vld [vmem:[%s1 + $0x390] sm:$0xff]
  %v4304 = vld [vmem:[%s1 + $0x398] sm:$0xff]
  %v4305 = vld [vmem:[%s1 + $0x3a0] sm:$0xff]
  %v4306 = vld [vmem:[%s1 + $0x3a8] sm:$0xff]
  %v4307 = vld [vmem:[%s1 + $0x3b0] sm:$0xff]
  %v4308 = vld [vmem:[%s1 + $0x3b8] sm:$0xff]
  %v4309 = vld [vmem:[%s1 + $0x3c0] sm:$0xff]
  %v4310 = vld [vmem:[%s1 + $0x3c8] sm:$0xff]
  %v4311 = vld [vmem:[%s1 + $0x3d0] sm:$0xff]
  %v4312 = vld [vmem:[%s1 + $0x3d8] sm:$0xff]
  %v4313 = vld [vmem:[%s1 + $0x3e0] sm:$0xff]
  %v4314 = vld [vmem:[%s1 + $0x3e8] sm:$0xff]
  %v4315 = vld [vmem:[%s1 + $0x3f0] sm:$0xff]
  %v4316 = vld [vmem:[%s1 + $0x3f8] sm:$0xff]
  %v4445 = vunpack.c.l.b16 %v4189
  %v4446 = vunpack.c.h.b16 %v4189
  %v4447 = vunpack.c.l.b16 %v4190
  %v4448 = vunpack.c.h.b16 %v4190
  %v4449 = vunpack.c.l.b16 %v4191
  %v4450 = vunpack.c.h.b16 %v4191
  %v4451 = vunpack.c.l.b16 %v4192
  %v4452 = vunpack.c.h.b16 %v4192
  %v4453 = vunpack.c.l.b16 %v4193
  %v4454 = vunpack.c.h.b16 %v4193
  %v4455 = vunpack.c.l.b16 %v4194
  %v4456 = vunpack.c.h.b16 %v4194
  %v4457 = vunpack.c.l.b16 %v4195
  %v4458 = vunpack.c.h.b16 %v4195
  %v4459 = vunpack.c.l.b16 %v4196
  %v4460 = vunpack.c.h.b16 %v4196
  %v4461 = vunpack.c.l.b16 %v4197
  %v4462 = vunpack.c.h.b16 %v4197
  %v4463 = vunpack.c.l.b16 %v4198
  %v4464 = vunpack.c.h.b16 %v4198
  %v4465 = vunpack.c.l.b16 %v4199
  %v4466 = vunpack.c.h.b16 %v4199
  %v4467 = vunpack.c.l.b16 %v4200
  %v4468 = vunpack.c.h.b16 %v4200
  %v4469 = vunpack.c.l.b16 %v4201
  %v4470 = vunpack.c.h.b16 %v4201
  %v4471 = vunpack.c.l.b16 %v4202
  %v4472 = vunpack.c.h.b16 %v4202
  %v4473 = vunpack.c.l.b16 %v4203
  %v4474 = vunpack.c.h.b16 %v4203
  %v4475 = vunpack.c.l.b16 %v4204
  %v4476 = vunpack.c.h.b16 %v4204
  %v4477 = vunpack.c.l.b16 %v4205
  %v4478 = vunpack.c.h.b16 %v4205
  %v4479 = vunpack.c.l.b16 %v4206
  %v4480 = vunpack.c.h.b16 %v4206
  %v4481 = vunpack.c.l.b16 %v4207
  %v4482 = vunpack.c.h.b16 %v4207
  %v4483 = vunpack.c.l.b16 %v4208
  %v4484 = vunpack.c.h.b16 %v4208
  %v4485 = vunpack.c.l.b16 %v4209
  %v4486 = vunpack.c.h.b16 %v4209
  %v4487 = vunpack.c.l.b16 %v4210
  %v4488 = vunpack.c.h.b16 %v4210
  %v4489 = vunpack.c.l.b16 %v4211
  %v4490 = vunpack.c.h.b16 %v4211
  %v4491 = vunpack.c.l.b16 %v4212
  %v4492 = vunpack.c.h.b16 %v4212
  %v4493 = vunpack.c.l.b16 %v4213
  %v4494 = vunpack.c.h.b16 %v4213
  %v4495 = vunpack.c.l.b16 %v4214
  %v4496 = vunpack.c.h.b16 %v4214
  %v4497 = vunpack.c.l.b16 %v4215
  %v4498 = vunpack.c.h.b16 %v4215
  %v4499 = vunpack.c.l.b16 %v4216
  %v4500 = vunpack.c.h.b16 %v4216
  %v4501 = vunpack.c.l.b16 %v4217
  %v4502 = vunpack.c.h.b16 %v4217
  %v4503 = vunpack.c.l.b16 %v4218
  %v4504 = vunpack.c.h.b16 %v4218
  %v4505 = vunpack.c.l.b16 %v4219
  %v4506 = vunpack.c.h.b16 %v4219
  %v4507 = vunpack.c.l.b16 %v4220
  %v4508 = vunpack.c.h.b16 %v4220
  %v4509 = vunpack.c.l.b16 %v4221
  %v4510 = vunpack.c.h.b16 %v4221
  %v4511 = vunpack.c.l.b16 %v4222
  %v4512 = vunpack.c.h.b16 %v4222
  %v4513 = vunpack.c.l.b16 %v4223
  %v4514 = vunpack.c.h.b16 %v4223
  %v4515 = vunpack.c.l.b16 %v4224
  %v4516 = vunpack.c.h.b16 %v4224
  %v4517 = vunpack.c.l.b16 %v4225
  %v4518 = vunpack.c.h.b16 %v4225
  %v4519 = vunpack.c.l.b16 %v4226
  %v4520 = vunpack.c.h.b16 %v4226
  %v4521 = vunpack.c.l.b16 %v4227
  %v4522 = vunpack.c.h.b16 %v4227
  %v4523 = vunpack.c.l.b16 %v4228
  %v4524 = vunpack.c.h.b16 %v4228
  %v4525 = vunpack.c.l.b16 %v4229
  %v4526 = vunpack.c.h.b16 %v4229
  %v4527 = vunpack.c.l.b16 %v4230
  %v4528 = vunpack.c.h.b16 %v4230
  %v4529 = vunpack.c.l.b16 %v4231
  %v4530 = vunpack.c.h.b16 %v4231
  %v4531 = vunpack.c.l.b16 %v4232
  %v4532 = vunpack.c.h.b16 %v4232
  %v4533 = vunpack.c.l.b16 %v4233
  %v4534 = vunpack.c.h.b16 %v4233
  %v4535 = vunpack.c.l.b16 %v4234
  %v4536 = vunpack.c.h.b16 %v4234
  %v4537 = vunpack.c.l.b16 %v4235
  %v4538 = vunpack.c.h.b16 %v4235
  %v4539 = vunpack.c.l.b16 %v4236
  %v4540 = vunpack.c.h.b16 %v4236
  %v4541 = vunpack.c.l.b16 %v4237
  %v4542 = vunpack.c.h.b16 %v4237
  %v4543 = vunpack.c.l.b16 %v4238
  %v4544 = vunpack.c.h.b16 %v4238
  %v4545 = vunpack.c.l.b16 %v4239
  %v4546 = vunpack.c.h.b16 %v4239
  %v4547 = vunpack.c.l.b16 %v4240
  %v4548 = vunpack.c.h.b16 %v4240
  %v4549 = vunpack.c.l.b16 %v4241
  %v4550 = vunpack.c.h.b16 %v4241
  %v4551 = vunpack.c.l.b16 %v4242
  %v4552 = vunpack.c.h.b16 %v4242
  %v4553 = vunpack.c.l.b16 %v4243
  %v4554 = vunpack.c.h.b16 %v4243
  %v4555 = vunpack.c.l.b16 %v4244
  %v4556 = vunpack.c.h.b16 %v4244
  %v4557 = vunpack.c.l.b16 %v4245
  %v4558 = vunpack.c.h.b16 %v4245
  %v4559 = vunpack.c.l.b16 %v4246
  %v4560 = vunpack.c.h.b16 %v4246
  %v4561 = vunpack.c.l.b16 %v4247
  %v4562 = vunpack.c.h.b16 %v4247
  %v4563 = vunpack.c.l.b16 %v4248
  %v4564 = vunpack.c.h.b16 %v4248
  %v4565 = vunpack.c.l.b16 %v4249
  %v4566 = vunpack.c.h.b16 %v4249
  %v4567 = vunpack.c.l.b16 %v4250
  %v4568 = vunpack.c.h.b16 %v4250
  %v4569 = vunpack.c.l.b16 %v4251
  %v4570 = vunpack.c.h.b16 %v4251
  %v4571 = vunpack.c.l.b16 %v4252
  %v4572 = vunpack.c.h.b16 %v4252
  %v4573 = vunpack.c.l.b16 %v4253
  %v4574 = vunpack.c.h.b16 %v4253
  %v4575 = vunpack.c.l.b16 %v4254
  %v4576 = vunpack.c.h.b16 %v4254
  %v4577 = vunpack.c.l.b16 %v4255
  %v4578 = vunpack.c.h.b16 %v4255
  %v4579 = vunpack.c.l.b16 %v4256
  %v4580 = vunpack.c.h.b16 %v4256
  %v4581 = vunpack.c.l.b16 %v4257
  %v4582 = vunpack.c.h.b16 %v4257
  %v4583 = vunpack.c.l.b16 %v4258
  %v4584 = vunpack.c.h.b16 %v4258
  %v4585 = vunpack.c.l.b16 %v4259
  %v4586 = vunpack.c.h.b16 %v4259
  %v4587 = vunpack.c.l.b16 %v4260
  %v4588 = vunpack.c.h.b16 %v4260
  %v4589 = vunpack.c.l.b16 %v4261
  %v4590 = vunpack.c.h.b16 %v4261
  %v4591 = vunpack.c.l.b16 %v4262
  %v4592 = vunpack.c.h.b16 %v4262
  %v4593 = vunpack.c.l.b16 %v4263
  %v4594 = vunpack.c.h.b16 %v4263
  %v4595 = vunpack.c.l.b16 %v4264
  %v4596 = vunpack.c.h.b16 %v4264
  %v4597 = vunpack.c.l.b16 %v4265
  %v4598 = vunpack.c.h.b16 %v4265
  %v4599 = vunpack.c.l.b16 %v4266
  %v4600 = vunpack.c.h.b16 %v4266
  %v4601 = vunpack.c.l.b16 %v4267
  %v4602 = vunpack.c.h.b16 %v4267
  %v4603 = vunpack.c.l.b16 %v4268
  %v4604 = vunpack.c.h.b16 %v4268
  %v4605 = vunpack.c.l.b16 %v4269
  %v4606 = vunpack.c.h.b16 %v4269
  %v4607 = vunpack.c.l.b16 %v4270
  %v4608 = vunpack.c.h.b16 %v4270
  %v4609 = vunpack.c.l.b16 %v4271
  %v4610 = vunpack.c.h.b16 %v4271
  %v4611 = vunpack.c.l.b16 %v4272
  %v4612 = vunpack.c.h.b16 %v4272
  %v4613 = vunpack.c.l.b16 %v4273
  %v4614 = vunpack.c.h.b16 %v4273
  %v4615 = vunpack.c.l.b16 %v4274
  %v4616 = vunpack.c.h.b16 %v4274
  %v4617 = vunpack.c.l.b16 %v4275
  %v4618 = vunpack.c.h.b16 %v4275
  %v4619 = vunpack.c.l.b16 %v4276
  %v4620 = vunpack.c.h.b16 %v4276
  %v4621 = vunpack.c.l.b16 %v4277
  %v4622 = vunpack.c.h.b16 %v4277
  %v4623 = vunpack.c.l.b16 %v4278
  %v4624 = vunpack.c.h.b16 %v4278
  %v4625 = vunpack.c.l.b16 %v4279
  %v4626 = vunpack.c.h.b16 %v4279
  %v4627 = vunpack.c.l.b16 %v4280
  %v4628 = vunpack.c.h.b16 %v4280
  %v4629 = vunpack.c.l.b16 %v4281
  %v4630 = vunpack.c.h.b16 %v4281
  %v4631 = vunpack.c.l.b16 %v4282
  %v4632 = vunpack.c.h.b16 %v4282
  %v4633 = vunpack.c.l.b16 %v4283
  %v4634 = vunpack.c.h.b16 %v4283
  %v4635 = vunpack.c.l.b16 %v4284
  %v4636 = vunpack.c.h.b16 %v4284
  %v4637 = vunpack.c.l.b16 %v4285
  %v4638 = vunpack.c.h.b16 %v4285
  %v4639 = vunpack.c.l.b16 %v4286
  %v4640 = vunpack.c.h.b16 %v4286
  %v4641 = vunpack.c.l.b16 %v4287
  %v4642 = vunpack.c.h.b16 %v4287
  %v4643 = vunpack.c.l.b16 %v4288
  %v4644 = vunpack.c.h.b16 %v4288
  %v4645 = vunpack.c.l.b16 %v4289
  %v4646 = vunpack.c.h.b16 %v4289
  %v4647 = vunpack.c.l.b16 %v4290
  %v4648 = vunpack.c.h.b16 %v4290
  %v4649 = vunpack.c.l.b16 %v4291
  %v4650 = vunpack.c.h.b16 %v4291
  %v4651 = vunpack.c.l.b16 %v4292
  %v4652 = vunpack.c.h.b16 %v4292
  %v4653 = vunpack.c.l.b16 %v4293
  %v4654 = vunpack.c.h.b16 %v4293
  %v4655 = vunpack.c.l.b16 %v4294
  %v4656 = vunpack.c.h.b16 %v4294
  %v4657 = vunpack.c.l.b16 %v4295
  %v4658 = vunpack.c.h.b16 %v4295
  %v4659 = vunpack.c.l.b16 %v4296
  %v4660 = vunpack.c.h.b16 %v4296
  %v4661 = vunpack.c.l.b16 %v4297
  %v4662 = vunpack.c.h.b16 %v4297
  %v4663 = vunpack.c.l.b16 %v4298
  %v4664 = vunpack.c.h.b16 %v4298
  %v4665 = vunpack.c.l.b16 %v4299
  %v4666 = vunpack.c.h.b16 %v4299
  %v4667 = vunpack.c.l.b16 %v4300
  %v4668 = vunpack.c.h.b16 %v4300
  %v4669 = vunpack.c.l.b16 %v4301
  %v4670 = vunpack.c.h.b16 %v4301
  %v4671 = vunpack.c.l.b16 %v4302
  %v4672 = vunpack.c.h.b16 %v4302
  %v4673 = vunpack.c.l.b16 %v4303
  %v4674 = vunpack.c.h.b16 %v4303
  %v4675 = vunpack.c.l.b16 %v4304
  %v4676 = vunpack.c.h.b16 %v4304
  %v4677 = vunpack.c.l.b16 %v4305
  %v4678 = vunpack.c.h.b16 %v4305
  %v4679 = vunpack.c.l.b16 %v4306
  %v4680 = vunpack.c.h.b16 %v4306
  %v4681 = vunpack.c.l.b16 %v4307
  %v4682 = vunpack.c.h.b16 %v4307
  %v4683 = vunpack.c.l.b16 %v4308
  %v4684 = vunpack.c.h.b16 %v4308
  %v4685 = vunpack.c.l.b16 %v4309
  %v4686 = vunpack.c.h.b16 %v4309
  %v4687 = vunpack.c.l.b16 %v4310
  %v4688 = vunpack.c.h.b16 %v4310
  %v4689 = vunpack.c.l.b16 %v4311
  %v4690 = vunpack.c.h.b16 %v4311
  %v4691 = vunpack.c.l.b16 %v4312
  %v4692 = vunpack.c.h.b16 %v4312
  %v4693 = vunpack.c.l.b16 %v4313
  %v4694 = vunpack.c.h.b16 %v4313
  %v4695 = vunpack.c.l.b16 %v4314
  %v4696 = vunpack.c.h.b16 %v4314
  %v4697 = vunpack.c.l.b16 %v4315
  %v4698 = vunpack.c.h.b16 %v4315
  %v4699 = vunpack.c.l.b16 %v4316
  %v4700 = vunpack.c.h.b16 %v4316
  %v4701 = vpack.c.b16 %v4453, %v4445
  %v4702 = vpack.c.b16 %v4454, %v4446
  %v4703 = vpack.c.b16 %v4455, %v4447
  %v4704 = vpack.c.b16 %v4456, %v4448
  %v4705 = vpack.c.b16 %v4457, %v4449
  %v4706 = vpack.c.b16 %v4458, %v4450
  %v4707 = vpack.c.b16 %v4459, %v4451
  %v4708 = vpack.c.b16 %v4460, %v4452
  %v4709 = vpack.c.b16 %v4469, %v4461
  %v4710 = vpack.c.b16 %v4470, %v4462
  %v4711 = vpack.c.b16 %v4471, %v4463
  %v4712 = vpack.c.b16 %v4472, %v4464
  %v4713 = vpack.c.b16 %v4473, %v4465
  %v4714 = vpack.c.b16 %v4474, %v4466
  %v4715 = vpack.c.b16 %v4475, %v4467
  %v4716 = vpack.c.b16 %v4476, %v4468
  %v4717 = vpack.c.b16 %v4485, %v4477
  %v4718 = vpack.c.b16 %v4486, %v4478
  %v4719 = vpack.c.b16 %v4487, %v4479
  %v4720 = vpack.c.b16 %v4488, %v4480
  %v4721 = vpack.c.b16 %v4489, %v4481
  %v4722 = vpack.c.b16 %v4490, %v4482
  %v4723 = vpack.c.b16 %v4491, %v4483
  %v4724 = vpack.c.b16 %v4492, %v4484
  %v4725 = vpack.c.b16 %v4501, %v4493
  %v4726 = vpack.c.b16 %v4502, %v4494
  %v4727 = vpack.c.b16 %v4503, %v4495
  %v4728 = vpack.c.b16 %v4504, %v4496
  %v4729 = vpack.c.b16 %v4505, %v4497
  %v4730 = vpack.c.b16 %v4506, %v4498
  %v4731 = vpack.c.b16 %v4507, %v4499
  %v4732 = vpack.c.b16 %v4508, %v4500
  %v4733 = vpack.c.b16 %v4517, %v4509
  %v4734 = vpack.c.b16 %v4518, %v4510
  %v4735 = vpack.c.b16 %v4519, %v4511
  %v4736 = vpack.c.b16 %v4520, %v4512
  %v4737 = vpack.c.b16 %v4521, %v4513
  %v4738 = vpack.c.b16 %v4522, %v4514
  %v4739 = vpack.c.b16 %v4523, %v4515
  %v4740 = vpack.c.b16 %v4524, %v4516
  %v4741 = vpack.c.b16 %v4533, %v4525
  %v4742 = vpack.c.b16 %v4534, %v4526
  %v4743 = vpack.c.b16 %v4535, %v4527
  %v4744 = vpack.c.b16 %v4536, %v4528
  %v4745 = vpack.c.b16 %v4537, %v4529
  %v4746 = vpack.c.b16 %v4538, %v4530
  %v4747 = vpack.c.b16 %v4539, %v4531
  %v4748 = vpack.c.b16 %v4540, %v4532
  %v4749 = vpack.c.b16 %v4549, %v4541
  %v4750 = vpack.c.b16 %v4550, %v4542
  %v4751 = vpack.c.b16 %v4551, %v4543
  %v4752 = vpack.c.b16 %v4552, %v4544
  %v4753 = vpack.c.b16 %v4553, %v4545
  %v4754 = vpack.c.b16 %v4554, %v4546
  %v4755 = vpack.c.b16 %v4555, %v4547
  %v4756 = vpack.c.b16 %v4556, %v4548
  %v4757 = vpack.c.b16 %v4565, %v4557
  %v4758 = vpack.c.b16 %v4566, %v4558
  %v4759 = vpack.c.b16 %v4567, %v4559
  %v4760 = vpack.c.b16 %v4568, %v4560
  %v4761 = vpack.c.b16 %v4569, %v4561
  %v4762 = vpack.c.b16 %v4570, %v4562
  %v4763 = vpack.c.b16 %v4571, %v4563
  %v4764 = vpack.c.b16 %v4572, %v4564
  %v4765 = vpack.c.b16 %v4581, %v4573
  %v4766 = vpack.c.b16 %v4582, %v4574
  %v4767 = vpack.c.b16 %v4583, %v4575
  %v4768 = vpack.c.b16 %v4584, %v4576
  %v4769 = vpack.c.b16 %v4585, %v4577
  %v4770 = vpack.c.b16 %v4586, %v4578
  %v4771 = vpack.c.b16 %v4587, %v4579
  %v4772 = vpack.c.b16 %v4588, %v4580
  %v4773 = vpack.c.b16 %v4597, %v4589
  %v4774 = vpack.c.b16 %v4598, %v4590
  %v4775 = vpack.c.b16 %v4599, %v4591
  %v4776 = vpack.c.b16 %v4600, %v4592
  %v4777 = vpack.c.b16 %v4601, %v4593
  %v4778 = vpack.c.b16 %v4602, %v4594
  %v4779 = vpack.c.b16 %v4603, %v4595
  %v4780 = vpack.c.b16 %v4604, %v4596
  %v4781 = vpack.c.b16 %v4613, %v4605
  %v4782 = vpack.c.b16 %v4614, %v4606
  %v4783 = vpack.c.b16 %v4615, %v4607
  %v4784 = vpack.c.b16 %v4616, %v4608
  %v4785 = vpack.c.b16 %v4617, %v4609
  %v4786 = vpack.c.b16 %v4618, %v4610
  %v4787 = vpack.c.b16 %v4619, %v4611
  %v4788 = vpack.c.b16 %v4620, %v4612
  %v4789 = vpack.c.b16 %v4629, %v4621
  %v4790 = vpack.c.b16 %v4630, %v4622
  %v4791 = vpack.c.b16 %v4631, %v4623
  %v4792 = vpack.c.b16 %v4632, %v4624
  %v4793 = vpack.c.b16 %v4633, %v4625
  %v4794 = vpack.c.b16 %v4634, %v4626
  %v4795 = vpack.c.b16 %v4635, %v4627
  %v4796 = vpack.c.b16 %v4636, %v4628
  %v4797 = vpack.c.b16 %v4645, %v4637
  %v4798 = vpack.c.b16 %v4646, %v4638
  %v4799 = vpack.c.b16 %v4647, %v4639
  %v4800 = vpack.c.b16 %v4648, %v4640
  %v4801 = vpack.c.b16 %v4649, %v4641
  %v4802 = vpack.c.b16 %v4650, %v4642
  %v4803 = vpack.c.b16 %v4651, %v4643
  %v4804 = vpack.c.b16 %v4652, %v4644
  %v4805 = vpack.c.b16 %v4661, %v4653
  %v4806 = vpack.c.b16 %v4662, %v4654
  %v4807 = vpack.c.b16 %v4663, %v4655
  %v4808 = vpack.c.b16 %v4664, %v4656
  %v4809 = vpack.c.b16 %v4665, %v4657
  %v4810 = vpack.c.b16 %v4666, %v4658
  %v4811 = vpack.c.b16 %v4667, %v4659
  %v4812 = vpack.c.b16 %v4668, %v4660
  %v4813 = vpack.c.b16 %v4677, %v4669
  %v4814 = vpack.c.b16 %v4678, %v4670
  %v4815 = vpack.c.b16 %v4679, %v4671
  %v4816 = vpack.c.b16 %v4680, %v4672
  %v4817 = vpack.c.b16 %v4681, %v4673
  %v4818 = vpack.c.b16 %v4682, %v4674
  %v4819 = vpack.c.b16 %v4683, %v4675
  %v4820 = vpack.c.b16 %v4684, %v4676
  %v4821 = vpack.c.b16 %v4693, %v4685
  %v4822 = vpack.c.b16 %v4694, %v4686
  %v4823 = vpack.c.b16 %v4695, %v4687
  %v4824 = vpack.c.b16 %v4696, %v4688
  %v4825 = vpack.c.b16 %v4697, %v4689
  %v4826 = vpack.c.b16 %v4698, %v4690
  %v4827 = vpack.c.b16 %v4699, %v4691
  %v4828 = vpack.c.b16 %v4700, %v4692
  %4957 = vmatprep.subr.bf16.mxu0 %v4702
  %4958 = vmatpush1.bf16.msra.mxu0 %v4701
  %4959 = vmatprep.subr.bf16.mxu0 %v4710
  %4960 = vmatpush1.bf16.msra.mxu0 %v4709
  %4961 = vmatprep.subr.bf16.mxu0 %v4718
  %4962 = vmatpush1.bf16.msra.mxu0 %v4717
  %4963 = vmatprep.subr.bf16.mxu0 %v4726
  %4964 = vmatpush1.bf16.msra.mxu0 %v4725
  %4965 = vmatprep.subr.bf16.mxu0 %v4734
  %4966 = vmatpush1.bf16.msra.mxu0 %v4733
  %4967 = vmatprep.subr.bf16.mxu0 %v4742
  %4968 = vmatpush1.bf16.msra.mxu0 %v4741
  %4969 = vmatprep.subr.bf16.mxu0 %v4750
  %4970 = vmatpush1.bf16.msra.mxu0 %v4749
  %4971 = vmatprep.subr.bf16.mxu0 %v4758
  %4972 = vmatpush1.bf16.msra.mxu0 %v4757
  %4973 = vmatprep.subr.bf16.mxu0 %v4766
  %4974 = vmatpush1.bf16.msra.mxu0 %v4765
  %4975 = vmatprep.subr.bf16.mxu0 %v4774
  %4976 = vmatpush1.bf16.msra.mxu0 %v4773
  %4977 = vmatprep.subr.bf16.mxu0 %v4782
  %4978 = vmatpush1.bf16.msra.mxu0 %v4781
  %4979 = vmatprep.subr.bf16.mxu0 %v4790
  %4980 = vmatpush1.bf16.msra.mxu0 %v4789
  %4981 = vmatprep.subr.bf16.mxu0 %v4798
  %4982 = vmatpush1.bf16.msra.mxu0 %v4797
  %4983 = vmatprep.subr.bf16.mxu0 %v4806
  %4984 = vmatpush1.bf16.msra.mxu0 %v4805
  %4985 = vmatprep.subr.bf16.mxu0 %v4814
  %4986 = vmatpush1.bf16.msra.mxu0 %v4813
  %4987 = vmatprep.subr.bf16.mxu0 %v4822
  %4988 = vmatpush1.bf16.msra.mxu0 %v4821
  %4989 = vmatprep.mubr.bf16.mxu0 %v4165
  %4990 = vmatmul.mubr.bf16.gmra.mrb[0].mxu0 %v4164
  %v4991 = vpop.f32.mrb[0].mxu0
  %v4992 = vadd.f32 0.0, %v4991
  %v4993 = vpop.f32.mrb[0].mxu0
  %v4994 = vadd.f32 0.0, %v4993
  %v4995 = vpop.f32.mrb[0].mxu0
  %v4996 = vpop.f32.mrb[0].mxu0
  %4997 = vdwg.mxu0
  %4998 = vmatprep.subr.bf16.mxu0 %v4704
  %4999 = vmatpush1.bf16.msra.mxu0 %v4703
  %5000 = vmatprep.subr.bf16.mxu0 %v4712
  %5001 = vmatpush1.bf16.msra.mxu0 %v4711
  %5002 = vmatprep.subr.bf16.mxu0 %v4720
  %5003 = vmatpush1.bf16.msra.mxu0 %v4719
  %5004 = vmatprep.subr.bf16.mxu0 %v4728
  %5005 = vmatpush1.bf16.msra.mxu0 %v4727
  %5006 = vmatprep.subr.bf16.mxu0 %v4736
  %5007 = vmatpush1.bf16.msra.mxu0 %v4735
  %5008 = vmatprep.subr.bf16.mxu0 %v4744
  %5009 = vmatpush1.bf16.msra.mxu0 %v4743
  %5010 = vmatprep.subr.bf16.mxu0 %v4752
  %5011 = vmatpush1.bf16.msra.mxu0 %v4751
  %5012 = vmatprep.subr.bf16.mxu0 %v4760
  %5013 = vmatpush1.bf16.msra.mxu0 %v4759
  %5014 = vmatprep.subr.bf16.mxu0 %v4768
  %5015 = vmatpush1.bf16.msra.mxu0 %v4767
  %5016 = vmatprep.subr.bf16.mxu0 %v4776
  %5017 = vmatpush1.bf16.msra.mxu0 %v4775
  %5018 = vmatprep.subr.bf16.mxu0 %v4784
  %5019 = vmatpush1.bf16.msra.mxu0 %v4783
  %5020 = vmatprep.subr.bf16.mxu0 %v4792
  %5021 = vmatpush1.bf16.msra.mxu0 %v4791
  %5022 = vmatprep.subr.bf16.mxu0 %v4800
  %5023 = vmatpush1.bf16.msra.mxu0 %v4799
  %5024 = vmatprep.subr.bf16.mxu0 %v4808
  %5025 = vmatpush1.bf16.msra.mxu0 %v4807
  %5026 = vmatprep.subr.bf16.mxu0 %v4816
  %5027 = vmatpush1.bf16.msra.mxu0 %v4815
  %5028 = vmatprep.subr.bf16.mxu0 %v4824
  %5029 = vmatpush1.bf16.msra.mxu0 %v4823
  %5030 = vmatprep.mubr.bf16.mxu0 %v4165
  %5031 = vmatmul.mubr.bf16.gmra.mrb[0].mxu0 %v4164
  %v5032 = vpop.f32.mrb[0].mxu0
  %v5033 = vadd.f32 0.0, %v5032
  %v5034 = vpop.f32.mrb[0].mxu0
  %v5035 = vadd.f32 0.0, %v5034
  %v5036 = vpop.f32.mrb[0].mxu0
  %v5037 = vpop.f32.mrb[0].mxu0
  %5038 = vdwg.mxu0
  %5039 = vmatprep.subr.bf16.mxu0 %v4706
  %5040 = vmatpush1.bf16.msra.mxu0 %v4705
  %5041 = vmatprep.subr.bf16.mxu0 %v4714
  %5042 = vmatpush1.bf16.msra.mxu0 %v4713
  %5043 = vmatprep.subr.bf16.mxu0 %v4722
  %5044 = vmatpush1.bf16.msra.mxu0 %v4721
  %5045 = vmatprep.subr.bf16.mxu0 %v4730
  %5046 = vmatpush1.bf16.msra.mxu0 %v4729
  %5047 = vmatprep.subr.bf16.mxu0 %v4738
  %5048 = vmatpush1.bf16.msra.mxu0 %v4737
  %5049 = vmatprep.subr.bf16.mxu0 %v4746
  %5050 = vmatpush1.bf16.msra.mxu0 %v4745
  %5051 = vmatprep.subr.bf16.mxu0 %v4754
  %5052 = vmatpush1.bf16.msra.mxu0 %v4753
  %5053 = vmatprep.subr.bf16.mxu0 %v4762
  %5054 = vmatpush1.bf16.msra.mxu0 %v4761
  %5055 = vmatprep.subr.bf16.mxu0 %v4770
  %5056 = vmatpush1.bf16.msra.mxu0 %v4769
  %5057 = vmatprep.subr.bf16.mxu0 %v4778
  %5058 = vmatpush1.bf16.msra.mxu0 %v4777
  %5059 = vmatprep.subr.bf16.mxu0 %v4786
  %5060 = vmatpush1.bf16.msra.mxu0 %v4785
  %5061 = vmatprep.subr.bf16.mxu0 %v4794
  %5062 = vmatpush1.bf16.msra.mxu0 %v4793
  %5063 = vmatprep.subr.bf16.mxu0 %v4802
  %5064 = vmatpush1.bf16.msra.mxu0 %v4801
  %5065 = vmatprep.subr.bf16.mxu0 %v4810
  %5066 = vmatpush1.bf16.msra.mxu0 %v4809
  %5067 = vmatprep.subr.bf16.mxu0 %v4818
  %5068 = vmatpush1.bf16.msra.mxu0 %v4817
  %5069 = vmatprep.subr.bf16.mxu0 %v4826
  %5070 = vmatpush1.bf16.msra.mxu0 %v4825
  %5071 = vmatprep.mubr.bf16.mxu0 %v4165
  %5072 = vmatmul.mubr.bf16.gmra.mrb[0].mxu0 %v4164
  %v5073 = vpop.f32.mrb[0].mxu0
  %v5074 = vadd.f32 0.0, %v5073
  %v5075 = vpop.f32.mrb[0].mxu0
  %v5076 = vadd.f32 0.0, %v5075
  %v5077 = vpop.f32.mrb[0].mxu0
  %v5078 = vpop.f32.mrb[0].mxu0
  %5079 = vdwg.mxu0
  %5080 = vmatprep.subr.bf16.mxu0 %v4708
  %5081 = vmatpush1.bf16.msra.mxu0 %v4707
  %5082 = vmatprep.subr.bf16.mxu0 %v4716
  %5083 = vmatpush1.bf16.msra.mxu0 %v4715
  %5084 = vmatprep.subr.bf16.mxu0 %v4724
  %5085 = vmatpush1.bf16.msra.mxu0 %v4723
  %5086 = vmatprep.subr.bf16.mxu0 %v4732
  %5087 = vmatpush1.bf16.msra.mxu0 %v4731
  %5088 = vmatprep.subr.bf16.mxu0 %v4740
  %5089 = vmatpush1.bf16.msra.mxu0 %v4739
  %5090 = vmatprep.subr.bf16.mxu0 %v4748
  %5091 = vmatpush1.bf16.msra.mxu0 %v4747
  %5092 = vmatprep.subr.bf16.mxu0 %v4756
  %5093 = vmatpush1.bf16.msra.mxu0 %v4755
  %5094 = vmatprep.subr.bf16.mxu0 %v4764
  %5095 = vmatpush1.bf16.msra.mxu0 %v4763
  %5096 = vmatprep.subr.bf16.mxu0 %v4772
  %5097 = vmatpush1.bf16.msra.mxu0 %v4771
  %5098 = vmatprep.subr.bf16.mxu0 %v4780
  %5099 = vmatpush1.bf16.msra.mxu0 %v4779
  %5100 = vmatprep.subr.bf16.mxu0 %v4788
  %5101 = vmatpush1.bf16.msra.mxu0 %v4787
  %5102 = vmatprep.subr.bf16.mxu0 %v4796
  %5103 = vmatpush1.bf16.msra.mxu0 %v4795
  %5104 = vmatprep.subr.bf16.mxu0 %v4804
  %5105 = vmatpush1.bf16.msra.mxu0 %v4803
  %5106 = vmatprep.subr.bf16.mxu0 %v4812
  %5107 = vmatpush1.bf16.msra.mxu0 %v4811
  %5108 = vmatprep.subr.bf16.mxu0 %v4820
  %5109 = vmatpush1.bf16.msra.mxu0 %v4819
  %5110 = vmatprep.subr.bf16.mxu0 %v4828
  %5111 = vmatpush1.bf16.msra.mxu0 %v4827
  %5112 = vmatprep.mubr.bf16.mxu0 %v4165
  %5113 = vmatmul.mubr.bf16.gmra.mrb[0].mxu0 %v4164
  %v5114 = vpop.f32.mrb[0].mxu0
  %v5115 = vadd.f32 0.0, %v5114
  %v5116 = vpop.f32.mrb[0].mxu0
  %v5117 = vadd.f32 0.0, %v5116
  %v5118 = vpop.f32.mrb[0].mxu0
  %v5119 = vpop.f32.mrb[0].mxu0
  %5120 = vdwg.mxu0
  %v5129 = vcombine.low %v4992, %v4994
  %v5130 = vcombine.low %v5033, %v5035
  %v5132 = vunpack.c.l.s4 1983009808
  %v5133 = vunpack.c.0.s8 %v5132
  %v5134 = vlaneseq
  %v5135 = vshrl.u32 %v5134, 7
  %v5136 = vsub.s32 %v5133, %v5135
  %v5137 = vrot.slane %v5129, %v5136
  %v5139 = vunpack.c.l.s4 1983009808
  %v5140 = vunpack.c.0.s8 %v5139
  %v5141 = vlaneseq
  %v5142 = vshrl.u32 %v5141, 7
  %v5143 = vsub.s32 %v5140, %v5142
  %v5144 = vrot.slane %v5130, %v5143
  %v5145 = vcombine.low %v5137, %v5144
  %v5146 = vcombine.low %v5074, %v5076
  %v5147 = vcombine.low %v5115, %v5117
  %v5149 = vunpack.c.l.s4 1983009808
  %v5150 = vunpack.c.0.s8 %v5149
  %v5151 = vlaneseq
  %v5152 = vshrl.u32 %v5151, 7
  %v5153 = vsub.s32 %v5150, %v5152
  %v5154 = vrot.slane %v5146, %v5153
  %v5156 = vunpack.c.l.s4 1983009808
  %v5157 = vunpack.c.0.s8 %v5156
  %v5158 = vlaneseq
  %v5159 = vshrl.u32 %v5158, 7
  %v5160 = vsub.s32 %v5157, %v5159
  %v5161 = vrot.slane %v5147, %v5160
  %v5162 = vcombine.low %v5154, %v5161
  %v5165 = vadd.f32 %v4187, %v5145
  %v5166 = vadd.f32 %v4188, %v5162
  %v5167 = vxor.u32 %v5165, 2147483648
  %v5168 = vmul.f32 %v5167, 1.442695
  %v5169 = vpow.pop %v5168
  %v5170 = vadd.f32 %v5169, 1.0
  %v5171 = vrcp.pop %v5170
  %v5172 = vmul.f32 1.0, %v5171
  %v5174 = vrot.slane %v5165, 4
  %v5176 = vxor.u32 %v5174, 2147483648
  %v5177 = vmul.f32 %v5176, 1.442695
  %v5178 = vpow.pop %v5177
  %v5179 = vadd.f32 %v5178, 1.0
  %v5180 = vrcp.pop %v5179
  %v5181 = vmul.f32 1.0, %v5180
  %v5182 = vtanh.pop %v5166
  %v5184 = vrot.slane %v5166, 4
  %v5186 = vxor.u32 %v5184, 2147483648
  %v5187 = vmul.f32 %v5186, 1.442695
  %v5188 = vpow.pop %v5187
  %v5189 = vadd.f32 %v5188, 1.0
  %v5190 = vrcp.pop %v5189
  %v5191 = vmul.f32 1.0, %v5190
  %v5192 = vmul.f32 %v5181, %v4150
  %v5193 = vmul.f32 %v5172, %v5182
  %v5194 = vadd.f32 %v5192, %v5193
  %v5195 = vtanh.pop %v5194
  %v5196 = vmul.f32 %v5191, %v5195
  %v5199 = vunpack.c.l.s4 1983009808
  %v5200 = vunpack.c.0.s8 %v5199
  %v5201 = vlaneseq
  %v5202 = vshrl.u32 %v5201, 7
  %v5203 = vsub.s32 %v5200, %v5202
  %v5204 = vrot.slane %v5196, %v5203
  %v5205 = vcombine.high %v5204, %v5204
  %v5208 = vpack.c.bf16 %v5204, %v5204
  %v5209 = vpack.c.bf16 %v5205, %v5205
  %v5212 = vcombine.low %v5208, %v5209
  %v5214 = vunpack.c.l.s4 1966171168
  %v5215 = vunpack.c.0.s8 %v5214
  %v5216 = vlaneseq
  %v5217 = vshrl.u32 %v5216, 7
  %v5218 = vsub.s32 %v5215, %v5217
  %v5219 = vrot.slane %v5212, %v5218
  %v5221 = vunpack.c.l.s4 1966171168
  %v5222 = vunpack.c.0.s8 %v5221
  %v5223 = vlaneseq
  %v5224 = vshrl.u32 %v5223, 7
  %v5225 = vsub.s32 %v5222, %v5224
  %v5226 = vrot.slane %v5219, %v5225
  %s5228 = scalar_lea.vmem %s2, 8
  %5229 = vst [vmem:[%s5228] sm:$0x3] %v5226
  %s5230 = scalar_lea.vmem %s0, 80
  %v5231 = vld [vmem:[%s5230] sm:$0xff]
  %v5232 = vld [vmem:[%s5230 + $0x8] sm:$0xff]
  %v5233 = vld [vmem:[%s1] sm:$0xff]
  %v5234 = vld [vmem:[%s1 + $0x8] sm:$0xff]
  %v5235 = vld [vmem:[%s1 + $0x10] sm:$0xff]
  %v5236 = vld [vmem:[%s1 + $0x18] sm:$0xff]
  %v5237 = vld [vmem:[%s1 + $0x20] sm:$0xff]
  %v5238 = vld [vmem:[%s1 + $0x28] sm:$0xff]
  %v5239 = vld [vmem:[%s1 + $0x30] sm:$0xff]
  %v5240 = vld [vmem:[%s1 + $0x38] sm:$0xff]
  %v5241 = vld [vmem:[%s1 + $0x40] sm:$0xff]
  %v5242 = vld [vmem:[%s1 + $0x48] sm:$0xff]
  %v5243 = vld [vmem:[%s1 + $0x50] sm:$0xff]
  %v5244 = vld [vmem:[%s1 + $0x58] sm:$0xff]
  %v5245 = vld [vmem:[%s1 + $0x60] sm:$0xff]
  %v5246 = vld [vmem:[%s1 + $0x68] sm:$0xff]
  %v5247 = vld [vmem:[%s1 + $0x70] sm:$0xff]
  %v5248 = vld [vmem:[%s1 + $0x78] sm:$0xff]
  %v5249 = vld [vmem:[%s1 + $0x80] sm:$0xff]
  %v5250 = vld [vmem:[%s1 + $0x88] sm:$0xff]
  %v5251 = vld [vmem:[%s1 + $0x90] sm:$0xff]
  %v5252 = vld [vmem:[%s1 + $0x98] sm:$0xff]
  %v5253 = vld [vmem:[%s1 + $0xa0] sm:$0xff]
  %v5254 = vld [vmem:[%s1 + $0xa8] sm:$0xff]
  %v5255 = vld [vmem:[%s1 + $0xb0] sm:$0xff]
  %v5256 = vld [vmem:[%s1 + $0xb8] sm:$0xff]
  %v5257 = vld [vmem:[%s1 + $0xc0] sm:$0xff]
  %v5258 = vld [vmem:[%s1 + $0xc8] sm:$0xff]
  %v5259 = vld [vmem:[%s1 + $0xd0] sm:$0xff]
  %v5260 = vld [vmem:[%s1 + $0xd8] sm:$0xff]
  %v5261 = vld [vmem:[%s1 + $0xe0] sm:$0xff]
  %v5262 = vld [vmem:[%s1 + $0xe8] sm:$0xff]
  %v5263 = vld [vmem:[%s1 + $0xf0] sm:$0xff]
  %v5264 = vld [vmem:[%s1 + $0xf8] sm:$0xff]
  %v5265 = vld [vmem:[%s1 + $0x100] sm:$0xff]
  %v5266 = vld [vmem:[%s1 + $0x108] sm:$0xff]
  %v5267 = vld [vmem:[%s1 + $0x110] sm:$0xff]
  %v5268 = vld [vmem:[%s1 + $0x118] sm:$0xff]
  %v5269 = vld [vmem:[%s1 + $0x120] sm:$0xff]
  %v5270 = vld [vmem:[%s1 + $0x128] sm:$0xff]
  %v5271 = vld [vmem:[%s1 + $0x130] sm:$0xff]
  %v5272 = vld [vmem:[%s1 + $0x138] sm:$0xff]
  %v5273 = vld [vmem:[%s1 + $0x140] sm:$0xff]
  %v5274 = vld [vmem:[%s1 + $0x148] sm:$0xff]
  %v5275 = vld [vmem:[%s1 + $0x150] sm:$0xff]
  %v5276 = vld [vmem:[%s1 + $0x158] sm:$0xff]
  %v5277 = vld [vmem:[%s1 + $0x160] sm:$0xff]
  %v5278 = vld [vmem:[%s1 + $0x168] sm:$0xff]
  %v5279 = vld [vmem:[%s1 + $0x170] sm:$0xff]
  %v5280 = vld [vmem:[%s1 + $0x178] sm:$0xff]
  %v5281 = vld [vmem:[%s1 + $0x180] sm:$0xff]
  %v5282 = vld [vmem:[%s1 + $0x188] sm:$0xff]
  %v5283 = vld [vmem:[%s1 + $0x190] sm:$0xff]
  %v5284 = vld [vmem:[%s1 + $0x198] sm:$0xff]
  %v5285 = vld [vmem:[%s1 + $0x1a0] sm:$0xff]
  %v5286 = vld [vmem:[%s1 + $0x1a8] sm:$0xff]
  %v5287 = vld [vmem:[%s1 + $0x1b0] sm:$0xff]
  %v5288 = vld [vmem:[%s1 + $0x1b8] sm:$0xff]
  %v5289 = vld [vmem:[%s1 + $0x1c0] sm:$0xff]
  %v5290 = vld [vmem:[%s1 + $0x1c8] sm:$0xff]
  %v5291 = vld [vmem:[%s1 + $0x1d0] sm:$0xff]
  %v5292 = vld [vmem:[%s1 + $0x1d8] sm:$0xff]
  %v5293 = vld [vmem:[%s1 + $0x1e0] sm:$0xff]
  %v5294 = vld [vmem:[%s1 + $0x1e8] sm:$0xff]
  %v5295 = vld [vmem:[%s1 + $0x1f0] sm:$0xff]
  %v5296 = vld [vmem:[%s1 + $0x1f8] sm:$0xff]
  %v5297 = vld [vmem:[%s1 + $0x200] sm:$0xff]
  %v5298 = vld [vmem:[%s1 + $0x208] sm:$0xff]
  %v5299 = vld [vmem:[%s1 + $0x210] sm:$0xff]
  %v5300 = vld [vmem:[%s1 + $0x218] sm:$0xff]
  %v5301 = vld [vmem:[%s1 + $0x220] sm:$0xff]
  %v5302 = vld [vmem:[%s1 + $0x228] sm:$0xff]
  %v5303 = vld [vmem:[%s1 + $0x230] sm:$0xff]
  %v5304 = vld [vmem:[%s1 + $0x238] sm:$0xff]
  %v5305 = vld [vmem:[%s1 + $0x240] sm:$0xff]
  %v5306 = vld [vmem:[%s1 + $0x248] sm:$0xff]
  %v5307 = vld [vmem:[%s1 + $0x250] sm:$0xff]
  %v5308 = vld [vmem:[%s1 + $0x258] sm:$0xff]
  %v5309 = vld [vmem:[%s1 + $0x260] sm:$0xff]
  %v5310 = vld [vmem:[%s1 + $0x268] sm:$0xff]
  %v5311 = vld [vmem:[%s1 + $0x270] sm:$0xff]
  %v5312 = vld [vmem:[%s1 + $0x278] sm:$0xff]
  %v5313 = vld [vmem:[%s1 + $0x280] sm:$0xff]
  %v5314 = vld [vmem:[%s1 + $0x288] sm:$0xff]
  %v5315 = vld [vmem:[%s1 + $0x290] sm:$0xff]
  %v5316 = vld [vmem:[%s1 + $0x298] sm:$0xff]
  %v5317 = vld [vmem:[%s1 + $0x2a0] sm:$0xff]
  %v5318 = vld [vmem:[%s1 + $0x2a8] sm:$0xff]
  %v5319 = vld [vmem:[%s1 + $0x2b0] sm:$0xff]
  %v5320 = vld [vmem:[%s1 + $0x2b8] sm:$0xff]
  %v5321 = vld [vmem:[%s1 + $0x2c0] sm:$0xff]
  %v5322 = vld [vmem:[%s1 + $0x2c8] sm:$0xff]
  %v5323 = vld [vmem:[%s1 + $0x2d0] sm:$0xff]
  %v5324 = vld [vmem:[%s1 + $0x2d8] sm:$0xff]
  %v5325 = vld [vmem:[%s1 + $0x2e0] sm:$0xff]
  %v5326 = vld [vmem:[%s1 + $0x2e8] sm:$0xff]
  %v5327 = vld [vmem:[%s1 + $0x2f0] sm:$0xff]
  %v5328 = vld [vmem:[%s1 + $0x2f8] sm:$0xff]
  %v5329 = vld [vmem:[%s1 + $0x300] sm:$0xff]
  %v5330 = vld [vmem:[%s1 + $0x308] sm:$0xff]
  %v5331 = vld [vmem:[%s1 + $0x310] sm:$0xff]
  %v5332 = vld [vmem:[%s1 + $0x318] sm:$0xff]
  %v5333 = vld [vmem:[%s1 + $0x320] sm:$0xff]
  %v5334 = vld [vmem:[%s1 + $0x328] sm:$0xff]
  %v5335 = vld [vmem:[%s1 + $0x330] sm:$0xff]
  %v5336 = vld [vmem:[%s1 + $0x338] sm:$0xff]
  %v5337 = vld [vmem:[%s1 + $0x340] sm:$0xff]
  %v5338 = vld [vmem:[%s1 + $0x348] sm:$0xff]
  %v5339 = vld [vmem:[%s1 + $0x350] sm:$0xff]
  %v5340 = vld [vmem:[%s1 + $0x358] sm:$0xff]
  %v5341 = vld [vmem:[%s1 + $0x360] sm:$0xff]
  %v5342 = vld [vmem:[%s1 + $0x368] sm:$0xff]
  %v5343 = vld [vmem:[%s1 + $0x370] sm:$0xff]
  %v5344 = vld [vmem:[%s1 + $0x378] sm:$0xff]
  %v5345 = vld [vmem:[%s1 + $0x380] sm:$0xff]
  %v5346 = vld [vmem:[%s1 + $0x388] sm:$0xff]
  %v5347 = vld [vmem:[%s1 + $0x390] sm:$0xff]
  %v5348 = vld [vmem:[%s1 + $0x398] sm:$0xff]
  %v5349 = vld [vmem:[%s1 + $0x3a0] sm:$0xff]
  %v5350 = vld [vmem:[%s1 + $0x3a8] sm:$0xff]
  %v5351 = vld [vmem:[%s1 + $0x3b0] sm:$0xff]
  %v5352 = vld [vmem:[%s1 + $0x3b8] sm:$0xff]
  %v5353 = vld [vmem:[%s1 + $0x3c0] sm:$0xff]
  %v5354 = vld [vmem:[%s1 + $0x3c8] sm:$0xff]
  %v5355 = vld [vmem:[%s1 + $0x3d0] sm:$0xff]
  %v5356 = vld [vmem:[%s1 + $0x3d8] sm:$0xff]
  %v5357 = vld [vmem:[%s1 + $0x3e0] sm:$0xff]
  %v5358 = vld [vmem:[%s1 + $0x3e8] sm:$0xff]
  %v5359 = vld [vmem:[%s1 + $0x3f0] sm:$0xff]
  %v5360 = vld [vmem:[%s1 + $0x3f8] sm:$0xff]
  %v5489 = vunpack.c.l.b16 %v5233
  %v5490 = vunpack.c.h.b16 %v5233
  %v5491 = vunpack.c.l.b16 %v5234
  %v5492 = vunpack.c.h.b16 %v5234
  %v5493 = vunpack.c.l.b16 %v5235
  %v5494 = vunpack.c.h.b16 %v5235
  %v5495 = vunpack.c.l.b16 %v5236
  %v5496 = vunpack.c.h.b16 %v5236
  %v5497 = vunpack.c.l.b16 %v5237
  %v5498 = vunpack.c.h.b16 %v5237
  %v5499 = vunpack.c.l.b16 %v5238
  %v5500 = vunpack.c.h.b16 %v5238
  %v5501 = vunpack.c.l.b16 %v5239
  %v5502 = vunpack.c.h.b16 %v5239
  %v5503 = vunpack.c.l.b16 %v5240
  %v5504 = vunpack.c.h.b16 %v5240
  %v5505 = vunpack.c.l.b16 %v5241
  %v5506 = vunpack.c.h.b16 %v5241
  %v5507 = vunpack.c.l.b16 %v5242
  %v5508 = vunpack.c.h.b16 %v5242
  %v5509 = vunpack.c.l.b16 %v5243
  %v5510 = vunpack.c.h.b16 %v5243
  %v5511 = vunpack.c.l.b16 %v5244
  %v5512 = vunpack.c.h.b16 %v5244
  %v5513 = vunpack.c.l.b16 %v5245
  %v5514 = vunpack.c.h.b16 %v5245
  %v5515 = vunpack.c.l.b16 %v5246
  %v5516 = vunpack.c.h.b16 %v5246
  %v5517 = vunpack.c.l.b16 %v5247
  %v5518 = vunpack.c.h.b16 %v5247
  %v5519 = vunpack.c.l.b16 %v5248
  %v5520 = vunpack.c.h.b16 %v5248
  %v5521 = vunpack.c.l.b16 %v5249
  %v5522 = vunpack.c.h.b16 %v5249
  %v5523 = vunpack.c.l.b16 %v5250
  %v5524 = vunpack.c.h.b16 %v5250
  %v5525 = vunpack.c.l.b16 %v5251
  %v5526 = vunpack.c.h.b16 %v5251
  %v5527 = vunpack.c.l.b16 %v5252
  %v5528 = vunpack.c.h.b16 %v5252
  %v5529 = vunpack.c.l.b16 %v5253
  %v5530 = vunpack.c.h.b16 %v5253
  %v5531 = vunpack.c.l.b16 %v5254
  %v5532 = vunpack.c.h.b16 %v5254
  %v5533 = vunpack.c.l.b16 %v5255
  %v5534 = vunpack.c.h.b16 %v5255
  %v5535 = vunpack.c.l.b16 %v5256
  %v5536 = vunpack.c.h.b16 %v5256
  %v5537 = vunpack.c.l.b16 %v5257
  %v5538 = vunpack.c.h.b16 %v5257
  %v5539 = vunpack.c.l.b16 %v5258
  %v5540 = vunpack.c.h.b16 %v5258
  %v5541 = vunpack.c.l.b16 %v5259
  %v5542 = vunpack.c.h.b16 %v5259
  %v5543 = vunpack.c.l.b16 %v5260
  %v5544 = vunpack.c.h.b16 %v5260
  %v5545 = vunpack.c.l.b16 %v5261
  %v5546 = vunpack.c.h.b16 %v5261
  %v5547 = vunpack.c.l.b16 %v5262
  %v5548 = vunpack.c.h.b16 %v5262
  %v5549 = vunpack.c.l.b16 %v5263
  %v5550 = vunpack.c.h.b16 %v5263
  %v5551 = vunpack.c.l.b16 %v5264
  %v5552 = vunpack.c.h.b16 %v5264
  %v5553 = vunpack.c.l.b16 %v5265
  %v5554 = vunpack.c.h.b16 %v5265
  %v5555 = vunpack.c.l.b16 %v5266
  %v5556 = vunpack.c.h.b16 %v5266
  %v5557 = vunpack.c.l.b16 %v5267
  %v5558 = vunpack.c.h.b16 %v5267
  %v5559 = vunpack.c.l.b16 %v5268
  %v5560 = vunpack.c.h.b16 %v5268
  %v5561 = vunpack.c.l.b16 %v5269
  %v5562 = vunpack.c.h.b16 %v5269
  %v5563 = vunpack.c.l.b16 %v5270
  %v5564 = vunpack.c.h.b16 %v5270
  %v5565 = vunpack.c.l.b16 %v5271
  %v5566 = vunpack.c.h.b16 %v5271
  %v5567 = vunpack.c.l.b16 %v5272
  %v5568 = vunpack.c.h.b16 %v5272
  %v5569 = vunpack.c.l.b16 %v5273
  %v5570 = vunpack.c.h.b16 %v5273
  %v5571 = vunpack.c.l.b16 %v5274
  %v5572 = vunpack.c.h.b16 %v5274
  %v5573 = vunpack.c.l.b16 %v5275
  %v5574 = vunpack.c.h.b16 %v5275
  %v5575 = vunpack.c.l.b16 %v5276
  %v5576 = vunpack.c.h.b16 %v5276
  %v5577 = vunpack.c.l.b16 %v5277
  %v5578 = vunpack.c.h.b16 %v5277
  %v5579 = vunpack.c.l.b16 %v5278
  %v5580 = vunpack.c.h.b16 %v5278
  %v5581 = vunpack.c.l.b16 %v5279
  %v5582 = vunpack.c.h.b16 %v5279
  %v5583 = vunpack.c.l.b16 %v5280
  %v5584 = vunpack.c.h.b16 %v5280
  %v5585 = vunpack.c.l.b16 %v5281
  %v5586 = vunpack.c.h.b16 %v5281
  %v5587 = vunpack.c.l.b16 %v5282
  %v5588 = vunpack.c.h.b16 %v5282
  %v5589 = vunpack.c.l.b16 %v5283
  %v5590 = vunpack.c.h.b16 %v5283
  %v5591 = vunpack.c.l.b16 %v5284
  %v5592 = vunpack.c.h.b16 %v5284
  %v5593 = vunpack.c.l.b16 %v5285
  %v5594 = vunpack.c.h.b16 %v5285
  %v5595 = vunpack.c.l.b16 %v5286
  %v5596 = vunpack.c.h.b16 %v5286
  %v5597 = vunpack.c.l.b16 %v5287
  %v5598 = vunpack.c.h.b16 %v5287
  %v5599 = vunpack.c.l.b16 %v5288
  %v5600 = vunpack.c.h.b16 %v5288
  %v5601 = vunpack.c.l.b16 %v5289
  %v5602 = vunpack.c.h.b16 %v5289
  %v5603 = vunpack.c.l.b16 %v5290
  %v5604 = vunpack.c.h.b16 %v5290
  %v5605 = vunpack.c.l.b16 %v5291
  %v5606 = vunpack.c.h.b16 %v5291
  %v5607 = vunpack.c.l.b16 %v5292
  %v5608 = vunpack.c.h.b16 %v5292
  %v5609 = vunpack.c.l.b16 %v5293
  %v5610 = vunpack.c.h.b16 %v5293
  %v5611 = vunpack.c.l.b16 %v5294
  %v5612 = vunpack.c.h.b16 %v5294
  %v5613 = vunpack.c.l.b16 %v5295
  %v5614 = vunpack.c.h.b16 %v5295
  %v5615 = vunpack.c.l.b16 %v5296
  %v5616 = vunpack.c.h.b16 %v5296
  %v5617 = vunpack.c.l.b16 %v5297
  %v5618 = vunpack.c.h.b16 %v5297
  %v5619 = vunpack.c.l.b16 %v5298
  %v5620 = vunpack.c.h.b16 %v5298
  %v5621 = vunpack.c.l.b16 %v5299
  %v5622 = vunpack.c.h.b16 %v5299
  %v5623 = vunpack.c.l.b16 %v5300
  %v5624 = vunpack.c.h.b16 %v5300
  %v5625 = vunpack.c.l.b16 %v5301
  %v5626 = vunpack.c.h.b16 %v5301
  %v5627 = vunpack.c.l.b16 %v5302
  %v5628 = vunpack.c.h.b16 %v5302
  %v5629 = vunpack.c.l.b16 %v5303
  %v5630 = vunpack.c.h.b16 %v5303
  %v5631 = vunpack.c.l.b16 %v5304
  %v5632 = vunpack.c.h.b16 %v5304
  %v5633 = vunpack.c.l.b16 %v5305
  %v5634 = vunpack.c.h.b16 %v5305
  %v5635 = vunpack.c.l.b16 %v5306
  %v5636 = vunpack.c.h.b16 %v5306
  %v5637 = vunpack.c.l.b16 %v5307
  %v5638 = vunpack.c.h.b16 %v5307
  %v5639 = vunpack.c.l.b16 %v5308
  %v5640 = vunpack.c.h.b16 %v5308
  %v5641 = vunpack.c.l.b16 %v5309
  %v5642 = vunpack.c.h.b16 %v5309
  %v5643 = vunpack.c.l.b16 %v5310
  %v5644 = vunpack.c.h.b16 %v5310
  %v5645 = vunpack.c.l.b16 %v5311
  %v5646 = vunpack.c.h.b16 %v5311
  %v5647 = vunpack.c.l.b16 %v5312
  %v5648 = vunpack.c.h.b16 %v5312
  %v5649 = vunpack.c.l.b16 %v5313
  %v5650 = vunpack.c.h.b16 %v5313
  %v5651 = vunpack.c.l.b16 %v5314
  %v5652 = vunpack.c.h.b16 %v5314
  %v5653 = vunpack.c.l.b16 %v5315
  %v5654 = vunpack.c.h.b16 %v5315
  %v5655 = vunpack.c.l.b16 %v5316
  %v5656 = vunpack.c.h.b16 %v5316
  %v5657 = vunpack.c.l.b16 %v5317
  %v5658 = vunpack.c.h.b16 %v5317
  %v5659 = vunpack.c.l.b16 %v5318
  %v5660 = vunpack.c.h.b16 %v5318
  %v5661 = vunpack.c.l.b16 %v5319
  %v5662 = vunpack.c.h.b16 %v5319
  %v5663 = vunpack.c.l.b16 %v5320
  %v5664 = vunpack.c.h.b16 %v5320
  %v5665 = vunpack.c.l.b16 %v5321
  %v5666 = vunpack.c.h.b16 %v5321
  %v5667 = vunpack.c.l.b16 %v5322
  %v5668 = vunpack.c.h.b16 %v5322
  %v5669 = vunpack.c.l.b16 %v5323
  %v5670 = vunpack.c.h.b16 %v5323
  %v5671 = vunpack.c.l.b16 %v5324
  %v5672 = vunpack.c.h.b16 %v5324
  %v5673 = vunpack.c.l.b16 %v5325
  %v5674 = vunpack.c.h.b16 %v5325
  %v5675 = vunpack.c.l.b16 %v5326
  %v5676 = vunpack.c.h.b16 %v5326
  %v5677 = vunpack.c.l.b16 %v5327
  %v5678 = vunpack.c.h.b16 %v5327
  %v5679 = vunpack.c.l.b16 %v5328
  %v5680 = vunpack.c.h.b16 %v5328
  %v5681 = vunpack.c.l.b16 %v5329
  %v5682 = vunpack.c.h.b16 %v5329
  %v5683 = vunpack.c.l.b16 %v5330
  %v5684 = vunpack.c.h.b16 %v5330
  %v5685 = vunpack.c.l.b16 %v5331
  %v5686 = vunpack.c.h.b16 %v5331
  %v5687 = vunpack.c.l.b16 %v5332
  %v5688 = vunpack.c.h.b16 %v5332
  %v5689 = vunpack.c.l.b16 %v5333
  %v5690 = vunpack.c.h.b16 %v5333
  %v5691 = vunpack.c.l.b16 %v5334
  %v5692 = vunpack.c.h.b16 %v5334
  %v5693 = vunpack.c.l.b16 %v5335
  %v5694 = vunpack.c.h.b16 %v5335
  %v5695 = vunpack.c.l.b16 %v5336
  %v5696 = vunpack.c.h.b16 %v5336
  %v5697 = vunpack.c.l.b16 %v5337
  %v5698 = vunpack.c.h.b16 %v5337
  %v5699 = vunpack.c.l.b16 %v5338
  %v5700 = vunpack.c.h.b16 %v5338
  %v5701 = vunpack.c.l.b16 %v5339
  %v5702 = vunpack.c.h.b16 %v5339
  %v5703 = vunpack.c.l.b16 %v5340
  %v5704 = vunpack.c.h.b16 %v5340
  %v5705 = vunpack.c.l.b16 %v5341
  %v5706 = vunpack.c.h.b16 %v5341
  %v5707 = vunpack.c.l.b16 %v5342
  %v5708 = vunpack.c.h.b16 %v5342
  %v5709 = vunpack.c.l.b16 %v5343
  %v5710 = vunpack.c.h.b16 %v5343
  %v5711 = vunpack.c.l.b16 %v5344
  %v5712 = vunpack.c.h.b16 %v5344
  %v5713 = vunpack.c.l.b16 %v5345
  %v5714 = vunpack.c.h.b16 %v5345
  %v5715 = vunpack.c.l.b16 %v5346
  %v5716 = vunpack.c.h.b16 %v5346
  %v5717 = vunpack.c.l.b16 %v5347
  %v5718 = vunpack.c.h.b16 %v5347
  %v5719 = vunpack.c.l.b16 %v5348
  %v5720 = vunpack.c.h.b16 %v5348
  %v5721 = vunpack.c.l.b16 %v5349
  %v5722 = vunpack.c.h.b16 %v5349
  %v5723 = vunpack.c.l.b16 %v5350
  %v5724 = vunpack.c.h.b16 %v5350
  %v5725 = vunpack.c.l.b16 %v5351
  %v5726 = vunpack.c.h.b16 %v5351
  %v5727 = vunpack.c.l.b16 %v5352
  %v5728 = vunpack.c.h.b16 %v5352
  %v5729 = vunpack.c.l.b16 %v5353
  %v5730 = vunpack.c.h.b16 %v5353
  %v5731 = vunpack.c.l.b16 %v5354
  %v5732 = vunpack.c.h.b16 %v5354
  %v5733 = vunpack.c.l.b16 %v5355
  %v5734 = vunpack.c.h.b16 %v5355
  %v5735 = vunpack.c.l.b16 %v5356
  %v5736 = vunpack.c.h.b16 %v5356
  %v5737 = vunpack.c.l.b16 %v5357
  %v5738 = vunpack.c.h.b16 %v5357
  %v5739 = vunpack.c.l.b16 %v5358
  %v5740 = vunpack.c.h.b16 %v5358
  %v5741 = vunpack.c.l.b16 %v5359
  %v5742 = vunpack.c.h.b16 %v5359
  %v5743 = vunpack.c.l.b16 %v5360
  %v5744 = vunpack.c.h.b16 %v5360
  %v5745 = vpack.c.b16 %v5497, %v5489
  %v5746 = vpack.c.b16 %v5498, %v5490
  %v5747 = vpack.c.b16 %v5499, %v5491
  %v5748 = vpack.c.b16 %v5500, %v5492
  %v5749 = vpack.c.b16 %v5501, %v5493
  %v5750 = vpack.c.b16 %v5502, %v5494
  %v5751 = vpack.c.b16 %v5503, %v5495
  %v5752 = vpack.c.b16 %v5504, %v5496
  %v5753 = vpack.c.b16 %v5513, %v5505
  %v5754 = vpack.c.b16 %v5514, %v5506
  %v5755 = vpack.c.b16 %v5515, %v5507
  %v5756 = vpack.c.b16 %v5516, %v5508
  %v5757 = vpack.c.b16 %v5517, %v5509
  %v5758 = vpack.c.b16 %v5518, %v5510
  %v5759 = vpack.c.b16 %v5519, %v5511
  %v5760 = vpack.c.b16 %v5520, %v5512
  %v5761 = vpack.c.b16 %v5529, %v5521
  %v5762 = vpack.c.b16 %v5530, %v5522
  %v5763 = vpack.c.b16 %v5531, %v5523
  %v5764 = vpack.c.b16 %v5532, %v5524
  %v5765 = vpack.c.b16 %v5533, %v5525
  %v5766 = vpack.c.b16 %v5534, %v5526
  %v5767 = vpack.c.b16 %v5535, %v5527
  %v5768 = vpack.c.b16 %v5536, %v5528
  %v5769 = vpack.c.b16 %v5545, %v5537
  %v5770 = vpack.c.b16 %v5546, %v5538
  %v5771 = vpack.c.b16 %v5547, %v5539
  %v5772 = vpack.c.b16 %v5548, %v5540
  %v5773 = vpack.c.b16 %v5549, %v5541
  %v5774 = vpack.c.b16 %v5550, %v5542
  %v5775 = vpack.c.b16 %v5551, %v5543
  %v5776 = vpack.c.b16 %v5552, %v5544
  %v5777 = vpack.c.b16 %v5561, %v5553
  %v5778 = vpack.c.b16 %v5562, %v5554
  %v5779 = vpack.c.b16 %v5563, %v5555
  %v5780 = vpack.c.b16 %v5564, %v5556
  %v5781 = vpack.c.b16 %v5565, %v5557
  %v5782 = vpack.c.b16 %v5566, %v5558
  %v5783 = vpack.c.b16 %v5567, %v5559
  %v5784 = vpack.c.b16 %v5568, %v5560
  %v5785 = vpack.c.b16 %v5577, %v5569
  %v5786 = vpack.c.b16 %v5578, %v5570
  %v5787 = vpack.c.b16 %v5579, %v5571
  %v5788 = vpack.c.b16 %v5580, %v5572
  %v5789 = vpack.c.b16 %v5581, %v5573
  %v5790 = vpack.c.b16 %v5582, %v5574
  %v5791 = vpack.c.b16 %v5583, %v5575
  %v5792 = vpack.c.b16 %v5584, %v5576
  %v5793 = vpack.c.b16 %v5593, %v5585
  %v5794 = vpack.c.b16 %v5594, %v5586
  %v5795 = vpack.c.b16 %v5595, %v5587
  %v5796 = vpack.c.b16 %v5596, %v5588
  %v5797 = vpack.c.b16 %v5597, %v5589
  %v5798 = vpack.c.b16 %v5598, %v5590
  %v5799 = vpack.c.b16 %v5599, %v5591
  %v5800 = vpack.c.b16 %v5600, %v5592
  %v5801 = vpack.c.b16 %v5609, %v5601
  %v5802 = vpack.c.b16 %v5610, %v5602
  %v5803 = vpack.c.b16 %v5611, %v5603
  %v5804 = vpack.c.b16 %v5612, %v5604
  %v5805 = vpack.c.b16 %v5613, %v5605
  %v5806 = vpack.c.b16 %v5614, %v5606
  %v5807 = vpack.c.b16 %v5615, %v5607
  %v5808 = vpack.c.b16 %v5616, %v5608
  %v5809 = vpack.c.b16 %v5625, %v5617
  %v5810 = vpack.c.b16 %v5626, %v5618
  %v5811 = vpack.c.b16 %v5627, %v5619
  %v5812 = vpack.c.b16 %v5628, %v5620
  %v5813 = vpack.c.b16 %v5629, %v5621
  %v5814 = vpack.c.b16 %v5630, %v5622
  %v5815 = vpack.c.b16 %v5631, %v5623
  %v5816 = vpack.c.b16 %v5632, %v5624
  %v5817 = vpack.c.b16 %v5641, %v5633
  %v5818 = vpack.c.b16 %v5642, %v5634
  %v5819 = vpack.c.b16 %v5643, %v5635
  %v5820 = vpack.c.b16 %v5644, %v5636
  %v5821 = vpack.c.b16 %v5645, %v5637
  %v5822 = vpack.c.b16 %v5646, %v5638
  %v5823 = vpack.c.b16 %v5647, %v5639
  %v5824 = vpack.c.b16 %v5648, %v5640
  %v5825 = vpack.c.b16 %v5657, %v5649
  %v5826 = vpack.c.b16 %v5658, %v5650
  %v5827 = vpack.c.b16 %v5659, %v5651
  %v5828 = vpack.c.b16 %v5660, %v5652
  %v5829 = vpack.c.b16 %v5661, %v5653
  %v5830 = vpack.c.b16 %v5662, %v5654
  %v5831 = vpack.c.b16 %v5663, %v5655
  %v5832 = vpack.c.b16 %v5664, %v5656
  %v5833 = vpack.c.b16 %v5673, %v5665
  %v5834 = vpack.c.b16 %v5674, %v5666
  %v5835 = vpack.c.b16 %v5675, %v5667
  %v5836 = vpack.c.b16 %v5676, %v5668
  %v5837 = vpack.c.b16 %v5677, %v5669
  %v5838 = vpack.c.b16 %v5678, %v5670
  %v5839 = vpack.c.b16 %v5679, %v5671
  %v5840 = vpack.c.b16 %v5680, %v5672
  %v5841 = vpack.c.b16 %v5689, %v5681
  %v5842 = vpack.c.b16 %v5690, %v5682
  %v5843 = vpack.c.b16 %v5691, %v5683
  %v5844 = vpack.c.b16 %v5692, %v5684
  %v5845 = vpack.c.b16 %v5693, %v5685
  %v5846 = vpack.c.b16 %v5694, %v5686
  %v5847 = vpack.c.b16 %v5695, %v5687
  %v5848 = vpack.c.b16 %v5696, %v5688
  %v5849 = vpack.c.b16 %v5705, %v5697
  %v5850 = vpack.c.b16 %v5706, %v5698
  %v5851 = vpack.c.b16 %v5707, %v5699
  %v5852 = vpack.c.b16 %v5708, %v5700
  %v5853 = vpack.c.b16 %v5709, %v5701
  %v5854 = vpack.c.b16 %v5710, %v5702
  %v5855 = vpack.c.b16 %v5711, %v5703
  %v5856 = vpack.c.b16 %v5712, %v5704
  %v5857 = vpack.c.b16 %v5721, %v5713
  %v5858 = vpack.c.b16 %v5722, %v5714
  %v5859 = vpack.c.b16 %v5723, %v5715
  %v5860 = vpack.c.b16 %v5724, %v5716
  %v5861 = vpack.c.b16 %v5725, %v5717
  %v5862 = vpack.c.b16 %v5726, %v5718
  %v5863 = vpack.c.b16 %v5727, %v5719
  %v5864 = vpack.c.b16 %v5728, %v5720
  %v5865 = vpack.c.b16 %v5737, %v5729
  %v5866 = vpack.c.b16 %v5738, %v5730
  %v5867 = vpack.c.b16 %v5739, %v5731
  %v5868 = vpack.c.b16 %v5740, %v5732
  %v5869 = vpack.c.b16 %v5741, %v5733
  %v5870 = vpack.c.b16 %v5742, %v5734
  %v5871 = vpack.c.b16 %v5743, %v5735
  %v5872 = vpack.c.b16 %v5744, %v5736
  %6001 = vmatprep.subr.bf16.mxu0 %v5746
  %6002 = vmatpush1.bf16.msra.mxu0 %v5745
  %6003 = vmatprep.subr.bf16.mxu0 %v5754
  %6004 = vmatpush1.bf16.msra.mxu0 %v5753
  %6005 = vmatprep.subr.bf16.mxu0 %v5762
  %6006 = vmatpush1.bf16.msra.mxu0 %v5761
  %6007 = vmatprep.subr.bf16.mxu0 %v5770
  %6008 = vmatpush1.bf16.msra.mxu0 %v5769
  %6009 = vmatprep.subr.bf16.mxu0 %v5778
  %6010 = vmatpush1.bf16.msra.mxu0 %v5777
  %6011 = vmatprep.subr.bf16.mxu0 %v5786
  %6012 = vmatpush1.bf16.msra.mxu0 %v5785
  %6013 = vmatprep.subr.bf16.mxu0 %v5794
  %6014 = vmatpush1.bf16.msra.mxu0 %v5793
  %6015 = vmatprep.subr.bf16.mxu0 %v5802
  %6016 = vmatpush1.bf16.msra.mxu0 %v5801
  %6017 = vmatprep.subr.bf16.mxu0 %v5810
  %6018 = vmatpush1.bf16.msra.mxu0 %v5809
  %6019 = vmatprep.subr.bf16.mxu0 %v5818
  %6020 = vmatpush1.bf16.msra.mxu0 %v5817
  %6021 = vmatprep.subr.bf16.mxu0 %v5826
  %6022 = vmatpush1.bf16.msra.mxu0 %v5825
  %6023 = vmatprep.subr.bf16.mxu0 %v5834
  %6024 = vmatpush1.bf16.msra.mxu0 %v5833
  %6025 = vmatprep.subr.bf16.mxu0 %v5842
  %6026 = vmatpush1.bf16.msra.mxu0 %v5841
  %6027 = vmatprep.subr.bf16.mxu0 %v5850
  %6028 = vmatpush1.bf16.msra.mxu0 %v5849
  %6029 = vmatprep.subr.bf16.mxu0 %v5858
  %6030 = vmatpush1.bf16.msra.mxu0 %v5857
  %6031 = vmatprep.subr.bf16.mxu0 %v5866
  %6032 = vmatpush1.bf16.msra.mxu0 %v5865
  %6033 = vmatprep.mubr.bf16.mxu0 %v5209
  %6034 = vmatmul.mubr.bf16.gmra.mrb[0].mxu0 %v5208
  %v6035 = vpop.f32.mrb[0].mxu0
  %v6036 = vadd.f32 0.0, %v6035
  %v6037 = vpop.f32.mrb[0].mxu0
  %v6038 = vadd.f32 0.0, %v6037
  %v6039 = vpop.f32.mrb[0].mxu0
  %v6040 = vpop.f32.mrb[0].mxu0
  %6041 = vdwg.mxu0
  %6042 = vmatprep.subr.bf16.mxu0 %v5748
  %6043 = vmatpush1.bf16.msra.mxu0 %v5747
  %6044 = vmatprep.subr.bf16.mxu0 %v5756
  %6045 = vmatpush1.bf16.msra.mxu0 %v5755
  %6046 = vmatprep.subr.bf16.mxu0 %v5764
  %6047 = vmatpush1.bf16.msra.mxu0 %v5763
  %6048 = vmatprep.subr.bf16.mxu0 %v5772
  %6049 = vmatpush1.bf16.msra.mxu0 %v5771
  %6050 = vmatprep.subr.bf16.mxu0 %v5780
  %6051 = vmatpush1.bf16.msra.mxu0 %v5779
  %6052 = vmatprep.subr.bf16.mxu0 %v5788
  %6053 = vmatpush1.bf16.msra.mxu0 %v5787
  %6054 = vmatprep.subr.bf16.mxu0 %v5796
  %6055 = vmatpush1.bf16.msra.mxu0 %v5795
  %6056 = vmatprep.subr.bf16.mxu0 %v5804
  %6057 = vmatpush1.bf16.msra.mxu0 %v5803
  %6058 = vmatprep.subr.bf16.mxu0 %v5812
  %6059 = vmatpush1.bf16.msra.mxu0 %v5811
  %6060 = vmatprep.subr.bf16.mxu0 %v5820
  %6061 = vmatpush1.bf16.msra.mxu0 %v5819
  %6062 = vmatprep.subr.bf16.mxu0 %v5828
  %6063 = vmatpush1.bf16.msra.mxu0 %v5827
  %6064 = vmatprep.subr.bf16.mxu0 %v5836
  %6065 = vmatpush1.bf16.msra.mxu0 %v5835
  %6066 = vmatprep.subr.bf16.mxu0 %v5844
  %6067 = vmatpush1.bf16.msra.mxu0 %v5843
  %6068 = vmatprep.subr.bf16.mxu0 %v5852
  %6069 = vmatpush1.bf16.msra.mxu0 %v5851
  %6070 = vmatprep.subr.bf16.mxu0 %v5860
  %6071 = vmatpush1.bf16.msra.mxu0 %v5859
  %6072 = vmatprep.subr.bf16.mxu0 %v5868
  %6073 = vmatpush1.bf16.msra.mxu0 %v5867
  %6074 = vmatprep.mubr.bf16.mxu0 %v5209
  %6075 = vmatmul.mubr.bf16.gmra.mrb[0].mxu0 %v5208
  %v6076 = vpop.f32.mrb[0].mxu0
  %v6077 = vadd.f32 0.0, %v6076
  %v6078 = vpop.f32.mrb[0].mxu0
  %v6079 = vadd.f32 0.0, %v6078
  %v6080 = vpop.f32.mrb[0].mxu0
  %v6081 = vpop.f32.mrb[0].mxu0
  %6082 = vdwg.mxu0
  %6083 = vmatprep.subr.bf16.mxu0 %v5750
  %6084 = vmatpush1.bf16.msra.mxu0 %v5749
  %6085 = vmatprep.subr.bf16.mxu0 %v5758
  %6086 = vmatpush1.bf16.msra.mxu0 %v5757
  %6087 = vmatprep.subr.bf16.mxu0 %v5766
  %6088 = vmatpush1.bf16.msra.mxu0 %v5765
  %6089 = vmatprep.subr.bf16.mxu0 %v5774
  %6090 = vmatpush1.bf16.msra.mxu0 %v5773
  %6091 = vmatprep.subr.bf16.mxu0 %v5782
  %6092 = vmatpush1.bf16.msra.mxu0 %v5781
  %6093 = vmatprep.subr.bf16.mxu0 %v5790
  %6094 = vmatpush1.bf16.msra.mxu0 %v5789
  %6095 = vmatprep.subr.bf16.mxu0 %v5798
  %6096 = vmatpush1.bf16.msra.mxu0 %v5797
  %6097 = vmatprep.subr.bf16.mxu0 %v5806
  %6098 = vmatpush1.bf16.msra.mxu0 %v5805
  %6099 = vmatprep.subr.bf16.mxu0 %v5814
  %6100 = vmatpush1.bf16.msra.mxu0 %v5813
  %6101 = vmatprep.subr.bf16.mxu0 %v5822
  %6102 = vmatpush1.bf16.msra.mxu0 %v5821
  %6103 = vmatprep.subr.bf16.mxu0 %v5830
  %6104 = vmatpush1.bf16.msra.mxu0 %v5829
  %6105 = vmatprep.subr.bf16.mxu0 %v5838
  %6106 = vmatpush1.bf16.msra.mxu0 %v5837
  %6107 = vmatprep.subr.bf16.mxu0 %v5846
  %6108 = vmatpush1.bf16.msra.mxu0 %v5845
  %6109 = vmatprep.subr.bf16.mxu0 %v5854
  %6110 = vmatpush1.bf16.msra.mxu0 %v5853
  %6111 = vmatprep.subr.bf16.mxu0 %v5862
  %6112 = vmatpush1.bf16.msra.mxu0 %v5861
  %6113 = vmatprep.subr.bf16.mxu0 %v5870
  %6114 = vmatpush1.bf16.msra.mxu0 %v5869
  %6115 = vmatprep.mubr.bf16.mxu0 %v5209
  %6116 = vmatmul.mubr.bf16.gmra.mrb[0].mxu0 %v5208
  %v6117 = vpop.f32.mrb[0].mxu0
  %v6118 = vadd.f32 0.0, %v6117
  %v6119 = vpop.f32.mrb[0].mxu0
  %v6120 = vadd.f32 0.0, %v6119
  %v6121 = vpop.f32.mrb[0].mxu0
  %v6122 = vpop.f32.mrb[0].mxu0
  %6123 = vdwg.mxu0
  %6124 = vmatprep.subr.bf16.mxu0 %v5752
  %6125 = vmatpush1.bf16.msra.mxu0 %v5751
  %6126 = vmatprep.subr.bf16.mxu0 %v5760
  %6127 = vmatpush1.bf16.msra.mxu0 %v5759
  %6128 = vmatprep.subr.bf16.mxu0 %v5768
  %6129 = vmatpush1.bf16.msra.mxu0 %v5767
  %6130 = vmatprep.subr.bf16.mxu0 %v5776
  %6131 = vmatpush1.bf16.msra.mxu0 %v5775
  %6132 = vmatprep.subr.bf16.mxu0 %v5784
  %6133 = vmatpush1.bf16.msra.mxu0 %v5783
  %6134 = vmatprep.subr.bf16.mxu0 %v5792
  %6135 = vmatpush1.bf16.msra.mxu0 %v5791
  %6136 = vmatprep.subr.bf16.mxu0 %v5800
  %6137 = vmatpush1.bf16.msra.mxu0 %v5799
  %6138 = vmatprep.subr.bf16.mxu0 %v5808
  %6139 = vmatpush1.bf16.msra.mxu0 %v5807
  %6140 = vmatprep.subr.bf16.mxu0 %v5816
  %6141 = vmatpush1.bf16.msra.mxu0 %v5815
  %6142 = vmatprep.subr.bf16.mxu0 %v5824
  %6143 = vmatpush1.bf16.msra.mxu0 %v5823
  %6144 = vmatprep.subr.bf16.mxu0 %v5832
  %6145 = vmatpush1.bf16.msra.mxu0 %v5831
  %6146 = vmatprep.subr.bf16.mxu0 %v5840
  %6147 = vmatpush1.bf16.msra.mxu0 %v5839
  %6148 = vmatprep.subr.bf16.mxu0 %v5848
  %6149 = vmatpush1.bf16.msra.mxu0 %v5847
  %6150 = vmatprep.subr.bf16.mxu0 %v5856
  %6151 = vmatpush1.bf16.msra.mxu0 %v5855
  %6152 = vmatprep.subr.bf16.mxu0 %v5864
  %6153 = vmatpush1.bf16.msra.mxu0 %v5863
  %6154 = vmatprep.subr.bf16.mxu0 %v5872
  %6155 = vmatpush1.bf16.msra.mxu0 %v5871
  %6156 = vmatprep.mubr.bf16.mxu0 %v5209
  %6157 = vmatmul.mubr.bf16.gmra.mrb[0].mxu0 %v5208
  %v6158 = vpop.f32.mrb[0].mxu0
  %v6159 = vadd.f32 0.0, %v6158
  %v6160 = vpop.f32.mrb[0].mxu0
  %v6161 = vadd.f32 0.0, %v6160
  %v6162 = vpop.f32.mrb[0].mxu0
  %v6163 = vpop.f32.mrb[0].mxu0
  %6164 = vdwg.mxu0
  %v6173 = vcombine.low %v6036, %v6038
  %v6174 = vcombine.low %v6077, %v6079
  %v6176 = vunpack.c.l.s4 1983009808
  %v6177 = vunpack.c.0.s8 %v6176
  %v6178 = vlaneseq
  %v6179 = vshrl.u32 %v6178, 7
  %v6180 = vsub.s32 %v6177, %v6179
  %v6181 = vrot.slane %v6173, %v6180
  %v6183 = vunpack.c.l.s4 1983009808
  %v6184 = vunpack.c.0.s8 %v6183
  %v6185 = vlaneseq
  %v6186 = vshrl.u32 %v6185, 7
  %v6187 = vsub.s32 %v6184, %v6186
  %v6188 = vrot.slane %v6174, %v6187
  %v6189 = vcombine.low %v6181, %v6188
  %v6190 = vcombine.low %v6118, %v6120
  %v6191 = vcombine.low %v6159, %v6161
  %v6193 = vunpack.c.l.s4 1983009808
  %v6194 = vunpack.c.0.s8 %v6193
  %v6195 = vlaneseq
  %v6196 = vshrl.u32 %v6195, 7
  %v6197 = vsub.s32 %v6194, %v6196
  %v6198 = vrot.slane %v6190, %v6197
  %v6200 = vunpack.c.l.s4 1983009808
  %v6201 = vunpack.c.0.s8 %v6200
  %v6202 = vlaneseq
  %v6203 = vshrl.u32 %v6202, 7
  %v6204 = vsub.s32 %v6201, %v6203
  %v6205 = vrot.slane %v6191, %v6204
  %v6206 = vcombine.low %v6198, %v6205
  %v6209 = vadd.f32 %v5231, %v6189
  %v6210 = vadd.f32 %v5232, %v6206
  %v6211 = vxor.u32 %v6209, 2147483648
  %v6212 = vmul.f32 %v6211, 1.442695
  %v6213 = vpow.pop %v6212
  %v6214 = vadd.f32 %v6213, 1.0
  %v6215 = vrcp.pop %v6214
  %v6216 = vmul.f32 1.0, %v6215
  %v6218 = vrot.slane %v6209, 4
  %v6220 = vxor.u32 %v6218, 2147483648
  %v6221 = vmul.f32 %v6220, 1.442695
  %v6222 = vpow.pop %v6221
  %v6223 = vadd.f32 %v6222, 1.0
  %v6224 = vrcp.pop %v6223
  %v6225 = vmul.f32 1.0, %v6224
  %v6226 = vtanh.pop %v6210
  %v6228 = vrot.slane %v6210, 4
  %v6230 = vxor.u32 %v6228, 2147483648
  %v6231 = vmul.f32 %v6230, 1.442695
  %v6232 = vpow.pop %v6231
  %v6233 = vadd.f32 %v6232, 1.0
  %v6234 = vrcp.pop %v6233
  %v6235 = vmul.f32 1.0, %v6234
  %v6236 = vmul.f32 %v6225, %v5194
  %v6237 = vmul.f32 %v6216, %v6226
  %v6238 = vadd.f32 %v6236, %v6237
  %v6239 = vtanh.pop %v6238
  %v6240 = vmul.f32 %v6235, %v6239
  %v6243 = vunpack.c.l.s4 1983009808
  %v6244 = vunpack.c.0.s8 %v6243
  %v6245 = vlaneseq
  %v6246 = vshrl.u32 %v6245, 7
  %v6247 = vsub.s32 %v6244, %v6246
  %v6248 = vrot.slane %v6240, %v6247
  %v6249 = vcombine.high %v6248, %v6248
  %v6252 = vpack.c.bf16 %v6248, %v6248
  %v6253 = vpack.c.bf16 %v6249, %v6249
  %v6256 = vcombine.low %v6252, %v6253
  %v6258 = vunpack.c.l.s4 1966171168
  %v6259 = vunpack.c.0.s8 %v6258
  %v6260 = vlaneseq
  %v6261 = vshrl.u32 %v6260, 7
  %v6262 = vsub.s32 %v6259, %v6261
  %v6263 = vrot.slane %v6256, %v6262
  %v6265 = vunpack.c.l.s4 1966171168
  %v6266 = vunpack.c.0.s8 %v6265
  %v6267 = vlaneseq
  %v6268 = vshrl.u32 %v6267, 7
  %v6269 = vsub.s32 %v6266, %v6268
  %v6270 = vrot.slane %v6263, %v6269
  %s6272 = scalar_lea.vmem %s2, 10
  %6273 = vst [vmem:[%s6272] sm:$0x3] %v6270
  %s6274 = scalar_lea.vmem %s0, 96
  %v6275 = vld [vmem:[%s6274] sm:$0xff]
  %v6276 = vld [vmem:[%s6274 + $0x8] sm:$0xff]
  %v6277 = vld [vmem:[%s1] sm:$0xff]
  %v6278 = vld [vmem:[%s1 + $0x8] sm:$0xff]
  %v6279 = vld [vmem:[%s1 + $0x10] sm:$0xff]
  %v6280 = vld [vmem:[%s1 + $0x18] sm:$0xff]
  %v6281 = vld [vmem:[%s1 + $0x20] sm:$0xff]
  %v6282 = vld [vmem:[%s1 + $0x28] sm:$0xff]
  %v6283 = vld [vmem:[%s1 + $0x30] sm:$0xff]
  %v6284 = vld [vmem:[%s1 + $0x38] sm:$0xff]
  %v6285 = vld [vmem:[%s1 + $0x40] sm:$0xff]
  %v6286 = vld [vmem:[%s1 + $0x48] sm:$0xff]
  %v6287 = vld [vmem:[%s1 + $0x50] sm:$0xff]
  %v6288 = vld [vmem:[%s1 + $0x58] sm:$0xff]
  %v6289 = vld [vmem:[%s1 + $0x60] sm:$0xff]
  %v6290 = vld [vmem:[%s1 + $0x68] sm:$0xff]
  %v6291 = vld [vmem:[%s1 + $0x70] sm:$0xff]
  %v6292 = vld [vmem:[%s1 + $0x78] sm:$0xff]
  %v6293 = vld [vmem:[%s1 + $0x80] sm:$0xff]
  %v6294 = vld [vmem:[%s1 + $0x88] sm:$0xff]
  %v6295 = vld [vmem:[%s1 + $0x90] sm:$0xff]
  %v6296 = vld [vmem:[%s1 + $0x98] sm:$0xff]
  %v6297 = vld [vmem:[%s1 + $0xa0] sm:$0xff]
  %v6298 = vld [vmem:[%s1 + $0xa8] sm:$0xff]
  %v6299 = vld [vmem:[%s1 + $0xb0] sm:$0xff]
  %v6300 = vld [vmem:[%s1 + $0xb8] sm:$0xff]
  %v6301 = vld [vmem:[%s1 + $0xc0] sm:$0xff]
  %v6302 = vld [vmem:[%s1 + $0xc8] sm:$0xff]
  %v6303 = vld [vmem:[%s1 + $0xd0] sm:$0xff]
  %v6304 = vld [vmem:[%s1 + $0xd8] sm:$0xff]
  %v6305 = vld [vmem:[%s1 + $0xe0] sm:$0xff]
  %v6306 = vld [vmem:[%s1 + $0xe8] sm:$0xff]
  %v6307 = vld [vmem:[%s1 + $0xf0] sm:$0xff]
  %v6308 = vld [vmem:[%s1 + $0xf8] sm:$0xff]
  %v6309 = vld [vmem:[%s1 + $0x100] sm:$0xff]
  %v6310 = vld [vmem:[%s1 + $0x108] sm:$0xff]
  %v6311 = vld [vmem:[%s1 + $0x110] sm:$0xff]
  %v6312 = vld [vmem:[%s1 + $0x118] sm:$0xff]
  %v6313 = vld [vmem:[%s1 + $0x120] sm:$0xff]
  %v6314 = vld [vmem:[%s1 + $0x128] sm:$0xff]
  %v6315 = vld [vmem:[%s1 + $0x130] sm:$0xff]
  %v6316 = vld [vmem:[%s1 + $0x138] sm:$0xff]
  %v6317 = vld [vmem:[%s1 + $0x140] sm:$0xff]
  %v6318 = vld [vmem:[%s1 + $0x148] sm:$0xff]
  %v6319 = vld [vmem:[%s1 + $0x150] sm:$0xff]
  %v6320 = vld [vmem:[%s1 + $0x158] sm:$0xff]
  %v6321 = vld [vmem:[%s1 + $0x160] sm:$0xff]
  %v6322 = vld [vmem:[%s1 + $0x168] sm:$0xff]
  %v6323 = vld [vmem:[%s1 + $0x170] sm:$0xff]
  %v6324 = vld [vmem:[%s1 + $0x178] sm:$0xff]
  %v6325 = vld [vmem:[%s1 + $0x180] sm:$0xff]
  %v6326 = vld [vmem:[%s1 + $0x188] sm:$0xff]
  %v6327 = vld [vmem:[%s1 + $0x190] sm:$0xff]
  %v6328 = vld [vmem:[%s1 + $0x198] sm:$0xff]
  %v6329 = vld [vmem:[%s1 + $0x1a0] sm:$0xff]
  %v6330 = vld [vmem:[%s1 + $0x1a8] sm:$0xff]
  %v6331 = vld [vmem:[%s1 + $0x1b0] sm:$0xff]
  %v6332 = vld [vmem:[%s1 + $0x1b8] sm:$0xff]
  %v6333 = vld [vmem:[%s1 + $0x1c0] sm:$0xff]
  %v6334 = vld [vmem:[%s1 + $0x1c8] sm:$0xff]
  %v6335 = vld [vmem:[%s1 + $0x1d0] sm:$0xff]
  %v6336 = vld [vmem:[%s1 + $0x1d8] sm:$0xff]
  %v6337 = vld [vmem:[%s1 + $0x1e0] sm:$0xff]
  %v6338 = vld [vmem:[%s1 + $0x1e8] sm:$0xff]
  %v6339 = vld [vmem:[%s1 + $0x1f0] sm:$0xff]
  %v6340 = vld [vmem:[%s1 + $0x1f8] sm:$0xff]
  %v6341 = vld [vmem:[%s1 + $0x200] sm:$0xff]
  %v6342 = vld [vmem:[%s1 + $0x208] sm:$0xff]
  %v6343 = vld [vmem:[%s1 + $0x210] sm:$0xff]
  %v6344 = vld [vmem:[%s1 + $0x218] sm:$0xff]
  %v6345 = vld [vmem:[%s1 + $0x220] sm:$0xff]
  %v6346 = vld [vmem:[%s1 + $0x228] sm:$0xff]
  %v6347 = vld [vmem:[%s1 + $0x230] sm:$0xff]
  %v6348 = vld [vmem:[%s1 + $0x238] sm:$0xff]
  %v6349 = vld [vmem:[%s1 + $0x240] sm:$0xff]
  %v6350 = vld [vmem:[%s1 + $0x248] sm:$0xff]
  %v6351 = vld [vmem:[%s1 + $0x250] sm:$0xff]
  %v6352 = vld [vmem:[%s1 + $0x258] sm:$0xff]
  %v6353 = vld [vmem:[%s1 + $0x260] sm:$0xff]
  %v6354 = vld [vmem:[%s1 + $0x268] sm:$0xff]
  %v6355 = vld [vmem:[%s1 + $0x270] sm:$0xff]
  %v6356 = vld [vmem:[%s1 + $0x278] sm:$0xff]
  %v6357 = vld [vmem:[%s1 + $0x280] sm:$0xff]
  %v6358 = vld [vmem:[%s1 + $0x288] sm:$0xff]
  %v6359 = vld [vmem:[%s1 + $0x290] sm:$0xff]
  %v6360 = vld [vmem:[%s1 + $0x298] sm:$0xff]
  %v6361 = vld [vmem:[%s1 + $0x2a0] sm:$0xff]
  %v6362 = vld [vmem:[%s1 + $0x2a8] sm:$0xff]
  %v6363 = vld [vmem:[%s1 + $0x2b0] sm:$0xff]
  %v6364 = vld [vmem:[%s1 + $0x2b8] sm:$0xff]
  %v6365 = vld [vmem:[%s1 + $0x2c0] sm:$0xff]
  %v6366 = vld [vmem:[%s1 + $0x2c8] sm:$0xff]
  %v6367 = vld [vmem:[%s1 + $0x2d0] sm:$0xff]
  %v6368 = vld [vmem:[%s1 + $0x2d8] sm:$0xff]
  %v6369 = vld [vmem:[%s1 + $0x2e0] sm:$0xff]
  %v6370 = vld [vmem:[%s1 + $0x2e8] sm:$0xff]
  %v6371 = vld [vmem:[%s1 + $0x2f0] sm:$0xff]
  %v6372 = vld [vmem:[%s1 + $0x2f8] sm:$0xff]
  %v6373 = vld [vmem:[%s1 + $0x300] sm:$0xff]
  %v6374 = vld [vmem:[%s1 + $0x308] sm:$0xff]
  %v6375 = vld [vmem:[%s1 + $0x310] sm:$0xff]
  %v6376 = vld [vmem:[%s1 + $0x318] sm:$0xff]
  %v6377 = vld [vmem:[%s1 + $0x320] sm:$0xff]
  %v6378 = vld [vmem:[%s1 + $0x328] sm:$0xff]
  %v6379 = vld [vmem:[%s1 + $0x330] sm:$0xff]
  %v6380 = vld [vmem:[%s1 + $0x338] sm:$0xff]
  %v6381 = vld [vmem:[%s1 + $0x340] sm:$0xff]
  %v6382 = vld [vmem:[%s1 + $0x348] sm:$0xff]
  %v6383 = vld [vmem:[%s1 + $0x350] sm:$0xff]
  %v6384 = vld [vmem:[%s1 + $0x358] sm:$0xff]
  %v6385 = vld [vmem:[%s1 + $0x360] sm:$0xff]
  %v6386 = vld [vmem:[%s1 + $0x368] sm:$0xff]
  %v6387 = vld [vmem:[%s1 + $0x370] sm:$0xff]
  %v6388 = vld [vmem:[%s1 + $0x378] sm:$0xff]
  %v6389 = vld [vmem:[%s1 + $0x380] sm:$0xff]
  %v6390 = vld [vmem:[%s1 + $0x388] sm:$0xff]
  %v6391 = vld [vmem:[%s1 + $0x390] sm:$0xff]
  %v6392 = vld [vmem:[%s1 + $0x398] sm:$0xff]
  %v6393 = vld [vmem:[%s1 + $0x3a0] sm:$0xff]
  %v6394 = vld [vmem:[%s1 + $0x3a8] sm:$0xff]
  %v6395 = vld [vmem:[%s1 + $0x3b0] sm:$0xff]
  %v6396 = vld [vmem:[%s1 + $0x3b8] sm:$0xff]
  %v6397 = vld [vmem:[%s1 + $0x3c0] sm:$0xff]
  %v6398 = vld [vmem:[%s1 + $0x3c8] sm:$0xff]
  %v6399 = vld [vmem:[%s1 + $0x3d0] sm:$0xff]
  %v6400 = vld [vmem:[%s1 + $0x3d8] sm:$0xff]
  %v6401 = vld [vmem:[%s1 + $0x3e0] sm:$0xff]
  %v6402 = vld [vmem:[%s1 + $0x3e8] sm:$0xff]
  %v6403 = vld [vmem:[%s1 + $0x3f0] sm:$0xff]
  %v6404 = vld [vmem:[%s1 + $0x3f8] sm:$0xff]
  %v6533 = vunpack.c.l.b16 %v6277
  %v6534 = vunpack.c.h.b16 %v6277
  %v6535 = vunpack.c.l.b16 %v6278
  %v6536 = vunpack.c.h.b16 %v6278
  %v6537 = vunpack.c.l.b16 %v6279
  %v6538 = vunpack.c.h.b16 %v6279
  %v6539 = vunpack.c.l.b16 %v6280
  %v6540 = vunpack.c.h.b16 %v6280
  %v6541 = vunpack.c.l.b16 %v6281
  %v6542 = vunpack.c.h.b16 %v6281
  %v6543 = vunpack.c.l.b16 %v6282
  %v6544 = vunpack.c.h.b16 %v6282
  %v6545 = vunpack.c.l.b16 %v6283
  %v6546 = vunpack.c.h.b16 %v6283
  %v6547 = vunpack.c.l.b16 %v6284
  %v6548 = vunpack.c.h.b16 %v6284
  %v6549 = vunpack.c.l.b16 %v6285
  %v6550 = vunpack.c.h.b16 %v6285
  %v6551 = vunpack.c.l.b16 %v6286
  %v6552 = vunpack.c.h.b16 %v6286
  %v6553 = vunpack.c.l.b16 %v6287
  %v6554 = vunpack.c.h.b16 %v6287
  %v6555 = vunpack.c.l.b16 %v6288
  %v6556 = vunpack.c.h.b16 %v6288
  %v6557 = vunpack.c.l.b16 %v6289
  %v6558 = vunpack.c.h.b16 %v6289
  %v6559 = vunpack.c.l.b16 %v6290
  %v6560 = vunpack.c.h.b16 %v6290
  %v6561 = vunpack.c.l.b16 %v6291
  %v6562 = vunpack.c.h.b16 %v6291
  %v6563 = vunpack.c.l.b16 %v6292
  %v6564 = vunpack.c.h.b16 %v6292
  %v6565 = vunpack.c.l.b16 %v6293
  %v6566 = vunpack.c.h.b16 %v6293
  %v6567 = vunpack.c.l.b16 %v6294
  %v6568 = vunpack.c.h.b16 %v6294
  %v6569 = vunpack.c.l.b16 %v6295
  %v6570 = vunpack.c.h.b16 %v6295
  %v6571 = vunpack.c.l.b16 %v6296
  %v6572 = vunpack.c.h.b16 %v6296
  %v6573 = vunpack.c.l.b16 %v6297
  %v6574 = vunpack.c.h.b16 %v6297
  %v6575 = vunpack.c.l.b16 %v6298
  %v6576 = vunpack.c.h.b16 %v6298
  %v6577 = vunpack.c.l.b16 %v6299
  %v6578 = vunpack.c.h.b16 %v6299
  %v6579 = vunpack.c.l.b16 %v6300
  %v6580 = vunpack.c.h.b16 %v6300
  %v6581 = vunpack.c.l.b16 %v6301
  %v6582 = vunpack.c.h.b16 %v6301
  %v6583 = vunpack.c.l.b16 %v6302
  %v6584 = vunpack.c.h.b16 %v6302
  %v6585 = vunpack.c.l.b16 %v6303
  %v6586 = vunpack.c.h.b16 %v6303
  %v6587 = vunpack.c.l.b16 %v6304
  %v6588 = vunpack.c.h.b16 %v6304
  %v6589 = vunpack.c.l.b16 %v6305
  %v6590 = vunpack.c.h.b16 %v6305
  %v6591 = vunpack.c.l.b16 %v6306
  %v6592 = vunpack.c.h.b16 %v6306
  %v6593 = vunpack.c.l.b16 %v6307
  %v6594 = vunpack.c.h.b16 %v6307
  %v6595 = vunpack.c.l.b16 %v6308
  %v6596 = vunpack.c.h.b16 %v6308
  %v6597 = vunpack.c.l.b16 %v6309
  %v6598 = vunpack.c.h.b16 %v6309
  %v6599 = vunpack.c.l.b16 %v6310
  %v6600 = vunpack.c.h.b16 %v6310
  %v6601 = vunpack.c.l.b16 %v6311
  %v6602 = vunpack.c.h.b16 %v6311
  %v6603 = vunpack.c.l.b16 %v6312
  %v6604 = vunpack.c.h.b16 %v6312
  %v6605 = vunpack.c.l.b16 %v6313
  %v6606 = vunpack.c.h.b16 %v6313
  %v6607 = vunpack.c.l.b16 %v6314
  %v6608 = vunpack.c.h.b16 %v6314
  %v6609 = vunpack.c.l.b16 %v6315
  %v6610 = vunpack.c.h.b16 %v6315
  %v6611 = vunpack.c.l.b16 %v6316
  %v6612 = vunpack.c.h.b16 %v6316
  %v6613 = vunpack.c.l.b16 %v6317
  %v6614 = vunpack.c.h.b16 %v6317
  %v6615 = vunpack.c.l.b16 %v6318
  %v6616 = vunpack.c.h.b16 %v6318
  %v6617 = vunpack.c.l.b16 %v6319
  %v6618 = vunpack.c.h.b16 %v6319
  %v6619 = vunpack.c.l.b16 %v6320
  %v6620 = vunpack.c.h.b16 %v6320
  %v6621 = vunpack.c.l.b16 %v6321
  %v6622 = vunpack.c.h.b16 %v6321
  %v6623 = vunpack.c.l.b16 %v6322
  %v6624 = vunpack.c.h.b16 %v6322
  %v6625 = vunpack.c.l.b16 %v6323
  %v6626 = vunpack.c.h.b16 %v6323
  %v6627 = vunpack.c.l.b16 %v6324
  %v6628 = vunpack.c.h.b16 %v6324
  %v6629 = vunpack.c.l.b16 %v6325
  %v6630 = vunpack.c.h.b16 %v6325
  %v6631 = vunpack.c.l.b16 %v6326
  %v6632 = vunpack.c.h.b16 %v6326
  %v6633 = vunpack.c.l.b16 %v6327
  %v6634 = vunpack.c.h.b16 %v6327
  %v6635 = vunpack.c.l.b16 %v6328
  %v6636 = vunpack.c.h.b16 %v6328
  %v6637 = vunpack.c.l.b16 %v6329
  %v6638 = vunpack.c.h.b16 %v6329
  %v6639 = vunpack.c.l.b16 %v6330
  %v6640 = vunpack.c.h.b16 %v6330
  %v6641 = vunpack.c.l.b16 %v6331
  %v6642 = vunpack.c.h.b16 %v6331
  %v6643 = vunpack.c.l.b16 %v6332
  %v6644 = vunpack.c.h.b16 %v6332
  %v6645 = vunpack.c.l.b16 %v6333
  %v6646 = vunpack.c.h.b16 %v6333
  %v6647 = vunpack.c.l.b16 %v6334
  %v6648 = vunpack.c.h.b16 %v6334
  %v6649 = vunpack.c.l.b16 %v6335
  %v6650 = vunpack.c.h.b16 %v6335
  %v6651 = vunpack.c.l.b16 %v6336
  %v6652 = vunpack.c.h.b16 %v6336
  %v6653 = vunpack.c.l.b16 %v6337
  %v6654 = vunpack.c.h.b16 %v6337
  %v6655 = vunpack.c.l.b16 %v6338
  %v6656 = vunpack.c.h.b16 %v6338
  %v6657 = vunpack.c.l.b16 %v6339
  %v6658 = vunpack.c.h.b16 %v6339
  %v6659 = vunpack.c.l.b16 %v6340
  %v6660 = vunpack.c.h.b16 %v6340
  %v6661 = vunpack.c.l.b16 %v6341
  %v6662 = vunpack.c.h.b16 %v6341
  %v6663 = vunpack.c.l.b16 %v6342
  %v6664 = vunpack.c.h.b16 %v6342
  %v6665 = vunpack.c.l.b16 %v6343
  %v6666 = vunpack.c.h.b16 %v6343
  %v6667 = vunpack.c.l.b16 %v6344
  %v6668 = vunpack.c.h.b16 %v6344
  %v6669 = vunpack.c.l.b16 %v6345
  %v6670 = vunpack.c.h.b16 %v6345
  %v6671 = vunpack.c.l.b16 %v6346
  %v6672 = vunpack.c.h.b16 %v6346
  %v6673 = vunpack.c.l.b16 %v6347
  %v6674 = vunpack.c.h.b16 %v6347
  %v6675 = vunpack.c.l.b16 %v6348
  %v6676 = vunpack.c.h.b16 %v6348
  %v6677 = vunpack.c.l.b16 %v6349
  %v6678 = vunpack.c.h.b16 %v6349
  %v6679 = vunpack.c.l.b16 %v6350
  %v6680 = vunpack.c.h.b16 %v6350
  %v6681 = vunpack.c.l.b16 %v6351
  %v6682 = vunpack.c.h.b16 %v6351
  %v6683 = vunpack.c.l.b16 %v6352
  %v6684 = vunpack.c.h.b16 %v6352
  %v6685 = vunpack.c.l.b16 %v6353
  %v6686 = vunpack.c.h.b16 %v6353
  %v6687 = vunpack.c.l.b16 %v6354
  %v6688 = vunpack.c.h.b16 %v6354
  %v6689 = vunpack.c.l.b16 %v6355
  %v6690 = vunpack.c.h.b16 %v6355
  %v6691 = vunpack.c.l.b16 %v6356
  %v6692 = vunpack.c.h.b16 %v6356
  %v6693 = vunpack.c.l.b16 %v6357
  %v6694 = vunpack.c.h.b16 %v6357
  %v6695 = vunpack.c.l.b16 %v6358
  %v6696 = vunpack.c.h.b16 %v6358
  %v6697 = vunpack.c.l.b16 %v6359
  %v6698 = vunpack.c.h.b16 %v6359
  %v6699 = vunpack.c.l.b16 %v6360
  %v6700 = vunpack.c.h.b16 %v6360
  %v6701 = vunpack.c.l.b16 %v6361
  %v6702 = vunpack.c.h.b16 %v6361
  %v6703 = vunpack.c.l.b16 %v6362
  %v6704 = vunpack.c.h.b16 %v6362
  %v6705 = vunpack.c.l.b16 %v6363
  %v6706 = vunpack.c.h.b16 %v6363
  %v6707 = vunpack.c.l.b16 %v6364
  %v6708 = vunpack.c.h.b16 %v6364
  %v6709 = vunpack.c.l.b16 %v6365
  %v6710 = vunpack.c.h.b16 %v6365
  %v6711 = vunpack.c.l.b16 %v6366
  %v6712 = vunpack.c.h.b16 %v6366
  %v6713 = vunpack.c.l.b16 %v6367
  %v6714 = vunpack.c.h.b16 %v6367
  %v6715 = vunpack.c.l.b16 %v6368
  %v6716 = vunpack.c.h.b16 %v6368
  %v6717 = vunpack.c.l.b16 %v6369
  %v6718 = vunpack.c.h.b16 %v6369
  %v6719 = vunpack.c.l.b16 %v6370
  %v6720 = vunpack.c.h.b16 %v6370
  %v6721 = vunpack.c.l.b16 %v6371
  %v6722 = vunpack.c.h.b16 %v6371
  %v6723 = vunpack.c.l.b16 %v6372
  %v6724 = vunpack.c.h.b16 %v6372
  %v6725 = vunpack.c.l.b16 %v6373
  %v6726 = vunpack.c.h.b16 %v6373
  %v6727 = vunpack.c.l.b16 %v6374
  %v6728 = vunpack.c.h.b16 %v6374
  %v6729 = vunpack.c.l.b16 %v6375
  %v6730 = vunpack.c.h.b16 %v6375
  %v6731 = vunpack.c.l.b16 %v6376
  %v6732 = vunpack.c.h.b16 %v6376
  %v6733 = vunpack.c.l.b16 %v6377
  %v6734 = vunpack.c.h.b16 %v6377
  %v6735 = vunpack.c.l.b16 %v6378
  %v6736 = vunpack.c.h.b16 %v6378
  %v6737 = vunpack.c.l.b16 %v6379
  %v6738 = vunpack.c.h.b16 %v6379
  %v6739 = vunpack.c.l.b16 %v6380
  %v6740 = vunpack.c.h.b16 %v6380
  %v6741 = vunpack.c.l.b16 %v6381
  %v6742 = vunpack.c.h.b16 %v6381
  %v6743 = vunpack.c.l.b16 %v6382
  %v6744 = vunpack.c.h.b16 %v6382
  %v6745 = vunpack.c.l.b16 %v6383
  %v6746 = vunpack.c.h.b16 %v6383
  %v6747 = vunpack.c.l.b16 %v6384
  %v6748 = vunpack.c.h.b16 %v6384
  %v6749 = vunpack.c.l.b16 %v6385
  %v6750 = vunpack.c.h.b16 %v6385
  %v6751 = vunpack.c.l.b16 %v6386
  %v6752 = vunpack.c.h.b16 %v6386
  %v6753 = vunpack.c.l.b16 %v6387
  %v6754 = vunpack.c.h.b16 %v6387
  %v6755 = vunpack.c.l.b16 %v6388
  %v6756 = vunpack.c.h.b16 %v6388
  %v6757 = vunpack.c.l.b16 %v6389
  %v6758 = vunpack.c.h.b16 %v6389
  %v6759 = vunpack.c.l.b16 %v6390
  %v6760 = vunpack.c.h.b16 %v6390
  %v6761 = vunpack.c.l.b16 %v6391
  %v6762 = vunpack.c.h.b16 %v6391
  %v6763 = vunpack.c.l.b16 %v6392
  %v6764 = vunpack.c.h.b16 %v6392
  %v6765 = vunpack.c.l.b16 %v6393
  %v6766 = vunpack.c.h.b16 %v6393
  %v6767 = vunpack.c.l.b16 %v6394
  %v6768 = vunpack.c.h.b16 %v6394
  %v6769 = vunpack.c.l.b16 %v6395
  %v6770 = vunpack.c.h.b16 %v6395
  %v6771 = vunpack.c.l.b16 %v6396
  %v6772 = vunpack.c.h.b16 %v6396
  %v6773 = vunpack.c.l.b16 %v6397
  %v6774 = vunpack.c.h.b16 %v6397
  %v6775 = vunpack.c.l.b16 %v6398
  %v6776 = vunpack.c.h.b16 %v6398
  %v6777 = vunpack.c.l.b16 %v6399
  %v6778 = vunpack.c.h.b16 %v6399
  %v6779 = vunpack.c.l.b16 %v6400
  %v6780 = vunpack.c.h.b16 %v6400
  %v6781 = vunpack.c.l.b16 %v6401
  %v6782 = vunpack.c.h.b16 %v6401
  %v6783 = vunpack.c.l.b16 %v6402
  %v6784 = vunpack.c.h.b16 %v6402
  %v6785 = vunpack.c.l.b16 %v6403
  %v6786 = vunpack.c.h.b16 %v6403
  %v6787 = vunpack.c.l.b16 %v6404
  %v6788 = vunpack.c.h.b16 %v6404
  %v6789 = vpack.c.b16 %v6541, %v6533
  %v6790 = vpack.c.b16 %v6542, %v6534
  %v6791 = vpack.c.b16 %v6543, %v6535
  %v6792 = vpack.c.b16 %v6544, %v6536
  %v6793 = vpack.c.b16 %v6545, %v6537
  %v6794 = vpack.c.b16 %v6546, %v6538
  %v6795 = vpack.c.b16 %v6547, %v6539
  %v6796 = vpack.c.b16 %v6548, %v6540
  %v6797 = vpack.c.b16 %v6557, %v6549
  %v6798 = vpack.c.b16 %v6558, %v6550
  %v6799 = vpack.c.b16 %v6559, %v6551
  %v6800 = vpack.c.b16 %v6560, %v6552
  %v6801 = vpack.c.b16 %v6561, %v6553
  %v6802 = vpack.c.b16 %v6562, %v6554
  %v6803 = vpack.c.b16 %v6563, %v6555
  %v6804 = vpack.c.b16 %v6564, %v6556
  %v6805 = vpack.c.b16 %v6573, %v6565
  %v6806 = vpack.c.b16 %v6574, %v6566
  %v6807 = vpack.c.b16 %v6575, %v6567
  %v6808 = vpack.c.b16 %v6576, %v6568
  %v6809 = vpack.c.b16 %v6577, %v6569
  %v6810 = vpack.c.b16 %v6578, %v6570
  %v6811 = vpack.c.b16 %v6579, %v6571
  %v6812 = vpack.c.b16 %v6580, %v6572
  %v6813 = vpack.c.b16 %v6589, %v6581
  %v6814 = vpack.c.b16 %v6590, %v6582
  %v6815 = vpack.c.b16 %v6591, %v6583
  %v6816 = vpack.c.b16 %v6592, %v6584
  %v6817 = vpack.c.b16 %v6593, %v6585
  %v6818 = vpack.c.b16 %v6594, %v6586
  %v6819 = vpack.c.b16 %v6595, %v6587
  %v6820 = vpack.c.b16 %v6596, %v6588
  %v6821 = vpack.c.b16 %v6605, %v6597
  %v6822 = vpack.c.b16 %v6606, %v6598
  %v6823 = vpack.c.b16 %v6607, %v6599
  %v6824 = vpack.c.b16 %v6608, %v6600
  %v6825 = vpack.c.b16 %v6609, %v6601
  %v6826 = vpack.c.b16 %v6610, %v6602
  %v6827 = vpack.c.b16 %v6611, %v6603
  %v6828 = vpack.c.b16 %v6612, %v6604
  %v6829 = vpack.c.b16 %v6621, %v6613
  %v6830 = vpack.c.b16 %v6622, %v6614
  %v6831 = vpack.c.b16 %v6623, %v6615
  %v6832 = vpack.c.b16 %v6624, %v6616
  %v6833 = vpack.c.b16 %v6625, %v6617
  %v6834 = vpack.c.b16 %v6626, %v6618
  %v6835 = vpack.c.b16 %v6627, %v6619
  %v6836 = vpack.c.b16 %v6628, %v6620
  %v6837 = vpack.c.b16 %v6637, %v6629
  %v6838 = vpack.c.b16 %v6638, %v6630
  %v6839 = vpack.c.b16 %v6639, %v6631
  %v6840 = vpack.c.b16 %v6640, %v6632
  %v6841 = vpack.c.b16 %v6641, %v6633
  %v6842 = vpack.c.b16 %v6642, %v6634
  %v6843 = vpack.c.b16 %v6643, %v6635
  %v6844 = vpack.c.b16 %v6644, %v6636
  %v6845 = vpack.c.b16 %v6653, %v6645
  %v6846 = vpack.c.b16 %v6654, %v6646
  %v6847 = vpack.c.b16 %v6655, %v6647
  %v6848 = vpack.c.b16 %v6656, %v6648
  %v6849 = vpack.c.b16 %v6657, %v6649
  %v6850 = vpack.c.b16 %v6658, %v6650
  %v6851 = vpack.c.b16 %v6659, %v6651
  %v6852 = vpack.c.b16 %v6660, %v6652
  %v6853 = vpack.c.b16 %v6669, %v6661
  %v6854 = vpack.c.b16 %v6670, %v6662
  %v6855 = vpack.c.b16 %v6671, %v6663
  %v6856 = vpack.c.b16 %v6672, %v6664
  %v6857 = vpack.c.b16 %v6673, %v6665
  %v6858 = vpack.c.b16 %v6674, %v6666
  %v6859 = vpack.c.b16 %v6675, %v6667
  %v6860 = vpack.c.b16 %v6676, %v6668
  %v6861 = vpack.c.b16 %v6685, %v6677
  %v6862 = vpack.c.b16 %v6686, %v6678
  %v6863 = vpack.c.b16 %v6687, %v6679
  %v6864 = vpack.c.b16 %v6688, %v6680
  %v6865 = vpack.c.b16 %v6689, %v6681
  %v6866 = vpack.c.b16 %v6690, %v6682
  %v6867 = vpack.c.b16 %v6691, %v6683
  %v6868 = vpack.c.b16 %v6692, %v6684
  %v6869 = vpack.c.b16 %v6701, %v6693
  %v6870 = vpack.c.b16 %v6702, %v6694
  %v6871 = vpack.c.b16 %v6703, %v6695
  %v6872 = vpack.c.b16 %v6704, %v6696
  %v6873 = vpack.c.b16 %v6705, %v6697
  %v6874 = vpack.c.b16 %v6706, %v6698
  %v6875 = vpack.c.b16 %v6707, %v6699
  %v6876 = vpack.c.b16 %v6708, %v6700
  %v6877 = vpack.c.b16 %v6717, %v6709
  %v6878 = vpack.c.b16 %v6718, %v6710
  %v6879 = vpack.c.b16 %v6719, %v6711
  %v6880 = vpack.c.b16 %v6720, %v6712
  %v6881 = vpack.c.b16 %v6721, %v6713
  %v6882 = vpack.c.b16 %v6722, %v6714
  %v6883 = vpack.c.b16 %v6723, %v6715
  %v6884 = vpack.c.b16 %v6724, %v6716
  %v6885 = vpack.c.b16 %v6733, %v6725
  %v6886 = vpack.c.b16 %v6734, %v6726
  %v6887 = vpack.c.b16 %v6735, %v6727
  %v6888 = vpack.c.b16 %v6736, %v6728
  %v6889 = vpack.c.b16 %v6737, %v6729
  %v6890 = vpack.c.b16 %v6738, %v6730
  %v6891 = vpack.c.b16 %v6739, %v6731
  %v6892 = vpack.c.b16 %v6740, %v6732
  %v6893 = vpack.c.b16 %v6749, %v6741
  %v6894 = vpack.c.b16 %v6750, %v6742
  %v6895 = vpack.c.b16 %v6751, %v6743
  %v6896 = vpack.c.b16 %v6752, %v6744
  %v6897 = vpack.c.b16 %v6753, %v6745
  %v6898 = vpack.c.b16 %v6754, %v6746
  %v6899 = vpack.c.b16 %v6755, %v6747
  %v6900 = vpack.c.b16 %v6756, %v6748
  %v6901 = vpack.c.b16 %v6765, %v6757
  %v6902 = vpack.c.b16 %v6766, %v6758
  %v6903 = vpack.c.b16 %v6767, %v6759
  %v6904 = vpack.c.b16 %v6768, %v6760
  %v6905 = vpack.c.b16 %v6769, %v6761
  %v6906 = vpack.c.b16 %v6770, %v6762
  %v6907 = vpack.c.b16 %v6771, %v6763
  %v6908 = vpack.c.b16 %v6772, %v6764
  %v6909 = vpack.c.b16 %v6781, %v6773
  %v6910 = vpack.c.b16 %v6782, %v6774
  %v6911 = vpack.c.b16 %v6783, %v6775
  %v6912 = vpack.c.b16 %v6784, %v6776
  %v6913 = vpack.c.b16 %v6785, %v6777
  %v6914 = vpack.c.b16 %v6786, %v6778
  %v6915 = vpack.c.b16 %v6787, %v6779
  %v6916 = vpack.c.b16 %v6788, %v6780
  %7045 = vmatprep.subr.bf16.mxu0 %v6790
  %7046 = vmatpush1.bf16.msra.mxu0 %v6789
  %7047 = vmatprep.subr.bf16.mxu0 %v6798
  %7048 = vmatpush1.bf16.msra.mxu0 %v6797
  %7049 = vmatprep.subr.bf16.mxu0 %v6806
  %7050 = vmatpush1.bf16.msra.mxu0 %v6805
  %7051 = vmatprep.subr.bf16.mxu0 %v6814
  %7052 = vmatpush1.bf16.msra.mxu0 %v6813
  %7053 = vmatprep.subr.bf16.mxu0 %v6822
  %7054 = vmatpush1.bf16.msra.mxu0 %v6821
  %7055 = vmatprep.subr.bf16.mxu0 %v6830
  %7056 = vmatpush1.bf16.msra.mxu0 %v6829
  %7057 = vmatprep.subr.bf16.mxu0 %v6838
  %7058 = vmatpush1.bf16.msra.mxu0 %v6837
  %7059 = vmatprep.subr.bf16.mxu0 %v6846
  %7060 = vmatpush1.bf16.msra.mxu0 %v6845
  %7061 = vmatprep.subr.bf16.mxu0 %v6854
  %7062 = vmatpush1.bf16.msra.mxu0 %v6853
  %7063 = vmatprep.subr.bf16.mxu0 %v6862
  %7064 = vmatpush1.bf16.msra.mxu0 %v6861
  %7065 = vmatprep.subr.bf16.mxu0 %v6870
  %7066 = vmatpush1.bf16.msra.mxu0 %v6869
  %7067 = vmatprep.subr.bf16.mxu0 %v6878
  %7068 = vmatpush1.bf16.msra.mxu0 %v6877
  %7069 = vmatprep.subr.bf16.mxu0 %v6886
  %7070 = vmatpush1.bf16.msra.mxu0 %v6885
  %7071 = vmatprep.subr.bf16.mxu0 %v6894
  %7072 = vmatpush1.bf16.msra.mxu0 %v6893
  %7073 = vmatprep.subr.bf16.mxu0 %v6902
  %7074 = vmatpush1.bf16.msra.mxu0 %v6901
  %7075 = vmatprep.subr.bf16.mxu0 %v6910
  %7076 = vmatpush1.bf16.msra.mxu0 %v6909
  %7077 = vmatprep.mubr.bf16.mxu0 %v6253
  %7078 = vmatmul.mubr.bf16.gmra.mrb[0].mxu0 %v6252
  %v7079 = vpop.f32.mrb[0].mxu0
  %v7080 = vadd.f32 0.0, %v7079
  %v7081 = vpop.f32.mrb[0].mxu0
  %v7082 = vadd.f32 0.0, %v7081
  %v7083 = vpop.f32.mrb[0].mxu0
  %v7084 = vpop.f32.mrb[0].mxu0
  %7085 = vdwg.mxu0
  %7086 = vmatprep.subr.bf16.mxu0 %v6792
  %7087 = vmatpush1.bf16.msra.mxu0 %v6791
  %7088 = vmatprep.subr.bf16.mxu0 %v6800
  %7089 = vmatpush1.bf16.msra.mxu0 %v6799
  %7090 = vmatprep.subr.bf16.mxu0 %v6808
  %7091 = vmatpush1.bf16.msra.mxu0 %v6807
  %7092 = vmatprep.subr.bf16.mxu0 %v6816
  %7093 = vmatpush1.bf16.msra.mxu0 %v6815
  %7094 = vmatprep.subr.bf16.mxu0 %v6824
  %7095 = vmatpush1.bf16.msra.mxu0 %v6823
  %7096 = vmatprep.subr.bf16.mxu0 %v6832
  %7097 = vmatpush1.bf16.msra.mxu0 %v6831
  %7098 = vmatprep.subr.bf16.mxu0 %v6840
  %7099 = vmatpush1.bf16.msra.mxu0 %v6839
  %7100 = vmatprep.subr.bf16.mxu0 %v6848
  %7101 = vmatpush1.bf16.msra.mxu0 %v6847
  %7102 = vmatprep.subr.bf16.mxu0 %v6856
  %7103 = vmatpush1.bf16.msra.mxu0 %v6855
  %7104 = vmatprep.subr.bf16.mxu0 %v6864
  %7105 = vmatpush1.bf16.msra.mxu0 %v6863
  %7106 = vmatprep.subr.bf16.mxu0 %v6872
  %7107 = vmatpush1.bf16.msra.mxu0 %v6871
  %7108 = vmatprep.subr.bf16.mxu0 %v6880
  %7109 = vmatpush1.bf16.msra.mxu0 %v6879
  %7110 = vmatprep.subr.bf16.mxu0 %v6888
  %7111 = vmatpush1.bf16.msra.mxu0 %v6887
  %7112 = vmatprep.subr.bf16.mxu0 %v6896
  %7113 = vmatpush1.bf16.msra.mxu0 %v6895
  %7114 = vmatprep.subr.bf16.mxu0 %v6904
  %7115 = vmatpush1.bf16.msra.mxu0 %v6903
  %7116 = vmatprep.subr.bf16.mxu0 %v6912
  %7117 = vmatpush1.bf16.msra.mxu0 %v6911
  %7118 = vmatprep.mubr.bf16.mxu0 %v6253
  %7119 = vmatmul.mubr.bf16.gmra.mrb[0].mxu0 %v6252
  %v7120 = vpop.f32.mrb[0].mxu0
  %v7121 = vadd.f32 0.0, %v7120
  %v7122 = vpop.f32.mrb[0].mxu0
  %v7123 = vadd.f32 0.0, %v7122
  %v7124 = vpop.f32.mrb[0].mxu0
  %v7125 = vpop.f32.mrb[0].mxu0
  %7126 = vdwg.mxu0
  %7127 = vmatprep.subr.bf16.mxu0 %v6794
  %7128 = vmatpush1.bf16.msra.mxu0 %v6793
  %7129 = vmatprep.subr.bf16.mxu0 %v6802
  %7130 = vmatpush1.bf16.msra.mxu0 %v6801
  %7131 = vmatprep.subr.bf16.mxu0 %v6810
  %7132 = vmatpush1.bf16.msra.mxu0 %v6809
  %7133 = vmatprep.subr.bf16.mxu0 %v6818
  %7134 = vmatpush1.bf16.msra.mxu0 %v6817
  %7135 = vmatprep.subr.bf16.mxu0 %v6826
  %7136 = vmatpush1.bf16.msra.mxu0 %v6825
  %7137 = vmatprep.subr.bf16.mxu0 %v6834
  %7138 = vmatpush1.bf16.msra.mxu0 %v6833
  %7139 = vmatprep.subr.bf16.mxu0 %v6842
  %7140 = vmatpush1.bf16.msra.mxu0 %v6841
  %7141 = vmatprep.subr.bf16.mxu0 %v6850
  %7142 = vmatpush1.bf16.msra.mxu0 %v6849
  %7143 = vmatprep.subr.bf16.mxu0 %v6858
  %7144 = vmatpush1.bf16.msra.mxu0 %v6857
  %7145 = vmatprep.subr.bf16.mxu0 %v6866
  %7146 = vmatpush1.bf16.msra.mxu0 %v6865
  %7147 = vmatprep.subr.bf16.mxu0 %v6874
  %7148 = vmatpush1.bf16.msra.mxu0 %v6873
  %7149 = vmatprep.subr.bf16.mxu0 %v6882
  %7150 = vmatpush1.bf16.msra.mxu0 %v6881
  %7151 = vmatprep.subr.bf16.mxu0 %v6890
  %7152 = vmatpush1.bf16.msra.mxu0 %v6889
  %7153 = vmatprep.subr.bf16.mxu0 %v6898
  %7154 = vmatpush1.bf16.msra.mxu0 %v6897
  %7155 = vmatprep.subr.bf16.mxu0 %v6906
  %7156 = vmatpush1.bf16.msra.mxu0 %v6905
  %7157 = vmatprep.subr.bf16.mxu0 %v6914
  %7158 = vmatpush1.bf16.msra.mxu0 %v6913
  %7159 = vmatprep.mubr.bf16.mxu0 %v6253
  %7160 = vmatmul.mubr.bf16.gmra.mrb[0].mxu0 %v6252
  %v7161 = vpop.f32.mrb[0].mxu0
  %v7162 = vadd.f32 0.0, %v7161
  %v7163 = vpop.f32.mrb[0].mxu0
  %v7164 = vadd.f32 0.0, %v7163
  %v7165 = vpop.f32.mrb[0].mxu0
  %v7166 = vpop.f32.mrb[0].mxu0
  %7167 = vdwg.mxu0
  %7168 = vmatprep.subr.bf16.mxu0 %v6796
  %7169 = vmatpush1.bf16.msra.mxu0 %v6795
  %7170 = vmatprep.subr.bf16.mxu0 %v6804
  %7171 = vmatpush1.bf16.msra.mxu0 %v6803
  %7172 = vmatprep.subr.bf16.mxu0 %v6812
  %7173 = vmatpush1.bf16.msra.mxu0 %v6811
  %7174 = vmatprep.subr.bf16.mxu0 %v6820
  %7175 = vmatpush1.bf16.msra.mxu0 %v6819
  %7176 = vmatprep.subr.bf16.mxu0 %v6828
  %7177 = vmatpush1.bf16.msra.mxu0 %v6827
  %7178 = vmatprep.subr.bf16.mxu0 %v6836
  %7179 = vmatpush1.bf16.msra.mxu0 %v6835
  %7180 = vmatprep.subr.bf16.mxu0 %v6844
  %7181 = vmatpush1.bf16.msra.mxu0 %v6843
  %7182 = vmatprep.subr.bf16.mxu0 %v6852
  %7183 = vmatpush1.bf16.msra.mxu0 %v6851
  %7184 = vmatprep.subr.bf16.mxu0 %v6860
  %7185 = vmatpush1.bf16.msra.mxu0 %v6859
  %7186 = vmatprep.subr.bf16.mxu0 %v6868
  %7187 = vmatpush1.bf16.msra.mxu0 %v6867
  %7188 = vmatprep.subr.bf16.mxu0 %v6876
  %7189 = vmatpush1.bf16.msra.mxu0 %v6875
  %7190 = vmatprep.subr.bf16.mxu0 %v6884
  %7191 = vmatpush1.bf16.msra.mxu0 %v6883
  %7192 = vmatprep.subr.bf16.mxu0 %v6892
  %7193 = vmatpush1.bf16.msra.mxu0 %v6891
  %7194 = vmatprep.subr.bf16.mxu0 %v6900
  %7195 = vmatpush1.bf16.msra.mxu0 %v6899
  %7196 = vmatprep.subr.bf16.mxu0 %v6908
  %7197 = vmatpush1.bf16.msra.mxu0 %v6907
  %7198 = vmatprep.subr.bf16.mxu0 %v6916
  %7199 = vmatpush1.bf16.msra.mxu0 %v6915
  %7200 = vmatprep.mubr.bf16.mxu0 %v6253
  %7201 = vmatmul.mubr.bf16.gmra.mrb[0].mxu0 %v6252
  %v7202 = vpop.f32.mrb[0].mxu0
  %v7203 = vadd.f32 0.0, %v7202
  %v7204 = vpop.f32.mrb[0].mxu0
  %v7205 = vadd.f32 0.0, %v7204
  %v7206 = vpop.f32.mrb[0].mxu0
  %v7207 = vpop.f32.mrb[0].mxu0
  %7208 = vdwg.mxu0
  %v7217 = vcombine.low %v7080, %v7082
  %v7218 = vcombine.low %v7121, %v7123
  %v7220 = vunpack.c.l.s4 1983009808
  %v7221 = vunpack.c.0.s8 %v7220
  %v7222 = vlaneseq
  %v7223 = vshrl.u32 %v7222, 7
  %v7224 = vsub.s32 %v7221, %v7223
  %v7225 = vrot.slane %v7217, %v7224
  %v7227 = vunpack.c.l.s4 1983009808
  %v7228 = vunpack.c.0.s8 %v7227
  %v7229 = vlaneseq
  %v7230 = vshrl.u32 %v7229, 7
  %v7231 = vsub.s32 %v7228, %v7230
  %v7232 = vrot.slane %v7218, %v7231
  %v7233 = vcombine.low %v7225, %v7232
  %v7234 = vcombine.low %v7162, %v7164
  %v7235 = vcombine.low %v7203, %v7205
  %v7237 = vunpack.c.l.s4 1983009808
  %v7238 = vunpack.c.0.s8 %v7237
  %v7239 = vlaneseq
  %v7240 = vshrl.u32 %v7239, 7
  %v7241 = vsub.s32 %v7238, %v7240
  %v7242 = vrot.slane %v7234, %v7241
  %v7244 = vunpack.c.l.s4 1983009808
  %v7245 = vunpack.c.0.s8 %v7244
  %v7246 = vlaneseq
  %v7247 = vshrl.u32 %v7246, 7
  %v7248 = vsub.s32 %v7245, %v7247
  %v7249 = vrot.slane %v7235, %v7248
  %v7250 = vcombine.low %v7242, %v7249
  %v7253 = vadd.f32 %v6275, %v7233
  %v7254 = vadd.f32 %v6276, %v7250
  %v7255 = vxor.u32 %v7253, 2147483648
  %v7256 = vmul.f32 %v7255, 1.442695
  %v7257 = vpow.pop %v7256
  %v7258 = vadd.f32 %v7257, 1.0
  %v7259 = vrcp.pop %v7258
  %v7260 = vmul.f32 1.0, %v7259
  %v7262 = vrot.slane %v7253, 4
  %v7264 = vxor.u32 %v7262, 2147483648
  %v7265 = vmul.f32 %v7264, 1.442695
  %v7266 = vpow.pop %v7265
  %v7267 = vadd.f32 %v7266, 1.0
  %v7268 = vrcp.pop %v7267
  %v7269 = vmul.f32 1.0, %v7268
  %v7270 = vtanh.pop %v7254
  %v7272 = vrot.slane %v7254, 4
  %v7274 = vxor.u32 %v7272, 2147483648
  %v7275 = vmul.f32 %v7274, 1.442695
  %v7276 = vpow.pop %v7275
  %v7277 = vadd.f32 %v7276, 1.0
  %v7278 = vrcp.pop %v7277
  %v7279 = vmul.f32 1.0, %v7278
  %v7280 = vmul.f32 %v7269, %v6238
  %v7281 = vmul.f32 %v7260, %v7270
  %v7282 = vadd.f32 %v7280, %v7281
  %v7283 = vtanh.pop %v7282
  %v7284 = vmul.f32 %v7279, %v7283
  %v7287 = vunpack.c.l.s4 1983009808
  %v7288 = vunpack.c.0.s8 %v7287
  %v7289 = vlaneseq
  %v7290 = vshrl.u32 %v7289, 7
  %v7291 = vsub.s32 %v7288, %v7290
  %v7292 = vrot.slane %v7284, %v7291
  %v7293 = vcombine.high %v7292, %v7292
  %v7296 = vpack.c.bf16 %v7292, %v7292
  %v7297 = vpack.c.bf16 %v7293, %v7293
  %v7300 = vcombine.low %v7296, %v7297
  %v7302 = vunpack.c.l.s4 1966171168
  %v7303 = vunpack.c.0.s8 %v7302
  %v7304 = vlaneseq
  %v7305 = vshrl.u32 %v7304, 7
  %v7306 = vsub.s32 %v7303, %v7305
  %v7307 = vrot.slane %v7300, %v7306
  %v7309 = vunpack.c.l.s4 1966171168
  %v7310 = vunpack.c.0.s8 %v7309
  %v7311 = vlaneseq
  %v7312 = vshrl.u32 %v7311, 7
  %v7313 = vsub.s32 %v7310, %v7312
  %v7314 = vrot.slane %v7307, %v7313
  %s7316 = scalar_lea.vmem %s2, 12
  %7317 = vst [vmem:[%s7316] sm:$0x3] %v7314
  %s7318 = scalar_lea.vmem %s0, 112
  %v7319 = vld [vmem:[%s7318] sm:$0xff]
  %v7320 = vld [vmem:[%s7318 + $0x8] sm:$0xff]
  %v7321 = vld [vmem:[%s1] sm:$0xff]
  %v7322 = vld [vmem:[%s1 + $0x8] sm:$0xff]
  %v7323 = vld [vmem:[%s1 + $0x10] sm:$0xff]
  %v7324 = vld [vmem:[%s1 + $0x18] sm:$0xff]
  %v7325 = vld [vmem:[%s1 + $0x20] sm:$0xff]
  %v7326 = vld [vmem:[%s1 + $0x28] sm:$0xff]
  %v7327 = vld [vmem:[%s1 + $0x30] sm:$0xff]
  %v7328 = vld [vmem:[%s1 + $0x38] sm:$0xff]
  %v7329 = vld [vmem:[%s1 + $0x40] sm:$0xff]
  %v7330 = vld [vmem:[%s1 + $0x48] sm:$0xff]
  %v7331 = vld [vmem:[%s1 + $0x50] sm:$0xff]
  %v7332 = vld [vmem:[%s1 + $0x58] sm:$0xff]
  %v7333 = vld [vmem:[%s1 + $0x60] sm:$0xff]
  %v7334 = vld [vmem:[%s1 + $0x68] sm:$0xff]
  %v7335 = vld [vmem:[%s1 + $0x70] sm:$0xff]
  %v7336 = vld [vmem:[%s1 + $0x78] sm:$0xff]
  %v7337 = vld [vmem:[%s1 + $0x80] sm:$0xff]
  %v7338 = vld [vmem:[%s1 + $0x88] sm:$0xff]
  %v7339 = vld [vmem:[%s1 + $0x90] sm:$0xff]
  %v7340 = vld [vmem:[%s1 + $0x98] sm:$0xff]
  %v7341 = vld [vmem:[%s1 + $0xa0] sm:$0xff]
  %v7342 = vld [vmem:[%s1 + $0xa8] sm:$0xff]
  %v7343 = vld [vmem:[%s1 + $0xb0] sm:$0xff]
  %v7344 = vld [vmem:[%s1 + $0xb8] sm:$0xff]
  %v7345 = vld [vmem:[%s1 + $0xc0] sm:$0xff]
  %v7346 = vld [vmem:[%s1 + $0xc8] sm:$0xff]
  %v7347 = vld [vmem:[%s1 + $0xd0] sm:$0xff]
  %v7348 = vld [vmem:[%s1 + $0xd8] sm:$0xff]
  %v7349 = vld [vmem:[%s1 + $0xe0] sm:$0xff]
  %v7350 = vld [vmem:[%s1 + $0xe8] sm:$0xff]
  %v7351 = vld [vmem:[%s1 + $0xf0] sm:$0xff]
  %v7352 = vld [vmem:[%s1 + $0xf8] sm:$0xff]
  %v7353 = vld [vmem:[%s1 + $0x100] sm:$0xff]
  %v7354 = vld [vmem:[%s1 + $0x108] sm:$0xff]
  %v7355 = vld [vmem:[%s1 + $0x110] sm:$0xff]
  %v7356 = vld [vmem:[%s1 + $0x118] sm:$0xff]
  %v7357 = vld [vmem:[%s1 + $0x120] sm:$0xff]
  %v7358 = vld [vmem:[%s1 + $0x128] sm:$0xff]
  %v7359 = vld [vmem:[%s1 + $0x130] sm:$0xff]
  %v7360 = vld [vmem:[%s1 + $0x138] sm:$0xff]
  %v7361 = vld [vmem:[%s1 + $0x140] sm:$0xff]
  %v7362 = vld [vmem:[%s1 + $0x148] sm:$0xff]
  %v7363 = vld [vmem:[%s1 + $0x150] sm:$0xff]
  %v7364 = vld [vmem:[%s1 + $0x158] sm:$0xff]
  %v7365 = vld [vmem:[%s1 + $0x160] sm:$0xff]
  %v7366 = vld [vmem:[%s1 + $0x168] sm:$0xff]
  %v7367 = vld [vmem:[%s1 + $0x170] sm:$0xff]
  %v7368 = vld [vmem:[%s1 + $0x178] sm:$0xff]
  %v7369 = vld [vmem:[%s1 + $0x180] sm:$0xff]
  %v7370 = vld [vmem:[%s1 + $0x188] sm:$0xff]
  %v7371 = vld [vmem:[%s1 + $0x190] sm:$0xff]
  %v7372 = vld [vmem:[%s1 + $0x198] sm:$0xff]
  %v7373 = vld [vmem:[%s1 + $0x1a0] sm:$0xff]
  %v7374 = vld [vmem:[%s1 + $0x1a8] sm:$0xff]
  %v7375 = vld [vmem:[%s1 + $0x1b0] sm:$0xff]
  %v7376 = vld [vmem:[%s1 + $0x1b8] sm:$0xff]
  %v7377 = vld [vmem:[%s1 + $0x1c0] sm:$0xff]
  %v7378 = vld [vmem:[%s1 + $0x1c8] sm:$0xff]
  %v7379 = vld [vmem:[%s1 + $0x1d0] sm:$0xff]
  %v7380 = vld [vmem:[%s1 + $0x1d8] sm:$0xff]
  %v7381 = vld [vmem:[%s1 + $0x1e0] sm:$0xff]
  %v7382 = vld [vmem:[%s1 + $0x1e8] sm:$0xff]
  %v7383 = vld [vmem:[%s1 + $0x1f0] sm:$0xff]
  %v7384 = vld [vmem:[%s1 + $0x1f8] sm:$0xff]
  %v7385 = vld [vmem:[%s1 + $0x200] sm:$0xff]
  %v7386 = vld [vmem:[%s1 + $0x208] sm:$0xff]
  %v7387 = vld [vmem:[%s1 + $0x210] sm:$0xff]
  %v7388 = vld [vmem:[%s1 + $0x218] sm:$0xff]
  %v7389 = vld [vmem:[%s1 + $0x220] sm:$0xff]
  %v7390 = vld [vmem:[%s1 + $0x228] sm:$0xff]
  %v7391 = vld [vmem:[%s1 + $0x230] sm:$0xff]
  %v7392 = vld [vmem:[%s1 + $0x238] sm:$0xff]
  %v7393 = vld [vmem:[%s1 + $0x240] sm:$0xff]
  %v7394 = vld [vmem:[%s1 + $0x248] sm:$0xff]
  %v7395 = vld [vmem:[%s1 + $0x250] sm:$0xff]
  %v7396 = vld [vmem:[%s1 + $0x258] sm:$0xff]
  %v7397 = vld [vmem:[%s1 + $0x260] sm:$0xff]
  %v7398 = vld [vmem:[%s1 + $0x268] sm:$0xff]
  %v7399 = vld [vmem:[%s1 + $0x270] sm:$0xff]
  %v7400 = vld [vmem:[%s1 + $0x278] sm:$0xff]
  %v7401 = vld [vmem:[%s1 + $0x280] sm:$0xff]
  %v7402 = vld [vmem:[%s1 + $0x288] sm:$0xff]
  %v7403 = vld [vmem:[%s1 + $0x290] sm:$0xff]
  %v7404 = vld [vmem:[%s1 + $0x298] sm:$0xff]
  %v7405 = vld [vmem:[%s1 + $0x2a0] sm:$0xff]
  %v7406 = vld [vmem:[%s1 + $0x2a8] sm:$0xff]
  %v7407 = vld [vmem:[%s1 + $0x2b0] sm:$0xff]
  %v7408 = vld [vmem:[%s1 + $0x2b8] sm:$0xff]
  %v7409 = vld [vmem:[%s1 + $0x2c0] sm:$0xff]
  %v7410 = vld [vmem:[%s1 + $0x2c8] sm:$0xff]
  %v7411 = vld [vmem:[%s1 + $0x2d0] sm:$0xff]
  %v7412 = vld [vmem:[%s1 + $0x2d8] sm:$0xff]
  %v7413 = vld [vmem:[%s1 + $0x2e0] sm:$0xff]
  %v7414 = vld [vmem:[%s1 + $0x2e8] sm:$0xff]
  %v7415 = vld [vmem:[%s1 + $0x2f0] sm:$0xff]
  %v7416 = vld [vmem:[%s1 + $0x2f8] sm:$0xff]
  %v7417 = vld [vmem:[%s1 + $0x300] sm:$0xff]
  %v7418 = vld [vmem:[%s1 + $0x308] sm:$0xff]
  %v7419 = vld [vmem:[%s1 + $0x310] sm:$0xff]
  %v7420 = vld [vmem:[%s1 + $0x318] sm:$0xff]
  %v7421 = vld [vmem:[%s1 + $0x320] sm:$0xff]
  %v7422 = vld [vmem:[%s1 + $0x328] sm:$0xff]
  %v7423 = vld [vmem:[%s1 + $0x330] sm:$0xff]
  %v7424 = vld [vmem:[%s1 + $0x338] sm:$0xff]
  %v7425 = vld [vmem:[%s1 + $0x340] sm:$0xff]
  %v7426 = vld [vmem:[%s1 + $0x348] sm:$0xff]
  %v7427 = vld [vmem:[%s1 + $0x350] sm:$0xff]
  %v7428 = vld [vmem:[%s1 + $0x358] sm:$0xff]
  %v7429 = vld [vmem:[%s1 + $0x360] sm:$0xff]
  %v7430 = vld [vmem:[%s1 + $0x368] sm:$0xff]
  %v7431 = vld [vmem:[%s1 + $0x370] sm:$0xff]
  %v7432 = vld [vmem:[%s1 + $0x378] sm:$0xff]
  %v7433 = vld [vmem:[%s1 + $0x380] sm:$0xff]
  %v7434 = vld [vmem:[%s1 + $0x388] sm:$0xff]
  %v7435 = vld [vmem:[%s1 + $0x390] sm:$0xff]
  %v7436 = vld [vmem:[%s1 + $0x398] sm:$0xff]
  %v7437 = vld [vmem:[%s1 + $0x3a0] sm:$0xff]
  %v7438 = vld [vmem:[%s1 + $0x3a8] sm:$0xff]
  %v7439 = vld [vmem:[%s1 + $0x3b0] sm:$0xff]
  %v7440 = vld [vmem:[%s1 + $0x3b8] sm:$0xff]
  %v7441 = vld [vmem:[%s1 + $0x3c0] sm:$0xff]
  %v7442 = vld [vmem:[%s1 + $0x3c8] sm:$0xff]
  %v7443 = vld [vmem:[%s1 + $0x3d0] sm:$0xff]
  %v7444 = vld [vmem:[%s1 + $0x3d8] sm:$0xff]
  %v7445 = vld [vmem:[%s1 + $0x3e0] sm:$0xff]
  %v7446 = vld [vmem:[%s1 + $0x3e8] sm:$0xff]
  %v7447 = vld [vmem:[%s1 + $0x3f0] sm:$0xff]
  %v7448 = vld [vmem:[%s1 + $0x3f8] sm:$0xff]
  %v7577 = vunpack.c.l.b16 %v7321
  %v7578 = vunpack.c.h.b16 %v7321
  %v7579 = vunpack.c.l.b16 %v7322
  %v7580 = vunpack.c.h.b16 %v7322
  %v7581 = vunpack.c.l.b16 %v7323
  %v7582 = vunpack.c.h.b16 %v7323
  %v7583 = vunpack.c.l.b16 %v7324
  %v7584 = vunpack.c.h.b16 %v7324
  %v7585 = vunpack.c.l.b16 %v7325
  %v7586 = vunpack.c.h.b16 %v7325
  %v7587 = vunpack.c.l.b16 %v7326
  %v7588 = vunpack.c.h.b16 %v7326
  %v7589 = vunpack.c.l.b16 %v7327
  %v7590 = vunpack.c.h.b16 %v7327
  %v7591 = vunpack.c.l.b16 %v7328
  %v7592 = vunpack.c.h.b16 %v7328
  %v7593 = vunpack.c.l.b16 %v7329
  %v7594 = vunpack.c.h.b16 %v7329
  %v7595 = vunpack.c.l.b16 %v7330
  %v7596 = vunpack.c.h.b16 %v7330
  %v7597 = vunpack.c.l.b16 %v7331
  %v7598 = vunpack.c.h.b16 %v7331
  %v7599 = vunpack.c.l.b16 %v7332
  %v7600 = vunpack.c.h.b16 %v7332
  %v7601 = vunpack.c.l.b16 %v7333
  %v7602 = vunpack.c.h.b16 %v7333
  %v7603 = vunpack.c.l.b16 %v7334
  %v7604 = vunpack.c.h.b16 %v7334
  %v7605 = vunpack.c.l.b16 %v7335
  %v7606 = vunpack.c.h.b16 %v7335
  %v7607 = vunpack.c.l.b16 %v7336
  %v7608 = vunpack.c.h.b16 %v7336
  %v7609 = vunpack.c.l.b16 %v7337
  %v7610 = vunpack.c.h.b16 %v7337
  %v7611 = vunpack.c.l.b16 %v7338
  %v7612 = vunpack.c.h.b16 %v7338
  %v7613 = vunpack.c.l.b16 %v7339
  %v7614 = vunpack.c.h.b16 %v7339
  %v7615 = vunpack.c.l.b16 %v7340
  %v7616 = vunpack.c.h.b16 %v7340
  %v7617 = vunpack.c.l.b16 %v7341
  %v7618 = vunpack.c.h.b16 %v7341
  %v7619 = vunpack.c.l.b16 %v7342
  %v7620 = vunpack.c.h.b16 %v7342
  %v7621 = vunpack.c.l.b16 %v7343
  %v7622 = vunpack.c.h.b16 %v7343
  %v7623 = vunpack.c.l.b16 %v7344
  %v7624 = vunpack.c.h.b16 %v7344
  %v7625 = vunpack.c.l.b16 %v7345
  %v7626 = vunpack.c.h.b16 %v7345
  %v7627 = vunpack.c.l.b16 %v7346
  %v7628 = vunpack.c.h.b16 %v7346
  %v7629 = vunpack.c.l.b16 %v7347
  %v7630 = vunpack.c.h.b16 %v7347
  %v7631 = vunpack.c.l.b16 %v7348
  %v7632 = vunpack.c.h.b16 %v7348
  %v7633 = vunpack.c.l.b16 %v7349
  %v7634 = vunpack.c.h.b16 %v7349
  %v7635 = vunpack.c.l.b16 %v7350
  %v7636 = vunpack.c.h.b16 %v7350
  %v7637 = vunpack.c.l.b16 %v7351
  %v7638 = vunpack.c.h.b16 %v7351
  %v7639 = vunpack.c.l.b16 %v7352
  %v7640 = vunpack.c.h.b16 %v7352
  %v7641 = vunpack.c.l.b16 %v7353
  %v7642 = vunpack.c.h.b16 %v7353
  %v7643 = vunpack.c.l.b16 %v7354
  %v7644 = vunpack.c.h.b16 %v7354
  %v7645 = vunpack.c.l.b16 %v7355
  %v7646 = vunpack.c.h.b16 %v7355
  %v7647 = vunpack.c.l.b16 %v7356
  %v7648 = vunpack.c.h.b16 %v7356
  %v7649 = vunpack.c.l.b16 %v7357
  %v7650 = vunpack.c.h.b16 %v7357
  %v7651 = vunpack.c.l.b16 %v7358
  %v7652 = vunpack.c.h.b16 %v7358
  %v7653 = vunpack.c.l.b16 %v7359
  %v7654 = vunpack.c.h.b16 %v7359
  %v7655 = vunpack.c.l.b16 %v7360
  %v7656 = vunpack.c.h.b16 %v7360
  %v7657 = vunpack.c.l.b16 %v7361
  %v7658 = vunpack.c.h.b16 %v7361
  %v7659 = vunpack.c.l.b16 %v7362
  %v7660 = vunpack.c.h.b16 %v7362
  %v7661 = vunpack.c.l.b16 %v7363
  %v7662 = vunpack.c.h.b16 %v7363
  %v7663 = vunpack.c.l.b16 %v7364
  %v7664 = vunpack.c.h.b16 %v7364
  %v7665 = vunpack.c.l.b16 %v7365
  %v7666 = vunpack.c.h.b16 %v7365
  %v7667 = vunpack.c.l.b16 %v7366
  %v7668 = vunpack.c.h.b16 %v7366
  %v7669 = vunpack.c.l.b16 %v7367
  %v7670 = vunpack.c.h.b16 %v7367
  %v7671 = vunpack.c.l.b16 %v7368
  %v7672 = vunpack.c.h.b16 %v7368
  %v7673 = vunpack.c.l.b16 %v7369
  %v7674 = vunpack.c.h.b16 %v7369
  %v7675 = vunpack.c.l.b16 %v7370
  %v7676 = vunpack.c.h.b16 %v7370
  %v7677 = vunpack.c.l.b16 %v7371
  %v7678 = vunpack.c.h.b16 %v7371
  %v7679 = vunpack.c.l.b16 %v7372
  %v7680 = vunpack.c.h.b16 %v7372
  %v7681 = vunpack.c.l.b16 %v7373
  %v7682 = vunpack.c.h.b16 %v7373
  %v7683 = vunpack.c.l.b16 %v7374
  %v7684 = vunpack.c.h.b16 %v7374
  %v7685 = vunpack.c.l.b16 %v7375
  %v7686 = vunpack.c.h.b16 %v7375
  %v7687 = vunpack.c.l.b16 %v7376
  %v7688 = vunpack.c.h.b16 %v7376
  %v7689 = vunpack.c.l.b16 %v7377
  %v7690 = vunpack.c.h.b16 %v7377
  %v7691 = vunpack.c.l.b16 %v7378
  %v7692 = vunpack.c.h.b16 %v7378
  %v7693 = vunpack.c.l.b16 %v7379
  %v7694 = vunpack.c.h.b16 %v7379
  %v7695 = vunpack.c.l.b16 %v7380
  %v7696 = vunpack.c.h.b16 %v7380
  %v7697 = vunpack.c.l.b16 %v7381
  %v7698 = vunpack.c.h.b16 %v7381
  %v7699 = vunpack.c.l.b16 %v7382
  %v7700 = vunpack.c.h.b16 %v7382
  %v7701 = vunpack.c.l.b16 %v7383
  %v7702 = vunpack.c.h.b16 %v7383
  %v7703 = vunpack.c.l.b16 %v7384
  %v7704 = vunpack.c.h.b16 %v7384
  %v7705 = vunpack.c.l.b16 %v7385
  %v7706 = vunpack.c.h.b16 %v7385
  %v7707 = vunpack.c.l.b16 %v7386
  %v7708 = vunpack.c.h.b16 %v7386
  %v7709 = vunpack.c.l.b16 %v7387
  %v7710 = vunpack.c.h.b16 %v7387
  %v7711 = vunpack.c.l.b16 %v7388
  %v7712 = vunpack.c.h.b16 %v7388
  %v7713 = vunpack.c.l.b16 %v7389
  %v7714 = vunpack.c.h.b16 %v7389
  %v7715 = vunpack.c.l.b16 %v7390
  %v7716 = vunpack.c.h.b16 %v7390
  %v7717 = vunpack.c.l.b16 %v7391
  %v7718 = vunpack.c.h.b16 %v7391
  %v7719 = vunpack.c.l.b16 %v7392
  %v7720 = vunpack.c.h.b16 %v7392
  %v7721 = vunpack.c.l.b16 %v7393
  %v7722 = vunpack.c.h.b16 %v7393
  %v7723 = vunpack.c.l.b16 %v7394
  %v7724 = vunpack.c.h.b16 %v7394
  %v7725 = vunpack.c.l.b16 %v7395
  %v7726 = vunpack.c.h.b16 %v7395
  %v7727 = vunpack.c.l.b16 %v7396
  %v7728 = vunpack.c.h.b16 %v7396
  %v7729 = vunpack.c.l.b16 %v7397
  %v7730 = vunpack.c.h.b16 %v7397
  %v7731 = vunpack.c.l.b16 %v7398
  %v7732 = vunpack.c.h.b16 %v7398
  %v7733 = vunpack.c.l.b16 %v7399
  %v7734 = vunpack.c.h.b16 %v7399
  %v7735 = vunpack.c.l.b16 %v7400
  %v7736 = vunpack.c.h.b16 %v7400
  %v7737 = vunpack.c.l.b16 %v7401
  %v7738 = vunpack.c.h.b16 %v7401
  %v7739 = vunpack.c.l.b16 %v7402
  %v7740 = vunpack.c.h.b16 %v7402
  %v7741 = vunpack.c.l.b16 %v7403
  %v7742 = vunpack.c.h.b16 %v7403
  %v7743 = vunpack.c.l.b16 %v7404
  %v7744 = vunpack.c.h.b16 %v7404
  %v7745 = vunpack.c.l.b16 %v7405
  %v7746 = vunpack.c.h.b16 %v7405
  %v7747 = vunpack.c.l.b16 %v7406
  %v7748 = vunpack.c.h.b16 %v7406
  %v7749 = vunpack.c.l.b16 %v7407
  %v7750 = vunpack.c.h.b16 %v7407
  %v7751 = vunpack.c.l.b16 %v7408
  %v7752 = vunpack.c.h.b16 %v7408
  %v7753 = vunpack.c.l.b16 %v7409
  %v7754 = vunpack.c.h.b16 %v7409
  %v7755 = vunpack.c.l.b16 %v7410
  %v7756 = vunpack.c.h.b16 %v7410
  %v7757 = vunpack.c.l.b16 %v7411
  %v7758 = vunpack.c.h.b16 %v7411
  %v7759 = vunpack.c.l.b16 %v7412
  %v7760 = vunpack.c.h.b16 %v7412
  %v7761 = vunpack.c.l.b16 %v7413
  %v7762 = vunpack.c.h.b16 %v7413
  %v7763 = vunpack.c.l.b16 %v7414
  %v7764 = vunpack.c.h.b16 %v7414
  %v7765 = vunpack.c.l.b16 %v7415
  %v7766 = vunpack.c.h.b16 %v7415
  %v7767 = vunpack.c.l.b16 %v7416
  %v7768 = vunpack.c.h.b16 %v7416
  %v7769 = vunpack.c.l.b16 %v7417
  %v7770 = vunpack.c.h.b16 %v7417
  %v7771 = vunpack.c.l.b16 %v7418
  %v7772 = vunpack.c.h.b16 %v7418
  %v7773 = vunpack.c.l.b16 %v7419
  %v7774 = vunpack.c.h.b16 %v7419
  %v7775 = vunpack.c.l.b16 %v7420
  %v7776 = vunpack.c.h.b16 %v7420
  %v7777 = vunpack.c.l.b16 %v7421
  %v7778 = vunpack.c.h.b16 %v7421
  %v7779 = vunpack.c.l.b16 %v7422
  %v7780 = vunpack.c.h.b16 %v7422
  %v7781 = vunpack.c.l.b16 %v7423
  %v7782 = vunpack.c.h.b16 %v7423
  %v7783 = vunpack.c.l.b16 %v7424
  %v7784 = vunpack.c.h.b16 %v7424
  %v7785 = vunpack.c.l.b16 %v7425
  %v7786 = vunpack.c.h.b16 %v7425
  %v7787 = vunpack.c.l.b16 %v7426
  %v7788 = vunpack.c.h.b16 %v7426
  %v7789 = vunpack.c.l.b16 %v7427
  %v7790 = vunpack.c.h.b16 %v7427
  %v7791 = vunpack.c.l.b16 %v7428
  %v7792 = vunpack.c.h.b16 %v7428
  %v7793 = vunpack.c.l.b16 %v7429
  %v7794 = vunpack.c.h.b16 %v7429
  %v7795 = vunpack.c.l.b16 %v7430
  %v7796 = vunpack.c.h.b16 %v7430
  %v7797 = vunpack.c.l.b16 %v7431
  %v7798 = vunpack.c.h.b16 %v7431
  %v7799 = vunpack.c.l.b16 %v7432
  %v7800 = vunpack.c.h.b16 %v7432
  %v7801 = vunpack.c.l.b16 %v7433
  %v7802 = vunpack.c.h.b16 %v7433
  %v7803 = vunpack.c.l.b16 %v7434
  %v7804 = vunpack.c.h.b16 %v7434
  %v7805 = vunpack.c.l.b16 %v7435
  %v7806 = vunpack.c.h.b16 %v7435
  %v7807 = vunpack.c.l.b16 %v7436
  %v7808 = vunpack.c.h.b16 %v7436
  %v7809 = vunpack.c.l.b16 %v7437
  %v7810 = vunpack.c.h.b16 %v7437
  %v7811 = vunpack.c.l.b16 %v7438
  %v7812 = vunpack.c.h.b16 %v7438
  %v7813 = vunpack.c.l.b16 %v7439
  %v7814 = vunpack.c.h.b16 %v7439
  %v7815 = vunpack.c.l.b16 %v7440
  %v7816 = vunpack.c.h.b16 %v7440
  %v7817 = vunpack.c.l.b16 %v7441
  %v7818 = vunpack.c.h.b16 %v7441
  %v7819 = vunpack.c.l.b16 %v7442
  %v7820 = vunpack.c.h.b16 %v7442
  %v7821 = vunpack.c.l.b16 %v7443
  %v7822 = vunpack.c.h.b16 %v7443
  %v7823 = vunpack.c.l.b16 %v7444
  %v7824 = vunpack.c.h.b16 %v7444
  %v7825 = vunpack.c.l.b16 %v7445
  %v7826 = vunpack.c.h.b16 %v7445
  %v7827 = vunpack.c.l.b16 %v7446
  %v7828 = vunpack.c.h.b16 %v7446
  %v7829 = vunpack.c.l.b16 %v7447
  %v7830 = vunpack.c.h.b16 %v7447
  %v7831 = vunpack.c.l.b16 %v7448
  %v7832 = vunpack.c.h.b16 %v7448
  %v7833 = vpack.c.b16 %v7585, %v7577
  %v7834 = vpack.c.b16 %v7586, %v7578
  %v7835 = vpack.c.b16 %v7587, %v7579
  %v7836 = vpack.c.b16 %v7588, %v7580
  %v7837 = vpack.c.b16 %v7589, %v7581
  %v7838 = vpack.c.b16 %v7590, %v7582
  %v7839 = vpack.c.b16 %v7591, %v7583
  %v7840 = vpack.c.b16 %v7592, %v7584
  %v7841 = vpack.c.b16 %v7601, %v7593
  %v7842 = vpack.c.b16 %v7602, %v7594
  %v7843 = vpack.c.b16 %v7603, %v7595
  %v7844 = vpack.c.b16 %v7604, %v7596
  %v7845 = vpack.c.b16 %v7605, %v7597
  %v7846 = vpack.c.b16 %v7606, %v7598
  %v7847 = vpack.c.b16 %v7607, %v7599
  %v7848 = vpack.c.b16 %v7608, %v7600
  %v7849 = vpack.c.b16 %v7617, %v7609
  %v7850 = vpack.c.b16 %v7618, %v7610
  %v7851 = vpack.c.b16 %v7619, %v7611
  %v7852 = vpack.c.b16 %v7620, %v7612
  %v7853 = vpack.c.b16 %v7621, %v7613
  %v7854 = vpack.c.b16 %v7622, %v7614
  %v7855 = vpack.c.b16 %v7623, %v7615
  %v7856 = vpack.c.b16 %v7624, %v7616
  %v7857 = vpack.c.b16 %v7633, %v7625
  %v7858 = vpack.c.b16 %v7634, %v7626
  %v7859 = vpack.c.b16 %v7635, %v7627
  %v7860 = vpack.c.b16 %v7636, %v7628
  %v7861 = vpack.c.b16 %v7637, %v7629
  %v7862 = vpack.c.b16 %v7638, %v7630
  %v7863 = vpack.c.b16 %v7639, %v7631
  %v7864 = vpack.c.b16 %v7640, %v7632
  %v7865 = vpack.c.b16 %v7649, %v7641
  %v7866 = vpack.c.b16 %v7650, %v7642
  %v7867 = vpack.c.b16 %v7651, %v7643
  %v7868 = vpack.c.b16 %v7652, %v7644
  %v7869 = vpack.c.b16 %v7653, %v7645
  %v7870 = vpack.c.b16 %v7654, %v7646
  %v7871 = vpack.c.b16 %v7655, %v7647
  %v7872 = vpack.c.b16 %v7656, %v7648
  %v7873 = vpack.c.b16 %v7665, %v7657
  %v7874 = vpack.c.b16 %v7666, %v7658
  %v7875 = vpack.c.b16 %v7667, %v7659
  %v7876 = vpack.c.b16 %v7668, %v7660
  %v7877 = vpack.c.b16 %v7669, %v7661
  %v7878 = vpack.c.b16 %v7670, %v7662
  %v7879 = vpack.c.b16 %v7671, %v7663
  %v7880 = vpack.c.b16 %v7672, %v7664
  %v7881 = vpack.c.b16 %v7681, %v7673
  %v7882 = vpack.c.b16 %v7682, %v7674
  %v7883 = vpack.c.b16 %v7683, %v7675
  %v7884 = vpack.c.b16 %v7684, %v7676
  %v7885 = vpack.c.b16 %v7685, %v7677
  %v7886 = vpack.c.b16 %v7686, %v7678
  %v7887 = vpack.c.b16 %v7687, %v7679
  %v7888 = vpack.c.b16 %v7688, %v7680
  %v7889 = vpack.c.b16 %v7697, %v7689
  %v7890 = vpack.c.b16 %v7698, %v7690
  %v7891 = vpack.c.b16 %v7699, %v7691
  %v7892 = vpack.c.b16 %v7700, %v7692
  %v7893 = vpack.c.b16 %v7701, %v7693
  %v7894 = vpack.c.b16 %v7702, %v7694
  %v7895 = vpack.c.b16 %v7703, %v7695
  %v7896 = vpack.c.b16 %v7704, %v7696
  %v7897 = vpack.c.b16 %v7713, %v7705
  %v7898 = vpack.c.b16 %v7714, %v7706
  %v7899 = vpack.c.b16 %v7715, %v7707
  %v7900 = vpack.c.b16 %v7716, %v7708
  %v7901 = vpack.c.b16 %v7717, %v7709
  %v7902 = vpack.c.b16 %v7718, %v7710
  %v7903 = vpack.c.b16 %v7719, %v7711
  %v7904 = vpack.c.b16 %v7720, %v7712
  %v7905 = vpack.c.b16 %v7729, %v7721
  %v7906 = vpack.c.b16 %v7730, %v7722
  %v7907 = vpack.c.b16 %v7731, %v7723
  %v7908 = vpack.c.b16 %v7732, %v7724
  %v7909 = vpack.c.b16 %v7733, %v7725
  %v7910 = vpack.c.b16 %v7734, %v7726
  %v7911 = vpack.c.b16 %v7735, %v7727
  %v7912 = vpack.c.b16 %v7736, %v7728
  %v7913 = vpack.c.b16 %v7745, %v7737
  %v7914 = vpack.c.b16 %v7746, %v7738
  %v7915 = vpack.c.b16 %v7747, %v7739
  %v7916 = vpack.c.b16 %v7748, %v7740
  %v7917 = vpack.c.b16 %v7749, %v7741
  %v7918 = vpack.c.b16 %v7750, %v7742
  %v7919 = vpack.c.b16 %v7751, %v7743
  %v7920 = vpack.c.b16 %v7752, %v7744
  %v7921 = vpack.c.b16 %v7761, %v7753
  %v7922 = vpack.c.b16 %v7762, %v7754
  %v7923 = vpack.c.b16 %v7763, %v7755
  %v7924 = vpack.c.b16 %v7764, %v7756
  %v7925 = vpack.c.b16 %v7765, %v7757
  %v7926 = vpack.c.b16 %v7766, %v7758
  %v7927 = vpack.c.b16 %v7767, %v7759
  %v7928 = vpack.c.b16 %v7768, %v7760
  %v7929 = vpack.c.b16 %v7777, %v7769
  %v7930 = vpack.c.b16 %v7778, %v7770
  %v7931 = vpack.c.b16 %v7779, %v7771
  %v7932 = vpack.c.b16 %v7780, %v7772
  %v7933 = vpack.c.b16 %v7781, %v7773
  %v7934 = vpack.c.b16 %v7782, %v7774
  %v7935 = vpack.c.b16 %v7783, %v7775
  %v7936 = vpack.c.b16 %v7784, %v7776
  %v7937 = vpack.c.b16 %v7793, %v7785
  %v7938 = vpack.c.b16 %v7794, %v7786
  %v7939 = vpack.c.b16 %v7795, %v7787
  %v7940 = vpack.c.b16 %v7796, %v7788
  %v7941 = vpack.c.b16 %v7797, %v7789
  %v7942 = vpack.c.b16 %v7798, %v7790
  %v7943 = vpack.c.b16 %v7799, %v7791
  %v7944 = vpack.c.b16 %v7800, %v7792
  %v7945 = vpack.c.b16 %v7809, %v7801
  %v7946 = vpack.c.b16 %v7810, %v7802
  %v7947 = vpack.c.b16 %v7811, %v7803
  %v7948 = vpack.c.b16 %v7812, %v7804
  %v7949 = vpack.c.b16 %v7813, %v7805
  %v7950 = vpack.c.b16 %v7814, %v7806
  %v7951 = vpack.c.b16 %v7815, %v7807
  %v7952 = vpack.c.b16 %v7816, %v7808
  %v7953 = vpack.c.b16 %v7825, %v7817
  %v7954 = vpack.c.b16 %v7826, %v7818
  %v7955 = vpack.c.b16 %v7827, %v7819
  %v7956 = vpack.c.b16 %v7828, %v7820
  %v7957 = vpack.c.b16 %v7829, %v7821
  %v7958 = vpack.c.b16 %v7830, %v7822
  %v7959 = vpack.c.b16 %v7831, %v7823
  %v7960 = vpack.c.b16 %v7832, %v7824
  %8089 = vmatprep.subr.bf16.mxu0 %v7834
  %8090 = vmatpush1.bf16.msra.mxu0 %v7833
  %8091 = vmatprep.subr.bf16.mxu0 %v7842
  %8092 = vmatpush1.bf16.msra.mxu0 %v7841
  %8093 = vmatprep.subr.bf16.mxu0 %v7850
  %8094 = vmatpush1.bf16.msra.mxu0 %v7849
  %8095 = vmatprep.subr.bf16.mxu0 %v7858
  %8096 = vmatpush1.bf16.msra.mxu0 %v7857
  %8097 = vmatprep.subr.bf16.mxu0 %v7866
  %8098 = vmatpush1.bf16.msra.mxu0 %v7865
  %8099 = vmatprep.subr.bf16.mxu0 %v7874
  %8100 = vmatpush1.bf16.msra.mxu0 %v7873
  %8101 = vmatprep.subr.bf16.mxu0 %v7882
  %8102 = vmatpush1.bf16.msra.mxu0 %v7881
  %8103 = vmatprep.subr.bf16.mxu0 %v7890
  %8104 = vmatpush1.bf16.msra.mxu0 %v7889
  %8105 = vmatprep.subr.bf16.mxu0 %v7898
  %8106 = vmatpush1.bf16.msra.mxu0 %v7897
  %8107 = vmatprep.subr.bf16.mxu0 %v7906
  %8108 = vmatpush1.bf16.msra.mxu0 %v7905
  %8109 = vmatprep.subr.bf16.mxu0 %v7914
  %8110 = vmatpush1.bf16.msra.mxu0 %v7913
  %8111 = vmatprep.subr.bf16.mxu0 %v7922
  %8112 = vmatpush1.bf16.msra.mxu0 %v7921
  %8113 = vmatprep.subr.bf16.mxu0 %v7930
  %8114 = vmatpush1.bf16.msra.mxu0 %v7929
  %8115 = vmatprep.subr.bf16.mxu0 %v7938
  %8116 = vmatpush1.bf16.msra.mxu0 %v7937
  %8117 = vmatprep.subr.bf16.mxu0 %v7946
  %8118 = vmatpush1.bf16.msra.mxu0 %v7945
  %8119 = vmatprep.subr.bf16.mxu0 %v7954
  %8120 = vmatpush1.bf16.msra.mxu0 %v7953
  %8121 = vmatprep.mubr.bf16.mxu0 %v7297
  %8122 = vmatmul.mubr.bf16.gmra.mrb[0].mxu0 %v7296
  %v8123 = vpop.f32.mrb[0].mxu0
  %v8124 = vadd.f32 0.0, %v8123
  %v8125 = vpop.f32.mrb[0].mxu0
  %v8126 = vadd.f32 0.0, %v8125
  %v8127 = vpop.f32.mrb[0].mxu0
  %v8128 = vpop.f32.mrb[0].mxu0
  %8129 = vdwg.mxu0
  %8130 = vmatprep.subr.bf16.mxu0 %v7836
  %8131 = vmatpush1.bf16.msra.mxu0 %v7835
  %8132 = vmatprep.subr.bf16.mxu0 %v7844
  %8133 = vmatpush1.bf16.msra.mxu0 %v7843
  %8134 = vmatprep.subr.bf16.mxu0 %v7852
  %8135 = vmatpush1.bf16.msra.mxu0 %v7851
  %8136 = vmatprep.subr.bf16.mxu0 %v7860
  %8137 = vmatpush1.bf16.msra.mxu0 %v7859
  %8138 = vmatprep.subr.bf16.mxu0 %v7868
  %8139 = vmatpush1.bf16.msra.mxu0 %v7867
  %8140 = vmatprep.subr.bf16.mxu0 %v7876
  %8141 = vmatpush1.bf16.msra.mxu0 %v7875
  %8142 = vmatprep.subr.bf16.mxu0 %v7884
  %8143 = vmatpush1.bf16.msra.mxu0 %v7883
  %8144 = vmatprep.subr.bf16.mxu0 %v7892
  %8145 = vmatpush1.bf16.msra.mxu0 %v7891
  %8146 = vmatprep.subr.bf16.mxu0 %v7900
  %8147 = vmatpush1.bf16.msra.mxu0 %v7899
  %8148 = vmatprep.subr.bf16.mxu0 %v7908
  %8149 = vmatpush1.bf16.msra.mxu0 %v7907
  %8150 = vmatprep.subr.bf16.mxu0 %v7916
  %8151 = vmatpush1.bf16.msra.mxu0 %v7915
  %8152 = vmatprep.subr.bf16.mxu0 %v7924
  %8153 = vmatpush1.bf16.msra.mxu0 %v7923
  %8154 = vmatprep.subr.bf16.mxu0 %v7932
  %8155 = vmatpush1.bf16.msra.mxu0 %v7931
  %8156 = vmatprep.subr.bf16.mxu0 %v7940
  %8157 = vmatpush1.bf16.msra.mxu0 %v7939
  %8158 = vmatprep.subr.bf16.mxu0 %v7948
  %8159 = vmatpush1.bf16.msra.mxu0 %v7947
  %8160 = vmatprep.subr.bf16.mxu0 %v7956
  %8161 = vmatpush1.bf16.msra.mxu0 %v7955
  %8162 = vmatprep.mubr.bf16.mxu0 %v7297
  %8163 = vmatmul.mubr.bf16.gmra.mrb[0].mxu0 %v7296
  %v8164 = vpop.f32.mrb[0].mxu0
  %v8165 = vadd.f32 0.0, %v8164
  %v8166 = vpop.f32.mrb[0].mxu0
  %v8167 = vadd.f32 0.0, %v8166
  %v8168 = vpop.f32.mrb[0].mxu0
  %v8169 = vpop.f32.mrb[0].mxu0
  %8170 = vdwg.mxu0
  %8171 = vmatprep.subr.bf16.mxu0 %v7838
  %8172 = vmatpush1.bf16.msra.mxu0 %v7837
  %8173 = vmatprep.subr.bf16.mxu0 %v7846
  %8174 = vmatpush1.bf16.msra.mxu0 %v7845
  %8175 = vmatprep.subr.bf16.mxu0 %v7854
  %8176 = vmatpush1.bf16.msra.mxu0 %v7853
  %8177 = vmatprep.subr.bf16.mxu0 %v7862
  %8178 = vmatpush1.bf16.msra.mxu0 %v7861
  %8179 = vmatprep.subr.bf16.mxu0 %v7870
  %8180 = vmatpush1.bf16.msra.mxu0 %v7869
  %8181 = vmatprep.subr.bf16.mxu0 %v7878
  %8182 = vmatpush1.bf16.msra.mxu0 %v7877
  %8183 = vmatprep.subr.bf16.mxu0 %v7886
  %8184 = vmatpush1.bf16.msra.mxu0 %v7885
  %8185 = vmatprep.subr.bf16.mxu0 %v7894
  %8186 = vmatpush1.bf16.msra.mxu0 %v7893
  %8187 = vmatprep.subr.bf16.mxu0 %v7902
  %8188 = vmatpush1.bf16.msra.mxu0 %v7901
  %8189 = vmatprep.subr.bf16.mxu0 %v7910
  %8190 = vmatpush1.bf16.msra.mxu0 %v7909
  %8191 = vmatprep.subr.bf16.mxu0 %v7918
  %8192 = vmatpush1.bf16.msra.mxu0 %v7917
  %8193 = vmatprep.subr.bf16.mxu0 %v7926
  %8194 = vmatpush1.bf16.msra.mxu0 %v7925
  %8195 = vmatprep.subr.bf16.mxu0 %v7934
  %8196 = vmatpush1.bf16.msra.mxu0 %v7933
  %8197 = vmatprep.subr.bf16.mxu0 %v7942
  %8198 = vmatpush1.bf16.msra.mxu0 %v7941
  %8199 = vmatprep.subr.bf16.mxu0 %v7950
  %8200 = vmatpush1.bf16.msra.mxu0 %v7949
  %8201 = vmatprep.subr.bf16.mxu0 %v7958
  %8202 = vmatpush1.bf16.msra.mxu0 %v7957
  %8203 = vmatprep.mubr.bf16.mxu0 %v7297
  %8204 = vmatmul.mubr.bf16.gmra.mrb[0].mxu0 %v7296
  %v8205 = vpop.f32.mrb[0].mxu0
  %v8206 = vadd.f32 0.0, %v8205
  %v8207 = vpop.f32.mrb[0].mxu0
  %v8208 = vadd.f32 0.0, %v8207
  %v8209 = vpop.f32.mrb[0].mxu0
  %v8210 = vpop.f32.mrb[0].mxu0
  %8211 = vdwg.mxu0
  %8212 = vmatprep.subr.bf16.mxu0 %v7840
  %8213 = vmatpush1.bf16.msra.mxu0 %v7839
  %8214 = vmatprep.subr.bf16.mxu0 %v7848
  %8215 = vmatpush1.bf16.msra.mxu0 %v7847
  %8216 = vmatprep.subr.bf16.mxu0 %v7856
  %8217 = vmatpush1.bf16.msra.mxu0 %v7855
  %8218 = vmatprep.subr.bf16.mxu0 %v7864
  %8219 = vmatpush1.bf16.msra.mxu0 %v7863
  %8220 = vmatprep.subr.bf16.mxu0 %v7872
  %8221 = vmatpush1.bf16.msra.mxu0 %v7871
  %8222 = vmatprep.subr.bf16.mxu0 %v7880
  %8223 = vmatpush1.bf16.msra.mxu0 %v7879
  %8224 = vmatprep.subr.bf16.mxu0 %v7888
  %8225 = vmatpush1.bf16.msra.mxu0 %v7887
  %8226 = vmatprep.subr.bf16.mxu0 %v7896
  %8227 = vmatpush1.bf16.msra.mxu0 %v7895
  %8228 = vmatprep.subr.bf16.mxu0 %v7904
  %8229 = vmatpush1.bf16.msra.mxu0 %v7903
  %8230 = vmatprep.subr.bf16.mxu0 %v7912
  %8231 = vmatpush1.bf16.msra.mxu0 %v7911
  %8232 = vmatprep.subr.bf16.mxu0 %v7920
  %8233 = vmatpush1.bf16.msra.mxu0 %v7919
  %8234 = vmatprep.subr.bf16.mxu0 %v7928
  %8235 = vmatpush1.bf16.msra.mxu0 %v7927
  %8236 = vmatprep.subr.bf16.mxu0 %v7936
  %8237 = vmatpush1.bf16.msra.mxu0 %v7935
  %8238 = vmatprep.subr.bf16.mxu0 %v7944
  %8239 = vmatpush1.bf16.msra.mxu0 %v7943
  %8240 = vmatprep.subr.bf16.mxu0 %v7952
  %8241 = vmatpush1.bf16.msra.mxu0 %v7951
  %8242 = vmatprep.subr.bf16.mxu0 %v7960
  %8243 = vmatpush1.bf16.msra.mxu0 %v7959
  %8244 = vmatprep.mubr.bf16.mxu0 %v7297
  %8245 = vmatmul.mubr.bf16.gmra.mrb[0].mxu0 %v7296
  %v8246 = vpop.f32.mrb[0].mxu0
  %v8247 = vadd.f32 0.0, %v8246
  %v8248 = vpop.f32.mrb[0].mxu0
  %v8249 = vadd.f32 0.0, %v8248
  %v8250 = vpop.f32.mrb[0].mxu0
  %v8251 = vpop.f32.mrb[0].mxu0
  %8252 = vdwg.mxu0
  %v8261 = vcombine.low %v8124, %v8126
  %v8262 = vcombine.low %v8165, %v8167
  %v8264 = vunpack.c.l.s4 1983009808
  %v8265 = vunpack.c.0.s8 %v8264
  %v8266 = vlaneseq
  %v8267 = vshrl.u32 %v8266, 7
  %v8268 = vsub.s32 %v8265, %v8267
  %v8269 = vrot.slane %v8261, %v8268
  %v8271 = vunpack.c.l.s4 1983009808
  %v8272 = vunpack.c.0.s8 %v8271
  %v8273 = vlaneseq
  %v8274 = vshrl.u32 %v8273, 7
  %v8275 = vsub.s32 %v8272, %v8274
  %v8276 = vrot.slane %v8262, %v8275
  %v8277 = vcombine.low %v8269, %v8276
  %v8278 = vcombine.low %v8206, %v8208
  %v8279 = vcombine.low %v8247, %v8249
  %v8281 = vunpack.c.l.s4 1983009808
  %v8282 = vunpack.c.0.s8 %v8281
  %v8283 = vlaneseq
  %v8284 = vshrl.u32 %v8283, 7
  %v8285 = vsub.s32 %v8282, %v8284
  %v8286 = vrot.slane %v8278, %v8285
  %v8288 = vunpack.c.l.s4 1983009808
  %v8289 = vunpack.c.0.s8 %v8288
  %v8290 = vlaneseq
  %v8291 = vshrl.u32 %v8290, 7
  %v8292 = vsub.s32 %v8289, %v8291
  %v8293 = vrot.slane %v8279, %v8292
  %v8294 = vcombine.low %v8286, %v8293
  %v8297 = vadd.f32 %v7319, %v8277
  %v8298 = vadd.f32 %v7320, %v8294
  %v8299 = vxor.u32 %v8297, 2147483648
  %v8300 = vmul.f32 %v8299, 1.442695
  %v8301 = vpow.pop %v8300
  %v8302 = vadd.f32 %v8301, 1.0
  %v8303 = vrcp.pop %v8302
  %v8304 = vmul.f32 1.0, %v8303
  %v8306 = vrot.slane %v8297, 4
  %v8308 = vxor.u32 %v8306, 2147483648
  %v8309 = vmul.f32 %v8308, 1.442695
  %v8310 = vpow.pop %v8309
  %v8311 = vadd.f32 %v8310, 1.0
  %v8312 = vrcp.pop %v8311
  %v8313 = vmul.f32 1.0, %v8312
  %v8314 = vtanh.pop %v8298
  %v8316 = vrot.slane %v8298, 4
  %v8318 = vxor.u32 %v8316, 2147483648
  %v8319 = vmul.f32 %v8318, 1.442695
  %v8320 = vpow.pop %v8319
  %v8321 = vadd.f32 %v8320, 1.0
  %v8322 = vrcp.pop %v8321
  %v8323 = vmul.f32 1.0, %v8322
  %v8324 = vmul.f32 %v8313, %v7282
  %v8325 = vmul.f32 %v8304, %v8314
  %v8326 = vadd.f32 %v8324, %v8325
  %v8327 = vtanh.pop %v8326
  %v8328 = vmul.f32 %v8323, %v8327
  %v8331 = vunpack.c.l.s4 1983009808
  %v8332 = vunpack.c.0.s8 %v8331
  %v8333 = vlaneseq
  %v8334 = vshrl.u32 %v8333, 7
  %v8335 = vsub.s32 %v8332, %v8334
  %v8336 = vrot.slane %v8328, %v8335
  %v8337 = vcombine.high %v8336, %v8336
  %v8340 = vpack.c.bf16 %v8336, %v8336
  %v8341 = vpack.c.bf16 %v8337, %v8337
  %v8344 = vcombine.low %v8340, %v8341
  %v8346 = vunpack.c.l.s4 1966171168
  %v8347 = vunpack.c.0.s8 %v8346
  %v8348 = vlaneseq
  %v8349 = vshrl.u32 %v8348, 7
  %v8350 = vsub.s32 %v8347, %v8349
  %v8351 = vrot.slane %v8344, %v8350
  %v8353 = vunpack.c.l.s4 1966171168
  %v8354 = vunpack.c.0.s8 %v8353
  %v8355 = vlaneseq
  %v8356 = vshrl.u32 %v8355, 7
  %v8357 = vsub.s32 %v8354, %v8356
  %v8358 = vrot.slane %v8351, %v8357
  %s8360 = scalar_lea.vmem %s2, 14
  %8361 = vst [vmem:[%s8360] sm:$0x3] %v8358
  // Predicated region
  $region10: #{lstm_model_forward.4} parent=0 // pred_check
    _
  $region11: #{lstm_model_forward.4} parent=0 // pred_check_branch
    %8363 = sbr.rel (0) target = $region13
  $region12: #{lstm_model_forward.4} parent=0 // pred_region
    _
  $region13: #{lstm_model_forward.4} parent=0 // pred_fallthru
    _
  // Predicated region
  $region14: #{lstm_model_forward.4} parent=0 // pred_check
    _
  $region15: #{lstm_model_forward.4} parent=0 // pred_check_branch
    %8365 = sbr.rel (0) target = $region17
  $region16: #{lstm_model_forward.4} parent=0 // pred_region
    _
  $region17: #{lstm_model_forward.4} parent=0 // pred_fallthru
    _

</llo_original>
